<compile_context>
chip_gen: v6e
topology: v6e:2x2x1
jax: 0.10.0
libtpu: 0.0.40
codegen_flags: <defaults>
</compile_context>

<pallas_src>
import functools
import math

import jax
import jax.numpy as jnp
from jax.experimental import pallas as pl
from jax.experimental.pallas import tpu as pltpu

_EPS = 1e-5                      # nn.GroupNorm default eps
_LANE = 128
_STORE_DTYPE = jnp.bfloat16      # activation/weight storage (f32 accumulate)


def _round_up(v, m):
  return (v + m - 1) // m * m


# ---------------------------------------------------------------------------
# In-kernel math helpers
# ---------------------------------------------------------------------------
def _gelu(x):
  """erf-based GELU (A&S 7.1.26 rational approx, |err| < 1.5e-7 vs torch)."""
  a1, a2, a3, a4, a5 = (0.254829592, -0.284496736, 1.421413741,
                        -1.453152027, 1.061405429)
  pc = 0.3275911
  z = x * 0.7071067811865476
  az = jnp.abs(z)
  t = pl.reciprocal(1.0 + pc * az, approx=True)          # EUP slot (free-ish)
  poly = ((((a5 * t + a4) * t + a3) * t + a2) * t + a1) * t
  erf_az = 1.0 - poly * jnp.exp(-az * az)
  erf_z = jnp.where(z >= 0.0, erf_az, -erf_az)
  return 0.5 * x * (1.0 + erf_z)


# ---------------------------------------------------------------------------
# Kernel 1: stride-2 k^3 conv on the parity-decomposed padded input
#           (+ masked per-step GroupNorm partial statistics).
# Layout: channels on sublanes, flattened (sub-row * ws + sub-col) on lanes.
# Output lane f = y*ws + x (ws = wo+1); tap (kz,ky,kx) is a constant lane
# shift (ky//2)*ws + kx//2 into parity plane (ky%2, kx%2) of padded depth
# 2*z + kz.  All k^3 taps are fused in one grid step (grid = (N, do)).
# ---------------------------------------------------------------------------
def _conv_s2_kernel(*refs, k, ws, lout):
  nd = k // 2 + 1
  x_refs = refs[:nd]
  w_ref, b_ref, m_ref = refs[nd], refs[nd + 1], refs[nd + 2]
  o_ref, sum_ref, ssq_ref = refs[nd + 3], refs[nd + 4], refs[nd + 5]

  cout = o_ref.shape[2]
  acc = jnp.zeros((cout, lout), jnp.float32)
  for kz in range(k):
    j, dz = kz // 2, kz % 2
    for py in range(2):
      kys = [ky for ky in range(k) if ky % 2 == py]
      if not kys:
        continue
      for px in range(2):
        kxs = [kx for kx in range(k) if kx % 2 == px]
        if not kxs:
          continue
        plane = x_refs[j][0, dz, 2 * py + px]            # (Cin, Lplane)
        for ky in kys:
          for kx in kxs:
            off = (ky // 2) * ws + (kx // 2)
            xs = plane[:, off:off + lout]                # (Cin, lout)
            acc = acc + jnp.dot(w_ref[kz, ky, kx], xs,
                                preferred_element_type=jnp.float32)

  y = acc + b_ref[...]                                   # bias (Cout, 1) f32
  mask = m_ref[...]                                      # (1, lout) valid-lane mask
  sum_ref[0, 0] = jnp.sum(y * mask, axis=1, keepdims=True)
  ssq_ref[0, 0] = jnp.sum(y * y * mask, axis=1, keepdims=True)
  o_ref[0, 0] = y.astype(o_ref.dtype)


def conv_s2_gn(x_prep, w_taps, bias, mask, *, n, do, k, ws, lout, lplane,
               c_in, c_out):
  nd = k // 2 + 1
  in_specs = []
  for j in range(k // 2):    # pairs of padded depth slices [2z+2j, 2z+2j+2)
    in_specs.append(pl.BlockSpec((1, 2, 4, c_in, lplane),
                                 lambda nn, z, j=j: (nn, z + j, 0, 0, 0)))
  # last padded depth slice (tap kz = k-1)
  in_specs.append(pl.BlockSpec((1, 1, 4, c_in, lplane),
                               lambda nn, z: (nn, 2 * z + (k - 1), 0, 0, 0)))
  in_specs += [
      pl.BlockSpec((k, k, k, c_out, c_in), lambda nn, z: (0, 0, 0, 0, 0)),
      pl.BlockSpec((c_out, 1), lambda nn, z: (0, 0)),
      pl.BlockSpec((1, lout), lambda nn, z: (0, 0)),
  ]
  out_specs = [
      pl.BlockSpec((1, 1, c_out, lout), lambda nn, z: (nn, z, 0, 0)),
      pl.BlockSpec((1, 1, c_out, 1), lambda nn, z: (nn, z, 0, 0)),
      pl.BlockSpec((1, 1, c_out, 1), lambda nn, z: (nn, z, 0, 0)),
  ]
  out_shape = [
      jax.ShapeDtypeStruct((n, do, c_out, lout), _STORE_DTYPE),
      jax.ShapeDtypeStruct((n, do, c_out, 1), jnp.float32),
      jax.ShapeDtypeStruct((n, do, c_out, 1), jnp.float32),
  ]
  kern = functools.partial(_conv_s2_kernel, k=k, ws=ws, lout=lout)
  return pl.pallas_call(
      kern,
      grid=(n, do),
      in_specs=in_specs,
      out_specs=out_specs,
      out_shape=out_shape,
      compiler_params=pltpu.CompilerParams(
          dimension_semantics=("parallel", "parallel")),
  )(*([x_prep] * nd + [w_taps, bias, mask]))


# ---------------------------------------------------------------------------
# Kernel 2: stride-1 "same" k^3 conv on the padded-pitch mid activation
#           (+ masked GroupNorm partial statistics).  Weight is resident.
# Output lane f = y*wp2 + x; tap (kz,ky,kx) is the constant lane shift
# ky*wp2 + kx into padded depth slice z + kz.  Grid = (N, do).
# ---------------------------------------------------------------------------
def _conv_s1_kernel(*refs, k, wpitch, lout):
  x_refs = refs[:k]
  w_ref, b_ref, m_ref = refs[k], refs[k + 1], refs[k + 2]
  o_ref, sum_ref, ssq_ref = refs[k + 3], refs[k + 4], refs[k + 5]

  cout = o_ref.shape[2]
  acc = jnp.zeros((cout, lout), jnp.float32)
  for kz in range(k):
    plane = x_refs[kz][0, 0]                             # (C, Lmid)
    for ky in range(k):
      for kx in range(k):
        off = ky * wpitch + kx
        xs = plane[:, off:off + lout]
        acc = acc + jnp.dot(w_ref[kz, ky, kx], xs,
                            preferred_element_type=jnp.float32)

  y = acc + b_ref[...]
  mask = m_ref[...]
  sum_ref[0, 0] = jnp.sum(y * mask, axis=1, keepdims=True)
  ssq_ref[0, 0] = jnp.sum(y * y * mask, axis=1, keepdims=True)
  o_ref[0, 0] = y.astype(o_ref.dtype)


def conv_s1_gn(x_pad, w_taps, bias, mask, *, n, do, k, wpitch, lout, lmid, c):
  # TODO(synk): replace the k depth-slice refs with a manual-DMA rolling ring
  # (memory_space=pl.ANY) to cut the k-fold depth-slice re-reads to ~1x.
  in_specs = [pl.BlockSpec((1, 1, c, lmid),
                           lambda nn, z, j=j: (nn, z + j, 0, 0))
              for j in range(k)]
  in_specs += [
      pl.BlockSpec((k, k, k, c, c), lambda nn, z: (0, 0, 0, 0, 0)),
      pl.BlockSpec((c, 1), lambda nn, z: (0, 0)),
      pl.BlockSpec((1, lout), lambda nn, z: (0, 0)),
  ]
  out_specs = [
      pl.BlockSpec((1, 1, c, lout), lambda nn, z: (nn, z, 0, 0)),
      pl.BlockSpec((1, 1, c, 1), lambda nn, z: (nn, z, 0, 0)),
      pl.BlockSpec((1, 1, c, 1), lambda nn, z: (nn, z, 0, 0)),
  ]
  out_shape = [
      jax.ShapeDtypeStruct((n, do, c, lout), _STORE_DTYPE),
      jax.ShapeDtypeStruct((n, do, c, 1), jnp.float32),
      jax.ShapeDtypeStruct((n, do, c, 1), jnp.float32),
  ]
  kern = functools.partial(_conv_s1_kernel, k=k, wpitch=wpitch, lout=lout)
  return pl.pallas_call(
      kern,
      grid=(n, do),
      in_specs=in_specs,
      out_specs=out_specs,
      out_shape=out_shape,
      compiler_params=pltpu.CompilerParams(
          dimension_semantics=("parallel", "parallel")),
  )(*([x_pad] * k + [w_taps, bias, mask]))


# ---------------------------------------------------------------------------
# Kernel 3/4: fused GroupNorm-normalize -> 1x1 expand -> GELU -> 1x1 contract
#             -> + residual.  The expanded activation never leaves VMEM.
# Variant "proj": residual is the `self.add` stride-2 1x1 projection read
# straight from the parity-decomposed input.  Variant "add": plain residual.
# ---------------------------------------------------------------------------
def _pointwise_core(x, mean, rstd, g, b, we, be, wc, bc):
  xn = (x - mean) * rstd * g + b                         # f32 (C, L)
  h = jnp.dot(we, xn.astype(we.dtype),
              preferred_element_type=jnp.float32) + be
  h = _gelu(h)
  y = jnp.dot(wc, h.astype(wc.dtype),
              preferred_element_type=jnp.float32) + bc
  return y


def _pw_proj_kernel(x_ref, r_ref, m_ref, s_ref, g_ref, b_ref, we_ref, be_ref,
                    wc_ref, bc_ref, wa_ref, ba_ref, o_ref, *, roff, lout):
  x = x_ref[0, 0].astype(jnp.float32)
  y = _pointwise_core(x, m_ref[0], s_ref[0], g_ref[...], b_ref[...],
                      we_ref[...], be_ref[...], wc_ref[...], bc_ref[...])
  r = r_ref[0, 0, 0, :, roff:roff + lout]                # (C, lout) x_sub slice
  res = jnp.dot(wa_ref[...], r,
                preferred_element_type=jnp.float32) + ba_ref[...]
  o_ref[0, 0] = (y + res).astype(o_ref.dtype)


def _pw_add_kernel(x_ref, r_ref, m_ref, s_ref, g_ref, b_ref, we_ref, be_ref,
                   wc_ref, bc_ref, o_ref, *, roff, lout):
  x = x_ref[0, 0].astype(jnp.float32)
  y = _pointwise_core(x, m_ref[0], s_ref[0], g_ref[...], b_ref[...],
                      we_ref[...], be_ref[...], wc_ref[...], bc_ref[...])
  res = r_ref[0, 0, :, roff:roff + lout].astype(jnp.float32)
  o_ref[0, 0] = (y + res).astype(o_ref.dtype)


def fused_pointwise_proj(y0, x_prep, mean, rstd, gamma, beta,
                         we, be, wc, bc, wa, ba, *,
                         n, do, p, lout, lplane, c, ce, cout, ws):
  plane_idx = 3 * (p % 2)                 # parity plane holding x[2z,2y,2x]
  roff = (p // 2) * (ws + 1)              # lane offset of that sample
  in_specs = [
      pl.BlockSpec((1, 1, c, lout), lambda nn, z: (nn, z, 0, 0)),
      pl.BlockSpec((1, 1, 1, c, lplane),
                   lambda nn, z: (nn, 2 * z + p, plane_idx, 0, 0)),
      pl.BlockSpec((1, c, 1), lambda nn, z: (nn, 0, 0)),
      pl.BlockSpec((1, c, 1), lambda nn, z: (nn, 0, 0)),
      pl.BlockSpec((c, 1), lambda nn, z: (0, 0)),
      pl.BlockSpec((c, 1), lambda nn, z: (0, 0)),
      pl.BlockSpec((ce, c), lambda nn, z: (0, 0)),
      pl.BlockSpec((ce, 1), lambda nn, z: (0, 0)),
      pl.BlockSpec((cout, ce), lambda nn, z: (0, 0)),
      pl.BlockSpec((cout, 1), lambda nn, z: (0, 0)),
      pl.BlockSpec((cout, c), lambda nn, z: (0, 0)),
      pl.BlockSpec((cout, 1), lambda nn, z: (0, 0)),
  ]
  kern = functools.partial(_pw_proj_kernel, roff=roff, lout=lout)
  return pl.pallas_call(
      kern,
      grid=(n, do),
      in_specs=in_specs,
      out_specs=pl.BlockSpec((1, 1, cout, lout), lambda nn, z: (nn, z, 0, 0)),
      out_shape=jax.ShapeDtypeStruct((n, do, cout, lout), _STORE_DTYPE),
      compiler_params=pltpu.CompilerParams(
          dimension_semantics=("parallel", "parallel")),
  )(y0, x_prep, mean, rstd, gamma, beta, we, be, wc, bc, wa, ba)


def fused_pointwise_add(y1, x_mid_pad, mean, rstd, gamma, beta,
                        we, be, wc, bc, *,
                        n, do, p, lout, lmid, c, ce, cout, wpitch):
  roff = p * wpitch + p                    # x_mid(z,y,x) inside the padded slab
  in_specs = [
      pl.BlockSpec((1, 1, c, lout), lambda nn, z: (nn, z, 0, 0)),
      pl.BlockSpec((1, 1, c, lmid), lambda nn, z: (nn, z + p, 0, 0)),
      pl.BlockSpec((1, c, 1), lambda nn, z: (nn, 0, 0)),
      pl.BlockSpec((1, c, 1), lambda nn, z: (nn, 0, 0)),
      pl.BlockSpec((c, 1), lambda nn, z: (0, 0)),
      pl.BlockSpec((c, 1), lambda nn, z: (0, 0)),
      pl.BlockSpec((ce, c), lambda nn, z: (0, 0)),
      pl.BlockSpec((ce, 1), lambda nn, z: (0, 0)),
      pl.BlockSpec((cout, ce), lambda nn, z: (0, 0)),
      pl.BlockSpec((cout, 1), lambda nn, z: (0, 0)),
  ]
  kern = functools.partial(_pw_add_kernel, roff=roff, lout=lout)
  return pl.pallas_call(
      kern,
      grid=(n, do),
      in_specs=in_specs,
      out_specs=pl.BlockSpec((1, 1, cout, lout), lambda nn, z: (nn, z, 0, 0)),
      out_shape=jax.ShapeDtypeStruct((n, do, cout, lout), jnp.float32),
      compiler_params=pltpu.CompilerParams(
          dimension_semantics=("parallel", "parallel")),
  )(y1, x_mid_pad, mean, rstd, gamma, beta, we, be, wc, bc)


# ---------------------------------------------------------------------------
# JAX-side glue
# ---------------------------------------------------------------------------
def _valid_mask(ho, wo, pitch, lout):
  m = jnp.zeros((ho, pitch), jnp.float32).at[:, :wo].set(1.0)
  m = m.reshape(1, ho * pitch)
  return jnp.pad(m, ((0, 0), (0, lout - ho * pitch)))


def _finalize_gn(psum, pssq, count):
  # NOTE: E[x^2]-mean^2 in f32; clamped to avoid tiny negative variance from
  # cancellation (a shifted/Welford accumulation would be even safer).
  s = jnp.sum(psum[..., 0], axis=1)                      # (N, C)
  ss = jnp.sum(pssq[..., 0], axis=1)
  mean = s / count
  var = jnp.maximum(ss / count - mean * mean, 0.0)
  rstd = jax.lax.rsqrt(var + _EPS)
  return mean[:, :, None], rstd[:, :, None]              # (N, C, 1)


def init_down_params(key, c, k, r):
  c2 = 2 * c
  keys = jax.random.split(key, 14)

  def w(kk, shape, fan_in):
    return jax.random.normal(kk, shape, jnp.float32) / math.sqrt(fan_in)

  return {
      "b0_w": w(keys[0], (c, c, k, k, k), c * k ** 3),
      "b0_b": w(keys[1], (c,), c * k ** 3),
      "b1_g": jnp.ones((c,), jnp.float32),
      "b1_b": jnp.zeros((c,), jnp.float32),
      "b2_w": w(keys[2], (c * r, c, 1, 1, 1), c),
      "b2_b": w(keys[3], (c * r,), c),
      "b4_w": w(keys[4], (c2, c * r, 1, 1, 1), c * r),
      "b4_b": w(keys[5], (c2,), c * r),
      "add_w": w(keys[6], (c2, c, 1, 1, 1), c),
      "add_b": w(keys[7], (c2,), c),
      "m0_w": w(keys[8], (c2, c2, k, k, k), c2 * k ** 3),
      "m0_b": w(keys[9], (c2,), c2 * k ** 3),
      "m1_g": jnp.ones((c2,), jnp.float32),
      "m1_b": jnp.zeros((c2,), jnp.float32),
      "m2_w": w(keys[10], (c2 * r, c2, 1, 1, 1), c2),
      "m2_b": w(keys[11], (c2 * r,), c2),
      "m4_w": w(keys[12], (c2, c2 * r, 1, 1, 1), c2 * r),
      "m4_b": w(keys[13], (c2,), c2 * r),
  }


def down_forward(params, x, *, k, r):
  del r  # channel widths are baked into the parameter shapes
  n, c, d, h, w = x.shape
  assert k % 2 == 1, "odd kernel size required"
  assert d % 2 == 0 and h % 2 == 0 and w % 2 == 0, "even spatial dims required"
  c2 = 2 * c
  p = k // 2
  x = x.astype(jnp.float32)

  do, ho, wo = d // 2, h // 2, w // 2
  dp1 = d + 2 * p
  hs, ws = (h + 2 * p) // 2, (w + 2 * p) // 2
  lout1 = _round_up(ho * ws, _LANE)
  lplane1 = _round_up(max(hs * ws, lout1 + (k // 2) * (ws + 1)), _LANE)

  # ---- parity-decomposed, padded, channels-first, lane-flattened input ----
  xp = jnp.pad(x, ((0, 0), (0, 0), (p, p), (p, p), (p, p)))
  xr = xp.reshape(n, c, dp1, hs, 2, ws, 2)
  xr = jnp.transpose(xr, (0, 2, 4, 6, 1, 3, 5))   # (n, dp1, ypar, xpar, c, hs, ws)
  xr = xr.reshape(n, dp1, 4, c, hs * ws)
  x_prep = jnp.pad(xr, ((0, 0), (0, 0), (0, 0), (0, 0),
                        (0, lplane1 - hs * ws))).astype(_STORE_DTYPE)

  mask1 = _valid_mask(ho, wo, ws, lout1)
  cnt = float(do * ho * wo)

  # ---- block[0]: stride-2 conv + fused GN partial stats ----
  w0 = jnp.transpose(params["b0_w"], (2, 3, 4, 0, 1)).astype(_STORE_DTYPE)
  b0 = params["b0_b"].reshape(c, 1)
  y0, psum0, pssq0 = conv_s2_gn(x_prep, w0, b0, mask1,
                                n=n, do=do, k=k, ws=ws, lout=lout1,
                                lplane=lplane1, c_in=c, c_out=c)
  mean0, rstd0 = _finalize_gn(psum0, pssq0, cnt)

  # ---- GN norm + expand + GELU + contract + fused self.add projection ----
  cr = params["b2_w"].shape[0]
  x_mid = fused_pointwise_proj(
      y0, x_prep, mean0, rstd0,
      params["b1_g"].reshape(c, 1), params["b1_b"].reshape(c, 1),
      params["b2_w"].reshape(cr, c).astype(_STORE_DTYPE),
      params["b2_b"].reshape(cr, 1),
      params["b4_w"].reshape(c2, cr).astype(_STORE_DTYPE),
      params["b4_b"].reshape(c2, 1),
      params["add_w"].reshape(c2, c).astype(_STORE_DTYPE),
      params["add_b"].reshape(c2, 1),
      n=n, do=do, p=p, lout=lout1, lplane=lplane1,
      c=c, ce=cr, cout=c2, ws=ws)

  # ---- relayout x_mid to the padded-pitch layout used by the s1 conv ----
  dp2, hp2, wp2 = do + 2 * p, ho + 2 * p, wo + 2 * p
  lout3 = _round_up(ho * wp2, _LANE)
  lmid = _round_up(max(hp2 * wp2, lout3 + (k - 1) * (wp2 + 1)), _LANE)
  xm = x_mid[..., :ho * ws].reshape(n, do, c2, ho, ws)[..., :wo]
  xm = jnp.pad(xm, ((0, 0), (p, p), (0, 0), (p, p), (p, p)))
  xm = xm.reshape(n, dp2, c2, hp2 * wp2)
  x_mid_pad = jnp.pad(xm, ((0, 0), (0, 0), (0, 0), (0, lmid - hp2 * wp2)))

  mask3 = _valid_mask(ho, wo, wp2, lout3)

  # ---- mednext[0]: stride-1 conv (resident weight) + GN partial stats ----
  wm0 = jnp.transpose(params["m0_w"], (2, 3, 4, 0, 1)).astype(_STORE_DTYPE)
  bm0 = params["m0_b"].reshape(c2, 1)
  y1, psum1, pssq1 = conv_s1_gn(x_mid_pad, wm0, bm0, mask3,
                                n=n, do=do, k=k, wpitch=wp2, lout=lout3,
                                lmid=lmid, c=c2)
  mean1, rstd1 = _finalize_gn(psum1, pssq1, cnt)

  # ---- mednext GN norm + expand + GELU + contract + residual(x_mid) ----
  c2r = params["m2_w"].shape[0]
  out4 = fused_pointwise_add(
      y1, x_mid_pad, mean1, rstd1,
      params["m1_g"].reshape(c2, 1), params["m1_b"].reshape(c2, 1),
      params["m2_w"].reshape(c2r, c2).astype(_STORE_DTYPE),
      params["m2_b"].reshape(c2r, 1),
      params["m4_w"].reshape(c2, c2r).astype(_STORE_DTYPE),
      params["m4_b"].reshape(c2, 1),
      n=n, do=do, p=p, lout=lout3, lmid=lmid,
      c=c2, ce=c2r, cout=c2, wpitch=wp2)

  # ---- extract valid lanes, return NCDHW ----
  o = out4[..., :ho * wp2].reshape(n, do, c2, ho, wp2)[..., :wo]
  return jnp.transpose(o, (0, 2, 1, 3, 4))


if __name__ == "__main__":
  C, K, R = 8, 3, 2          # in_channels, kernel size, expansion ratio
  N, D = 2, 16               # batch, input spatial size
  key = jax.random.PRNGKey(0)
  kx, kp = jax.random.split(key)
  x = jax.random.normal(kx, (N, C, D, D, D), jnp.float32)
  params = init_down_params(kp, C, K, R)

  fwd = jax.jit(functools.partial(down_forward, k=K, r=R))
  out = fwd(params, x)
  jax.block_until_ready(out)
  assert out.shape == (N, 2 * C, D // 2, D // 2, D // 2), out.shape
  assert bool(jnp.all(jnp.isfinite(out)))
  print("KERNEL_OK")
</pallas_src>

<mosaic_0001>
module attributes {stable_mosaic.version = 11 : i64} {
  func.func @_conv_s2_kernel(%arg0: i32, %arg1: i32, %arg2: memref<1x2x4x8x256xbf16, #tpu.memory_space<vmem>>, %arg3: memref<1x1x4x8x256xbf16, #tpu.memory_space<vmem>>, %arg4: memref<3x3x3x8x8xbf16, #tpu.memory_space<vmem>>, %arg5: memref<8x1xf32, #tpu.memory_space<vmem>>, %arg6: memref<1x128xf32, #tpu.memory_space<vmem>>, %arg7: memref<1x1x8x128xbf16, #tpu.memory_space<vmem>>, %arg8: memref<1x1x8x1xf32, #tpu.memory_space<vmem>>, %arg9: memref<1x1x8x1xf32, #tpu.memory_space<vmem>>) attributes {dimension_semantics = [#tpu.dimension_semantics<parallel>, #tpu.dimension_semantics<parallel>], iteration_bounds = array<i64: 2, 8>, scalar_prefetch = 0 : i64, scratch_operands = 0 : i64, tpu.core_type = #tpu.core_type<tc>, window_params = [{transform_indices = @transform_0, window_bounds = array<i64: 1, 2, 4, 8, 256>}, {transform_indices = @transform_1, window_bounds = array<i64: 1, 1, 4, 8, 256>}, {pipeline_mode = #tpu.pipeline_mode<synchronous>, transform_indices = @transform_2, window_bounds = array<i64: 3, 3, 3, 8, 8>}, {pipeline_mode = #tpu.pipeline_mode<synchronous>, transform_indices = @transform_3, window_bounds = array<i64: 8, 1>}, {pipeline_mode = #tpu.pipeline_mode<synchronous>, transform_indices = @transform_4, window_bounds = array<i64: 1, 128>}, {transform_indices = @transform_5, window_bounds = array<i64: 1, 1, 8, 128>}, {transform_indices = @transform_6, window_bounds = array<i64: 1, 1, 8, 1>}, {transform_indices = @transform_7, window_bounds = array<i64: 1, 1, 8, 1>}]} {
    %cst = arith.constant 0.000000e+00 : f32
    %0 = vector.broadcast %cst : f32 to vector<8x128xf32>
    %c0 = arith.constant 0 : index
    %c0_0 = arith.constant 0 : index
    %c0_1 = arith.constant 0 : index
    %c0_2 = arith.constant 0 : index
    %c0_3 = arith.constant 0 : index
    %1 = vector.load %arg2[%c0, %c0_0, %c0_1, %c0_2, %c0_3] : memref<1x2x4x8x256xbf16, #tpu.memory_space<vmem>>, vector<1x1x1x8x256xbf16>
    %2 = vector.shape_cast %1 : vector<1x1x1x8x256xbf16> to vector<8x256xbf16>
    %3 = vector.extract_strided_slice %2 {offsets = [0, 0], sizes = [8, 128], strides = [1, 1]} : vector<8x256xbf16> to vector<8x128xbf16>
    %c0_4 = arith.constant 0 : index
    %c0_5 = arith.constant 0 : index
    %c0_6 = arith.constant 0 : index
    %c0_7 = arith.constant 0 : index
    %c0_8 = arith.constant 0 : index
    %4 = vector.load %arg4[%c0_4, %c0_5, %c0_6, %c0_7, %c0_8] : memref<3x3x3x8x8xbf16, #tpu.memory_space<vmem>>, vector<1x1x1x8x8xbf16>
    %5 = vector.shape_cast %4 : vector<1x1x1x8x8xbf16> to vector<8x8xbf16>
    %cst_9 = arith.constant dense<0.000000e+00> : vector<8x128xf32>
    %6 = tpu.matmul %5, %3, %cst_9 {dimension_numbers = #tpu.dot_dimension_numbers<[1], [0], [0], [1], [0, 0, 1, 1], [], []>} : vector<8x8xbf16>, vector<8x128xbf16>, vector<8x128xf32> -> vector<8x128xf32>
    %7 = arith.addf %0, %6 : vector<8x128xf32>
    %8 = vector.extract_strided_slice %2 {offsets = [0, 1], sizes = [8, 128], strides = [1, 1]} : vector<8x256xbf16> to vector<8x128xbf16>
    %c0_10 = arith.constant 0 : index
    %c0_11 = arith.constant 0 : index
    %c2 = arith.constant 2 : index
    %c0_12 = arith.constant 0 : index
    %c0_13 = arith.constant 0 : index
    %9 = vector.load %arg4[%c0_10, %c0_11, %c2, %c0_12, %c0_13] : memref<3x3x3x8x8xbf16, #tpu.memory_space<vmem>>, vector<1x1x1x8x8xbf16>
    %10 = vector.shape_cast %9 : vector<1x1x1x8x8xbf16> to vector<8x8xbf16>
    %cst_14 = arith.constant dense<0.000000e+00> : vector<8x128xf32>
    %11 = tpu.matmul %10, %8, %cst_14 {dimension_numbers = #tpu.dot_dimension_numbers<[1], [0], [0], [1], [0, 0, 1, 1], [], []>} : vector<8x8xbf16>, vector<8x128xbf16>, vector<8x128xf32> -> vector<8x128xf32>
    %12 = arith.addf %7, %11 : vector<8x128xf32>
    %13 = vector.extract_strided_slice %2 {offsets = [0, 9], sizes = [8, 128], strides = [1, 1]} : vector<8x256xbf16> to vector<8x128xbf16>
    %c0_15 = arith.constant 0 : index
    %c2_16 = arith.constant 2 : index
    %c0_17 = arith.constant 0 : index
    %c0_18 = arith.constant 0 : index
    %c0_19 = arith.constant 0 : index
    %14 = vector.load %arg4[%c0_15, %c2_16, %c0_17, %c0_18, %c0_19] : memref<3x3x3x8x8xbf16, #tpu.memory_space<vmem>>, vector<1x1x1x8x8xbf16>
    %15 = vector.shape_cast %14 : vector<1x1x1x8x8xbf16> to vector<8x8xbf16>
    %cst_20 = arith.constant dense<0.000000e+00> : vector<8x128xf32>
    %16 = tpu.matmul %15, %13, %cst_20 {dimension_numbers = #tpu.dot_dimension_numbers<[1], [0], [0], [1], [0, 0, 1, 1], [], []>} : vector<8x8xbf16>, vector<8x128xbf16>, vector<8x128xf32> -> vector<8x128xf32>
    %17 = arith.addf %12, %16 : vector<8x128xf32>
    %18 = vector.extract_strided_slice %2 {offsets = [0, 10], sizes = [8, 128], strides = [1, 1]} : vector<8x256xbf16> to vector<8x128xbf16>
    %c0_21 = arith.constant 0 : index
    %c2_22 = arith.constant 2 : index
    %c2_23 = arith.constant 2 : index
    %c0_24 = arith.constant 0 : index
    %c0_25 = arith.constant 0 : index
    %19 = vector.load %arg4[%c0_21, %c2_22, %c2_23, %c0_24, %c0_25] : memref<3x3x3x8x8xbf16, #tpu.memory_space<vmem>>, vector<1x1x1x8x8xbf16>
    %20 = vector.shape_cast %19 : vector<1x1x1x8x8xbf16> to vector<8x8xbf16>
    %cst_26 = arith.constant dense<0.000000e+00> : vector<8x128xf32>
    %21 = tpu.matmul %20, %18, %cst_26 {dimension_numbers = #tpu.dot_dimension_numbers<[1], [0], [0], [1], [0, 0, 1, 1], [], []>} : vector<8x8xbf16>, vector<8x128xbf16>, vector<8x128xf32> -> vector<8x128xf32>
    %22 = arith.addf %17, %21 : vector<8x128xf32>
    %c0_27 = arith.constant 0 : index
    %c0_28 = arith.constant 0 : index
    %c1 = arith.constant 1 : index
    %c0_29 = arith.constant 0 : index
    %c0_30 = arith.constant 0 : index
    %23 = vector.load %arg2[%c0_27, %c0_28, %c1, %c0_29, %c0_30] : memref<1x2x4x8x256xbf16, #tpu.memory_space<vmem>>, vector<1x1x1x8x256xbf16>
    %24 = vector.shape_cast %23 : vector<1x1x1x8x256xbf16> to vector<8x256xbf16>
    %25 = vector.extract_strided_slice %24 {offsets = [0, 0], sizes = [8, 128], strides = [1, 1]} : vector<8x256xbf16> to vector<8x128xbf16>
    %c0_31 = arith.constant 0 : index
    %c0_32 = arith.constant 0 : index
    %c1_33 = arith.constant 1 : index
    %c0_34 = arith.constant 0 : index
    %c0_35 = arith.constant 0 : index
    %26 = vector.load %arg4[%c0_31, %c0_32, %c1_33, %c0_34, %c0_35] : memref<3x3x3x8x8xbf16, #tpu.memory_space<vmem>>, vector<1x1x1x8x8xbf16>
    %27 = vector.shape_cast %26 : vector<1x1x1x8x8xbf16> to vector<8x8xbf16>
    %cst_36 = arith.constant dense<0.000000e+00> : vector<8x128xf32>
    %28 = tpu.matmul %27, %25, %cst_36 {dimension_numbers = #tpu.dot_dimension_numbers<[1], [0], [0], [1], [0, 0, 1, 1], [], []>} : vector<8x8xbf16>, vector<8x128xbf16>, vector<8x128xf32> -> vector<8x128xf32>
    %29 = arith.addf %22, %28 : vector<8x128xf32>
    %30 = vector.extract_strided_slice %24 {offsets = [0, 9], sizes = [8, 128], strides = [1, 1]} : vector<8x256xbf16> to vector<8x128xbf16>
    %c0_37 = arith.constant 0 : index
    %c2_38 = arith.constant 2 : index
    %c1_39 = arith.constant 1 : index
    %c0_40 = arith.constant 0 : index
    %c0_41 = arith.constant 0 : index
    %31 = vector.load %arg4[%c0_37, %c2_38, %c1_39, %c0_40, %c0_41] : memref<3x3x3x8x8xbf16, #tpu.memory_space<vmem>>, vector<1x1x1x8x8xbf16>
    %32 = vector.shape_cast %31 : vector<1x1x1x8x8xbf16> to vector<8x8xbf16>
    %cst_42 = arith.constant dense<0.000000e+00> : vector<8x128xf32>
    %33 = tpu.matmul %32, %30, %cst_42 {dimension_numbers = #tpu.dot_dimension_numbers<[1], [0], [0], [1], [0, 0, 1, 1], [], []>} : vector<8x8xbf16>, vector<8x128xbf16>, vector<8x128xf32> -> vector<8x128xf32>
    %34 = arith.addf %29, %33 : vector<8x128xf32>
    %c0_43 = arith.constant 0 : index
    %c0_44 = arith.constant 0 : index
    %c2_45 = arith.constant 2 : index
    %c0_46 = arith.constant 0 : index
    %c0_47 = arith.constant 0 : index
    %35 = vector.load %arg2[%c0_43, %c0_44, %c2_45, %c0_46, %c0_47] : memref<1x2x4x8x256xbf16, #tpu.memory_space<vmem>>, vector<1x1x1x8x256xbf16>
    %36 = vector.shape_cast %35 : vector<1x1x1x8x256xbf16> to vector<8x256xbf16>
    %37 = vector.extract_strided_slice %36 {offsets = [0, 0], sizes = [8, 128], strides = [1, 1]} : vector<8x256xbf16> to vector<8x128xbf16>
    %c0_48 = arith.constant 0 : index
    %c1_49 = arith.constant 1 : index
    %c0_50 = arith.constant 0 : index
    %c0_51 = arith.constant 0 : index
    %c0_52 = arith.constant 0 : index
    %38 = vector.load %arg4[%c0_48, %c1_49, %c0_50, %c0_51, %c0_52] : memref<3x3x3x8x8xbf16, #tpu.memory_space<vmem>>, vector<1x1x1x8x8xbf16>
    %39 = vector.shape_cast %38 : vector<1x1x1x8x8xbf16> to vector<8x8xbf16>
    %cst_53 = arith.constant dense<0.000000e+00> : vector<8x128xf32>
    %40 = tpu.matmul %39, %37, %cst_53 {dimension_numbers = #tpu.dot_dimension_numbers<[1], [0], [0], [1], [0, 0, 1, 1], [], []>} : vector<8x8xbf16>, vector<8x128xbf16>, vector<8x128xf32> -> vector<8x128xf32>
    %41 = arith.addf %34, %40 : vector<8x128xf32>
    %42 = vector.extract_strided_slice %36 {offsets = [0, 1], sizes = [8, 128], strides = [1, 1]} : vector<8x256xbf16> to vector<8x128xbf16>
    %c0_54 = arith.constant 0 : index
    %c1_55 = arith.constant 1 : index
    %c2_56 = arith.constant 2 : index
    %c0_57 = arith.constant 0 : index
    %c0_58 = arith.constant 0 : index
    %43 = vector.load %arg4[%c0_54, %c1_55, %c2_56, %c0_57, %c0_58] : memref<3x3x3x8x8xbf16, #tpu.memory_space<vmem>>, vector<1x1x1x8x8xbf16>
    %44 = vector.shape_cast %43 : vector<1x1x1x8x8xbf16> to vector<8x8xbf16>
    %cst_59 = arith.constant dense<0.000000e+00> : vector<8x128xf32>
    %45 = tpu.matmul %44, %42, %cst_59 {dimension_numbers = #tpu.dot_dimension_numbers<[1], [0], [0], [1], [0, 0, 1, 1], [], []>} : vector<8x8xbf16>, vector<8x128xbf16>, vector<8x128xf32> -> vector<8x128xf32>
    %46 = arith.addf %41, %45 : vector<8x128xf32>
    %c0_60 = arith.constant 0 : index
    %c0_61 = arith.constant 0 : index
    %c3 = arith.constant 3 : index
    %c0_62 = arith.constant 0 : index
    %c0_63 = arith.constant 0 : index
    %47 = vector.load %arg2[%c0_60, %c0_61, %c3, %c0_62, %c0_63] : memref<1x2x4x8x256xbf16, #tpu.memory_space<vmem>>, vector<1x1x1x8x256xbf16>
    %48 = vector.shape_cast %47 : vector<1x1x1x8x256xbf16> to vector<8x256xbf16>
    %49 = vector.extract_strided_slice %48 {offsets = [0, 0], sizes = [8, 128], strides = [1, 1]} : vector<8x256xbf16> to vector<8x128xbf16>
    %c0_64 = arith.constant 0 : index
    %c1_65 = arith.constant 1 : index
    %c1_66 = arith.constant 1 : index
    %c0_67 = arith.constant 0 : index
    %c0_68 = arith.constant 0 : index
    %50 = vector.load %arg4[%c0_64, %c1_65, %c1_66, %c0_67, %c0_68] : memref<3x3x3x8x8xbf16, #tpu.memory_space<vmem>>, vector<1x1x1x8x8xbf16>
    %51 = vector.shape_cast %50 : vector<1x1x1x8x8xbf16> to vector<8x8xbf16>
    %cst_69 = arith.constant dense<0.000000e+00> : vector<8x128xf32>
    %52 = tpu.matmul %51, %49, %cst_69 {dimension_numbers = #tpu.dot_dimension_numbers<[1], [0], [0], [1], [0, 0, 1, 1], [], []>} : vector<8x8xbf16>, vector<8x128xbf16>, vector<8x128xf32> -> vector<8x128xf32>
    %53 = arith.addf %46, %52 : vector<8x128xf32>
    %c0_70 = arith.constant 0 : index
    %c1_71 = arith.constant 1 : index
    %c0_72 = arith.constant 0 : index
    %c0_73 = arith.constant 0 : index
    %c0_74 = arith.constant 0 : index
    %54 = vector.load %arg2[%c0_70, %c1_71, %c0_72, %c0_73, %c0_74] : memref<1x2x4x8x256xbf16, #tpu.memory_space<vmem>>, vector<1x1x1x8x256xbf16>
    %55 = vector.shape_cast %54 : vector<1x1x1x8x256xbf16> to vector<8x256xbf16>
    %56 = vector.extract_strided_slice %55 {offsets = [0, 0], sizes = [8, 128], strides = [1, 1]} : vector<8x256xbf16> to vector<8x128xbf16>
    %c1_75 = arith.constant 1 : index
    %c0_76 = arith.constant 0 : index
    %c0_77 = arith.constant 0 : index
    %c0_78 = arith.constant 0 : index
    %c0_79 = arith.constant 0 : index
    %57 = vector.load %arg4[%c1_75, %c0_76, %c0_77, %c0_78, %c0_79] : memref<3x3x3x8x8xbf16, #tpu.memory_space<vmem>>, vector<1x1x1x8x8xbf16>
    %58 = vector.shape_cast %57 : vector<1x1x1x8x8xbf16> to vector<8x8xbf16>
    %cst_80 = arith.constant dense<0.000000e+00> : vector<8x128xf32>
    %59 = tpu.matmul %58, %56, %cst_80 {dimension_numbers = #tpu.dot_dimension_numbers<[1], [0], [0], [1], [0, 0, 1, 1], [], []>} : vector<8x8xbf16>, vector<8x128xbf16>, vector<8x128xf32> -> vector<8x128xf32>
    %60 = arith.addf %53, %59 : vector<8x128xf32>
    %61 = vector.extract_strided_slice %55 {offsets = [0, 1], sizes = [8, 128], strides = [1, 1]} : vector<8x256xbf16> to vector<8x128xbf16>
    %c1_81 = arith.constant 1 : index
    %c0_82 = arith.constant 0 : index
    %c2_83 = arith.constant 2 : index
    %c0_84 = arith.constant 0 : index
    %c0_85 = arith.constant 0 : index
    %62 = vector.load %arg4[%c1_81, %c0_82, %c2_83, %c0_84, %c0_85] : memref<3x3x3x8x8xbf16, #tpu.memory_space<vmem>>, vector<1x1x1x8x8xbf16>
    %63 = vector.shape_cast %62 : vector<1x1x1x8x8xbf16> to vector<8x8xbf16>
    %cst_86 = arith.constant dense<0.000000e+00> : vector<8x128xf32>
    %64 = tpu.matmul %63, %61, %cst_86 {dimension_numbers = #tpu.dot_dimension_numbers<[1], [0], [0], [1], [0, 0, 1, 1], [], []>} : vector<8x8xbf16>, vector<8x128xbf16>, vector<8x128xf32> -> vector<8x128xf32>
    %65 = arith.addf %60, %64 : vector<8x128xf32>
    %66 = vector.extract_strided_slice %55 {offsets = [0, 9], sizes = [8, 128], strides = [1, 1]} : vector<8x256xbf16> to vector<8x128xbf16>
    %c1_87 = arith.constant 1 : index
    %c2_88 = arith.constant 2 : index
    %c0_89 = arith.constant 0 : index
    %c0_90 = arith.constant 0 : index
    %c0_91 = arith.constant 0 : index
    %67 = vector.load %arg4[%c1_87, %c2_88, %c0_89, %c0_90, %c0_91] : memref<3x3x3x8x8xbf16, #tpu.memory_space<vmem>>, vector<1x1x1x8x8xbf16>
    %68 = vector.shape_cast %67 : vector<1x1x1x8x8xbf16> to vector<8x8xbf16>
    %cst_92 = arith.constant dense<0.000000e+00> : vector<8x128xf32>
    %69 = tpu.matmul %68, %66, %cst_92 {dimension_numbers = #tpu.dot_dimension_numbers<[1], [0], [0], [1], [0, 0, 1, 1], [], []>} : vector<8x8xbf16>, vector<8x128xbf16>, vector<8x128xf32> -> vector<8x128xf32>
    %70 = arith.addf %65, %69 : vector<8x128xf32>
    %71 = vector.extract_strided_slice %55 {offsets = [0, 10], sizes = [8, 128], strides = [1, 1]} : vector<8x256xbf16> to vector<8x128xbf16>
    %c1_93 = arith.constant 1 : index
    %c2_94 = arith.constant 2 : index
    %c2_95 = arith.constant 2 : index
    %c0_96 = arith.constant 0 : index
    %c0_97 = arith.constant 0 : index
    %72 = vector.load %arg4[%c1_93, %c2_94, %c2_95, %c0_96, %c0_97] : memref<3x3x3x8x8xbf16, #tpu.memory_space<vmem>>, vector<1x1x1x8x8xbf16>
    %73 = vector.shape_cast %72 : vector<1x1x1x8x8xbf16> to vector<8x8xbf16>
    %cst_98 = arith.constant dense<0.000000e+00> : vector<8x128xf32>
    %74 = tpu.matmul %73, %71, %cst_98 {dimension_numbers = #tpu.dot_dimension_numbers<[1], [0], [0], [1], [0, 0, 1, 1], [], []>} : vector<8x8xbf16>, vector<8x128xbf16>, vector<8x128xf32> -> vector<8x128xf32>
    %75 = arith.addf %70, %74 : vector<8x128xf32>
    %c0_99 = arith.constant 0 : index
    %c1_100 = arith.constant 1 : index
    %c1_101 = arith.constant 1 : index
    %c0_102 = arith.constant 0 : index
    %c0_103 = arith.constant 0 : index
    %76 = vector.load %arg2[%c0_99, %c1_100, %c1_101, %c0_102, %c0_103] : memref<1x2x4x8x256xbf16, #tpu.memory_space<vmem>>, vector<1x1x1x8x256xbf16>
    %77 = vector.shape_cast %76 : vector<1x1x1x8x256xbf16> to vector<8x256xbf16>
    %78 = vector.extract_strided_slice %77 {offsets = [0, 0], sizes = [8, 128], strides = [1, 1]} : vector<8x256xbf16> to vector<8x128xbf16>
    %c1_104 = arith.constant 1 : index
    %c0_105 = arith.constant 0 : index
    %c1_106 = arith.constant 1 : index
    %c0_107 = arith.constant 0 : index
    %c0_108 = arith.constant 0 : index
    %79 = vector.load %arg4[%c1_104, %c0_105, %c1_106, %c0_107, %c0_108] : memref<3x3x3x8x8xbf16, #tpu.memory_space<vmem>>, vector<1x1x1x8x8xbf16>
    %80 = vector.shape_cast %79 : vector<1x1x1x8x8xbf16> to vector<8x8xbf16>
    %cst_109 = arith.constant dense<0.000000e+00> : vector<8x128xf32>
    %81 = tpu.matmul %80, %78, %cst_109 {dimension_numbers = #tpu.dot_dimension_numbers<[1], [0], [0], [1], [0, 0, 1, 1], [], []>} : vector<8x8xbf16>, vector<8x128xbf16>, vector<8x128xf32> -> vector<8x128xf32>
    %82 = arith.addf %75, %81 : vector<8x128xf32>
    %83 = vector.extract_strided_slice %77 {offsets = [0, 9], sizes = [8, 128], strides = [1, 1]} : vector<8x256xbf16> to vector<8x128xbf16>
    %c1_110 = arith.constant 1 : index
    %c2_111 = arith.constant 2 : index
    %c1_112 = arith.constant 1 : index
    %c0_113 = arith.constant 0 : index
    %c0_114 = arith.constant 0 : index
    %84 = vector.load %arg4[%c1_110, %c2_111, %c1_112, %c0_113, %c0_114] : memref<3x3x3x8x8xbf16, #tpu.memory_space<vmem>>, vector<1x1x1x8x8xbf16>
    %85 = vector.shape_cast %84 : vector<1x1x1x8x8xbf16> to vector<8x8xbf16>
    %cst_115 = arith.constant dense<0.000000e+00> : vector<8x128xf32>
    %86 = tpu.matmul %85, %83, %cst_115 {dimension_numbers = #tpu.dot_dimension_numbers<[1], [0], [0], [1], [0, 0, 1, 1], [], []>} : vector<8x8xbf16>, vector<8x128xbf16>, vector<8x128xf32> -> vector<8x128xf32>
    %87 = arith.addf %82, %86 : vector<8x128xf32>
    %c0_116 = arith.constant 0 : index
    %c1_117 = arith.constant 1 : index
    %c2_118 = arith.constant 2 : index
    %c0_119 = arith.constant 0 : index
    %c0_120 = arith.constant 0 : index
    %88 = vector.load %arg2[%c0_116, %c1_117, %c2_118, %c0_119, %c0_120] : memref<1x2x4x8x256xbf16, #tpu.memory_space<vmem>>, vector<1x1x1x8x256xbf16>
    %89 = vector.shape_cast %88 : vector<1x1x1x8x256xbf16> to vector<8x256xbf16>
    %90 = vector.extract_strided_slice %89 {offsets = [0, 0], sizes = [8, 128], strides = [1, 1]} : vector<8x256xbf16> to vector<8x128xbf16>
    %c1_121 = arith.constant 1 : index
    %c1_122 = arith.constant 1 : index
    %c0_123 = arith.constant 0 : index
    %c0_124 = arith.constant 0 : index
    %c0_125 = arith.constant 0 : index
    %91 = vector.load %arg4[%c1_121, %c1_122, %c0_123, %c0_124, %c0_125] : memref<3x3x3x8x8xbf16, #tpu.memory_space<vmem>>, vector<1x1x1x8x8xbf16>
    %92 = vector.shape_cast %91 : vector<1x1x1x8x8xbf16> to vector<8x8xbf16>
    %cst_126 = arith.constant dense<0.000000e+00> : vector<8x128xf32>
    %93 = tpu.matmul %92, %90, %cst_126 {dimension_numbers = #tpu.dot_dimension_numbers<[1], [0], [0], [1], [0, 0, 1, 1], [], []>} : vector<8x8xbf16>, vector<8x128xbf16>, vector<8x128xf32> -> vector<8x128xf32>
    %94 = arith.addf %87, %93 : vector<8x128xf32>
    %95 = vector.extract_strided_slice %89 {offsets = [0, 1], sizes = [8, 128], strides = [1, 1]} : vector<8x256xbf16> to vector<8x128xbf16>
    %c1_127 = arith.constant 1 : index
    %c1_128 = arith.constant 1 : index
    %c2_129 = arith.constant 2 : index
    %c0_130 = arith.constant 0 : index
    %c0_131 = arith.constant 0 : index
    %96 = vector.load %arg4[%c1_127, %c1_128, %c2_129, %c0_130, %c0_131] : memref<3x3x3x8x8xbf16, #tpu.memory_space<vmem>>, vector<1x1x1x8x8xbf16>
    %97 = vector.shape_cast %96 : vector<1x1x1x8x8xbf16> to vector<8x8xbf16>
    %cst_132 = arith.constant dense<0.000000e+00> : vector<8x128xf32>
    %98 = tpu.matmul %97, %95, %cst_132 {dimension_numbers = #tpu.dot_dimension_numbers<[1], [0], [0], [1], [0, 0, 1, 1], [], []>} : vector<8x8xbf16>, vector<8x128xbf16>, vector<8x128xf32> -> vector<8x128xf32>
    %99 = arith.addf %94, %98 : vector<8x128xf32>
    %c0_133 = arith.constant 0 : index
    %c1_134 = arith.constant 1 : index
    %c3_135 = arith.constant 3 : index
    %c0_136 = arith.constant 0 : index
    %c0_137 = arith.constant 0 : index
    %100 = vector.load %arg2[%c0_133, %c1_134, %c3_135, %c0_136, %c0_137] : memref<1x2x4x8x256xbf16, #tpu.memory_space<vmem>>, vector<1x1x1x8x256xbf16>
    %101 = vector.shape_cast %100 : vector<1x1x1x8x256xbf16> to vector<8x256xbf16>
    %102 = vector.extract_strided_slice %101 {offsets = [0, 0], sizes = [8, 128], strides = [1, 1]} : vector<8x256xbf16> to vector<8x128xbf16>
    %c1_138 = arith.constant 1 : index
    %c1_139 = arith.constant 1 : index
    %c1_140 = arith.constant 1 : index
    %c0_141 = arith.constant 0 : index
    %c0_142 = arith.constant 0 : index
    %103 = vector.load %arg4[%c1_138, %c1_139, %c1_140, %c0_141, %c0_142] : memref<3x3x3x8x8xbf16, #tpu.memory_space<vmem>>, vector<1x1x1x8x8xbf16>
    %104 = vector.shape_cast %103 : vector<1x1x1x8x8xbf16> to vector<8x8xbf16>
    %cst_143 = arith.constant dense<0.000000e+00> : vector<8x128xf32>
    %105 = tpu.matmul %104, %102, %cst_143 {dimension_numbers = #tpu.dot_dimension_numbers<[1], [0], [0], [1], [0, 0, 1, 1], [], []>} : vector<8x8xbf16>, vector<8x128xbf16>, vector<8x128xf32> -> vector<8x128xf32>
    %106 = arith.addf %99, %105 : vector<8x128xf32>
    %c0_144 = arith.constant 0 : index
    %c0_145 = arith.constant 0 : index
    %c0_146 = arith.constant 0 : index
    %c0_147 = arith.constant 0 : index
    %c0_148 = arith.constant 0 : index
    %107 = vector.load %arg3[%c0_144, %c0_145, %c0_146, %c0_147, %c0_148] : memref<1x1x4x8x256xbf16, #tpu.memory_space<vmem>>, vector<1x1x1x8x256xbf16>
    %108 = vector.shape_cast %107 : vector<1x1x1x8x256xbf16> to vector<8x256xbf16>
    %109 = vector.extract_strided_slice %108 {offsets = [0, 0], sizes = [8, 128], strides = [1, 1]} : vector<8x256xbf16> to vector<8x128xbf16>
    %c2_149 = arith.constant 2 : index
    %c0_150 = arith.constant 0 : index
    %c0_151 = arith.constant 0 : index
    %c0_152 = arith.constant 0 : index
    %c0_153 = arith.constant 0 : index
    %110 = vector.load %arg4[%c2_149, %c0_150, %c0_151, %c0_152, %c0_153] : memref<3x3x3x8x8xbf16, #tpu.memory_space<vmem>>, vector<1x1x1x8x8xbf16>
    %111 = vector.shape_cast %110 : vector<1x1x1x8x8xbf16> to vector<8x8xbf16>
    %cst_154 = arith.constant dense<0.000000e+00> : vector<8x128xf32>
    %112 = tpu.matmul %111, %109, %cst_154 {dimension_numbers = #tpu.dot_dimension_numbers<[1], [0], [0], [1], [0, 0, 1, 1], [], []>} : vector<8x8xbf16>, vector<8x128xbf16>, vector<8x128xf32> -> vector<8x128xf32>
    %113 = arith.addf %106, %112 : vector<8x128xf32>
    %114 = vector.extract_strided_slice %108 {offsets = [0, 1], sizes = [8, 128], strides = [1, 1]} : vector<8x256xbf16> to vector<8x128xbf16>
    %c2_155 = arith.constant 2 : index
    %c0_156 = arith.constant 0 : index
    %c2_157 = arith.constant 2 : index
    %c0_158 = arith.constant 0 : index
    %c0_159 = arith.constant 0 : index
    %115 = vector.load %arg4[%c2_155, %c0_156, %c2_157, %c0_158, %c0_159] : memref<3x3x3x8x8xbf16, #tpu.memory_space<vmem>>, vector<1x1x1x8x8xbf16>
    %116 = vector.shape_cast %115 : vector<1x1x1x8x8xbf16> to vector<8x8xbf16>
    %cst_160 = arith.constant dense<0.000000e+00> : vector<8x128xf32>
    %117 = tpu.matmul %116, %114, %cst_160 {dimension_numbers = #tpu.dot_dimension_numbers<[1], [0], [0], [1], [0, 0, 1, 1], [], []>} : vector<8x8xbf16>, vector<8x128xbf16>, vector<8x128xf32> -> vector<8x128xf32>
    %118 = arith.addf %113, %117 : vector<8x128xf32>
    %119 = vector.extract_strided_slice %108 {offsets = [0, 9], sizes = [8, 128], strides = [1, 1]} : vector<8x256xbf16> to vector<8x128xbf16>
    %c2_161 = arith.constant 2 : index
    %c2_162 = arith.constant 2 : index
    %c0_163 = arith.constant 0 : index
    %c0_164 = arith.constant 0 : index
    %c0_165 = arith.constant 0 : index
    %120 = vector.load %arg4[%c2_161, %c2_162, %c0_163, %c0_164, %c0_165] : memref<3x3x3x8x8xbf16, #tpu.memory_space<vmem>>, vector<1x1x1x8x8xbf16>
    %121 = vector.shape_cast %120 : vector<1x1x1x8x8xbf16> to vector<8x8xbf16>
    %cst_166 = arith.constant dense<0.000000e+00> : vector<8x128xf32>
    %122 = tpu.matmul %121, %119, %cst_166 {dimension_numbers = #tpu.dot_dimension_numbers<[1], [0], [0], [1], [0, 0, 1, 1], [], []>} : vector<8x8xbf16>, vector<8x128xbf16>, vector<8x128xf32> -> vector<8x128xf32>
    %123 = arith.addf %118, %122 : vector<8x128xf32>
    %124 = vector.extract_strided_slice %108 {offsets = [0, 10], sizes = [8, 128], strides = [1, 1]} : vector<8x256xbf16> to vector<8x128xbf16>
    %c2_167 = arith.constant 2 : index
    %c2_168 = arith.constant 2 : index
    %c2_169 = arith.constant 2 : index
    %c0_170 = arith.constant 0 : index
    %c0_171 = arith.constant 0 : index
    %125 = vector.load %arg4[%c2_167, %c2_168, %c2_169, %c0_170, %c0_171] : memref<3x3x3x8x8xbf16, #tpu.memory_space<vmem>>, vector<1x1x1x8x8xbf16>
    %126 = vector.shape_cast %125 : vector<1x1x1x8x8xbf16> to vector<8x8xbf16>
    %cst_172 = arith.constant dense<0.000000e+00> : vector<8x128xf32>
    %127 = tpu.matmul %126, %124, %cst_172 {dimension_numbers = #tpu.dot_dimension_numbers<[1], [0], [0], [1], [0, 0, 1, 1], [], []>} : vector<8x8xbf16>, vector<8x128xbf16>, vector<8x128xf32> -> vector<8x128xf32>
    %128 = arith.addf %123, %127 : vector<8x128xf32>
    %c0_173 = arith.constant 0 : index
    %c0_174 = arith.constant 0 : index
    %c1_175 = arith.constant 1 : index
    %c0_176 = arith.constant 0 : index
    %c0_177 = arith.constant 0 : index
    %129 = vector.load %arg3[%c0_173, %c0_174, %c1_175, %c0_176, %c0_177] : memref<1x1x4x8x256xbf16, #tpu.memory_space<vmem>>, vector<1x1x1x8x256xbf16>
    %130 = vector.shape_cast %129 : vector<1x1x1x8x256xbf16> to vector<8x256xbf16>
    %131 = vector.extract_strided_slice %130 {offsets = [0, 0], sizes = [8, 128], strides = [1, 1]} : vector<8x256xbf16> to vector<8x128xbf16>
    %c2_178 = arith.constant 2 : index
    %c0_179 = arith.constant 0 : index
    %c1_180 = arith.constant 1 : index
    %c0_181 = arith.constant 0 : index
    %c0_182 = arith.constant 0 : index
    %132 = vector.load %arg4[%c2_178, %c0_179, %c1_180, %c0_181, %c0_182] : memref<3x3x3x8x8xbf16, #tpu.memory_space<vmem>>, vector<1x1x1x8x8xbf16>
    %133 = vector.shape_cast %132 : vector<1x1x1x8x8xbf16> to vector<8x8xbf16>
    %cst_183 = arith.constant dense<0.000000e+00> : vector<8x128xf32>
    %134 = tpu.matmul %133, %131, %cst_183 {dimension_numbers = #tpu.dot_dimension_numbers<[1], [0], [0], [1], [0, 0, 1, 1], [], []>} : vector<8x8xbf16>, vector<8x128xbf16>, vector<8x128xf32> -> vector<8x128xf32>
    %135 = arith.addf %128, %134 : vector<8x128xf32>
    %136 = vector.extract_strided_slice %130 {offsets = [0, 9], sizes = [8, 128], strides = [1, 1]} : vector<8x256xbf16> to vector<8x128xbf16>
    %c2_184 = arith.constant 2 : index
    %c2_185 = arith.constant 2 : index
    %c1_186 = arith.constant 1 : index
    %c0_187 = arith.constant 0 : index
    %c0_188 = arith.constant 0 : index
    %137 = vector.load %arg4[%c2_184, %c2_185, %c1_186, %c0_187, %c0_188] : memref<3x3x3x8x8xbf16, #tpu.memory_space<vmem>>, vector<1x1x1x8x8xbf16>
    %138 = vector.shape_cast %137 : vector<1x1x1x8x8xbf16> to vector<8x8xbf16>
    %cst_189 = arith.constant dense<0.000000e+00> : vector<8x128xf32>
    %139 = tpu.matmul %138, %136, %cst_189 {dimension_numbers = #tpu.dot_dimension_numbers<[1], [0], [0], [1], [0, 0, 1, 1], [], []>} : vector<8x8xbf16>, vector<8x128xbf16>, vector<8x128xf32> -> vector<8x128xf32>
    %140 = arith.addf %135, %139 : vector<8x128xf32>
    %c0_190 = arith.constant 0 : index
    %c0_191 = arith.constant 0 : index
    %c2_192 = arith.constant 2 : index
    %c0_193 = arith.constant 0 : index
    %c0_194 = arith.constant 0 : index
    %141 = vector.load %arg3[%c0_190, %c0_191, %c2_192, %c0_193, %c0_194] : memref<1x1x4x8x256xbf16, #tpu.memory_space<vmem>>, vector<1x1x1x8x256xbf16>
    %142 = vector.shape_cast %141 : vector<1x1x1x8x256xbf16> to vector<8x256xbf16>
    %143 = vector.extract_strided_slice %142 {offsets = [0, 0], sizes = [8, 128], strides = [1, 1]} : vector<8x256xbf16> to vector<8x128xbf16>
    %c2_195 = arith.constant 2 : index
    %c1_196 = arith.constant 1 : index
    %c0_197 = arith.constant 0 : index
    %c0_198 = arith.constant 0 : index
    %c0_199 = arith.constant 0 : index
    %144 = vector.load %arg4[%c2_195, %c1_196, %c0_197, %c0_198, %c0_199] : memref<3x3x3x8x8xbf16, #tpu.memory_space<vmem>>, vector<1x1x1x8x8xbf16>
    %145 = vector.shape_cast %144 : vector<1x1x1x8x8xbf16> to vector<8x8xbf16>
    %cst_200 = arith.constant dense<0.000000e+00> : vector<8x128xf32>
    %146 = tpu.matmul %145, %143, %cst_200 {dimension_numbers = #tpu.dot_dimension_numbers<[1], [0], [0], [1], [0, 0, 1, 1], [], []>} : vector<8x8xbf16>, vector<8x128xbf16>, vector<8x128xf32> -> vector<8x128xf32>
    %147 = arith.addf %140, %146 : vector<8x128xf32>
    %148 = vector.extract_strided_slice %142 {offsets = [0, 1], sizes = [8, 128], strides = [1, 1]} : vector<8x256xbf16> to vector<8x128xbf16>
    %c2_201 = arith.constant 2 : index
    %c1_202 = arith.constant 1 : index
    %c2_203 = arith.constant 2 : index
    %c0_204 = arith.constant 0 : index
    %c0_205 = arith.constant 0 : index
    %149 = vector.load %arg4[%c2_201, %c1_202, %c2_203, %c0_204, %c0_205] : memref<3x3x3x8x8xbf16, #tpu.memory_space<vmem>>, vector<1x1x1x8x8xbf16>
    %150 = vector.shape_cast %149 : vector<1x1x1x8x8xbf16> to vector<8x8xbf16>
    %cst_206 = arith.constant dense<0.000000e+00> : vector<8x128xf32>
    %151 = tpu.matmul %150, %148, %cst_206 {dimension_numbers = #tpu.dot_dimension_numbers<[1], [0], [0], [1], [0, 0, 1, 1], [], []>} : vector<8x8xbf16>, vector<8x128xbf16>, vector<8x128xf32> -> vector<8x128xf32>
    %152 = arith.addf %147, %151 : vector<8x128xf32>
    %c0_207 = arith.constant 0 : index
    %c0_208 = arith.constant 0 : index
    %c3_209 = arith.constant 3 : index
    %c0_210 = arith.constant 0 : index
    %c0_211 = arith.constant 0 : index
    %153 = vector.load %arg3[%c0_207, %c0_208, %c3_209, %c0_210, %c0_211] : memref<1x1x4x8x256xbf16, #tpu.memory_space<vmem>>, vector<1x1x1x8x256xbf16>
    %154 = vector.shape_cast %153 : vector<1x1x1x8x256xbf16> to vector<8x256xbf16>
    %155 = vector.extract_strided_slice %154 {offsets = [0, 0], sizes = [8, 128], strides = [1, 1]} : vector<8x256xbf16> to vector<8x128xbf16>
    %c2_212 = arith.constant 2 : index
    %c1_213 = arith.constant 1 : index
    %c1_214 = arith.constant 1 : index
    %c0_215 = arith.constant 0 : index
    %c0_216 = arith.constant 0 : index
    %156 = vector.load %arg4[%c2_212, %c1_213, %c1_214, %c0_215, %c0_216] : memref<3x3x3x8x8xbf16, #tpu.memory_space<vmem>>, vector<1x1x1x8x8xbf16>
    %157 = vector.shape_cast %156 : vector<1x1x1x8x8xbf16> to vector<8x8xbf16>
    %cst_217 = arith.constant dense<0.000000e+00> : vector<8x128xf32>
    %158 = tpu.matmul %157, %155, %cst_217 {dimension_numbers = #tpu.dot_dimension_numbers<[1], [0], [0], [1], [0, 0, 1, 1], [], []>} : vector<8x8xbf16>, vector<8x128xbf16>, vector<8x128xf32> -> vector<8x128xf32>
    %159 = arith.addf %152, %158 : vector<8x128xf32>
    %c0_218 = arith.constant 0 : index
    %c0_219 = arith.constant 0 : index
    %160 = vector.load %arg5[%c0_218, %c0_219] : memref<8x1xf32, #tpu.memory_space<vmem>>, vector<8x1xf32>
    %161 = vector.broadcast %160 : vector<8x1xf32> to vector<8x128xf32>
    %162 = arith.addf %159, %161 : vector<8x128xf32>
    %c0_220 = arith.constant 0 : index
    %c0_221 = arith.constant 0 : index
    %163 = vector.load %arg6[%c0_220, %c0_221] : memref<1x128xf32, #tpu.memory_space<vmem>>, vector<1x128xf32>
    %164 = vector.broadcast %163 : vector<1x128xf32> to vector<8x128xf32>
    %165 = arith.mulf %162, %164 : vector<8x128xf32>
    %cst_222 = arith.constant dense<0.000000e+00> : vector<8xf32>
    %166 = vector.multi_reduction <add>, %165, %cst_222 [1] : vector<8x128xf32> to vector<8xf32>
    %167 = vector.shape_cast %166 : vector<8xf32> to vector<8x1xf32>
    %c0_223 = arith.constant 0 : index
    %c0_224 = arith.constant 0 : index
    %c0_225 = arith.constant 0 : index
    %c0_226 = arith.constant 0 : index
    %168 = vector.load %arg8[%c0_223, %c0_224, %c0_225, %c0_226] : memref<1x1x8x1xf32, #tpu.memory_space<vmem>>, vector<1x1x8x1xf32>
    %169 = vector.shape_cast %168 : vector<1x1x8x1xf32> to vector<8x1xf32>
    %170 = vector.shape_cast %167 : vector<8x1xf32> to vector<1x1x8x1xf32>
    tpu.vector_store %arg8[%c0_223, %c0_224, %c0_225, %c0_226], %170 {strides = array<i32>} : memref<1x1x8x1xf32, #tpu.memory_space<vmem>>, vector<1x1x8x1xf32>,
    %171 = arith.mulf %162, %162 : vector<8x128xf32>
    %172 = vector.broadcast %163 : vector<1x128xf32> to vector<8x128xf32>
    %173 = arith.mulf %171, %172 : vector<8x128xf32>
    %cst_227 = arith.constant dense<0.000000e+00> : vector<8xf32>
    %174 = vector.multi_reduction <add>, %173, %cst_227 [1] : vector<8x128xf32> to vector<8xf32>
    %175 = vector.shape_cast %174 : vector<8xf32> to vector<8x1xf32>
    %c0_228 = arith.constant 0 : index
    %c0_229 = arith.constant 0 : index
    %c0_230 = arith.constant 0 : index
    %c0_231 = arith.constant 0 : index
    %176 = vector.load %arg9[%c0_228, %c0_229, %c0_230, %c0_231] : memref<1x1x8x1xf32, #tpu.memory_space<vmem>>, vector<1x1x8x1xf32>
    %177 = vector.shape_cast %176 : vector<1x1x8x1xf32> to vector<8x1xf32>
    %178 = vector.shape_cast %175 : vector<8x1xf32> to vector<1x1x8x1xf32>
    tpu.vector_store %arg9[%c0_228, %c0_229, %c0_230, %c0_231], %178 {strides = array<i32>} : memref<1x1x8x1xf32, #tpu.memory_space<vmem>>, vector<1x1x8x1xf32>,
    %179 = arith.truncf %162 : vector<8x128xf32> to vector<8x128xbf16>
    %c0_232 = arith.constant 0 : index
    %c0_233 = arith.constant 0 : index
    %c0_234 = arith.constant 0 : index
    %c0_235 = arith.constant 0 : index
    %180 = vector.load %arg7[%c0_232, %c0_233, %c0_234, %c0_235] : memref<1x1x8x128xbf16, #tpu.memory_space<vmem>>, vector<1x1x8x128xbf16>
    %181 = vector.shape_cast %180 : vector<1x1x8x128xbf16> to vector<8x128xbf16>
    %182 = vector.shape_cast %179 : vector<8x128xbf16> to vector<1x1x8x128xbf16>
    tpu.vector_store %arg7[%c0_232, %c0_233, %c0_234, %c0_235], %182 {strides = array<i32>} : memref<1x1x8x128xbf16, #tpu.memory_space<vmem>>, vector<1x1x8x128xbf16>,
    return
  }
  func.func @transform_0(%arg0: i32, %arg1: i32) -> (i32, i32, i32, i32, i32) {
    %c0_i32 = arith.constant 0 : i32
    %0 = arith.addi %arg1, %c0_i32 : i32
    %c0_i32_0 = arith.constant 0 : i32
    %c0_i32_1 = arith.constant 0 : i32
    %c0_i32_2 = arith.constant 0 : i32
    %c0_i32_3 = arith.constant 0 : i32
    return %arg0, %0, %c0_i32_0, %c0_i32_1, %c0_i32_2 : i32, i32, i32, i32, i32
  }
  func.func @transform_1(%arg0: i32, %arg1: i32) -> (i32, i32, i32, i32, i32) {
    %c2_i32 = arith.constant 2 : i32
    %0 = arith.muli %c2_i32, %arg1 : i32
    %c2_i32_0 = arith.constant 2 : i32
    %1 = arith.addi %0, %c2_i32_0 : i32
    %c0_i32 = arith.constant 0 : i32
    %c0_i32_1 = arith.constant 0 : i32
    %c0_i32_2 = arith.constant 0 : i32
    %c0_i32_3 = arith.constant 0 : i32
    return %arg0, %1, %c0_i32, %c0_i32_1, %c0_i32_2 : i32, i32, i32, i32, i32
  }
  func.func @transform_2(%arg0: i32, %arg1: i32) -> (i32, i32, i32, i32, i32) {
    %c0_i32 = arith.constant 0 : i32
    %c0_i32_0 = arith.constant 0 : i32
    %c0_i32_1 = arith.constant 0 : i32
    %c0_i32_2 = arith.constant 0 : i32
    %c0_i32_3 = arith.constant 0 : i32
    %c0_i32_4 = arith.constant 0 : i32
    return %c0_i32, %c0_i32_0, %c0_i32_1, %c0_i32_2, %c0_i32_3 : i32, i32, i32, i32, i32
  }
  func.func @transform_3(%arg0: i32, %arg1: i32) -> (i32, i32) {
    %c0_i32 = arith.constant 0 : i32
    %c0_i32_0 = arith.constant 0 : i32
    %c0_i32_1 = arith.constant 0 : i32
    return %c0_i32, %c0_i32_0 : i32, i32
  }
  func.func @transform_4(%arg0: i32, %arg1: i32) -> (i32, i32) {
    %c0_i32 = arith.constant 0 : i32
    %c0_i32_0 = arith.constant 0 : i32
    %c0_i32_1 = arith.constant 0 : i32
    return %c0_i32, %c0_i32_0 : i32, i32
  }
  func.func @transform_5(%arg0: i32, %arg1: i32) -> (i32, i32, i32, i32) {
    %c0_i32 = arith.constant 0 : i32
    %c0_i32_0 = arith.constant 0 : i32
    %c0_i32_1 = arith.constant 0 : i32
    return %arg0, %arg1, %c0_i32, %c0_i32_0 : i32, i32, i32, i32
  }
  func.func @transform_6(%arg0: i32, %arg1: i32) -> (i32, i32, i32, i32) {
    %c0_i32 = arith.constant 0 : i32
    %c0_i32_0 = arith.constant 0 : i32
    %c0_i32_1 = arith.constant 0 : i32
    return %arg0, %arg1, %c0_i32, %c0_i32_0 : i32, i32, i32, i32
  }
  func.func @transform_7(%arg0: i32, %arg1: i32) -> (i32, i32, i32, i32) {
    %c0_i32 = arith.constant 0 : i32
    %c0_i32_0 = arith.constant 0 : i32
    %c0_i32_1 = arith.constant 0 : i32
    return %arg0, %arg1, %c0_i32, %c0_i32_0 : i32, i32, i32, i32
  }
}

module attributes {stable_mosaic.version = 11 : i64} {
  func.func @_pw_proj_kernel(%arg0: i32, %arg1: i32, %arg2: memref<1x1x8x128xbf16, #tpu.memory_space<vmem>>, %arg3: memref<1x1x1x8x256xbf16, #tpu.memory_space<vmem>>, %arg4: memref<1x8x1xf32, #tpu.memory_space<vmem>>, %arg5: memref<1x8x1xf32, #tpu.memory_space<vmem>>, %arg6: memref<8x1xf32, #tpu.memory_space<vmem>>, %arg7: memref<8x1xf32, #tpu.memory_space<vmem>>, %arg8: memref<16x8xbf16, #tpu.memory_space<vmem>>, %arg9: memref<16x1xf32, #tpu.memory_space<vmem>>, %arg10: memref<16x16xbf16, #tpu.memory_space<vmem>>, %arg11: memref<16x1xf32, #tpu.memory_space<vmem>>, %arg12: memref<16x8xbf16, #tpu.memory_space<vmem>>, %arg13: memref<16x1xf32, #tpu.memory_space<vmem>>, %arg14: memref<1x1x16x128xbf16, #tpu.memory_space<vmem>>) attributes {dimension_semantics = [#tpu.dimension_semantics<parallel>, #tpu.dimension_semantics<parallel>], iteration_bounds = array<i64: 2, 8>, scalar_prefetch = 0 : i64, scratch_operands = 0 : i64, tpu.core_type = #tpu.core_type<tc>, window_params = [{transform_indices = @transform_0, window_bounds = array<i64: 1, 1, 8, 128>}, {transform_indices = @transform_1, window_bounds = array<i64: 1, 1, 1, 8, 256>}, {transform_indices = @transform_2, window_bounds = array<i64: 1, 8, 1>}, {transform_indices = @transform_3, window_bounds = array<i64: 1, 8, 1>}, {pipeline_mode = #tpu.pipeline_mode<synchronous>, transform_indices = @transform_4, window_bounds = array<i64: 8, 1>}, {pipeline_mode = #tpu.pipeline_mode<synchronous>, transform_indices = @transform_5, window_bounds = array<i64: 8, 1>}, {pipeline_mode = #tpu.pipeline_mode<synchronous>, transform_indices = @transform_6, window_bounds = array<i64: 16, 8>}, {pipeline_mode = #tpu.pipeline_mode<synchronous>, transform_indices = @transform_7, window_bounds = array<i64: 16, 1>}, {pipeline_mode = #tpu.pipeline_mode<synchronous>, transform_indices = @transform_8, window_bounds = array<i64: 16, 16>}, {pipeline_mode = #tpu.pipeline_mode<synchronous>, transform_indices = @transform_9, window_bounds = array<i64: 16, 1>}, {pipeline_mode = #tpu.pipeline_mode<synchronous>, transform_indices = @transform_10, window_bounds = array<i64: 16, 8>}, {pipeline_mode = #tpu.pipeline_mode<synchronous>, transform_indices = @transform_11, window_bounds = array<i64: 16, 1>}, {transform_indices = @transform_12, window_bounds = array<i64: 1, 1, 16, 128>}]} {
    %c0 = arith.constant 0 : index
    %c0_0 = arith.constant 0 : index
    %c0_1 = arith.constant 0 : index
    %c0_2 = arith.constant 0 : index
    %0 = vector.load %arg2[%c0, %c0_0, %c0_1, %c0_2] : memref<1x1x8x128xbf16, #tpu.memory_space<vmem>>, vector<1x1x8x128xbf16>
    %1 = vector.shape_cast %0 : vector<1x1x8x128xbf16> to vector<8x128xbf16>
    %2 = arith.extf %1 : vector<8x128xbf16> to vector<8x128xf32>
    %c0_3 = arith.constant 0 : index
    %c0_4 = arith.constant 0 : index
    %c0_5 = arith.constant 0 : index
    %3 = vector.load %arg4[%c0_3, %c0_4, %c0_5] : memref<1x8x1xf32, #tpu.memory_space<vmem>>, vector<1x8x1xf32>
    %4 = vector.shape_cast %3 : vector<1x8x1xf32> to vector<8x1xf32>
    %c0_6 = arith.constant 0 : index
    %c0_7 = arith.constant 0 : index
    %c0_8 = arith.constant 0 : index
    %5 = vector.load %arg5[%c0_6, %c0_7, %c0_8] : memref<1x8x1xf32, #tpu.memory_space<vmem>>, vector<1x8x1xf32>
    %6 = vector.shape_cast %5 : vector<1x8x1xf32> to vector<8x1xf32>
    %c0_9 = arith.constant 0 : index
    %c0_10 = arith.constant 0 : index
    %7 = vector.load %arg6[%c0_9, %c0_10] : memref<8x1xf32, #tpu.memory_space<vmem>>, vector<8x1xf32>
    %c0_11 = arith.constant 0 : index
    %c0_12 = arith.constant 0 : index
    %8 = vector.load %arg7[%c0_11, %c0_12] : memref<8x1xf32, #tpu.memory_space<vmem>>, vector<8x1xf32>
    %c0_13 = arith.constant 0 : index
    %c0_14 = arith.constant 0 : index
    %9 = vector.load %arg8[%c0_13, %c0_14] : memref<16x8xbf16, #tpu.memory_space<vmem>>, vector<16x8xbf16>
    %c0_15 = arith.constant 0 : index
    %c0_16 = arith.constant 0 : index
    %10 = vector.load %arg9[%c0_15, %c0_16] : memref<16x1xf32, #tpu.memory_space<vmem>>, vector<16x1xf32>
    %c0_17 = arith.constant 0 : index
    %c0_18 = arith.constant 0 : index
    %11 = vector.load %arg10[%c0_17, %c0_18] : memref<16x16xbf16, #tpu.memory_space<vmem>>, vector<16x16xbf16>
    %c0_19 = arith.constant 0 : index
    %c0_20 = arith.constant 0 : index
    %12 = vector.load %arg11[%c0_19, %c0_20] : memref<16x1xf32, #tpu.memory_space<vmem>>, vector<16x1xf32>
    %13 = vector.broadcast %4 : vector<8x1xf32> to vector<8x128xf32>
    %14 = arith.subf %2, %13 : vector<8x128xf32>
    %15 = vector.broadcast %6 : vector<8x1xf32> to vector<8x128xf32>
    %16 = arith.mulf %14, %15 : vector<8x128xf32>
    %17 = vector.broadcast %7 : vector<8x1xf32> to vector<8x128xf32>
    %18 = arith.mulf %16, %17 : vector<8x128xf32>
    %19 = vector.broadcast %8 : vector<8x1xf32> to vector<8x128xf32>
    %20 = arith.addf %18, %19 : vector<8x128xf32>
    %21 = arith.truncf %20 : vector<8x128xf32> to vector<8x128xbf16>
    %cst = arith.constant dense<0.000000e+00> : vector<16x128xf32>
    %22 = tpu.matmul %9, %21, %cst {dimension_numbers = #tpu.dot_dimension_numbers<[1], [0], [0], [1], [0, 0, 1, 1], [], []>} : vector<16x8xbf16>, vector<8x128xbf16>, vector<16x128xf32> -> vector<16x128xf32>
    %23 = vector.broadcast %10 : vector<16x1xf32> to vector<16x128xf32>
    %24 = arith.addf %22, %23 : vector<16x128xf32>
    %cst_21 = arith.constant 0.707106769 : f32
    %25 = vector.broadcast %cst_21 : f32 to vector<16x128xf32>
    %26 = arith.mulf %24, %25 : vector<16x128xf32>
    %27 = math.absf %26 : vector<16x128xf32>
    %cst_22 = arith.constant 0.327591091 : f32
    %28 = vector.broadcast %cst_22 : f32 to vector<16x128xf32>
    %29 = arith.mulf %28, %27 : vector<16x128xf32>
    %cst_23 = arith.constant 1.000000e+00 : f32
    %30 = vector.broadcast %cst_23 : f32 to vector<16x128xf32>
    %31 = arith.addf %30, %29 : vector<16x128xf32>
    %32 = tpu.reciprocal %31 {approx = true} : vector<16x128xf32> -> vector<16x128xf32>
    %cst_24 = arith.constant 1.06140542 : f32
    %33 = vector.broadcast %cst_24 : f32 to vector<16x128xf32>
    %34 = arith.mulf %33, %32 : vector<16x128xf32>
    %cst_25 = arith.constant -1.45315206 : f32
    %35 = vector.broadcast %cst_25 : f32 to vector<16x128xf32>
    %36 = arith.addf %34, %35 : vector<16x128xf32>
    %37 = arith.mulf %36, %32 : vector<16x128xf32>
    %cst_26 = arith.constant 1.42141378 : f32
    %38 = vector.broadcast %cst_26 : f32 to vector<16x128xf32>
    %39 = arith.addf %37, %38 : vector<16x128xf32>
    %40 = arith.mulf %39, %32 : vector<16x128xf32>
    %cst_27 = arith.constant -0.284496725 : f32
    %41 = vector.broadcast %cst_27 : f32 to vector<16x128xf32>
    %42 = arith.addf %40, %41 : vector<16x128xf32>
    %43 = arith.mulf %42, %32 : vector<16x128xf32>
    %cst_28 = arith.constant 0.254829586 : f32
    %44 = vector.broadcast %cst_28 : f32 to vector<16x128xf32>
    %45 = arith.addf %43, %44 : vector<16x128xf32>
    %46 = arith.mulf %45, %32 : vector<16x128xf32>
    %cst_29 = arith.constant 0.000000e+00 : f32
    %47 = vector.broadcast %cst_29 : f32 to vector<16x128xf32>
    %48 = arith.subf %47, %27 : vector<16x128xf32>
    %49 = arith.mulf %48, %27 : vector<16x128xf32>
    %50 = math.exp %49 : vector<16x128xf32>
    %51 = arith.mulf %46, %50 : vector<16x128xf32>
    %cst_30 = arith.constant 1.000000e+00 : f32
    %52 = vector.broadcast %cst_30 : f32 to vector<16x128xf32>
    %53 = arith.subf %52, %51 : vector<16x128xf32>
    %cst_31 = arith.constant 0.000000e+00 : f32
    %54 = vector.broadcast %cst_31 : f32 to vector<16x128xf32>
    %55 = arith.cmpf oge, %26, %54 : vector<16x128xf32>
    %cst_32 = arith.constant 0.000000e+00 : f32
    %56 = vector.broadcast %cst_32 : f32 to vector<16x128xf32>
    %57 = arith.subf %56, %53 : vector<16x128xf32>
    %58 = arith.select %55, %53, %57 : vector<16x128xi1>, vector<16x128xf32>
    %cst_33 = arith.constant 5.000000e-01 : f32
    %59 = vector.broadcast %cst_33 : f32 to vector<16x128xf32>
    %60 = arith.mulf %59, %24 : vector<16x128xf32>
    %cst_34 = arith.constant 1.000000e+00 : f32
    %61 = vector.broadcast %cst_34 : f32 to vector<16x128xf32>
    %62 = arith.addf %61, %58 : vector<16x128xf32>
    %63 = arith.mulf %60, %62 : vector<16x128xf32>
    %64 = arith.truncf %63 : vector<16x128xf32> to vector<16x128xbf16>
    %cst_35 = arith.constant dense<0.000000e+00> : vector<16x128xf32>
    %65 = tpu.matmul %11, %64, %cst_35 {dimension_numbers = #tpu.dot_dimension_numbers<[1], [0], [0], [1], [0, 0, 1, 1], [], []>} : vector<16x16xbf16>, vector<16x128xbf16>, vector<16x128xf32> -> vector<16x128xf32>
    %66 = vector.broadcast %12 : vector<16x1xf32> to vector<16x128xf32>
    %67 = arith.addf %65, %66 : vector<16x128xf32>
    %c0_36 = arith.constant 0 : index
    %c0_37 = arith.constant 0 : index
    %c0_38 = arith.constant 0 : index
    %c0_39 = arith.constant 0 : index
    %c0_40 = arith.constant 0 : index
    %68 = vector.load %arg3[%c0_36, %c0_37, %c0_38, %c0_39, %c0_40] : memref<1x1x1x8x256xbf16, #tpu.memory_space<vmem>>, vector<1x1x1x8x128xbf16>
    %69 = vector.shape_cast %68 : vector<1x1x1x8x128xbf16> to vector<8x128xbf16>
    %c0_41 = arith.constant 0 : index
    %c0_42 = arith.constant 0 : index
    %70 = vector.load %arg12[%c0_41, %c0_42] : memref<16x8xbf16, #tpu.memory_space<vmem>>, vector<16x8xbf16>
    %cst_43 = arith.constant dense<0.000000e+00> : vector<16x128xf32>
    %71 = tpu.matmul %70, %69, %cst_43 {dimension_numbers = #tpu.dot_dimension_numbers<[1], [0], [0], [1], [0, 0, 1, 1], [], []>} : vector<16x8xbf16>, vector<8x128xbf16>, vector<16x128xf32> -> vector<16x128xf32>
    %c0_44 = arith.constant 0 : index
    %c0_45 = arith.constant 0 : index
    %72 = vector.load %arg13[%c0_44, %c0_45] : memref<16x1xf32, #tpu.memory_space<vmem>>, vector<16x1xf32>
    %73 = vector.broadcast %72 : vector<16x1xf32> to vector<16x128xf32>
    %74 = arith.addf %71, %73 : vector<16x128xf32>
    %75 = arith.addf %67, %74 : vector<16x128xf32>
    %76 = arith.truncf %75 : vector<16x128xf32> to vector<16x128xbf16>
    %c0_46 = arith.constant 0 : index
    %c0_47 = arith.constant 0 : index
    %c0_48 = arith.constant 0 : index
    %c0_49 = arith.constant 0 : index
    %77 = vector.load %arg14[%c0_46, %c0_47, %c0_48, %c0_49] : memref<1x1x16x128xbf16, #tpu.memory_space<vmem>>, vector<1x1x16x128xbf16>
    %78 = vector.shape_cast %77 : vector<1x1x16x128xbf16> to vector<16x128xbf16>
    %79 = vector.shape_cast %76 : vector<16x128xbf16> to vector<1x1x16x128xbf16>
    tpu.vector_store %arg14[%c0_46, %c0_47, %c0_48, %c0_49], %79 {strides = array<i32>} : memref<1x1x16x128xbf16, #tpu.memory_space<vmem>>, vector<1x1x16x128xbf16>,
    return
  }
  func.func @transform_0(%arg0: i32, %arg1: i32) -> (i32, i32, i32, i32) {
    %c0_i32 = arith.constant 0 : i32
    %c0_i32_0 = arith.constant 0 : i32
    %c0_i32_1 = arith.constant 0 : i32
    return %arg0, %arg1, %c0_i32, %c0_i32_0 : i32, i32, i32, i32
  }
  func.func @transform_1(%arg0: i32, %arg1: i32) -> (i32, i32, i32, i32, i32) {
    %c2_i32 = arith.constant 2 : i32
    %0 = arith.muli %c2_i32, %arg1 : i32
    %c1_i32 = arith.constant 1 : i32
    %1 = arith.addi %0, %c1_i32 : i32
    %c3_i32 = arith.constant 3 : i32
    %c0_i32 = arith.constant 0 : i32
    %c0_i32_0 = arith.constant 0 : i32
    %c0_i32_1 = arith.constant 0 : i32
    return %arg0, %1, %c3_i32, %c0_i32, %c0_i32_0 : i32, i32, i32, i32, i32
  }
  func.func @transform_2(%arg0: i32, %arg1: i32) -> (i32, i32, i32) {
    %c0_i32 = arith.constant 0 : i32
    %c0_i32_0 = arith.constant 0 : i32
    %c0_i32_1 = arith.constant 0 : i32
    return %arg0, %c0_i32, %c0_i32_0 : i32, i32, i32
  }
  func.func @transform_3(%arg0: i32, %arg1: i32) -> (i32, i32, i32) {
    %c0_i32 = arith.constant 0 : i32
    %c0_i32_0 = arith.constant 0 : i32
    %c0_i32_1 = arith.constant 0 : i32
    return %arg0, %c0_i32, %c0_i32_0 : i32, i32, i32
  }
  func.func @transform_4(%arg0: i32, %arg1: i32) -> (i32, i32) {
    %c0_i32 = arith.constant 0 : i32
    %c0_i32_0 = arith.constant 0 : i32
    %c0_i32_1 = arith.constant 0 : i32
    return %c0_i32, %c0_i32_0 : i32, i32
  }
  func.func @transform_5(%arg0: i32, %arg1: i32) -> (i32, i32) {
    %c0_i32 = arith.constant 0 : i32
    %c0_i32_0 = arith.constant 0 : i32
    %c0_i32_1 = arith.constant 0 : i32
    return %c0_i32, %c0_i32_0 : i32, i32
  }
  func.func @transform_6(%arg0: i32, %arg1: i32) -> (i32, i32) {
    %c0_i32 = arith.constant 0 : i32
    %c0_i32_0 = arith.constant 0 : i32
    %c0_i32_1 = arith.constant 0 : i32
    return %c0_i32, %c0_i32_0 : i32, i32
  }
  func.func @transform_7(%arg0: i32, %arg1: i32) -> (i32, i32) {
    %c0_i32 = arith.constant 0 : i32
    %c0_i32_0 = arith.constant 0 : i32
    %c0_i32_1 = arith.constant 0 : i32
    return %c0_i32, %c0_i32_0 : i32, i32
  }
  func.func @transform_8(%arg0: i32, %arg1: i32) -> (i32, i32) {
    %c0_i32 = arith.constant 0 : i32
    %c0_i32_0 = arith.constant 0 : i32
    %c0_i32_1 = arith.constant 0 : i32
    return %c0_i32, %c0_i32_0 : i32, i32
  }
  func.func @transform_9(%arg0: i32, %arg1: i32) -> (i32, i32) {
    %c0_i32 = arith.constant 0 : i32
    %c0_i32_0 = arith.constant 0 : i32
    %c0_i32_1 = arith.constant 0 : i32
    return %c0_i32, %c0_i32_0 : i32, i32
  }
  func.func @transform_10(%arg0: i32, %arg1: i32) -> (i32, i32) {
    %c0_i32 = arith.constant 0 : i32
    %c0_i32_0 = arith.constant 0 : i32
    %c0_i32_1 = arith.constant 0 : i32
    return %c0_i32, %c0_i32_0 : i32, i32
  }
  func.func @transform_11(%arg0: i32, %arg1: i32) -> (i32, i32) {
    %c0_i32 = arith.constant 0 : i32
    %c0_i32_0 = arith.constant 0 : i32
    %c0_i32_1 = arith.constant 0 : i32
    return %c0_i32, %c0_i32_0 : i32, i32
  }
  func.func @transform_12(%arg0: i32, %arg1: i32) -> (i32, i32, i32, i32) {
    %c0_i32 = arith.constant 0 : i32
    %c0_i32_0 = arith.constant 0 : i32
    %c0_i32_1 = arith.constant 0 : i32
    return %arg0, %arg1, %c0_i32, %c0_i32_0 : i32, i32, i32, i32
  }
}

module attributes {stable_mosaic.version = 11 : i64} {
  func.func @_conv_s1_kernel(%arg0: i32, %arg1: i32, %arg2: memref<1x1x16x256xbf16, #tpu.memory_space<vmem>>, %arg3: memref<1x1x16x256xbf16, #tpu.memory_space<vmem>>, %arg4: memref<1x1x16x256xbf16, #tpu.memory_space<vmem>>, %arg5: memref<3x3x3x16x16xbf16, #tpu.memory_space<vmem>>, %arg6: memref<16x1xf32, #tpu.memory_space<vmem>>, %arg7: memref<1x128xf32, #tpu.memory_space<vmem>>, %arg8: memref<1x1x16x128xbf16, #tpu.memory_space<vmem>>, %arg9: memref<1x1x16x1xf32, #tpu.memory_space<vmem>>, %arg10: memref<1x1x16x1xf32, #tpu.memory_space<vmem>>) attributes {dimension_semantics = [#tpu.dimension_semantics<parallel>, #tpu.dimension_semantics<parallel>], iteration_bounds = array<i64: 2, 8>, scalar_prefetch = 0 : i64, scratch_operands = 0 : i64, tpu.core_type = #tpu.core_type<tc>, window_params = [{transform_indices = @transform_0, window_bounds = array<i64: 1, 1, 16, 256>}, {transform_indices = @transform_1, window_bounds = array<i64: 1, 1, 16, 256>}, {transform_indices = @transform_2, window_bounds = array<i64: 1, 1, 16, 256>}, {pipeline_mode = #tpu.pipeline_mode<synchronous>, transform_indices = @transform_3, window_bounds = array<i64: 3, 3, 3, 16, 16>}, {pipeline_mode = #tpu.pipeline_mode<synchronous>, transform_indices = @transform_4, window_bounds = array<i64: 16, 1>}, {pipeline_mode = #tpu.pipeline_mode<synchronous>, transform_indices = @transform_5, window_bounds = array<i64: 1, 128>}, {transform_indices = @transform_6, window_bounds = array<i64: 1, 1, 16, 128>}, {transform_indices = @transform_7, window_bounds = array<i64: 1, 1, 16, 1>}, {transform_indices = @transform_8, window_bounds = array<i64: 1, 1, 16, 1>}]} {
    %cst = arith.constant 0.000000e+00 : f32
    %0 = vector.broadcast %cst : f32 to vector<16x128xf32>
    %c0 = arith.constant 0 : index
    %c0_0 = arith.constant 0 : index
    %c0_1 = arith.constant 0 : index
    %c0_2 = arith.constant 0 : index
    %1 = vector.load %arg2[%c0, %c0_0, %c0_1, %c0_2] : memref<1x1x16x256xbf16, #tpu.memory_space<vmem>>, vector<1x1x16x256xbf16>
    %2 = vector.shape_cast %1 : vector<1x1x16x256xbf16> to vector<16x256xbf16>
    %3 = vector.extract_strided_slice %2 {offsets = [0, 0], sizes = [16, 128], strides = [1, 1]} : vector<16x256xbf16> to vector<16x128xbf16>
    %c0_3 = arith.constant 0 : index
    %c0_4 = arith.constant 0 : index
    %c0_5 = arith.constant 0 : index
    %c0_6 = arith.constant 0 : index
    %c0_7 = arith.constant 0 : index
    %4 = vector.load %arg5[%c0_3, %c0_4, %c0_5, %c0_6, %c0_7] : memref<3x3x3x16x16xbf16, #tpu.memory_space<vmem>>, vector<1x1x1x16x16xbf16>
    %5 = vector.shape_cast %4 : vector<1x1x1x16x16xbf16> to vector<16x16xbf16>
    %cst_8 = arith.constant dense<0.000000e+00> : vector<16x128xf32>
    %6 = tpu.matmul %5, %3, %cst_8 {dimension_numbers = #tpu.dot_dimension_numbers<[1], [0], [0], [1], [0, 0, 1, 1], [], []>} : vector<16x16xbf16>, vector<16x128xbf16>, vector<16x128xf32> -> vector<16x128xf32>
    %7 = arith.addf %0, %6 : vector<16x128xf32>
    %8 = vector.extract_strided_slice %2 {offsets = [0, 1], sizes = [16, 128], strides = [1, 1]} : vector<16x256xbf16> to vector<16x128xbf16>
    %c0_9 = arith.constant 0 : index
    %c0_10 = arith.constant 0 : index
    %c1 = arith.constant 1 : index
    %c0_11 = arith.constant 0 : index
    %c0_12 = arith.constant 0 : index
    %9 = vector.load %arg5[%c0_9, %c0_10, %c1, %c0_11, %c0_12] : memref<3x3x3x16x16xbf16, #tpu.memory_space<vmem>>, vector<1x1x1x16x16xbf16>
    %10 = vector.shape_cast %9 : vector<1x1x1x16x16xbf16> to vector<16x16xbf16>
    %cst_13 = arith.constant dense<0.000000e+00> : vector<16x128xf32>
    %11 = tpu.matmul %10, %8, %cst_13 {dimension_numbers = #tpu.dot_dimension_numbers<[1], [0], [0], [1], [0, 0, 1, 1], [], []>} : vector<16x16xbf16>, vector<16x128xbf16>, vector<16x128xf32> -> vector<16x128xf32>
    %12 = arith.addf %7, %11 : vector<16x128xf32>
    %13 = vector.extract_strided_slice %2 {offsets = [0, 2], sizes = [16, 128], strides = [1, 1]} : vector<16x256xbf16> to vector<16x128xbf16>
    %c0_14 = arith.constant 0 : index
    %c0_15 = arith.constant 0 : index
    %c2 = arith.constant 2 : index
    %c0_16 = arith.constant 0 : index
    %c0_17 = arith.constant 0 : index
    %14 = vector.load %arg5[%c0_14, %c0_15, %c2, %c0_16, %c0_17] : memref<3x3x3x16x16xbf16, #tpu.memory_space<vmem>>, vector<1x1x1x16x16xbf16>
    %15 = vector.shape_cast %14 : vector<1x1x1x16x16xbf16> to vector<16x16xbf16>
    %cst_18 = arith.constant dense<0.000000e+00> : vector<16x128xf32>
    %16 = tpu.matmul %15, %13, %cst_18 {dimension_numbers = #tpu.dot_dimension_numbers<[1], [0], [0], [1], [0, 0, 1, 1], [], []>} : vector<16x16xbf16>, vector<16x128xbf16>, vector<16x128xf32> -> vector<16x128xf32>
    %17 = arith.addf %12, %16 : vector<16x128xf32>
    %18 = vector.extract_strided_slice %2 {offsets = [0, 10], sizes = [16, 128], strides = [1, 1]} : vector<16x256xbf16> to vector<16x128xbf16>
    %c0_19 = arith.constant 0 : index
    %c1_20 = arith.constant 1 : index
    %c0_21 = arith.constant 0 : index
    %c0_22 = arith.constant 0 : index
    %c0_23 = arith.constant 0 : index
    %19 = vector.load %arg5[%c0_19, %c1_20, %c0_21, %c0_22, %c0_23] : memref<3x3x3x16x16xbf16, #tpu.memory_space<vmem>>, vector<1x1x1x16x16xbf16>
    %20 = vector.shape_cast %19 : vector<1x1x1x16x16xbf16> to vector<16x16xbf16>
    %cst_24 = arith.constant dense<0.000000e+00> : vector<16x128xf32>
    %21 = tpu.matmul %20, %18, %cst_24 {dimension_numbers = #tpu.dot_dimension_numbers<[1], [0], [0], [1], [0, 0, 1, 1], [], []>} : vector<16x16xbf16>, vector<16x128xbf16>, vector<16x128xf32> -> vector<16x128xf32>
    %22 = arith.addf %17, %21 : vector<16x128xf32>
    %23 = vector.extract_strided_slice %2 {offsets = [0, 11], sizes = [16, 128], strides = [1, 1]} : vector<16x256xbf16> to vector<16x128xbf16>
    %c0_25 = arith.constant 0 : index
    %c1_26 = arith.constant 1 : index
    %c1_27 = arith.constant 1 : index
    %c0_28 = arith.constant 0 : index
    %c0_29 = arith.constant 0 : index
    %24 = vector.load %arg5[%c0_25, %c1_26, %c1_27, %c0_28, %c0_29] : memref<3x3x3x16x16xbf16, #tpu.memory_space<vmem>>, vector<1x1x1x16x16xbf16>
    %25 = vector.shape_cast %24 : vector<1x1x1x16x16xbf16> to vector<16x16xbf16>
    %cst_30 = arith.constant dense<0.000000e+00> : vector<16x128xf32>
    %26 = tpu.matmul %25, %23, %cst_30 {dimension_numbers = #tpu.dot_dimension_numbers<[1], [0], [0], [1], [0, 0, 1, 1], [], []>} : vector<16x16xbf16>, vector<16x128xbf16>, vector<16x128xf32> -> vector<16x128xf32>
    %27 = arith.addf %22, %26 : vector<16x128xf32>
    %28 = vector.extract_strided_slice %2 {offsets = [0, 12], sizes = [16, 128], strides = [1, 1]} : vector<16x256xbf16> to vector<16x128xbf16>
    %c0_31 = arith.constant 0 : index
    %c1_32 = arith.constant 1 : index
    %c2_33 = arith.constant 2 : index
    %c0_34 = arith.constant 0 : index
    %c0_35 = arith.constant 0 : index
    %29 = vector.load %arg5[%c0_31, %c1_32, %c2_33, %c0_34, %c0_35] : memref<3x3x3x16x16xbf16, #tpu.memory_space<vmem>>, vector<1x1x1x16x16xbf16>
    %30 = vector.shape_cast %29 : vector<1x1x1x16x16xbf16> to vector<16x16xbf16>
    %cst_36 = arith.constant dense<0.000000e+00> : vector<16x128xf32>
    %31 = tpu.matmul %30, %28, %cst_36 {dimension_numbers = #tpu.dot_dimension_numbers<[1], [0], [0], [1], [0, 0, 1, 1], [], []>} : vector<16x16xbf16>, vector<16x128xbf16>, vector<16x128xf32> -> vector<16x128xf32>
    %32 = arith.addf %27, %31 : vector<16x128xf32>
    %33 = vector.extract_strided_slice %2 {offsets = [0, 20], sizes = [16, 128], strides = [1, 1]} : vector<16x256xbf16> to vector<16x128xbf16>
    %c0_37 = arith.constant 0 : index
    %c2_38 = arith.constant 2 : index
    %c0_39 = arith.constant 0 : index
    %c0_40 = arith.constant 0 : index
    %c0_41 = arith.constant 0 : index
    %34 = vector.load %arg5[%c0_37, %c2_38, %c0_39, %c0_40, %c0_41] : memref<3x3x3x16x16xbf16, #tpu.memory_space<vmem>>, vector<1x1x1x16x16xbf16>
    %35 = vector.shape_cast %34 : vector<1x1x1x16x16xbf16> to vector<16x16xbf16>
    %cst_42 = arith.constant dense<0.000000e+00> : vector<16x128xf32>
    %36 = tpu.matmul %35, %33, %cst_42 {dimension_numbers = #tpu.dot_dimension_numbers<[1], [0], [0], [1], [0, 0, 1, 1], [], []>} : vector<16x16xbf16>, vector<16x128xbf16>, vector<16x128xf32> -> vector<16x128xf32>
    %37 = arith.addf %32, %36 : vector<16x128xf32>
    %38 = vector.extract_strided_slice %2 {offsets = [0, 21], sizes = [16, 128], strides = [1, 1]} : vector<16x256xbf16> to vector<16x128xbf16>
    %c0_43 = arith.constant 0 : index
    %c2_44 = arith.constant 2 : index
    %c1_45 = arith.constant 1 : index
    %c0_46 = arith.constant 0 : index
    %c0_47 = arith.constant 0 : index
    %39 = vector.load %arg5[%c0_43, %c2_44, %c1_45, %c0_46, %c0_47] : memref<3x3x3x16x16xbf16, #tpu.memory_space<vmem>>, vector<1x1x1x16x16xbf16>
    %40 = vector.shape_cast %39 : vector<1x1x1x16x16xbf16> to vector<16x16xbf16>
    %cst_48 = arith.constant dense<0.000000e+00> : vector<16x128xf32>
    %41 = tpu.matmul %40, %38, %cst_48 {dimension_numbers = #tpu.dot_dimension_numbers<[1], [0], [0], [1], [0, 0, 1, 1], [], []>} : vector<16x16xbf16>, vector<16x128xbf16>, vector<16x128xf32> -> vector<16x128xf32>
    %42 = arith.addf %37, %41 : vector<16x128xf32>
    %43 = vector.extract_strided_slice %2 {offsets = [0, 22], sizes = [16, 128], strides = [1, 1]} : vector<16x256xbf16> to vector<16x128xbf16>
    %c0_49 = arith.constant 0 : index
    %c2_50 = arith.constant 2 : index
    %c2_51 = arith.constant 2 : index
    %c0_52 = arith.constant 0 : index
    %c0_53 = arith.constant 0 : index
    %44 = vector.load %arg5[%c0_49, %c2_50, %c2_51, %c0_52, %c0_53] : memref<3x3x3x16x16xbf16, #tpu.memory_space<vmem>>, vector<1x1x1x16x16xbf16>
    %45 = vector.shape_cast %44 : vector<1x1x1x16x16xbf16> to vector<16x16xbf16>
    %cst_54 = arith.constant dense<0.000000e+00> : vector<16x128xf32>
    %46 = tpu.matmul %45, %43, %cst_54 {dimension_numbers = #tpu.dot_dimension_numbers<[1], [0], [0], [1], [0, 0, 1, 1], [], []>} : vector<16x16xbf16>, vector<16x128xbf16>, vector<16x128xf32> -> vector<16x128xf32>
    %47 = arith.addf %42, %46 : vector<16x128xf32>
    %c0_55 = arith.constant 0 : index
    %c0_56 = arith.constant 0 : index
    %c0_57 = arith.constant 0 : index
    %c0_58 = arith.constant 0 : index
    %48 = vector.load %arg3[%c0_55, %c0_56, %c0_57, %c0_58] : memref<1x1x16x256xbf16, #tpu.memory_space<vmem>>, vector<1x1x16x256xbf16>
    %49 = vector.shape_cast %48 : vector<1x1x16x256xbf16> to vector<16x256xbf16>
    %50 = vector.extract_strided_slice %49 {offsets = [0, 0], sizes = [16, 128], strides = [1, 1]} : vector<16x256xbf16> to vector<16x128xbf16>
    %c1_59 = arith.constant 1 : index
    %c0_60 = arith.constant 0 : index
    %c0_61 = arith.constant 0 : index
    %c0_62 = arith.constant 0 : index
    %c0_63 = arith.constant 0 : index
    %51 = vector.load %arg5[%c1_59, %c0_60, %c0_61, %c0_62, %c0_63] : memref<3x3x3x16x16xbf16, #tpu.memory_space<vmem>>, vector<1x1x1x16x16xbf16>
    %52 = vector.shape_cast %51 : vector<1x1x1x16x16xbf16> to vector<16x16xbf16>
    %cst_64 = arith.constant dense<0.000000e+00> : vector<16x128xf32>
    %53 = tpu.matmul %52, %50, %cst_64 {dimension_numbers = #tpu.dot_dimension_numbers<[1], [0], [0], [1], [0, 0, 1, 1], [], []>} : vector<16x16xbf16>, vector<16x128xbf16>, vector<16x128xf32> -> vector<16x128xf32>
    %54 = arith.addf %47, %53 : vector<16x128xf32>
    %55 = vector.extract_strided_slice %49 {offsets = [0, 1], sizes = [16, 128], strides = [1, 1]} : vector<16x256xbf16> to vector<16x128xbf16>
    %c1_65 = arith.constant 1 : index
    %c0_66 = arith.constant 0 : index
    %c1_67 = arith.constant 1 : index
    %c0_68 = arith.constant 0 : index
    %c0_69 = arith.constant 0 : index
    %56 = vector.load %arg5[%c1_65, %c0_66, %c1_67, %c0_68, %c0_69] : memref<3x3x3x16x16xbf16, #tpu.memory_space<vmem>>, vector<1x1x1x16x16xbf16>
    %57 = vector.shape_cast %56 : vector<1x1x1x16x16xbf16> to vector<16x16xbf16>
    %cst_70 = arith.constant dense<0.000000e+00> : vector<16x128xf32>
    %58 = tpu.matmul %57, %55, %cst_70 {dimension_numbers = #tpu.dot_dimension_numbers<[1], [0], [0], [1], [0, 0, 1, 1], [], []>} : vector<16x16xbf16>, vector<16x128xbf16>, vector<16x128xf32> -> vector<16x128xf32>
    %59 = arith.addf %54, %58 : vector<16x128xf32>
    %60 = vector.extract_strided_slice %49 {offsets = [0, 2], sizes = [16, 128], strides = [1, 1]} : vector<16x256xbf16> to vector<16x128xbf16>
    %c1_71 = arith.constant 1 : index
    %c0_72 = arith.constant 0 : index
    %c2_73 = arith.constant 2 : index
    %c0_74 = arith.constant 0 : index
    %c0_75 = arith.constant 0 : index
    %61 = vector.load %arg5[%c1_71, %c0_72, %c2_73, %c0_74, %c0_75] : memref<3x3x3x16x16xbf16, #tpu.memory_space<vmem>>, vector<1x1x1x16x16xbf16>
    %62 = vector.shape_cast %61 : vector<1x1x1x16x16xbf16> to vector<16x16xbf16>
    %cst_76 = arith.constant dense<0.000000e+00> : vector<16x128xf32>
    %63 = tpu.matmul %62, %60, %cst_76 {dimension_numbers = #tpu.dot_dimension_numbers<[1], [0], [0], [1], [0, 0, 1, 1], [], []>} : vector<16x16xbf16>, vector<16x128xbf16>, vector<16x128xf32> -> vector<16x128xf32>
    %64 = arith.addf %59, %63 : vector<16x128xf32>
    %65 = vector.extract_strided_slice %49 {offsets = [0, 10], sizes = [16, 128], strides = [1, 1]} : vector<16x256xbf16> to vector<16x128xbf16>
    %c1_77 = arith.constant 1 : index
    %c1_78 = arith.constant 1 : index
    %c0_79 = arith.constant 0 : index
    %c0_80 = arith.constant 0 : index
    %c0_81 = arith.constant 0 : index
    %66 = vector.load %arg5[%c1_77, %c1_78, %c0_79, %c0_80, %c0_81] : memref<3x3x3x16x16xbf16, #tpu.memory_space<vmem>>, vector<1x1x1x16x16xbf16>
    %67 = vector.shape_cast %66 : vector<1x1x1x16x16xbf16> to vector<16x16xbf16>
    %cst_82 = arith.constant dense<0.000000e+00> : vector<16x128xf32>
    %68 = tpu.matmul %67, %65, %cst_82 {dimension_numbers = #tpu.dot_dimension_numbers<[1], [0], [0], [1], [0, 0, 1, 1], [], []>} : vector<16x16xbf16>, vector<16x128xbf16>, vector<16x128xf32> -> vector<16x128xf32>
    %69 = arith.addf %64, %68 : vector<16x128xf32>
    %70 = vector.extract_strided_slice %49 {offsets = [0, 11], sizes = [16, 128], strides = [1, 1]} : vector<16x256xbf16> to vector<16x128xbf16>
    %c1_83 = arith.constant 1 : index
    %c1_84 = arith.constant 1 : index
    %c1_85 = arith.constant 1 : index
    %c0_86 = arith.constant 0 : index
    %c0_87 = arith.constant 0 : index
    %71 = vector.load %arg5[%c1_83, %c1_84, %c1_85, %c0_86, %c0_87] : memref<3x3x3x16x16xbf16, #tpu.memory_space<vmem>>, vector<1x1x1x16x16xbf16>
    %72 = vector.shape_cast %71 : vector<1x1x1x16x16xbf16> to vector<16x16xbf16>
    %cst_88 = arith.constant dense<0.000000e+00> : vector<16x128xf32>
    %73 = tpu.matmul %72, %70, %cst_88 {dimension_numbers = #tpu.dot_dimension_numbers<[1], [0], [0], [1], [0, 0, 1, 1], [], []>} : vector<16x16xbf16>, vector<16x128xbf16>, vector<16x128xf32> -> vector<16x128xf32>
    %74 = arith.addf %69, %73 : vector<16x128xf32>
    %75 = vector.extract_strided_slice %49 {offsets = [0, 12], sizes = [16, 128], strides = [1, 1]} : vector<16x256xbf16> to vector<16x128xbf16>
    %c1_89 = arith.constant 1 : index
    %c1_90 = arith.constant 1 : index
    %c2_91 = arith.constant 2 : index
    %c0_92 = arith.constant 0 : index
    %c0_93 = arith.constant 0 : index
    %76 = vector.load %arg5[%c1_89, %c1_90, %c2_91, %c0_92, %c0_93] : memref<3x3x3x16x16xbf16, #tpu.memory_space<vmem>>, vector<1x1x1x16x16xbf16>
    %77 = vector.shape_cast %76 : vector<1x1x1x16x16xbf16> to vector<16x16xbf16>
    %cst_94 = arith.constant dense<0.000000e+00> : vector<16x128xf32>
    %78 = tpu.matmul %77, %75, %cst_94 {dimension_numbers = #tpu.dot_dimension_numbers<[1], [0], [0], [1], [0, 0, 1, 1], [], []>} : vector<16x16xbf16>, vector<16x128xbf16>, vector<16x128xf32> -> vector<16x128xf32>
    %79 = arith.addf %74, %78 : vector<16x128xf32>
    %80 = vector.extract_strided_slice %49 {offsets = [0, 20], sizes = [16, 128], strides = [1, 1]} : vector<16x256xbf16> to vector<16x128xbf16>
    %c1_95 = arith.constant 1 : index
    %c2_96 = arith.constant 2 : index
    %c0_97 = arith.constant 0 : index
    %c0_98 = arith.constant 0 : index
    %c0_99 = arith.constant 0 : index
    %81 = vector.load %arg5[%c1_95, %c2_96, %c0_97, %c0_98, %c0_99] : memref<3x3x3x16x16xbf16, #tpu.memory_space<vmem>>, vector<1x1x1x16x16xbf16>
    %82 = vector.shape_cast %81 : vector<1x1x1x16x16xbf16> to vector<16x16xbf16>
    %cst_100 = arith.constant dense<0.000000e+00> : vector<16x128xf32>
    %83 = tpu.matmul %82, %80, %cst_100 {dimension_numbers = #tpu.dot_dimension_numbers<[1], [0], [0], [1], [0, 0, 1, 1], [], []>} : vector<16x16xbf16>, vector<16x128xbf16>, vector<16x128xf32> -> vector<16x128xf32>
    %84 = arith.addf %79, %83 : vector<16x128xf32>
    %85 = vector.extract_strided_slice %49 {offsets = [0, 21], sizes = [16, 128], strides = [1, 1]} : vector<16x256xbf16> to vector<16x128xbf16>
    %c1_101 = arith.constant 1 : index
    %c2_102 = arith.constant 2 : index
    %c1_103 = arith.constant 1 : index
    %c0_104 = arith.constant 0 : index
    %c0_105 = arith.constant 0 : index
    %86 = vector.load %arg5[%c1_101, %c2_102, %c1_103, %c0_104, %c0_105] : memref<3x3x3x16x16xbf16, #tpu.memory_space<vmem>>, vector<1x1x1x16x16xbf16>
    %87 = vector.shape_cast %86 : vector<1x1x1x16x16xbf16> to vector<16x16xbf16>
    %cst_106 = arith.constant dense<0.000000e+00> : vector<16x128xf32>
    %88 = tpu.matmul %87, %85, %cst_106 {dimension_numbers = #tpu.dot_dimension_numbers<[1], [0], [0], [1], [0, 0, 1, 1], [], []>} : vector<16x16xbf16>, vector<16x128xbf16>, vector<16x128xf32> -> vector<16x128xf32>
    %89 = arith.addf %84, %88 : vector<16x128xf32>
    %90 = vector.extract_strided_slice %49 {offsets = [0, 22], sizes = [16, 128], strides = [1, 1]} : vector<16x256xbf16> to vector<16x128xbf16>
    %c1_107 = arith.constant 1 : index
    %c2_108 = arith.constant 2 : index
    %c2_109 = arith.constant 2 : index
    %c0_110 = arith.constant 0 : index
    %c0_111 = arith.constant 0 : index
    %91 = vector.load %arg5[%c1_107, %c2_108, %c2_109, %c0_110, %c0_111] : memref<3x3x3x16x16xbf16, #tpu.memory_space<vmem>>, vector<1x1x1x16x16xbf16>
    %92 = vector.shape_cast %91 : vector<1x1x1x16x16xbf16> to vector<16x16xbf16>
    %cst_112 = arith.constant dense<0.000000e+00> : vector<16x128xf32>
    %93 = tpu.matmul %92, %90, %cst_112 {dimension_numbers = #tpu.dot_dimension_numbers<[1], [0], [0], [1], [0, 0, 1, 1], [], []>} : vector<16x16xbf16>, vector<16x128xbf16>, vector<16x128xf32> -> vector<16x128xf32>
    %94 = arith.addf %89, %93 : vector<16x128xf32>
    %c0_113 = arith.constant 0 : index
    %c0_114 = arith.constant 0 : index
    %c0_115 = arith.constant 0 : index
    %c0_116 = arith.constant 0 : index
    %95 = vector.load %arg4[%c0_113, %c0_114, %c0_115, %c0_116] : memref<1x1x16x256xbf16, #tpu.memory_space<vmem>>, vector<1x1x16x256xbf16>
    %96 = vector.shape_cast %95 : vector<1x1x16x256xbf16> to vector<16x256xbf16>
    %97 = vector.extract_strided_slice %96 {offsets = [0, 0], sizes = [16, 128], strides = [1, 1]} : vector<16x256xbf16> to vector<16x128xbf16>
    %c2_117 = arith.constant 2 : index
    %c0_118 = arith.constant 0 : index
    %c0_119 = arith.constant 0 : index
    %c0_120 = arith.constant 0 : index
    %c0_121 = arith.constant 0 : index
    %98 = vector.load %arg5[%c2_117, %c0_118, %c0_119, %c0_120, %c0_121] : memref<3x3x3x16x16xbf16, #tpu.memory_space<vmem>>, vector<1x1x1x16x16xbf16>
    %99 = vector.shape_cast %98 : vector<1x1x1x16x16xbf16> to vector<16x16xbf16>
    %cst_122 = arith.constant dense<0.000000e+00> : vector<16x128xf32>
    %100 = tpu.matmul %99, %97, %cst_122 {dimension_numbers = #tpu.dot_dimension_numbers<[1], [0], [0], [1], [0, 0, 1, 1], [], []>} : vector<16x16xbf16>, vector<16x128xbf16>, vector<16x128xf32> -> vector<16x128xf32>
    %101 = arith.addf %94, %100 : vector<16x128xf32>
    %102 = vector.extract_strided_slice %96 {offsets = [0, 1], sizes = [16, 128], strides = [1, 1]} : vector<16x256xbf16> to vector<16x128xbf16>
    %c2_123 = arith.constant 2 : index
    %c0_124 = arith.constant 0 : index
    %c1_125 = arith.constant 1 : index
    %c0_126 = arith.constant 0 : index
    %c0_127 = arith.constant 0 : index
    %103 = vector.load %arg5[%c2_123, %c0_124, %c1_125, %c0_126, %c0_127] : memref<3x3x3x16x16xbf16, #tpu.memory_space<vmem>>, vector<1x1x1x16x16xbf16>
    %104 = vector.shape_cast %103 : vector<1x1x1x16x16xbf16> to vector<16x16xbf16>
    %cst_128 = arith.constant dense<0.000000e+00> : vector<16x128xf32>
    %105 = tpu.matmul %104, %102, %cst_128 {dimension_numbers = #tpu.dot_dimension_numbers<[1], [0], [0], [1], [0, 0, 1, 1], [], []>} : vector<16x16xbf16>, vector<16x128xbf16>, vector<16x128xf32> -> vector<16x128xf32>
    %106 = arith.addf %101, %105 : vector<16x128xf32>
    %107 = vector.extract_strided_slice %96 {offsets = [0, 2], sizes = [16, 128], strides = [1, 1]} : vector<16x256xbf16> to vector<16x128xbf16>
    %c2_129 = arith.constant 2 : index
    %c0_130 = arith.constant 0 : index
    %c2_131 = arith.constant 2 : index
    %c0_132 = arith.constant 0 : index
    %c0_133 = arith.constant 0 : index
    %108 = vector.load %arg5[%c2_129, %c0_130, %c2_131, %c0_132, %c0_133] : memref<3x3x3x16x16xbf16, #tpu.memory_space<vmem>>, vector<1x1x1x16x16xbf16>
    %109 = vector.shape_cast %108 : vector<1x1x1x16x16xbf16> to vector<16x16xbf16>
    %cst_134 = arith.constant dense<0.000000e+00> : vector<16x128xf32>
    %110 = tpu.matmul %109, %107, %cst_134 {dimension_numbers = #tpu.dot_dimension_numbers<[1], [0], [0], [1], [0, 0, 1, 1], [], []>} : vector<16x16xbf16>, vector<16x128xbf16>, vector<16x128xf32> -> vector<16x128xf32>
    %111 = arith.addf %106, %110 : vector<16x128xf32>
    %112 = vector.extract_strided_slice %96 {offsets = [0, 10], sizes = [16, 128], strides = [1, 1]} : vector<16x256xbf16> to vector<16x128xbf16>
    %c2_135 = arith.constant 2 : index
    %c1_136 = arith.constant 1 : index
    %c0_137 = arith.constant 0 : index
    %c0_138 = arith.constant 0 : index
    %c0_139 = arith.constant 0 : index
    %113 = vector.load %arg5[%c2_135, %c1_136, %c0_137, %c0_138, %c0_139] : memref<3x3x3x16x16xbf16, #tpu.memory_space<vmem>>, vector<1x1x1x16x16xbf16>
    %114 = vector.shape_cast %113 : vector<1x1x1x16x16xbf16> to vector<16x16xbf16>
    %cst_140 = arith.constant dense<0.000000e+00> : vector<16x128xf32>
    %115 = tpu.matmul %114, %112, %cst_140 {dimension_numbers = #tpu.dot_dimension_numbers<[1], [0], [0], [1], [0, 0, 1, 1], [], []>} : vector<16x16xbf16>, vector<16x128xbf16>, vector<16x128xf32> -> vector<16x128xf32>
    %116 = arith.addf %111, %115 : vector<16x128xf32>
    %117 = vector.extract_strided_slice %96 {offsets = [0, 11], sizes = [16, 128], strides = [1, 1]} : vector<16x256xbf16> to vector<16x128xbf16>
    %c2_141 = arith.constant 2 : index
    %c1_142 = arith.constant 1 : index
    %c1_143 = arith.constant 1 : index
    %c0_144 = arith.constant 0 : index
    %c0_145 = arith.constant 0 : index
    %118 = vector.load %arg5[%c2_141, %c1_142, %c1_143, %c0_144, %c0_145] : memref<3x3x3x16x16xbf16, #tpu.memory_space<vmem>>, vector<1x1x1x16x16xbf16>
    %119 = vector.shape_cast %118 : vector<1x1x1x16x16xbf16> to vector<16x16xbf16>
    %cst_146 = arith.constant dense<0.000000e+00> : vector<16x128xf32>
    %120 = tpu.matmul %119, %117, %cst_146 {dimension_numbers = #tpu.dot_dimension_numbers<[1], [0], [0], [1], [0, 0, 1, 1], [], []>} : vector<16x16xbf16>, vector<16x128xbf16>, vector<16x128xf32> -> vector<16x128xf32>
    %121 = arith.addf %116, %120 : vector<16x128xf32>
    %122 = vector.extract_strided_slice %96 {offsets = [0, 12], sizes = [16, 128], strides = [1, 1]} : vector<16x256xbf16> to vector<16x128xbf16>
    %c2_147 = arith.constant 2 : index
    %c1_148 = arith.constant 1 : index
    %c2_149 = arith.constant 2 : index
    %c0_150 = arith.constant 0 : index
    %c0_151 = arith.constant 0 : index
    %123 = vector.load %arg5[%c2_147, %c1_148, %c2_149, %c0_150, %c0_151] : memref<3x3x3x16x16xbf16, #tpu.memory_space<vmem>>, vector<1x1x1x16x16xbf16>
    %124 = vector.shape_cast %123 : vector<1x1x1x16x16xbf16> to vector<16x16xbf16>
    %cst_152 = arith.constant dense<0.000000e+00> : vector<16x128xf32>
    %125 = tpu.matmul %124, %122, %cst_152 {dimension_numbers = #tpu.dot_dimension_numbers<[1], [0], [0], [1], [0, 0, 1, 1], [], []>} : vector<16x16xbf16>, vector<16x128xbf16>, vector<16x128xf32> -> vector<16x128xf32>
    %126 = arith.addf %121, %125 : vector<16x128xf32>
    %127 = vector.extract_strided_slice %96 {offsets = [0, 20], sizes = [16, 128], strides = [1, 1]} : vector<16x256xbf16> to vector<16x128xbf16>
    %c2_153 = arith.constant 2 : index
    %c2_154 = arith.constant 2 : index
    %c0_155 = arith.constant 0 : index
    %c0_156 = arith.constant 0 : index
    %c0_157 = arith.constant 0 : index
    %128 = vector.load %arg5[%c2_153, %c2_154, %c0_155, %c0_156, %c0_157] : memref<3x3x3x16x16xbf16, #tpu.memory_space<vmem>>, vector<1x1x1x16x16xbf16>
    %129 = vector.shape_cast %128 : vector<1x1x1x16x16xbf16> to vector<16x16xbf16>
    %cst_158 = arith.constant dense<0.000000e+00> : vector<16x128xf32>
    %130 = tpu.matmul %129, %127, %cst_158 {dimension_numbers = #tpu.dot_dimension_numbers<[1], [0], [0], [1], [0, 0, 1, 1], [], []>} : vector<16x16xbf16>, vector<16x128xbf16>, vector<16x128xf32> -> vector<16x128xf32>
    %131 = arith.addf %126, %130 : vector<16x128xf32>
    %132 = vector.extract_strided_slice %96 {offsets = [0, 21], sizes = [16, 128], strides = [1, 1]} : vector<16x256xbf16> to vector<16x128xbf16>
    %c2_159 = arith.constant 2 : index
    %c2_160 = arith.constant 2 : index
    %c1_161 = arith.constant 1 : index
    %c0_162 = arith.constant 0 : index
    %c0_163 = arith.constant 0 : index
    %133 = vector.load %arg5[%c2_159, %c2_160, %c1_161, %c0_162, %c0_163] : memref<3x3x3x16x16xbf16, #tpu.memory_space<vmem>>, vector<1x1x1x16x16xbf16>
    %134 = vector.shape_cast %133 : vector<1x1x1x16x16xbf16> to vector<16x16xbf16>
    %cst_164 = arith.constant dense<0.000000e+00> : vector<16x128xf32>
    %135 = tpu.matmul %134, %132, %cst_164 {dimension_numbers = #tpu.dot_dimension_numbers<[1], [0], [0], [1], [0, 0, 1, 1], [], []>} : vector<16x16xbf16>, vector<16x128xbf16>, vector<16x128xf32> -> vector<16x128xf32>
    %136 = arith.addf %131, %135 : vector<16x128xf32>
    %137 = vector.extract_strided_slice %96 {offsets = [0, 22], sizes = [16, 128], strides = [1, 1]} : vector<16x256xbf16> to vector<16x128xbf16>
    %c2_165 = arith.constant 2 : index
    %c2_166 = arith.constant 2 : index
    %c2_167 = arith.constant 2 : index
    %c0_168 = arith.constant 0 : index
    %c0_169 = arith.constant 0 : index
    %138 = vector.load %arg5[%c2_165, %c2_166, %c2_167, %c0_168, %c0_169] : memref<3x3x3x16x16xbf16, #tpu.memory_space<vmem>>, vector<1x1x1x16x16xbf16>
    %139 = vector.shape_cast %138 : vector<1x1x1x16x16xbf16> to vector<16x16xbf16>
    %cst_170 = arith.constant dense<0.000000e+00> : vector<16x128xf32>
    %140 = tpu.matmul %139, %137, %cst_170 {dimension_numbers = #tpu.dot_dimension_numbers<[1], [0], [0], [1], [0, 0, 1, 1], [], []>} : vector<16x16xbf16>, vector<16x128xbf16>, vector<16x128xf32> -> vector<16x128xf32>
    %141 = arith.addf %136, %140 : vector<16x128xf32>
    %c0_171 = arith.constant 0 : index
    %c0_172 = arith.constant 0 : index
    %142 = vector.load %arg6[%c0_171, %c0_172] : memref<16x1xf32, #tpu.memory_space<vmem>>, vector<16x1xf32>
    %143 = vector.broadcast %142 : vector<16x1xf32> to vector<16x128xf32>
    %144 = arith.addf %141, %143 : vector<16x128xf32>
    %c0_173 = arith.constant 0 : index
    %c0_174 = arith.constant 0 : index
    %145 = vector.load %arg7[%c0_173, %c0_174] : memref<1x128xf32, #tpu.memory_space<vmem>>, vector<1x128xf32>
    %146 = vector.broadcast %145 : vector<1x128xf32> to vector<16x128xf32>
    %147 = arith.mulf %144, %146 : vector<16x128xf32>
    %cst_175 = arith.constant dense<0.000000e+00> : vector<16xf32>
    %148 = vector.multi_reduction <add>, %147, %cst_175 [1] : vector<16x128xf32> to vector<16xf32>
    %149 = vector.shape_cast %148 : vector<16xf32> to vector<16x1xf32>
    %c0_176 = arith.constant 0 : index
    %c0_177 = arith.constant 0 : index
    %c0_178 = arith.constant 0 : index
    %c0_179 = arith.constant 0 : index
    %150 = vector.load %arg9[%c0_176, %c0_177, %c0_178, %c0_179] : memref<1x1x16x1xf32, #tpu.memory_space<vmem>>, vector<1x1x16x1xf32>
    %151 = vector.shape_cast %150 : vector<1x1x16x1xf32> to vector<16x1xf32>
    %152 = vector.shape_cast %149 : vector<16x1xf32> to vector<1x1x16x1xf32>
    tpu.vector_store %arg9[%c0_176, %c0_177, %c0_178, %c0_179], %152 {strides = array<i32>} : memref<1x1x16x1xf32, #tpu.memory_space<vmem>>, vector<1x1x16x1xf32>,
    %153 = arith.mulf %144, %144 : vector<16x128xf32>
    %154 = vector.broadcast %145 : vector<1x128xf32> to vector<16x128xf32>
    %155 = arith.mulf %153, %154 : vector<16x128xf32>
    %cst_180 = arith.constant dense<0.000000e+00> : vector<16xf32>
    %156 = vector.multi_reduction <add>, %155, %cst_180 [1] : vector<16x128xf32> to vector<16xf32>
    %157 = vector.shape_cast %156 : vector<16xf32> to vector<16x1xf32>
    %c0_181 = arith.constant 0 : index
    %c0_182 = arith.constant 0 : index
    %c0_183 = arith.constant 0 : index
    %c0_184 = arith.constant 0 : index
    %158 = vector.load %arg10[%c0_181, %c0_182, %c0_183, %c0_184] : memref<1x1x16x1xf32, #tpu.memory_space<vmem>>, vector<1x1x16x1xf32>
    %159 = vector.shape_cast %158 : vector<1x1x16x1xf32> to vector<16x1xf32>
    %160 = vector.shape_cast %157 : vector<16x1xf32> to vector<1x1x16x1xf32>
    tpu.vector_store %arg10[%c0_181, %c0_182, %c0_183, %c0_184], %160 {strides = array<i32>} : memref<1x1x16x1xf32, #tpu.memory_space<vmem>>, vector<1x1x16x1xf32>,
    %161 = arith.truncf %144 : vector<16x128xf32> to vector<16x128xbf16>
    %c0_185 = arith.constant 0 : index
    %c0_186 = arith.constant 0 : index
    %c0_187 = arith.constant 0 : index
    %c0_188 = arith.constant 0 : index
    %162 = vector.load %arg8[%c0_185, %c0_186, %c0_187, %c0_188] : memref<1x1x16x128xbf16, #tpu.memory_space<vmem>>, vector<1x1x16x128xbf16>
    %163 = vector.shape_cast %162 : vector<1x1x16x128xbf16> to vector<16x128xbf16>
    %164 = vector.shape_cast %161 : vector<16x128xbf16> to vector<1x1x16x128xbf16>
    tpu.vector_store %arg8[%c0_185, %c0_186, %c0_187, %c0_188], %164 {strides = array<i32>} : memref<1x1x16x128xbf16, #tpu.memory_space<vmem>>, vector<1x1x16x128xbf16>,
    return
  }
  func.func @transform_0(%arg0: i32, %arg1: i32) -> (i32, i32, i32, i32) {
    %c0_i32 = arith.constant 0 : i32
    %0 = arith.addi %arg1, %c0_i32 : i32
    %c0_i32_0 = arith.constant 0 : i32
    %c0_i32_1 = arith.constant 0 : i32
    %c0_i32_2 = arith.constant 0 : i32
    return %arg0, %0, %c0_i32_0, %c0_i32_1 : i32, i32, i32, i32
  }
  func.func @transform_1(%arg0: i32, %arg1: i32) -> (i32, i32, i32, i32) {
    %c1_i32 = arith.constant 1 : i32
    %0 = arith.addi %arg1, %c1_i32 : i32
    %c0_i32 = arith.constant 0 : i32
    %c0_i32_0 = arith.constant 0 : i32
    %c0_i32_1 = arith.constant 0 : i32
    return %arg0, %0, %c0_i32, %c0_i32_0 : i32, i32, i32, i32
  }
  func.func @transform_2(%arg0: i32, %arg1: i32) -> (i32, i32, i32, i32) {
    %c2_i32 = arith.constant 2 : i32
    %0 = arith.addi %arg1, %c2_i32 : i32
    %c0_i32 = arith.constant 0 : i32
    %c0_i32_0 = arith.constant 0 : i32
    %c0_i32_1 = arith.constant 0 : i32
    return %arg0, %0, %c0_i32, %c0_i32_0 : i32, i32, i32, i32
  }
  func.func @transform_3(%arg0: i32, %arg1: i32) -> (i32, i32, i32, i32, i32) {
    %c0_i32 = arith.constant 0 : i32
    %c0_i32_0 = arith.constant 0 : i32
    %c0_i32_1 = arith.constant 0 : i32
    %c0_i32_2 = arith.constant 0 : i32
    %c0_i32_3 = arith.constant 0 : i32
    %c0_i32_4 = arith.constant 0 : i32
    return %c0_i32, %c0_i32_0, %c0_i32_1, %c0_i32_2, %c0_i32_3 : i32, i32, i32, i32, i32
  }
  func.func @transform_4(%arg0: i32, %arg1: i32) -> (i32, i32) {
    %c0_i32 = arith.constant 0 : i32
    %c0_i32_0 = arith.constant 0 : i32
    %c0_i32_1 = arith.constant 0 : i32
    return %c0_i32, %c0_i32_0 : i32, i32
  }
  func.func @transform_5(%arg0: i32, %arg1: i32) -> (i32, i32) {
    %c0_i32 = arith.constant 0 : i32
    %c0_i32_0 = arith.constant 0 : i32
    %c0_i32_1 = arith.constant 0 : i32
    return %c0_i32, %c0_i32_0 : i32, i32
  }
  func.func @transform_6(%arg0: i32, %arg1: i32) -> (i32, i32, i32, i32) {
    %c0_i32 = arith.constant 0 : i32
    %c0_i32_0 = arith.constant 0 : i32
    %c0_i32_1 = arith.constant 0 : i32
    return %arg0, %arg1, %c0_i32, %c0_i32_0 : i32, i32, i32, i32
  }
  func.func @transform_7(%arg0: i32, %arg1: i32) -> (i32, i32, i32, i32) {
    %c0_i32 = arith.constant 0 : i32
    %c0_i32_0 = arith.constant 0 : i32
    %c0_i32_1 = arith.constant 0 : i32
    return %arg0, %arg1, %c0_i32, %c0_i32_0 : i32, i32, i32, i32
  }
  func.func @transform_8(%arg0: i32, %arg1: i32) -> (i32, i32, i32, i32) {
    %c0_i32 = arith.constant 0 : i32
    %c0_i32_0 = arith.constant 0 : i32
    %c0_i32_1 = arith.constant 0 : i32
    return %arg0, %arg1, %c0_i32, %c0_i32_0 : i32, i32, i32, i32
  }
}

module attributes {stable_mosaic.version = 11 : i64} {
  func.func @_pw_add_kernel(%arg0: i32, %arg1: i32, %arg2: memref<1x1x16x128xbf16, #tpu.memory_space<vmem>>, %arg3: memref<1x1x16x256xbf16, #tpu.memory_space<vmem>>, %arg4: memref<1x16x1xf32, #tpu.memory_space<vmem>>, %arg5: memref<1x16x1xf32, #tpu.memory_space<vmem>>, %arg6: memref<16x1xf32, #tpu.memory_space<vmem>>, %arg7: memref<16x1xf32, #tpu.memory_space<vmem>>, %arg8: memref<32x16xbf16, #tpu.memory_space<vmem>>, %arg9: memref<32x1xf32, #tpu.memory_space<vmem>>, %arg10: memref<16x32xbf16, #tpu.memory_space<vmem>>, %arg11: memref<16x1xf32, #tpu.memory_space<vmem>>, %arg12: memref<1x1x16x128xf32, #tpu.memory_space<vmem>>) attributes {dimension_semantics = [#tpu.dimension_semantics<parallel>, #tpu.dimension_semantics<parallel>], iteration_bounds = array<i64: 2, 8>, scalar_prefetch = 0 : i64, scratch_operands = 0 : i64, tpu.core_type = #tpu.core_type<tc>, window_params = [{transform_indices = @transform_0, window_bounds = array<i64: 1, 1, 16, 128>}, {transform_indices = @transform_1, window_bounds = array<i64: 1, 1, 16, 256>}, {transform_indices = @transform_2, window_bounds = array<i64: 1, 16, 1>}, {transform_indices = @transform_3, window_bounds = array<i64: 1, 16, 1>}, {pipeline_mode = #tpu.pipeline_mode<synchronous>, transform_indices = @transform_4, window_bounds = array<i64: 16, 1>}, {pipeline_mode = #tpu.pipeline_mode<synchronous>, transform_indices = @transform_5, window_bounds = array<i64: 16, 1>}, {pipeline_mode = #tpu.pipeline_mode<synchronous>, transform_indices = @transform_6, window_bounds = array<i64: 32, 16>}, {pipeline_mode = #tpu.pipeline_mode<synchronous>, transform_indices = @transform_7, window_bounds = array<i64: 32, 1>}, {pipeline_mode = #tpu.pipeline_mode<synchronous>, transform_indices = @transform_8, window_bounds = array<i64: 16, 32>}, {pipeline_mode = #tpu.pipeline_mode<synchronous>, transform_indices = @transform_9, window_bounds = array<i64: 16, 1>}, {transform_indices = @transform_10, window_bounds = array<i64: 1, 1, 16, 128>}]} {
    %c0 = arith.constant 0 : index
    %c0_0 = arith.constant 0 : index
    %c0_1 = arith.constant 0 : index
    %c0_2 = arith.constant 0 : index
    %0 = vector.load %arg2[%c0, %c0_0, %c0_1, %c0_2] : memref<1x1x16x128xbf16, #tpu.memory_space<vmem>>, vector<1x1x16x128xbf16>
    %1 = vector.shape_cast %0 : vector<1x1x16x128xbf16> to vector<16x128xbf16>
    %2 = arith.extf %1 : vector<16x128xbf16> to vector<16x128xf32>
    %c0_3 = arith.constant 0 : index
    %c0_4 = arith.constant 0 : index
    %c0_5 = arith.constant 0 : index
    %3 = vector.load %arg4[%c0_3, %c0_4, %c0_5] : memref<1x16x1xf32, #tpu.memory_space<vmem>>, vector<1x16x1xf32>
    %4 = vector.shape_cast %3 : vector<1x16x1xf32> to vector<16x1xf32>
    %c0_6 = arith.constant 0 : index
    %c0_7 = arith.constant 0 : index
    %c0_8 = arith.constant 0 : index
    %5 = vector.load %arg5[%c0_6, %c0_7, %c0_8] : memref<1x16x1xf32, #tpu.memory_space<vmem>>, vector<1x16x1xf32>
    %6 = vector.shape_cast %5 : vector<1x16x1xf32> to vector<16x1xf32>
    %c0_9 = arith.constant 0 : index
    %c0_10 = arith.constant 0 : index
    %7 = vector.load %arg6[%c0_9, %c0_10] : memref<16x1xf32, #tpu.memory_space<vmem>>, vector<16x1xf32>
    %c0_11 = arith.constant 0 : index
    %c0_12 = arith.constant 0 : index
    %8 = vector.load %arg7[%c0_11, %c0_12] : memref<16x1xf32, #tpu.memory_space<vmem>>, vector<16x1xf32>
    %c0_13 = arith.constant 0 : index
    %c0_14 = arith.constant 0 : index
    %9 = vector.load %arg8[%c0_13, %c0_14] : memref<32x16xbf16, #tpu.memory_space<vmem>>, vector<32x16xbf16>
    %c0_15 = arith.constant 0 : index
    %c0_16 = arith.constant 0 : index
    %10 = vector.load %arg9[%c0_15, %c0_16] : memref<32x1xf32, #tpu.memory_space<vmem>>, vector<32x1xf32>
    %c0_17 = arith.constant 0 : index
    %c0_18 = arith.constant 0 : index
    %11 = vector.load %arg10[%c0_17, %c0_18] : memref<16x32xbf16, #tpu.memory_space<vmem>>, vector<16x32xbf16>
    %c0_19 = arith.constant 0 : index
    %c0_20 = arith.constant 0 : index
    %12 = vector.load %arg11[%c0_19, %c0_20] : memref<16x1xf32, #tpu.memory_space<vmem>>, vector<16x1xf32>
    %13 = vector.broadcast %4 : vector<16x1xf32> to vector<16x128xf32>
    %14 = arith.subf %2, %13 : vector<16x128xf32>
    %15 = vector.broadcast %6 : vector<16x1xf32> to vector<16x128xf32>
    %16 = arith.mulf %14, %15 : vector<16x128xf32>
    %17 = vector.broadcast %7 : vector<16x1xf32> to vector<16x128xf32>
    %18 = arith.mulf %16, %17 : vector<16x128xf32>
    %19 = vector.broadcast %8 : vector<16x1xf32> to vector<16x128xf32>
    %20 = arith.addf %18, %19 : vector<16x128xf32>
    %21 = arith.truncf %20 : vector<16x128xf32> to vector<16x128xbf16>
    %cst = arith.constant dense<0.000000e+00> : vector<32x128xf32>
    %22 = tpu.matmul %9, %21, %cst {dimension_numbers = #tpu.dot_dimension_numbers<[1], [0], [0], [1], [0, 0, 1, 1], [], []>} : vector<32x16xbf16>, vector<16x128xbf16>, vector<32x128xf32> -> vector<32x128xf32>
    %23 = vector.broadcast %10 : vector<32x1xf32> to vector<32x128xf32>
    %24 = arith.addf %22, %23 : vector<32x128xf32>
    %cst_21 = arith.constant 0.707106769 : f32
    %25 = vector.broadcast %cst_21 : f32 to vector<32x128xf32>
    %26 = arith.mulf %24, %25 : vector<32x128xf32>
    %27 = math.absf %26 : vector<32x128xf32>
    %cst_22 = arith.constant 0.327591091 : f32
    %28 = vector.broadcast %cst_22 : f32 to vector<32x128xf32>
    %29 = arith.mulf %28, %27 : vector<32x128xf32>
    %cst_23 = arith.constant 1.000000e+00 : f32
    %30 = vector.broadcast %cst_23 : f32 to vector<32x128xf32>
    %31 = arith.addf %30, %29 : vector<32x128xf32>
    %32 = tpu.reciprocal %31 {approx = true} : vector<32x128xf32> -> vector<32x128xf32>
    %cst_24 = arith.constant 1.06140542 : f32
    %33 = vector.broadcast %cst_24 : f32 to vector<32x128xf32>
    %34 = arith.mulf %33, %32 : vector<32x128xf32>
    %cst_25 = arith.constant -1.45315206 : f32
    %35 = vector.broadcast %cst_25 : f32 to vector<32x128xf32>
    %36 = arith.addf %34, %35 : vector<32x128xf32>
    %37 = arith.mulf %36, %32 : vector<32x128xf32>
    %cst_26 = arith.constant 1.42141378 : f32
    %38 = vector.broadcast %cst_26 : f32 to vector<32x128xf32>
    %39 = arith.addf %37, %38 : vector<32x128xf32>
    %40 = arith.mulf %39, %32 : vector<32x128xf32>
    %cst_27 = arith.constant -0.284496725 : f32
    %41 = vector.broadcast %cst_27 : f32 to vector<32x128xf32>
    %42 = arith.addf %40, %41 : vector<32x128xf32>
    %43 = arith.mulf %42, %32 : vector<32x128xf32>
    %cst_28 = arith.constant 0.254829586 : f32
    %44 = vector.broadcast %cst_28 : f32 to vector<32x128xf32>
    %45 = arith.addf %43, %44 : vector<32x128xf32>
    %46 = arith.mulf %45, %32 : vector<32x128xf32>
    %cst_29 = arith.constant 0.000000e+00 : f32
    %47 = vector.broadcast %cst_29 : f32 to vector<32x128xf32>
    %48 = arith.subf %47, %27 : vector<32x128xf32>
    %49 = arith.mulf %48, %27 : vector<32x128xf32>
    %50 = math.exp %49 : vector<32x128xf32>
    %51 = arith.mulf %46, %50 : vector<32x128xf32>
    %cst_30 = arith.constant 1.000000e+00 : f32
    %52 = vector.broadcast %cst_30 : f32 to vector<32x128xf32>
    %53 = arith.subf %52, %51 : vector<32x128xf32>
    %cst_31 = arith.constant 0.000000e+00 : f32
    %54 = vector.broadcast %cst_31 : f32 to vector<32x128xf32>
    %55 = arith.cmpf oge, %26, %54 : vector<32x128xf32>
    %cst_32 = arith.constant 0.000000e+00 : f32
    %56 = vector.broadcast %cst_32 : f32 to vector<32x128xf32>
    %57 = arith.subf %56, %53 : vector<32x128xf32>
    %58 = arith.select %55, %53, %57 : vector<32x128xi1>, vector<32x128xf32>
    %cst_33 = arith.constant 5.000000e-01 : f32
    %59 = vector.broadcast %cst_33 : f32 to vector<32x128xf32>
    %60 = arith.mulf %59, %24 : vector<32x128xf32>
    %cst_34 = arith.constant 1.000000e+00 : f32
    %61 = vector.broadcast %cst_34 : f32 to vector<32x128xf32>
    %62 = arith.addf %61, %58 : vector<32x128xf32>
    %63 = arith.mulf %60, %62 : vector<32x128xf32>
    %64 = arith.truncf %63 : vector<32x128xf32> to vector<32x128xbf16>
    %cst_35 = arith.constant dense<0.000000e+00> : vector<16x128xf32>
    %65 = tpu.matmul %11, %64, %cst_35 {dimension_numbers = #tpu.dot_dimension_numbers<[1], [0], [0], [1], [0, 0, 1, 1], [], []>} : vector<16x32xbf16>, vector<32x128xbf16>, vector<16x128xf32> -> vector<16x128xf32>
    %66 = vector.broadcast %12 : vector<16x1xf32> to vector<16x128xf32>
    %67 = arith.addf %65, %66 : vector<16x128xf32>
    %c0_36 = arith.constant 0 : index
    %c0_37 = arith.constant 0 : index
    %c0_38 = arith.constant 0 : index
    %c11 = arith.constant 11 : index
    %68 = vector.load %arg3[%c0_36, %c0_37, %c0_38, %c11] : memref<1x1x16x256xbf16, #tpu.memory_space<vmem>>, vector<1x1x16x128xbf16>
    %69 = vector.shape_cast %68 : vector<1x1x16x128xbf16> to vector<16x128xbf16>
    %70 = arith.extf %69 : vector<16x128xbf16> to vector<16x128xf32>
    %71 = arith.addf %67, %70 : vector<16x128xf32>
    %c0_39 = arith.constant 0 : index
    %c0_40 = arith.constant 0 : index
    %c0_41 = arith.constant 0 : index
    %c0_42 = arith.constant 0 : index
    %72 = vector.load %arg12[%c0_39, %c0_40, %c0_41, %c0_42] : memref<1x1x16x128xf32, #tpu.memory_space<vmem>>, vector<1x1x16x128xf32>
    %73 = vector.shape_cast %72 : vector<1x1x16x128xf32> to vector<16x128xf32>
    %74 = vector.shape_cast %71 : vector<16x128xf32> to vector<1x1x16x128xf32>
    tpu.vector_store %arg12[%c0_39, %c0_40, %c0_41, %c0_42], %74 {strides = array<i32>} : memref<1x1x16x128xf32, #tpu.memory_space<vmem>>, vector<1x1x16x128xf32>,
    return
  }
  func.func @transform_0(%arg0: i32, %arg1: i32) -> (i32, i32, i32, i32) {
    %c0_i32 = arith.constant 0 : i32
    %c0_i32_0 = arith.constant 0 : i32
    %c0_i32_1 = arith.constant 0 : i32
    return %arg0, %arg1, %c0_i32, %c0_i32_0 : i32, i32, i32, i32
  }
  func.func @transform_1(%arg0: i32, %arg1: i32) -> (i32, i32, i32, i32) {
    %c1_i32 = arith.constant 1 : i32
    %0 = arith.addi %arg1, %c1_i32 : i32
    %c0_i32 = arith.constant 0 : i32
    %c0_i32_0 = arith.constant 0 : i32
    %c0_i32_1 = arith.constant 0 : i32
    return %arg0, %0, %c0_i32, %c0_i32_0 : i32, i32, i32, i32
  }
  func.func @transform_2(%arg0: i32, %arg1: i32) -> (i32, i32, i32) {
    %c0_i32 = arith.constant 0 : i32
    %c0_i32_0 = arith.constant 0 : i32
    %c0_i32_1 = arith.constant 0 : i32
    return %arg0, %c0_i32, %c0_i32_0 : i32, i32, i32
  }
  func.func @transform_3(%arg0: i32, %arg1: i32) -> (i32, i32, i32) {
    %c0_i32 = arith.constant 0 : i32
    %c0_i32_0 = arith.constant 0 : i32
    %c0_i32_1 = arith.constant 0 : i32
    return %arg0, %c0_i32, %c0_i32_0 : i32, i32, i32
  }
  func.func @transform_4(%arg0: i32, %arg1: i32) -> (i32, i32) {
    %c0_i32 = arith.constant 0 : i32
    %c0_i32_0 = arith.constant 0 : i32
    %c0_i32_1 = arith.constant 0 : i32
    return %c0_i32, %c0_i32_0 : i32, i32
  }
  func.func @transform_5(%arg0: i32, %arg1: i32) -> (i32, i32) {
    %c0_i32 = arith.constant 0 : i32
    %c0_i32_0 = arith.constant 0 : i32
    %c0_i32_1 = arith.constant 0 : i32
    return %c0_i32, %c0_i32_0 : i32, i32
  }
  func.func @transform_6(%arg0: i32, %arg1: i32) -> (i32, i32) {
    %c0_i32 = arith.constant 0 : i32
    %c0_i32_0 = arith.constant 0 : i32
    %c0_i32_1 = arith.constant 0 : i32
    return %c0_i32, %c0_i32_0 : i32, i32
  }
  func.func @transform_7(%arg0: i32, %arg1: i32) -> (i32, i32) {
    %c0_i32 = arith.constant 0 : i32
    %c0_i32_0 = arith.constant 0 : i32
    %c0_i32_1 = arith.constant 0 : i32
    return %c0_i32, %c0_i32_0 : i32, i32
  }
  func.func @transform_8(%arg0: i32, %arg1: i32) -> (i32, i32) {
    %c0_i32 = arith.constant 0 : i32
    %c0_i32_0 = arith.constant 0 : i32
    %c0_i32_1 = arith.constant 0 : i32
    return %c0_i32, %c0_i32_0 : i32, i32
  }
  func.func @transform_9(%arg0: i32, %arg1: i32) -> (i32, i32) {
    %c0_i32 = arith.constant 0 : i32
    %c0_i32_0 = arith.constant 0 : i32
    %c0_i32_1 = arith.constant 0 : i32
    return %c0_i32, %c0_i32_0 : i32, i32
  }
  func.func @transform_10(%arg0: i32, %arg1: i32) -> (i32, i32, i32, i32) {
    %c0_i32 = arith.constant 0 : i32
    %c0_i32_0 = arith.constant 0 : i32
    %c0_i32_1 = arith.constant 0 : i32
    return %arg0, %arg1, %c0_i32, %c0_i32_0 : i32, i32, i32, i32
  }
}

</mosaic_0001>

<llo_original>
// kernel: down_forward.4
$region0: #{down_forward.4}
  #allocation0 [shape = 'u32[]', space=smem, size = 0x4, offset = 0x4, fixed_abs, tag = 'smem constant byte address 0x4 - core index']
  #allocation1 [shape = 'u32[144,128]{1,0:T(1,128)}', space=vmem, size = 0x12000, scoped, tag = 'internal scratch']
  %s0 = inlined_call_operand.vmem [shape: bf16[2,18,4,8,256], index: 0, kind: input, shape index: {}, may-alias: {0,1}]
  %s1 = inlined_call_operand.vmem [shape: bf16[2,18,4,8,256], index: 1, kind: input, shape index: {}, may-alias: {0,1}]
  %s2 = inlined_call_operand.vmem [shape: bf16[3,3,3,8,8], index: 2, kind: input, shape index: {}]
  %s3 = inlined_call_operand.vmem [shape: f32[8,1], index: 3, kind: input, shape index: {}]
  %s4 = inlined_call_operand.vmem [shape: f32[1,128], index: 4, kind: input, shape index: {}]
  %s5 = inlined_call_operand.vmem [shape: bf16[2,8,8,128], index: 5, kind: output, shape index: {0}]
  %s6 = inlined_call_operand.vmem [shape: f32[2,8,8,1], index: 6, kind: output, shape index: {1}]
  %s7 = inlined_call_operand.vmem [shape: f32[2,8,8,1], index: 7, kind: output, shape index: {2}]
  %8 = xla_tuple %s5, %s6, %s7
  %s9 = sld [smem:[#allocation0]]
  $region69: #{down_forward.4} parent=0
    _
  %s11 = ssub.s32 1, %s9
  %s12 = scalar_select 0, %s11, %s9
  loop: start=0, step=1, limit=18
  $region2: #{down_forward.4} parent=0 // loop_pre_header
    _
  $region3: #{down_forward.4} parent=0 // loop_header
    %s14 = sphi 0, %s18
    %p15 = scmp.ge.s32.totalorder %s14, 18
    %s21 = sphi 0, %s33
    %s22 = sphi 0, %s29
    %s23 = sphi 0, %s21
    %s24 = sphi 0, %s22
    %s25 = sphi 0, %s23
    %s26 = sphi 0, %s24
    %s38 = sphi 0, %s40
    %s41 = sphi 0, %s38
    %s42 = sphi 0, %s41
    %s58 = sphi 0, %s42
    %s70 = sphi 0, %s72
    %s73 = sphi 0, %s70
    %s74 = sphi 0, %s73
    %s90 = sphi 0, %s74
    %s94 = sphi 0, %s94
    %s96 = sphi 0, %s94
    %s97 = sphi 0, %s96
    %s111 = sphi 0, %s97
    %s115 = sphi 0, %s115
    %s117 = sphi 0, %s115
    %s118 = sphi 0, %s117
    %s132 = sphi 0, %s118
    %s136 = sphi 0, %s136
    %s138 = sphi 0, %s136
    %s139 = sphi 0, %s138
    %s153 = sphi 0, %s139
    %s161 = sphi 0, %s163
    %s164 = sphi 0, %s161
    %s165 = sphi 0, %s164
    %s181 = sphi 0, %s165
    %s189 = sphi 0, %s191
    %s192 = sphi 0, %s189
    %s193 = sphi 0, %s192
    %s209 = sphi 0, %s193
    %s217 = sphi 0, %s219
    %s220 = sphi 0, %s217
    %s221 = sphi 0, %s220
    %s237 = sphi 0, %s221
  $region4: #{down_forward.4} parent=0 // loop_header_branch
    %17 = sbr.rel (%p15) target = $region8
  $region5: #{down_forward.4} parent=0 // loop_body
    %s19 = ssub.s32 %s14, 1
    %s20 = ssub.s32 %s14, 2
    %s27 = sadd.s32 1, %s22
    %p28 = scmp.ge.s32.totalorder %s27, 8
    %s29 = scalar_select %p28, 0, %s27
    %s30 = sadd.s32 1, %s21
    %s31 = scalar_select %p28, %s30, %s21
    %p32 = scmp.ge.s32.totalorder %s31, 2
    %s33 = scalar_select %p32, 0, %s31
    %s34 = ssub.s32 %s21, %s33
    %s35 = ssub.s32 %s22, %s29
    %s36 = sor.u32 %s34, %s35
    %p37 = scmp.eq.s32.totalorder %s36, 0
    %s39 = sadd.s32 %s38, 1
    %s40 = scalar_select %p37, %s38, %s39
    %p43 = pneg %p37
    %p44 = scmp.eq.s32.totalorder %s14, 15
    %p45 = por %p43, %p44
    %p46 = scmp.ne.s32.totalorder %s38, %s41
    %p47 = scmp.eq.s32.totalorder %s14, 0
    %p48 = por %p46, %p47
    %p49 = scmp.ne.s32.totalorder %s38, %s41
    %p50 = scmp.eq.s32.totalorder %s19, 15
    %p51 = por %p49, %p50
    %p52 = scmp.ne.s32.totalorder %s41, %s42
    %p53 = scmp.eq.s32.totalorder %s19, 0
    %p54 = por %p52, %p53
    %p55 = scmp.ne.s32.totalorder %s41, %s42
    %p56 = scmp.eq.s32.totalorder %s20, 15
    %p57 = por %p55, %p56
    %p59 = scmp.ne.s32.totalorder %s42, %s58
    %p60 = scmp.eq.s32.totalorder %s20, 0
    %p61 = por %p59, %p60
    %s62 = smul.u32 %s22, 2
    %s63 = sadd.s32 %s62, 2
    %s64 = smul.u32 %s29, 2
    %s65 = sadd.s32 %s64, 2
    %s66 = ssub.s32 %s21, %s33
    %s67 = ssub.s32 %s63, %s65
    %s68 = sor.u32 %s66, %s67
    %p69 = scmp.eq.s32.totalorder %s68, 0
    %s71 = sadd.s32 %s70, 1
    %s72 = scalar_select %p69, %s70, %s71
    %p75 = pneg %p69
    %p76 = scmp.eq.s32.totalorder %s14, 15
    %p77 = por %p75, %p76
    %p78 = scmp.ne.s32.totalorder %s70, %s73
    %p79 = scmp.eq.s32.totalorder %s14, 0
    %p80 = por %p78, %p79
    %p81 = scmp.ne.s32.totalorder %s70, %s73
    %p82 = scmp.eq.s32.totalorder %s19, 15
    %p83 = por %p81, %p82
    %p84 = scmp.ne.s32.totalorder %s73, %s74
    %p85 = scmp.eq.s32.totalorder %s19, 0
    %p86 = por %p84, %p85
    %p87 = scmp.ne.s32.totalorder %s73, %s74
    %p88 = scmp.eq.s32.totalorder %s20, 15
    %p89 = por %p87, %p88
    %p91 = scmp.ne.s32.totalorder %s74, %s90
    %p92 = scmp.eq.s32.totalorder %s20, 0
    %p93 = por %p91, %p92
    %s95 = sadd.s32 %s94, 1
    %p98 = scmp.eq.s32.totalorder %s14, 15
    %p99 = scmp.ne.s32.totalorder %s94, %s96
    %p100 = scmp.eq.s32.totalorder %s14, 0
    %p101 = por %p99, %p100
    %p102 = scmp.ne.s32.totalorder %s94, %s96
    %p103 = scmp.eq.s32.totalorder %s19, 15
    %p104 = por %p102, %p103
    %p105 = scmp.ne.s32.totalorder %s96, %s97
    %p106 = scmp.eq.s32.totalorder %s19, 0
    %p107 = por %p105, %p106
    %p108 = scmp.ne.s32.totalorder %s96, %s97
    %p109 = scmp.eq.s32.totalorder %s20, 15
    %p110 = por %p108, %p109
    %p112 = scmp.ne.s32.totalorder %s97, %s111
    %p113 = scmp.eq.s32.totalorder %s20, 0
    %p114 = por %p112, %p113
    %s116 = sadd.s32 %s115, 1
    %p119 = scmp.eq.s32.totalorder %s14, 15
    %p120 = scmp.ne.s32.totalorder %s115, %s117
    %p121 = scmp.eq.s32.totalorder %s14, 0
    %p122 = por %p120, %p121
    %p123 = scmp.ne.s32.totalorder %s115, %s117
    %p124 = scmp.eq.s32.totalorder %s19, 15
    %p125 = por %p123, %p124
    %p126 = scmp.ne.s32.totalorder %s117, %s118
    %p127 = scmp.eq.s32.totalorder %s19, 0
    %p128 = por %p126, %p127
    %p129 = scmp.ne.s32.totalorder %s117, %s118
    %p130 = scmp.eq.s32.totalorder %s20, 15
    %p131 = por %p129, %p130
    %p133 = scmp.ne.s32.totalorder %s118, %s132
    %p134 = scmp.eq.s32.totalorder %s20, 0
    %p135 = por %p133, %p134
    %s137 = sadd.s32 %s136, 1
    %p140 = scmp.eq.s32.totalorder %s14, 15
    %p141 = scmp.ne.s32.totalorder %s136, %s138
    %p142 = scmp.eq.s32.totalorder %s14, 0
    %p143 = por %p141, %p142
    %p144 = scmp.ne.s32.totalorder %s136, %s138
    %p145 = scmp.eq.s32.totalorder %s19, 15
    %p146 = por %p144, %p145
    %p147 = scmp.ne.s32.totalorder %s138, %s139
    %p148 = scmp.eq.s32.totalorder %s19, 0
    %p149 = por %p147, %p148
    %p150 = scmp.ne.s32.totalorder %s138, %s139
    %p151 = scmp.eq.s32.totalorder %s20, 15
    %p152 = por %p150, %p151
    %p154 = scmp.ne.s32.totalorder %s139, %s153
    %p155 = scmp.eq.s32.totalorder %s20, 0
    %p156 = por %p154, %p155
    %s157 = ssub.s32 %s21, %s33
    %s158 = ssub.s32 %s22, %s29
    %s159 = sor.u32 %s157, %s158
    %p160 = scmp.eq.s32.totalorder %s159, 0
    %s162 = sadd.s32 %s161, 1
    %s163 = scalar_select %p160, %s161, %s162
    %p166 = pneg %p160
    %p167 = scmp.eq.s32.totalorder %s14, 15
    %p168 = por %p166, %p167
    %p169 = scmp.ne.s32.totalorder %s161, %s164
    %p170 = scmp.eq.s32.totalorder %s14, 0
    %p171 = por %p169, %p170
    %p172 = scmp.ne.s32.totalorder %s161, %s164
    %p173 = scmp.eq.s32.totalorder %s19, 15
    %p174 = por %p172, %p173
    %p175 = scmp.ne.s32.totalorder %s164, %s165
    %p176 = scmp.eq.s32.totalorder %s19, 0
    %p177 = por %p175, %p176
    %p178 = scmp.ne.s32.totalorder %s164, %s165
    %p179 = scmp.eq.s32.totalorder %s20, 15
    %p180 = por %p178, %p179
    %p182 = scmp.ne.s32.totalorder %s165, %s181
    %p183 = scmp.eq.s32.totalorder %s20, 0
    %p184 = por %p182, %p183
    %s185 = ssub.s32 %s21, %s33
    %s186 = ssub.s32 %s22, %s29
    %s187 = sor.u32 %s185, %s186
    %p188 = scmp.eq.s32.totalorder %s187, 0
    %s190 = sadd.s32 %s189, 1
    %s191 = scalar_select %p188, %s189, %s190
    %p194 = pneg %p188
    %p195 = scmp.eq.s32.totalorder %s14, 15
    %p196 = por %p194, %p195
    %p197 = scmp.ne.s32.totalorder %s189, %s192
    %p198 = scmp.eq.s32.totalorder %s14, 0
    %p199 = por %p197, %p198
    %p200 = scmp.ne.s32.totalorder %s189, %s192
    %p201 = scmp.eq.s32.totalorder %s19, 15
    %p202 = por %p200, %p201
    %p203 = scmp.ne.s32.totalorder %s192, %s193
    %p204 = scmp.eq.s32.totalorder %s19, 0
    %p205 = por %p203, %p204
    %p206 = scmp.ne.s32.totalorder %s192, %s193
    %p207 = scmp.eq.s32.totalorder %s20, 15
    %p208 = por %p206, %p207
    %p210 = scmp.ne.s32.totalorder %s193, %s209
    %p211 = scmp.eq.s32.totalorder %s20, 0
    %p212 = por %p210, %p211
    %s213 = ssub.s32 %s21, %s33
    %s214 = ssub.s32 %s22, %s29
    %s215 = sor.u32 %s213, %s214
    %p216 = scmp.eq.s32.totalorder %s215, 0
    %s218 = sadd.s32 %s217, 1
    %s219 = scalar_select %p216, %s217, %s218
    %p222 = pneg %p216
    %p223 = scmp.eq.s32.totalorder %s14, 15
    %p224 = por %p222, %p223
    %p225 = scmp.ne.s32.totalorder %s217, %s220
    %p226 = scmp.eq.s32.totalorder %s14, 0
    %p227 = por %p225, %p226
    %p228 = scmp.ne.s32.totalorder %s217, %s220
    %p229 = scmp.eq.s32.totalorder %s19, 15
    %p230 = por %p228, %p229
    %p231 = scmp.ne.s32.totalorder %s220, %s221
    %p232 = scmp.eq.s32.totalorder %s19, 0
    %p233 = por %p231, %p232
    %p234 = scmp.ne.s32.totalorder %s220, %s221
    %p235 = scmp.eq.s32.totalorder %s20, 15
    %p236 = por %p234, %p235
    %p238 = scmp.ne.s32.totalorder %s221, %s237
    %p239 = scmp.eq.s32.totalorder %s20, 0
    %p240 = por %p238, %p239
    %p241 = scmp.le.s32.totalorder 1, %s14
    %p242 = scmp.lt.s32.totalorder %s14, 17
    %p243 = pnand %p241, %p242
    %p244 = pneg %p243
    // Predicated region
    $region9: #{down_forward.4} parent=5 // pred_check
      _
    $region10: #{down_forward.4} parent=5 // pred_check_branch
      %246 = sbr.rel (%p243) target = $region12
    $region11: #{down_forward.4} parent=5 // pred_region
      %s247 = ssub.s32 %s14, 1
      // Predicated region
      $region13: #{down_forward.4} parent=11 // pred_check
        %p248 = pneg %p107
      $region14: #{down_forward.4} parent=11 // pred_check_branch
        %250 = sbr.rel (%p248) target = $region16
      $region15: #{down_forward.4} parent=11 // pred_region
        _
      $region16: #{down_forward.4} parent=11 // pred_fallthru
        _
      // Predicated region
      $region17: #{down_forward.4} parent=11 // pred_check
        %p251 = pneg %p128
      $region18: #{down_forward.4} parent=11 // pred_check_branch
        %253 = sbr.rel (%p251) target = $region20
      $region19: #{down_forward.4} parent=11 // pred_region
        _
      $region20: #{down_forward.4} parent=11 // pred_fallthru
        _
      // Predicated region
      $region21: #{down_forward.4} parent=11 // pred_check
        %p254 = pneg %p149
      $region22: #{down_forward.4} parent=11 // pred_check_branch
        %256 = sbr.rel (%p254) target = $region24
      $region23: #{down_forward.4} parent=11 // pred_region
        _
      $region24: #{down_forward.4} parent=11 // pred_fallthru
        _
    $region12: #{down_forward.4} parent=5 // pred_fallthru
      _
    %p257 = scmp.lt.s32.totalorder %s14, 16
    // Predicated region
    $region25: #{down_forward.4} parent=5 // pred_check
      %p258 = pneg %p257
    $region26: #{down_forward.4} parent=5 // pred_check_branch
      %260 = sbr.rel (%p258) target = $region28
    $region27: #{down_forward.4} parent=5 // pred_region
      // Predicated region
      $region29: #{down_forward.4} parent=27 // pred_check
        %p261 = pneg %p48
      $region30: #{down_forward.4} parent=27 // pred_check_branch
        %263 = sbr.rel (%p261) target = $region32
      $region31: #{down_forward.4} parent=27 // pred_region
        %s264 = smul.u32 2, %s22
        %p265 = scmp.lt.s32.totalorder %s21, 1
        %s266 = scalar_select %p265, %s21, 1
        %p267 = scmp.lt.s32.totalorder %s264, 17
        %s268 = scalar_select %p267, %s264, 17
        %s269 = smul.addr %s268, 8
        %s270 = smul.addr %s266, 144
        %s271 = sadd.s32 %s269, %s270
        %s272 = smul.addr %s271, 4
        %s273 = scalar_lea.vmem %s0, %s272
        %s274 = smul.u32 2, %s22
      $region32: #{down_forward.4} parent=27 // pred_fallthru
        _
      // Predicated region
      $region33: #{down_forward.4} parent=27 // pred_check
        %p275 = pneg %p80
      $region34: #{down_forward.4} parent=27 // pred_check_branch
        %277 = sbr.rel (%p275) target = $region36
      $region35: #{down_forward.4} parent=27 // pred_region
        %s278 = smul.u32 %s22, 2
        %s279 = sadd.s32 %s278, 2
        %p280 = scmp.lt.s32.totalorder %s21, 1
        %s281 = scalar_select %p280, %s21, 1
        %p282 = scmp.lt.s32.totalorder %s279, 17
        %s283 = scalar_select %p282, %s279, 17
        %s284 = smul.addr %s283, 8
        %s285 = smul.addr %s281, 144
        %s286 = sadd.s32 %s284, %s285
        %s287 = smul.addr %s286, 4
        %s288 = scalar_lea.vmem %s1, %s287
        %s289 = smul.u32 %s22, 2
        %s290 = sadd.s32 %s289, 2
      $region36: #{down_forward.4} parent=27 // pred_fallthru
        _
    $region28: #{down_forward.4} parent=5 // pred_fallthru
      _
    %p291 = scmp.le.s32.totalorder 1, %s14
    %p292 = scmp.lt.s32.totalorder %s14, 17
    %p293 = pnand %p291, %p292
    %p294 = pneg %p293
    // Predicated region
    $region37: #{down_forward.4} parent=5 // pred_check
      _
    $region38: #{down_forward.4} parent=5 // pred_check_branch
      %296 = sbr.rel (%p293) target = $region40
    $region39: #{down_forward.4} parent=5 // pred_region
      %s297 = ssub.s32 %s14, 1
      %s298 = smul.u32 2, %s24
      %p299 = scmp.lt.s32.totalorder %s23, 1
      %s300 = scalar_select %p299, %s23, 1
      %p301 = scmp.lt.s32.totalorder %s298, 17
      %s302 = scalar_select %p301, %s298, 17
      %s303 = smul.addr %s302, 8
      %s304 = smul.addr %s300, 144
      %s305 = sadd.s32 %s303, %s304
      %s306 = smul.addr %s305, 4
      %s307 = scalar_lea.vmem %s0, %s306
      %p308 = pneg %p54
      %p309 = pneg %p51
      %s310 = smul.u32 %s24, 2
      %s311 = sadd.s32 %s310, 2
      %p312 = scmp.lt.s32.totalorder %s23, 1
      %s313 = scalar_select %p312, %s23, 1
      %p314 = scmp.lt.s32.totalorder %s311, 17
      %s315 = scalar_select %p314, %s311, 17
      %s316 = smul.addr %s315, 8
      %s317 = smul.addr %s313, 144
      %s318 = sadd.s32 %s316, %s317
      %s319 = smul.addr %s318, 4
      %s320 = scalar_lea.vmem %s1, %s319
      %p321 = pneg %p86
      %p322 = pneg %p83
      %p323 = pneg %p107
      %p324 = pneg %p104
      %p325 = pneg %p128
      %p326 = pneg %p125
      %p327 = pneg %p149
      %p328 = pneg %p146
      %p329 = pneg %p177
      %p330 = pneg %p174
      %p331 = scmp.lt.s32.totalorder %s23, 1
      %s332 = scalar_select %p331, %s23, 1
      %p333 = scmp.lt.s32.totalorder %s24, 7
      %s334 = scalar_select %p333, %s24, 7
      %s335 = smul.addr %s332, 8
      %s336 = sadd.s32 %s334, %s335
      %s337 = smul.addr %s336, 4
      %s338 = scalar_lea.vmem %s5, %s337
      %p339 = pneg %p205
      %p340 = pneg %p202
      %p341 = scmp.lt.s32.totalorder %s23, 1
      %s342 = scalar_select %p341, %s23, 1
      %p343 = scmp.lt.s32.totalorder %s24, 7
      %s344 = scalar_select %p343, %s24, 7
      %s345 = smul.addr %s342, 8
      %s346 = sadd.s32 %s344, %s345
      %s347 = smul.addr %s346, 8
      %s348 = scalar_lea.vmem %s6, %s347
      %p349 = pneg %p233
      %p350 = pneg %p230
      %p351 = scmp.lt.s32.totalorder %s23, 1
      %s352 = scalar_select %p351, %s23, 1
      %p353 = scmp.lt.s32.totalorder %s24, 7
      %s354 = scalar_select %p353, %s24, 7
      %s355 = smul.addr %s352, 8
      %s356 = sadd.s32 %s354, %s355
      %s357 = smul.addr %s356, 8
      %s358 = scalar_lea.vmem %s7, %s357
      %s359 = smul.u32 2, %s24
      %p360 = scmp.lt.s32.totalorder %s23, 1
      %s361 = scalar_select %p360, %s23, 1
      %p362 = scmp.lt.s32.totalorder %s359, 17
      %s363 = scalar_select %p362, %s359, 17
      %s364 = smul.addr %s363, 8
      %s365 = smul.addr %s361, 144
      %s366 = sadd.s32 %s364, %s365
      %s367 = smul.addr %s366, 4
      %s368 = scalar_lea.vmem %s0, %s367
      %s369 = smul.u32 2, %s24
      %s370 = smul.u32 %s24, 2
      %s371 = sadd.s32 %s370, 2
      %p372 = scmp.lt.s32.totalorder %s23, 1
      %s373 = scalar_select %p372, %s23, 1
      %p374 = scmp.lt.s32.totalorder %s371, 17
      %s375 = scalar_select %p374, %s371, 17
      %s376 = smul.addr %s375, 8
      %s377 = smul.addr %s373, 144
      %s378 = sadd.s32 %s376, %s377
      %s379 = smul.addr %s378, 4
      %s380 = scalar_lea.vmem %s1, %s379
      %s381 = smul.u32 %s24, 2
      %s382 = sadd.s32 %s381, 2
      %p383 = scmp.lt.s32.totalorder %s23, 1
      %s384 = scalar_select %p383, %s23, 1
      %p385 = scmp.lt.s32.totalorder %s24, 7
      %s386 = scalar_select %p385, %s24, 7
      %s387 = smul.addr %s384, 8
      %s388 = sadd.s32 %s386, %s387
      %s389 = smul.addr %s388, 4
      %s390 = scalar_lea.vmem %s5, %s389
      %p391 = scmp.lt.s32.totalorder %s23, 1
      %s392 = scalar_select %p391, %s23, 1
      %p393 = scmp.lt.s32.totalorder %s24, 7
      %s394 = scalar_select %p393, %s24, 7
      %s395 = smul.addr %s392, 8
      %s396 = sadd.s32 %s394, %s395
      %s397 = smul.addr %s396, 8
      %s398 = scalar_lea.vmem %s6, %s397
      %p399 = scmp.lt.s32.totalorder %s23, 1
      %s400 = scalar_select %p399, %s23, 1
      %p401 = scmp.lt.s32.totalorder %s24, 7
      %s402 = scalar_select %p401, %s24, 7
      %s403 = smul.addr %s400, 8
      %s404 = sadd.s32 %s402, %s403
      %s405 = smul.addr %s404, 8
      %s406 = scalar_lea.vmem %s7, %s405
      %v408 = vld [vmem:[%s368] sm:$0xff]
      %v409 = vld [vmem:[%s2] sm:$0xf]
      %s410 = scalar_lea.vmem %s2, 8
      %v411 = vld [vmem:[%s410] sm:$0xf]
      %v413 = vunpack.c.l.b16 %v408
      %v414 = vunpack.c.h.b16 %v408
      %v415 = vpack.c.b16 %v413, %v413
      %v416 = vpack.c.b16 %v414, %v414
      %417 = vrot.lane.b32.xlu0 %v415, 127
      %v418 = vpop.permute.xlu0 %417
      %419 = vrot.lane.b32.xlu0 %v416, 127
      %v420 = vpop.permute.xlu0 %419
      %vm421 = vcmask 1039360
      %v422 = vsel %vm421, %v418, %v420
      %vm423 = vcmask 64512
      %v425 = vsel %vm423, %v411, 0
      %vm427 = vcmask 1043456
      %v429 = vsel %vm427, %v422, 0
      %431 = vmatprep.subr.bf16.mxu0 0
      %432 = vmatpush1.bf16.msra.mxu0 0
      %433 = vmatprep.subr.bf16.mxu0 0
      %434 = vmatpush1.bf16.msra.mxu0 0
      %435 = vmatprep.subr.bf16.mxu0 0
      %436 = vmatpush1.bf16.msra.mxu0 0
      %437 = vmatprep.subr.bf16.mxu0 0
      %438 = vmatpush1.bf16.msra.mxu0 0
      %439 = vmatprep.subr.bf16.mxu0 0
      %440 = vmatpush1.bf16.msra.mxu0 0
      %441 = vmatprep.subr.bf16.mxu0 0
      %442 = vmatpush1.bf16.msra.mxu0 0
      %443 = vmatprep.subr.bf16.mxu0 0
      %444 = vmatpush1.bf16.msra.mxu0 0
      %445 = vmatprep.subr.bf16.mxu0 0
      %446 = vmatpush1.bf16.msra.mxu0 %v429
      %447 = vmatprep.subr.bf16.mxu0 0
      %448 = vmatpush2.bf16.msra.mxu0 0
      %449 = vmatprep.subr.bf16.mxu0 0
      %450 = vmatpush2.bf16.msra.mxu0 0
      %451 = vmatprep.subr.bf16.mxu0 0
      %452 = vmatpush2.bf16.msra.mxu0 0
      %453 = vmatprep.subr.bf16.mxu0 0
      %454 = vmatpush2.bf16.msra.mxu0 0
      %455 = vmatprep.subr.bf16.mxu0 0
      %456 = vmatpush2.bf16.msra.mxu0 0
      %457 = vmatprep.subr.bf16.mxu0 0
      %458 = vmatpush2.bf16.msra.mxu0 0
      %459 = vmatprep.subr.bf16.mxu0 0
      %460 = vmatpush2.bf16.msra.mxu0 0
      %461 = vmatprep.subr.bf16.mxu0 0
      %462 = vmatpush2.bf16.msra.mxu0 0
      %463 = vmatprep.mubr.bf16.mxu0 0
      %464 = vmatmul.mubr.bf16.gmra.mxu0 %v425
      %v465 = vpop.f32.mrf.mxu0
      %v466 = vadd.f32 0.0, %v465
      %v467 = vpop.f32.mrf.mxu0
      %v468 = vpop.f32.mrf.mxu0
      %v469 = vpop.f32.mrf.mxu0
      %470 = vdwg.mxu0
      %v472 = vsel %vm423, %v409, 0
      %v475 = vsel %vm427, %v408, 0
      %477 = vmatprep.subr.bf16.mxu0 0
      %478 = vmatpush1.bf16.msra.mxu0 0
      %479 = vmatprep.subr.bf16.mxu0 0
      %480 = vmatpush1.bf16.msra.mxu0 0
      %481 = vmatprep.subr.bf16.mxu0 0
      %482 = vmatpush1.bf16.msra.mxu0 0
      %483 = vmatprep.subr.bf16.mxu0 0
      %484 = vmatpush1.bf16.msra.mxu0 0
      %485 = vmatprep.subr.bf16.mxu0 0
      %486 = vmatpush1.bf16.msra.mxu0 0
      %487 = vmatprep.subr.bf16.mxu0 0
      %488 = vmatpush1.bf16.msra.mxu0 0
      %489 = vmatprep.subr.bf16.mxu0 0
      %490 = vmatpush1.bf16.msra.mxu0 0
      %491 = vmatprep.subr.bf16.mxu0 0
      %492 = vmatpush1.bf16.msra.mxu0 %v475
      %493 = vmatprep.subr.bf16.mxu0 0
      %494 = vmatpush2.bf16.msra.mxu0 0
      %495 = vmatprep.subr.bf16.mxu0 0
      %496 = vmatpush2.bf16.msra.mxu0 0
      %497 = vmatprep.subr.bf16.mxu0 0
      %498 = vmatpush2.bf16.msra.mxu0 0
      %499 = vmatprep.subr.bf16.mxu0 0
      %500 = vmatpush2.bf16.msra.mxu0 0
      %501 = vmatprep.subr.bf16.mxu0 0
      %502 = vmatpush2.bf16.msra.mxu0 0
      %503 = vmatprep.subr.bf16.mxu0 0
      %504 = vmatpush2.bf16.msra.mxu0 0
      %505 = vmatprep.subr.bf16.mxu0 0
      %506 = vmatpush2.bf16.msra.mxu0 0
      %507 = vmatprep.subr.bf16.mxu0 0
      %508 = vmatpush2.bf16.msra.mxu0 0
      %509 = vmatprep.mubr.bf16.mxu0 0
      %510 = vmatmul.mubr.bf16.gmra.mxu0 %v472
      %v511 = vpop.f32.mrf.mxu0
      %v512 = vadd.f32 %v466, %v511
      %v513 = vpop.f32.mrf.mxu0
      %v514 = vpop.f32.mrf.mxu0
      %v515 = vpop.f32.mrf.mxu0
      %516 = vdwg.mxu0
      %s517 = scalar_lea.vmem %s2, 24
      %v518 = vld [vmem:[%s517] sm:$0xf]
      %519 = vrot.lane.b32.xlu0 %v415, 119
      %v520 = vpop.permute.xlu0 %519
      %521 = vrot.lane.b32.xlu0 %v416, 119
      %v522 = vpop.permute.xlu0 %521
      %vm523 = vcmask 973824
      %v524 = vsel %vm523, %v520, %v522
      %v526 = vsel %vm423, %v518, 0
      %v529 = vsel %vm427, %v524, 0
      %531 = vmatprep.subr.bf16.mxu0 0
      %532 = vmatpush1.bf16.msra.mxu0 0
      %533 = vmatprep.subr.bf16.mxu0 0
      %534 = vmatpush1.bf16.msra.mxu0 0
      %535 = vmatprep.subr.bf16.mxu0 0
      %536 = vmatpush1.bf16.msra.mxu0 0
      %537 = vmatprep.subr.bf16.mxu0 0
      %538 = vmatpush1.bf16.msra.mxu0 0
      %539 = vmatprep.subr.bf16.mxu0 0
      %540 = vmatpush1.bf16.msra.mxu0 0
      %541 = vmatprep.subr.bf16.mxu0 0
      %542 = vmatpush1.bf16.msra.mxu0 0
      %543 = vmatprep.subr.bf16.mxu0 0
      %544 = vmatpush1.bf16.msra.mxu0 0
      %545 = vmatprep.subr.bf16.mxu0 0
      %546 = vmatpush1.bf16.msra.mxu0 %v529
      %547 = vmatprep.subr.bf16.mxu0 0
      %548 = vmatpush2.bf16.msra.mxu0 0
      %549 = vmatprep.subr.bf16.mxu0 0
      %550 = vmatpush2.bf16.msra.mxu0 0
      %551 = vmatprep.subr.bf16.mxu0 0
      %552 = vmatpush2.bf16.msra.mxu0 0
      %553 = vmatprep.subr.bf16.mxu0 0
      %554 = vmatpush2.bf16.msra.mxu0 0
      %555 = vmatprep.subr.bf16.mxu0 0
      %556 = vmatpush2.bf16.msra.mxu0 0
      %557 = vmatprep.subr.bf16.mxu0 0
      %558 = vmatpush2.bf16.msra.mxu0 0
      %559 = vmatprep.subr.bf16.mxu0 0
      %560 = vmatpush2.bf16.msra.mxu0 0
      %561 = vmatprep.subr.bf16.mxu0 0
      %562 = vmatpush2.bf16.msra.mxu0 0
      %563 = vmatprep.mubr.bf16.mxu0 0
      %564 = vmatmul.mubr.bf16.gmra.mxu0 %v526
      %v565 = vpop.f32.mrf.mxu0
      %v566 = vadd.f32 0.0, %v565
      %v567 = vpop.f32.mrf.mxu0
      %v568 = vpop.f32.mrf.mxu0
      %v569 = vpop.f32.mrf.mxu0
      %570 = vdwg.mxu0
      %v571 = vadd.f32 %v512, %v566
      %s572 = scalar_lea.vmem %s2, 32
      %v573 = vld [vmem:[%s572] sm:$0xf]
      %574 = vrot.lane.b32.xlu0 %v415, 118
      %v575 = vpop.permute.xlu0 %574
      %576 = vrot.lane.b32.xlu0 %v416, 118
      %v577 = vpop.permute.xlu0 %576
      %vm578 = vcmask 965632
      %v579 = vsel %vm578, %v575, %v577
      %v581 = vsel %vm423, %v573, 0
      %v584 = vsel %vm427, %v579, 0
      %586 = vmatprep.subr.bf16.mxu0 0
      %587 = vmatpush1.bf16.msra.mxu0 0
      %588 = vmatprep.subr.bf16.mxu0 0
      %589 = vmatpush1.bf16.msra.mxu0 0
      %590 = vmatprep.subr.bf16.mxu0 0
      %591 = vmatpush1.bf16.msra.mxu0 0
      %592 = vmatprep.subr.bf16.mxu0 0
      %593 = vmatpush1.bf16.msra.mxu0 0
      %594 = vmatprep.subr.bf16.mxu0 0
      %595 = vmatpush1.bf16.msra.mxu0 0
      %596 = vmatprep.subr.bf16.mxu0 0
      %597 = vmatpush1.bf16.msra.mxu0 0
      %598 = vmatprep.subr.bf16.mxu0 0
      %599 = vmatpush1.bf16.msra.mxu0 0
      %600 = vmatprep.subr.bf16.mxu0 0
      %601 = vmatpush1.bf16.msra.mxu0 %v584
      %602 = vmatprep.subr.bf16.mxu0 0
      %603 = vmatpush2.bf16.msra.mxu0 0
      %604 = vmatprep.subr.bf16.mxu0 0
      %605 = vmatpush2.bf16.msra.mxu0 0
      %606 = vmatprep.subr.bf16.mxu0 0
      %607 = vmatpush2.bf16.msra.mxu0 0
      %608 = vmatprep.subr.bf16.mxu0 0
      %609 = vmatpush2.bf16.msra.mxu0 0
      %610 = vmatprep.subr.bf16.mxu0 0
      %611 = vmatpush2.bf16.msra.mxu0 0
      %612 = vmatprep.subr.bf16.mxu0 0
      %613 = vmatpush2.bf16.msra.mxu0 0
      %614 = vmatprep.subr.bf16.mxu0 0
      %615 = vmatpush2.bf16.msra.mxu0 0
      %616 = vmatprep.subr.bf16.mxu0 0
      %617 = vmatpush2.bf16.msra.mxu0 0
      %618 = vmatprep.mubr.bf16.mxu0 0
      %619 = vmatmul.mubr.bf16.gmra.mxu0 %v581
      %v620 = vpop.f32.mrf.mxu0
      %v621 = vadd.f32 0.0, %v620
      %v622 = vpop.f32.mrf.mxu0
      %v623 = vpop.f32.mrf.mxu0
      %v624 = vpop.f32.mrf.mxu0
      %625 = vdwg.mxu0
      %v626 = vadd.f32 %v571, %v621
      %s627 = scalar_lea.vmem %s368, 8
      %v628 = vld [vmem:[%s627] sm:$0xff]
      %s629 = scalar_lea.vmem %s2, 4
      %v630 = vld [vmem:[%s629] sm:$0xf]
      %v632 = vsel %vm423, %v630, 0
      %v635 = vsel %vm427, %v628, 0
      %637 = vmatprep.subr.bf16.mxu0 0
      %638 = vmatpush1.bf16.msra.mxu0 0
      %639 = vmatprep.subr.bf16.mxu0 0
      %640 = vmatpush1.bf16.msra.mxu0 0
      %641 = vmatprep.subr.bf16.mxu0 0
      %642 = vmatpush1.bf16.msra.mxu0 0
      %643 = vmatprep.subr.bf16.mxu0 0
      %644 = vmatpush1.bf16.msra.mxu0 0
      %645 = vmatprep.subr.bf16.mxu0 0
      %646 = vmatpush1.bf16.msra.mxu0 0
      %647 = vmatprep.subr.bf16.mxu0 0
      %648 = vmatpush1.bf16.msra.mxu0 0
      %649 = vmatprep.subr.bf16.mxu0 0
      %650 = vmatpush1.bf16.msra.mxu0 0
      %651 = vmatprep.subr.bf16.mxu0 0
      %652 = vmatpush1.bf16.msra.mxu0 %v635
      %653 = vmatprep.subr.bf16.mxu0 0
      %654 = vmatpush2.bf16.msra.mxu0 0
      %655 = vmatprep.subr.bf16.mxu0 0
      %656 = vmatpush2.bf16.msra.mxu0 0
      %657 = vmatprep.subr.bf16.mxu0 0
      %658 = vmatpush2.bf16.msra.mxu0 0
      %659 = vmatprep.subr.bf16.mxu0 0
      %660 = vmatpush2.bf16.msra.mxu0 0
      %661 = vmatprep.subr.bf16.mxu0 0
      %662 = vmatpush2.bf16.msra.mxu0 0
      %663 = vmatprep.subr.bf16.mxu0 0
      %664 = vmatpush2.bf16.msra.mxu0 0
      %665 = vmatprep.subr.bf16.mxu0 0
      %666 = vmatpush2.bf16.msra.mxu0 0
      %667 = vmatprep.subr.bf16.mxu0 0
      %668 = vmatpush2.bf16.msra.mxu0 0
      %669 = vmatprep.mubr.bf16.mxu0 0
      %670 = vmatmul.mubr.bf16.gmra.mxu0 %v632
      %v671 = vpop.f32.mrf.mxu0
      %v672 = vadd.f32 0.0, %v671
      %v673 = vpop.f32.mrf.mxu0
      %v674 = vpop.f32.mrf.mxu0
      %v675 = vpop.f32.mrf.mxu0
      %676 = vdwg.mxu0
      %v677 = vadd.f32 %v626, %v672
      %s678 = scalar_lea.vmem %s2, 28
      %v679 = vld [vmem:[%s678] sm:$0xf]
      %v681 = vunpack.c.l.b16 %v628
      %v682 = vunpack.c.h.b16 %v628
      %v683 = vpack.c.b16 %v681, %v681
      %v684 = vpack.c.b16 %v682, %v682
      %685 = vrot.lane.b32.xlu0 %v683, 119
      %v686 = vpop.permute.xlu0 %685
      %687 = vrot.lane.b32.xlu0 %v684, 119
      %v688 = vpop.permute.xlu0 %687
      %v689 = vsel %vm523, %v686, %v688
      %v691 = vsel %vm423, %v679, 0
      %v694 = vsel %vm427, %v689, 0
      %696 = vmatprep.subr.bf16.mxu0 0
      %697 = vmatpush1.bf16.msra.mxu0 0
      %698 = vmatprep.subr.bf16.mxu0 0
      %699 = vmatpush1.bf16.msra.mxu0 0
      %700 = vmatprep.subr.bf16.mxu0 0
      %701 = vmatpush1.bf16.msra.mxu0 0
      %702 = vmatprep.subr.bf16.mxu0 0
      %703 = vmatpush1.bf16.msra.mxu0 0
      %704 = vmatprep.subr.bf16.mxu0 0
      %705 = vmatpush1.bf16.msra.mxu0 0
      %706 = vmatprep.subr.bf16.mxu0 0
      %707 = vmatpush1.bf16.msra.mxu0 0
      %708 = vmatprep.subr.bf16.mxu0 0
      %709 = vmatpush1.bf16.msra.mxu0 0
      %710 = vmatprep.subr.bf16.mxu0 0
      %711 = vmatpush1.bf16.msra.mxu0 %v694
      %712 = vmatprep.subr.bf16.mxu0 0
      %713 = vmatpush2.bf16.msra.mxu0 0
      %714 = vmatprep.subr.bf16.mxu0 0
      %715 = vmatpush2.bf16.msra.mxu0 0
      %716 = vmatprep.subr.bf16.mxu0 0
      %717 = vmatpush2.bf16.msra.mxu0 0
      %718 = vmatprep.subr.bf16.mxu0 0
      %719 = vmatpush2.bf16.msra.mxu0 0
      %720 = vmatprep.subr.bf16.mxu0 0
      %721 = vmatpush2.bf16.msra.mxu0 0
      %722 = vmatprep.subr.bf16.mxu0 0
      %723 = vmatpush2.bf16.msra.mxu0 0
      %724 = vmatprep.subr.bf16.mxu0 0
      %725 = vmatpush2.bf16.msra.mxu0 0
      %726 = vmatprep.subr.bf16.mxu0 0
      %727 = vmatpush2.bf16.msra.mxu0 0
      %728 = vmatprep.mubr.bf16.mxu0 0
      %729 = vmatmul.mubr.bf16.gmra.mxu0 %v691
      %v730 = vpop.f32.mrf.mxu0
      %v731 = vadd.f32 0.0, %v730
      %v732 = vpop.f32.mrf.mxu0
      %v733 = vpop.f32.mrf.mxu0
      %v734 = vpop.f32.mrf.mxu0
      %735 = vdwg.mxu0
      %v736 = vadd.f32 %v677, %v731
      %s737 = scalar_lea.vmem %s368, 16
      %v738 = vld [vmem:[%s737] sm:$0xff]
      %s739 = scalar_lea.vmem %s2, 12
      %v740 = vld [vmem:[%s739] sm:$0xf]
      %v742 = vsel %vm423, %v740, 0
      %v745 = vsel %vm427, %v738, 0
      %747 = vmatprep.subr.bf16.mxu0 0
      %748 = vmatpush1.bf16.msra.mxu0 0
      %749 = vmatprep.subr.bf16.mxu0 0
      %750 = vmatpush1.bf16.msra.mxu0 0
      %751 = vmatprep.subr.bf16.mxu0 0
      %752 = vmatpush1.bf16.msra.mxu0 0
      %753 = vmatprep.subr.bf16.mxu0 0
      %754 = vmatpush1.bf16.msra.mxu0 0
      %755 = vmatprep.subr.bf16.mxu0 0
      %756 = vmatpush1.bf16.msra.mxu0 0
      %757 = vmatprep.subr.bf16.mxu0 0
      %758 = vmatpush1.bf16.msra.mxu0 0
      %759 = vmatprep.subr.bf16.mxu0 0
      %760 = vmatpush1.bf16.msra.mxu0 0
      %761 = vmatprep.subr.bf16.mxu0 0
      %762 = vmatpush1.bf16.msra.mxu0 %v745
      %763 = vmatprep.subr.bf16.mxu0 0
      %764 = vmatpush2.bf16.msra.mxu0 0
      %765 = vmatprep.subr.bf16.mxu0 0
      %766 = vmatpush2.bf16.msra.mxu0 0
      %767 = vmatprep.subr.bf16.mxu0 0
      %768 = vmatpush2.bf16.msra.mxu0 0
      %769 = vmatprep.subr.bf16.mxu0 0
      %770 = vmatpush2.bf16.msra.mxu0 0
      %771 = vmatprep.subr.bf16.mxu0 0
      %772 = vmatpush2.bf16.msra.mxu0 0
      %773 = vmatprep.subr.bf16.mxu0 0
      %774 = vmatpush2.bf16.msra.mxu0 0
      %775 = vmatprep.subr.bf16.mxu0 0
      %776 = vmatpush2.bf16.msra.mxu0 0
      %777 = vmatprep.subr.bf16.mxu0 0
      %778 = vmatpush2.bf16.msra.mxu0 0
      %779 = vmatprep.mubr.bf16.mxu0 0
      %780 = vmatmul.mubr.bf16.gmra.mxu0 %v742
      %v781 = vpop.f32.mrf.mxu0
      %v782 = vadd.f32 0.0, %v781
      %v783 = vpop.f32.mrf.mxu0
      %v784 = vpop.f32.mrf.mxu0
      %v785 = vpop.f32.mrf.mxu0
      %786 = vdwg.mxu0
      %v787 = vadd.f32 %v736, %v782
      %s788 = scalar_lea.vmem %s2, 20
      %v789 = vld [vmem:[%s788] sm:$0xf]
      %v791 = vunpack.c.l.b16 %v738
      %v792 = vunpack.c.h.b16 %v738
      %v793 = vpack.c.b16 %v791, %v791
      %v794 = vpack.c.b16 %v792, %v792
      %795 = vrot.lane.b32.xlu0 %v793, 127
      %v796 = vpop.permute.xlu0 %795
      %797 = vrot.lane.b32.xlu0 %v794, 127
      %v798 = vpop.permute.xlu0 %797
      %v799 = vsel %vm421, %v796, %v798
      %v801 = vsel %vm423, %v789, 0
      %v804 = vsel %vm427, %v799, 0
      %806 = vmatprep.subr.bf16.mxu0 0
      %807 = vmatpush1.bf16.msra.mxu0 0
      %808 = vmatprep.subr.bf16.mxu0 0
      %809 = vmatpush1.bf16.msra.mxu0 0
      %810 = vmatprep.subr.bf16.mxu0 0
      %811 = vmatpush1.bf16.msra.mxu0 0
      %812 = vmatprep.subr.bf16.mxu0 0
      %813 = vmatpush1.bf16.msra.mxu0 0
      %814 = vmatprep.subr.bf16.mxu0 0
      %815 = vmatpush1.bf16.msra.mxu0 0
      %816 = vmatprep.subr.bf16.mxu0 0
      %817 = vmatpush1.bf16.msra.mxu0 0
      %818 = vmatprep.subr.bf16.mxu0 0
      %819 = vmatpush1.bf16.msra.mxu0 0
      %820 = vmatprep.subr.bf16.mxu0 0
      %821 = vmatpush1.bf16.msra.mxu0 %v804
      %822 = vmatprep.subr.bf16.mxu0 0
      %823 = vmatpush2.bf16.msra.mxu0 0
      %824 = vmatprep.subr.bf16.mxu0 0
      %825 = vmatpush2.bf16.msra.mxu0 0
      %826 = vmatprep.subr.bf16.mxu0 0
      %827 = vmatpush2.bf16.msra.mxu0 0
      %828 = vmatprep.subr.bf16.mxu0 0
      %829 = vmatpush2.bf16.msra.mxu0 0
      %830 = vmatprep.subr.bf16.mxu0 0
      %831 = vmatpush2.bf16.msra.mxu0 0
      %832 = vmatprep.subr.bf16.mxu0 0
      %833 = vmatpush2.bf16.msra.mxu0 0
      %834 = vmatprep.subr.bf16.mxu0 0
      %835 = vmatpush2.bf16.msra.mxu0 0
      %836 = vmatprep.subr.bf16.mxu0 0
      %837 = vmatpush2.bf16.msra.mxu0 0
      %838 = vmatprep.mubr.bf16.mxu0 0
      %839 = vmatmul.mubr.bf16.gmra.mxu0 %v801
      %v840 = vpop.f32.mrf.mxu0
      %v841 = vadd.f32 0.0, %v840
      %v842 = vpop.f32.mrf.mxu0
      %v843 = vpop.f32.mrf.mxu0
      %v844 = vpop.f32.mrf.mxu0
      %845 = vdwg.mxu0
      %v846 = vadd.f32 %v787, %v841
      %s847 = scalar_lea.vmem %s368, 24
      %v848 = vld [vmem:[%s847] sm:$0xff]
      %s849 = scalar_lea.vmem %s2, 16
      %v850 = vld [vmem:[%s849] sm:$0xf]
      %v852 = vsel %vm423, %v850, 0
      %v855 = vsel %vm427, %v848, 0
      %857 = vmatprep.subr.bf16.mxu0 0
      %858 = vmatpush1.bf16.msra.mxu0 0
      %859 = vmatprep.subr.bf16.mxu0 0
      %860 = vmatpush1.bf16.msra.mxu0 0
      %861 = vmatprep.subr.bf16.mxu0 0
      %862 = vmatpush1.bf16.msra.mxu0 0
      %863 = vmatprep.subr.bf16.mxu0 0
      %864 = vmatpush1.bf16.msra.mxu0 0
      %865 = vmatprep.subr.bf16.mxu0 0
      %866 = vmatpush1.bf16.msra.mxu0 0
      %867 = vmatprep.subr.bf16.mxu0 0
      %868 = vmatpush1.bf16.msra.mxu0 0
      %869 = vmatprep.subr.bf16.mxu0 0
      %870 = vmatpush1.bf16.msra.mxu0 0
      %871 = vmatprep.subr.bf16.mxu0 0
      %872 = vmatpush1.bf16.msra.mxu0 %v855
      %873 = vmatprep.subr.bf16.mxu0 0
      %874 = vmatpush2.bf16.msra.mxu0 0
      %875 = vmatprep.subr.bf16.mxu0 0
      %876 = vmatpush2.bf16.msra.mxu0 0
      %877 = vmatprep.subr.bf16.mxu0 0
      %878 = vmatpush2.bf16.msra.mxu0 0
      %879 = vmatprep.subr.bf16.mxu0 0
      %880 = vmatpush2.bf16.msra.mxu0 0
      %881 = vmatprep.subr.bf16.mxu0 0
      %882 = vmatpush2.bf16.msra.mxu0 0
      %883 = vmatprep.subr.bf16.mxu0 0
      %884 = vmatpush2.bf16.msra.mxu0 0
      %885 = vmatprep.subr.bf16.mxu0 0
      %886 = vmatpush2.bf16.msra.mxu0 0
      %887 = vmatprep.subr.bf16.mxu0 0
      %888 = vmatpush2.bf16.msra.mxu0 0
      %889 = vmatprep.mubr.bf16.mxu0 0
      %890 = vmatmul.mubr.bf16.gmra.mxu0 %v852
      %v891 = vpop.f32.mrf.mxu0
      %v892 = vadd.f32 0.0, %v891
      %v893 = vpop.f32.mrf.mxu0
      %v894 = vpop.f32.mrf.mxu0
      %v895 = vpop.f32.mrf.mxu0
      %896 = vdwg.mxu0
      %v897 = vadd.f32 %v846, %v892
      %s898 = scalar_lea.vmem %s368, 32
      %v899 = vld [vmem:[%s898] sm:$0xff]
      %s900 = scalar_lea.vmem %s2, 36
      %v901 = vld [vmem:[%s900] sm:$0xf]
      %v903 = vsel %vm423, %v901, 0
      %v906 = vsel %vm427, %v899, 0
      %908 = vmatprep.subr.bf16.mxu0 0
      %909 = vmatpush1.bf16.msra.mxu0 0
      %910 = vmatprep.subr.bf16.mxu0 0
      %911 = vmatpush1.bf16.msra.mxu0 0
      %912 = vmatprep.subr.bf16.mxu0 0
      %913 = vmatpush1.bf16.msra.mxu0 0
      %914 = vmatprep.subr.bf16.mxu0 0
      %915 = vmatpush1.bf16.msra.mxu0 0
      %916 = vmatprep.subr.bf16.mxu0 0
      %917 = vmatpush1.bf16.msra.mxu0 0
      %918 = vmatprep.subr.bf16.mxu0 0
      %919 = vmatpush1.bf16.msra.mxu0 0
      %920 = vmatprep.subr.bf16.mxu0 0
      %921 = vmatpush1.bf16.msra.mxu0 0
      %922 = vmatprep.subr.bf16.mxu0 0
      %923 = vmatpush1.bf16.msra.mxu0 %v906
      %924 = vmatprep.subr.bf16.mxu0 0
      %925 = vmatpush2.bf16.msra.mxu0 0
      %926 = vmatprep.subr.bf16.mxu0 0
      %927 = vmatpush2.bf16.msra.mxu0 0
      %928 = vmatprep.subr.bf16.mxu0 0
      %929 = vmatpush2.bf16.msra.mxu0 0
      %930 = vmatprep.subr.bf16.mxu0 0
      %931 = vmatpush2.bf16.msra.mxu0 0
      %932 = vmatprep.subr.bf16.mxu0 0
      %933 = vmatpush2.bf16.msra.mxu0 0
      %934 = vmatprep.subr.bf16.mxu0 0
      %935 = vmatpush2.bf16.msra.mxu0 0
      %936 = vmatprep.subr.bf16.mxu0 0
      %937 = vmatpush2.bf16.msra.mxu0 0
      %938 = vmatprep.subr.bf16.mxu0 0
      %939 = vmatpush2.bf16.msra.mxu0 0
      %940 = vmatprep.mubr.bf16.mxu0 0
      %941 = vmatmul.mubr.bf16.gmra.mxu0 %v903
      %v942 = vpop.f32.mrf.mxu0
      %v943 = vadd.f32 0.0, %v942
      %v944 = vpop.f32.mrf.mxu0
      %v945 = vpop.f32.mrf.mxu0
      %v946 = vpop.f32.mrf.mxu0
      %947 = vdwg.mxu0
      %v948 = vadd.f32 %v897, %v943
      %s949 = scalar_lea.vmem %s2, 44
      %v950 = vld [vmem:[%s949] sm:$0xf]
      %v952 = vunpack.c.l.b16 %v899
      %v953 = vunpack.c.h.b16 %v899
      %v954 = vpack.c.b16 %v952, %v952
      %v955 = vpack.c.b16 %v953, %v953
      %956 = vrot.lane.b32.xlu0 %v954, 127
      %v957 = vpop.permute.xlu0 %956
      %958 = vrot.lane.b32.xlu0 %v955, 127
      %v959 = vpop.permute.xlu0 %958
      %v960 = vsel %vm421, %v957, %v959
      %v962 = vsel %vm423, %v950, 0
      %v965 = vsel %vm427, %v960, 0
      %967 = vmatprep.subr.bf16.mxu0 0
      %968 = vmatpush1.bf16.msra.mxu0 0
      %969 = vmatprep.subr.bf16.mxu0 0
      %970 = vmatpush1.bf16.msra.mxu0 0
      %971 = vmatprep.subr.bf16.mxu0 0
      %972 = vmatpush1.bf16.msra.mxu0 0
      %973 = vmatprep.subr.bf16.mxu0 0
      %974 = vmatpush1.bf16.msra.mxu0 0
      %975 = vmatprep.subr.bf16.mxu0 0
      %976 = vmatpush1.bf16.msra.mxu0 0
      %977 = vmatprep.subr.bf16.mxu0 0
      %978 = vmatpush1.bf16.msra.mxu0 0
      %979 = vmatprep.subr.bf16.mxu0 0
      %980 = vmatpush1.bf16.msra.mxu0 0
      %981 = vmatprep.subr.bf16.mxu0 0
      %982 = vmatpush1.bf16.msra.mxu0 %v965
      %983 = vmatprep.subr.bf16.mxu0 0
      %984 = vmatpush2.bf16.msra.mxu0 0
      %985 = vmatprep.subr.bf16.mxu0 0
      %986 = vmatpush2.bf16.msra.mxu0 0
      %987 = vmatprep.subr.bf16.mxu0 0
      %988 = vmatpush2.bf16.msra.mxu0 0
      %989 = vmatprep.subr.bf16.mxu0 0
      %990 = vmatpush2.bf16.msra.mxu0 0
      %991 = vmatprep.subr.bf16.mxu0 0
      %992 = vmatpush2.bf16.msra.mxu0 0
      %993 = vmatprep.subr.bf16.mxu0 0
      %994 = vmatpush2.bf16.msra.mxu0 0
      %995 = vmatprep.subr.bf16.mxu0 0
      %996 = vmatpush2.bf16.msra.mxu0 0
      %997 = vmatprep.subr.bf16.mxu0 0
      %998 = vmatpush2.bf16.msra.mxu0 0
      %999 = vmatprep.mubr.bf16.mxu0 0
      %1000 = vmatmul.mubr.bf16.gmra.mxu0 %v962
      %v1001 = vpop.f32.mrf.mxu0
      %v1002 = vadd.f32 0.0, %v1001
      %v1003 = vpop.f32.mrf.mxu0
      %v1004 = vpop.f32.mrf.mxu0
      %v1005 = vpop.f32.mrf.mxu0
      %1006 = vdwg.mxu0
      %v1007 = vadd.f32 %v948, %v1002
      %s1008 = scalar_lea.vmem %s2, 60
      %v1009 = vld [vmem:[%s1008] sm:$0xf]
      %1010 = vrot.lane.b32.xlu0 %v954, 119
      %v1011 = vpop.permute.xlu0 %1010
      %1012 = vrot.lane.b32.xlu0 %v955, 119
      %v1013 = vpop.permute.xlu0 %1012
      %v1014 = vsel %vm523, %v1011, %v1013
      %v1016 = vsel %vm423, %v1009, 0
      %v1019 = vsel %vm427, %v1014, 0
      %1021 = vmatprep.subr.bf16.mxu0 0
      %1022 = vmatpush1.bf16.msra.mxu0 0
      %1023 = vmatprep.subr.bf16.mxu0 0
      %1024 = vmatpush1.bf16.msra.mxu0 0
      %1025 = vmatprep.subr.bf16.mxu0 0
      %1026 = vmatpush1.bf16.msra.mxu0 0
      %1027 = vmatprep.subr.bf16.mxu0 0
      %1028 = vmatpush1.bf16.msra.mxu0 0
      %1029 = vmatprep.subr.bf16.mxu0 0
      %1030 = vmatpush1.bf16.msra.mxu0 0
      %1031 = vmatprep.subr.bf16.mxu0 0
      %1032 = vmatpush1.bf16.msra.mxu0 0
      %1033 = vmatprep.subr.bf16.mxu0 0
      %1034 = vmatpush1.bf16.msra.mxu0 0
      %1035 = vmatprep.subr.bf16.mxu0 0
      %1036 = vmatpush1.bf16.msra.mxu0 %v1019
      %1037 = vmatprep.subr.bf16.mxu0 0
      %1038 = vmatpush2.bf16.msra.mxu0 0
      %1039 = vmatprep.subr.bf16.mxu0 0
      %1040 = vmatpush2.bf16.msra.mxu0 0
      %1041 = vmatprep.subr.bf16.mxu0 0
      %1042 = vmatpush2.bf16.msra.mxu0 0
      %1043 = vmatprep.subr.bf16.mxu0 0
      %1044 = vmatpush2.bf16.msra.mxu0 0
      %1045 = vmatprep.subr.bf16.mxu0 0
      %1046 = vmatpush2.bf16.msra.mxu0 0
      %1047 = vmatprep.subr.bf16.mxu0 0
      %1048 = vmatpush2.bf16.msra.mxu0 0
      %1049 = vmatprep.subr.bf16.mxu0 0
      %1050 = vmatpush2.bf16.msra.mxu0 0
      %1051 = vmatprep.subr.bf16.mxu0 0
      %1052 = vmatpush2.bf16.msra.mxu0 0
      %1053 = vmatprep.mubr.bf16.mxu0 0
      %1054 = vmatmul.mubr.bf16.gmra.mxu0 %v1016
      %v1055 = vpop.f32.mrf.mxu0
      %v1056 = vadd.f32 0.0, %v1055
      %v1057 = vpop.f32.mrf.mxu0
      %v1058 = vpop.f32.mrf.mxu0
      %v1059 = vpop.f32.mrf.mxu0
      %1060 = vdwg.mxu0
      %v1061 = vadd.f32 %v1007, %v1056
      %s1062 = scalar_lea.vmem %s2, 68
      %v1063 = vld [vmem:[%s1062] sm:$0xf]
      %1064 = vrot.lane.b32.xlu0 %v954, 118
      %v1065 = vpop.permute.xlu0 %1064
      %1066 = vrot.lane.b32.xlu0 %v955, 118
      %v1067 = vpop.permute.xlu0 %1066
      %v1068 = vsel %vm578, %v1065, %v1067
      %v1070 = vsel %vm423, %v1063, 0
      %v1073 = vsel %vm427, %v1068, 0
      %1075 = vmatprep.subr.bf16.mxu0 0
      %1076 = vmatpush1.bf16.msra.mxu0 0
      %1077 = vmatprep.subr.bf16.mxu0 0
      %1078 = vmatpush1.bf16.msra.mxu0 0
      %1079 = vmatprep.subr.bf16.mxu0 0
      %1080 = vmatpush1.bf16.msra.mxu0 0
      %1081 = vmatprep.subr.bf16.mxu0 0
      %1082 = vmatpush1.bf16.msra.mxu0 0
      %1083 = vmatprep.subr.bf16.mxu0 0
      %1084 = vmatpush1.bf16.msra.mxu0 0
      %1085 = vmatprep.subr.bf16.mxu0 0
      %1086 = vmatpush1.bf16.msra.mxu0 0
      %1087 = vmatprep.subr.bf16.mxu0 0
      %1088 = vmatpush1.bf16.msra.mxu0 0
      %1089 = vmatprep.subr.bf16.mxu0 0
      %1090 = vmatpush1.bf16.msra.mxu0 %v1073
      %1091 = vmatprep.subr.bf16.mxu0 0
      %1092 = vmatpush2.bf16.msra.mxu0 0
      %1093 = vmatprep.subr.bf16.mxu0 0
      %1094 = vmatpush2.bf16.msra.mxu0 0
      %1095 = vmatprep.subr.bf16.mxu0 0
      %1096 = vmatpush2.bf16.msra.mxu0 0
      %1097 = vmatprep.subr.bf16.mxu0 0
      %1098 = vmatpush2.bf16.msra.mxu0 0
      %1099 = vmatprep.subr.bf16.mxu0 0
      %1100 = vmatpush2.bf16.msra.mxu0 0
      %1101 = vmatprep.subr.bf16.mxu0 0
      %1102 = vmatpush2.bf16.msra.mxu0 0
      %1103 = vmatprep.subr.bf16.mxu0 0
      %1104 = vmatpush2.bf16.msra.mxu0 0
      %1105 = vmatprep.subr.bf16.mxu0 0
      %1106 = vmatpush2.bf16.msra.mxu0 0
      %1107 = vmatprep.mubr.bf16.mxu0 0
      %1108 = vmatmul.mubr.bf16.gmra.mxu0 %v1070
      %v1109 = vpop.f32.mrf.mxu0
      %v1110 = vadd.f32 0.0, %v1109
      %v1111 = vpop.f32.mrf.mxu0
      %v1112 = vpop.f32.mrf.mxu0
      %v1113 = vpop.f32.mrf.mxu0
      %1114 = vdwg.mxu0
      %v1115 = vadd.f32 %v1061, %v1110
      %s1116 = scalar_lea.vmem %s368, 40
      %v1117 = vld [vmem:[%s1116] sm:$0xff]
      %s1118 = scalar_lea.vmem %s2, 40
      %v1119 = vld [vmem:[%s1118] sm:$0xf]
      %v1121 = vsel %vm423, %v1119, 0
      %v1124 = vsel %vm427, %v1117, 0
      %1126 = vmatprep.subr.bf16.mxu0 0
      %1127 = vmatpush1.bf16.msra.mxu0 0
      %1128 = vmatprep.subr.bf16.mxu0 0
      %1129 = vmatpush1.bf16.msra.mxu0 0
      %1130 = vmatprep.subr.bf16.mxu0 0
      %1131 = vmatpush1.bf16.msra.mxu0 0
      %1132 = vmatprep.subr.bf16.mxu0 0
      %1133 = vmatpush1.bf16.msra.mxu0 0
      %1134 = vmatprep.subr.bf16.mxu0 0
      %1135 = vmatpush1.bf16.msra.mxu0 0
      %1136 = vmatprep.subr.bf16.mxu0 0
      %1137 = vmatpush1.bf16.msra.mxu0 0
      %1138 = vmatprep.subr.bf16.mxu0 0
      %1139 = vmatpush1.bf16.msra.mxu0 0
      %1140 = vmatprep.subr.bf16.mxu0 0
      %1141 = vmatpush1.bf16.msra.mxu0 %v1124
      %1142 = vmatprep.subr.bf16.mxu0 0
      %1143 = vmatpush2.bf16.msra.mxu0 0
      %1144 = vmatprep.subr.bf16.mxu0 0
      %1145 = vmatpush2.bf16.msra.mxu0 0
      %1146 = vmatprep.subr.bf16.mxu0 0
      %1147 = vmatpush2.bf16.msra.mxu0 0
      %1148 = vmatprep.subr.bf16.mxu0 0
      %1149 = vmatpush2.bf16.msra.mxu0 0
      %1150 = vmatprep.subr.bf16.mxu0 0
      %1151 = vmatpush2.bf16.msra.mxu0 0
      %1152 = vmatprep.subr.bf16.mxu0 0
      %1153 = vmatpush2.bf16.msra.mxu0 0
      %1154 = vmatprep.subr.bf16.mxu0 0
      %1155 = vmatpush2.bf16.msra.mxu0 0
      %1156 = vmatprep.subr.bf16.mxu0 0
      %1157 = vmatpush2.bf16.msra.mxu0 0
      %1158 = vmatprep.mubr.bf16.mxu0 0
      %1159 = vmatmul.mubr.bf16.gmra.mxu0 %v1121
      %v1160 = vpop.f32.mrf.mxu0
      %v1161 = vadd.f32 0.0, %v1160
      %v1162 = vpop.f32.mrf.mxu0
      %v1163 = vpop.f32.mrf.mxu0
      %v1164 = vpop.f32.mrf.mxu0
      %1165 = vdwg.mxu0
      %v1166 = vadd.f32 %v1115, %v1161
      %s1167 = scalar_lea.vmem %s2, 64
      %v1168 = vld [vmem:[%s1167] sm:$0xf]
      %v1170 = vunpack.c.l.b16 %v1117
      %v1171 = vunpack.c.h.b16 %v1117
      %v1172 = vpack.c.b16 %v1170, %v1170
      %v1173 = vpack.c.b16 %v1171, %v1171
      %1174 = vrot.lane.b32.xlu0 %v1172, 119
      %v1175 = vpop.permute.xlu0 %1174
      %1176 = vrot.lane.b32.xlu0 %v1173, 119
      %v1177 = vpop.permute.xlu0 %1176
      %v1178 = vsel %vm523, %v1175, %v1177
      %v1180 = vsel %vm423, %v1168, 0
      %v1183 = vsel %vm427, %v1178, 0
      %1185 = vmatprep.subr.bf16.mxu0 0
      %1186 = vmatpush1.bf16.msra.mxu0 0
      %1187 = vmatprep.subr.bf16.mxu0 0
      %1188 = vmatpush1.bf16.msra.mxu0 0
      %1189 = vmatprep.subr.bf16.mxu0 0
      %1190 = vmatpush1.bf16.msra.mxu0 0
      %1191 = vmatprep.subr.bf16.mxu0 0
      %1192 = vmatpush1.bf16.msra.mxu0 0
      %1193 = vmatprep.subr.bf16.mxu0 0
      %1194 = vmatpush1.bf16.msra.mxu0 0
      %1195 = vmatprep.subr.bf16.mxu0 0
      %1196 = vmatpush1.bf16.msra.mxu0 0
      %1197 = vmatprep.subr.bf16.mxu0 0
      %1198 = vmatpush1.bf16.msra.mxu0 0
      %1199 = vmatprep.subr.bf16.mxu0 0
      %1200 = vmatpush1.bf16.msra.mxu0 %v1183
      %1201 = vmatprep.subr.bf16.mxu0 0
      %1202 = vmatpush2.bf16.msra.mxu0 0
      %1203 = vmatprep.subr.bf16.mxu0 0
      %1204 = vmatpush2.bf16.msra.mxu0 0
      %1205 = vmatprep.subr.bf16.mxu0 0
      %1206 = vmatpush2.bf16.msra.mxu0 0
      %1207 = vmatprep.subr.bf16.mxu0 0
      %1208 = vmatpush2.bf16.msra.mxu0 0
      %1209 = vmatprep.subr.bf16.mxu0 0
      %1210 = vmatpush2.bf16.msra.mxu0 0
      %1211 = vmatprep.subr.bf16.mxu0 0
      %1212 = vmatpush2.bf16.msra.mxu0 0
      %1213 = vmatprep.subr.bf16.mxu0 0
      %1214 = vmatpush2.bf16.msra.mxu0 0
      %1215 = vmatprep.subr.bf16.mxu0 0
      %1216 = vmatpush2.bf16.msra.mxu0 0
      %1217 = vmatprep.mubr.bf16.mxu0 0
      %1218 = vmatmul.mubr.bf16.gmra.mxu0 %v1180
      %v1219 = vpop.f32.mrf.mxu0
      %v1220 = vadd.f32 0.0, %v1219
      %v1221 = vpop.f32.mrf.mxu0
      %v1222 = vpop.f32.mrf.mxu0
      %v1223 = vpop.f32.mrf.mxu0
      %1224 = vdwg.mxu0
      %v1225 = vadd.f32 %v1166, %v1220
      %s1226 = scalar_lea.vmem %s368, 48
      %v1227 = vld [vmem:[%s1226] sm:$0xff]
      %s1228 = scalar_lea.vmem %s2, 48
      %v1229 = vld [vmem:[%s1228] sm:$0xf]
      %v1231 = vsel %vm423, %v1229, 0
      %v1234 = vsel %vm427, %v1227, 0
      %1236 = vmatprep.subr.bf16.mxu0 0
      %1237 = vmatpush1.bf16.msra.mxu0 0
      %1238 = vmatprep.subr.bf16.mxu0 0
      %1239 = vmatpush1.bf16.msra.mxu0 0
      %1240 = vmatprep.subr.bf16.mxu0 0
      %1241 = vmatpush1.bf16.msra.mxu0 0
      %1242 = vmatprep.subr.bf16.mxu0 0
      %1243 = vmatpush1.bf16.msra.mxu0 0
      %1244 = vmatprep.subr.bf16.mxu0 0
      %1245 = vmatpush1.bf16.msra.mxu0 0
      %1246 = vmatprep.subr.bf16.mxu0 0
      %1247 = vmatpush1.bf16.msra.mxu0 0
      %1248 = vmatprep.subr.bf16.mxu0 0
      %1249 = vmatpush1.bf16.msra.mxu0 0
      %1250 = vmatprep.subr.bf16.mxu0 0
      %1251 = vmatpush1.bf16.msra.mxu0 %v1234
      %1252 = vmatprep.subr.bf16.mxu0 0
      %1253 = vmatpush2.bf16.msra.mxu0 0
      %1254 = vmatprep.subr.bf16.mxu0 0
      %1255 = vmatpush2.bf16.msra.mxu0 0
      %1256 = vmatprep.subr.bf16.mxu0 0
      %1257 = vmatpush2.bf16.msra.mxu0 0
      %1258 = vmatprep.subr.bf16.mxu0 0
      %1259 = vmatpush2.bf16.msra.mxu0 0
      %1260 = vmatprep.subr.bf16.mxu0 0
      %1261 = vmatpush2.bf16.msra.mxu0 0
      %1262 = vmatprep.subr.bf16.mxu0 0
      %1263 = vmatpush2.bf16.msra.mxu0 0
      %1264 = vmatprep.subr.bf16.mxu0 0
      %1265 = vmatpush2.bf16.msra.mxu0 0
      %1266 = vmatprep.subr.bf16.mxu0 0
      %1267 = vmatpush2.bf16.msra.mxu0 0
      %1268 = vmatprep.mubr.bf16.mxu0 0
      %1269 = vmatmul.mubr.bf16.gmra.mxu0 %v1231
      %v1270 = vpop.f32.mrf.mxu0
      %v1271 = vadd.f32 0.0, %v1270
      %v1272 = vpop.f32.mrf.mxu0
      %v1273 = vpop.f32.mrf.mxu0
      %v1274 = vpop.f32.mrf.mxu0
      %1275 = vdwg.mxu0
      %v1276 = vadd.f32 %v1225, %v1271
      %s1277 = scalar_lea.vmem %s2, 56
      %v1278 = vld [vmem:[%s1277] sm:$0xf]
      %v1280 = vunpack.c.l.b16 %v1227
      %v1281 = vunpack.c.h.b16 %v1227
      %v1282 = vpack.c.b16 %v1280, %v1280
      %v1283 = vpack.c.b16 %v1281, %v1281
      %1284 = vrot.lane.b32.xlu0 %v1282, 127
      %v1285 = vpop.permute.xlu0 %1284
      %1286 = vrot.lane.b32.xlu0 %v1283, 127
      %v1287 = vpop.permute.xlu0 %1286
      %v1288 = vsel %vm421, %v1285, %v1287
      %v1290 = vsel %vm423, %v1278, 0
      %v1293 = vsel %vm427, %v1288, 0
      %1295 = vmatprep.subr.bf16.mxu0 0
      %1296 = vmatpush1.bf16.msra.mxu0 0
      %1297 = vmatprep.subr.bf16.mxu0 0
      %1298 = vmatpush1.bf16.msra.mxu0 0
      %1299 = vmatprep.subr.bf16.mxu0 0
      %1300 = vmatpush1.bf16.msra.mxu0 0
      %1301 = vmatprep.subr.bf16.mxu0 0
      %1302 = vmatpush1.bf16.msra.mxu0 0
      %1303 = vmatprep.subr.bf16.mxu0 0
      %1304 = vmatpush1.bf16.msra.mxu0 0
      %1305 = vmatprep.subr.bf16.mxu0 0
      %1306 = vmatpush1.bf16.msra.mxu0 0
      %1307 = vmatprep.subr.bf16.mxu0 0
      %1308 = vmatpush1.bf16.msra.mxu0 0
      %1309 = vmatprep.subr.bf16.mxu0 0
      %1310 = vmatpush1.bf16.msra.mxu0 %v1293
      %1311 = vmatprep.subr.bf16.mxu0 0
      %1312 = vmatpush2.bf16.msra.mxu0 0
      %1313 = vmatprep.subr.bf16.mxu0 0
      %1314 = vmatpush2.bf16.msra.mxu0 0
      %1315 = vmatprep.subr.bf16.mxu0 0
      %1316 = vmatpush2.bf16.msra.mxu0 0
      %1317 = vmatprep.subr.bf16.mxu0 0
      %1318 = vmatpush2.bf16.msra.mxu0 0
      %1319 = vmatprep.subr.bf16.mxu0 0
      %1320 = vmatpush2.bf16.msra.mxu0 0
      %1321 = vmatprep.subr.bf16.mxu0 0
      %1322 = vmatpush2.bf16.msra.mxu0 0
      %1323 = vmatprep.subr.bf16.mxu0 0
      %1324 = vmatpush2.bf16.msra.mxu0 0
      %1325 = vmatprep.subr.bf16.mxu0 0
      %1326 = vmatpush2.bf16.msra.mxu0 0
      %1327 = vmatprep.mubr.bf16.mxu0 0
      %1328 = vmatmul.mubr.bf16.gmra.mxu0 %v1290
      %v1329 = vpop.f32.mrf.mxu0
      %v1330 = vadd.f32 0.0, %v1329
      %v1331 = vpop.f32.mrf.mxu0
      %v1332 = vpop.f32.mrf.mxu0
      %v1333 = vpop.f32.mrf.mxu0
      %1334 = vdwg.mxu0
      %v1335 = vadd.f32 %v1276, %v1330
      %s1336 = scalar_lea.vmem %s368, 56
      %v1337 = vld [vmem:[%s1336] sm:$0xff]
      %s1338 = scalar_lea.vmem %s2, 52
      %v1339 = vld [vmem:[%s1338] sm:$0xf]
      %v1341 = vsel %vm423, %v1339, 0
      %v1344 = vsel %vm427, %v1337, 0
      %1346 = vmatprep.subr.bf16.mxu0 0
      %1347 = vmatpush1.bf16.msra.mxu0 0
      %1348 = vmatprep.subr.bf16.mxu0 0
      %1349 = vmatpush1.bf16.msra.mxu0 0
      %1350 = vmatprep.subr.bf16.mxu0 0
      %1351 = vmatpush1.bf16.msra.mxu0 0
      %1352 = vmatprep.subr.bf16.mxu0 0
      %1353 = vmatpush1.bf16.msra.mxu0 0
      %1354 = vmatprep.subr.bf16.mxu0 0
      %1355 = vmatpush1.bf16.msra.mxu0 0
      %1356 = vmatprep.subr.bf16.mxu0 0
      %1357 = vmatpush1.bf16.msra.mxu0 0
      %1358 = vmatprep.subr.bf16.mxu0 0
      %1359 = vmatpush1.bf16.msra.mxu0 0
      %1360 = vmatprep.subr.bf16.mxu0 0
      %1361 = vmatpush1.bf16.msra.mxu0 %v1344
      %1362 = vmatprep.subr.bf16.mxu0 0
      %1363 = vmatpush2.bf16.msra.mxu0 0
      %1364 = vmatprep.subr.bf16.mxu0 0
      %1365 = vmatpush2.bf16.msra.mxu0 0
      %1366 = vmatprep.subr.bf16.mxu0 0
      %1367 = vmatpush2.bf16.msra.mxu0 0
      %1368 = vmatprep.subr.bf16.mxu0 0
      %1369 = vmatpush2.bf16.msra.mxu0 0
      %1370 = vmatprep.subr.bf16.mxu0 0
      %1371 = vmatpush2.bf16.msra.mxu0 0
      %1372 = vmatprep.subr.bf16.mxu0 0
      %1373 = vmatpush2.bf16.msra.mxu0 0
      %1374 = vmatprep.subr.bf16.mxu0 0
      %1375 = vmatpush2.bf16.msra.mxu0 0
      %1376 = vmatprep.subr.bf16.mxu0 0
      %1377 = vmatpush2.bf16.msra.mxu0 0
      %1378 = vmatprep.mubr.bf16.mxu0 0
      %1379 = vmatmul.mubr.bf16.gmra.mxu0 %v1341
      %v1380 = vpop.f32.mrf.mxu0
      %v1381 = vadd.f32 0.0, %v1380
      %v1382 = vpop.f32.mrf.mxu0
      %v1383 = vpop.f32.mrf.mxu0
      %v1384 = vpop.f32.mrf.mxu0
      %1385 = vdwg.mxu0
      %v1386 = vadd.f32 %v1335, %v1381
      %v1387 = vld [vmem:[%s380] sm:$0xff]
      %s1388 = scalar_lea.vmem %s2, 72
      %v1389 = vld [vmem:[%s1388] sm:$0xf]
      %v1391 = vsel %vm423, %v1389, 0
      %v1394 = vsel %vm427, %v1387, 0
      %1396 = vmatprep.subr.bf16.mxu0 0
      %1397 = vmatpush1.bf16.msra.mxu0 0
      %1398 = vmatprep.subr.bf16.mxu0 0
      %1399 = vmatpush1.bf16.msra.mxu0 0
      %1400 = vmatprep.subr.bf16.mxu0 0
      %1401 = vmatpush1.bf16.msra.mxu0 0
      %1402 = vmatprep.subr.bf16.mxu0 0
      %1403 = vmatpush1.bf16.msra.mxu0 0
      %1404 = vmatprep.subr.bf16.mxu0 0
      %1405 = vmatpush1.bf16.msra.mxu0 0
      %1406 = vmatprep.subr.bf16.mxu0 0
      %1407 = vmatpush1.bf16.msra.mxu0 0
      %1408 = vmatprep.subr.bf16.mxu0 0
      %1409 = vmatpush1.bf16.msra.mxu0 0
      %1410 = vmatprep.subr.bf16.mxu0 0
      %1411 = vmatpush1.bf16.msra.mxu0 %v1394
      %1412 = vmatprep.subr.bf16.mxu0 0
      %1413 = vmatpush2.bf16.msra.mxu0 0
      %1414 = vmatprep.subr.bf16.mxu0 0
      %1415 = vmatpush2.bf16.msra.mxu0 0
      %1416 = vmatprep.subr.bf16.mxu0 0
      %1417 = vmatpush2.bf16.msra.mxu0 0
      %1418 = vmatprep.subr.bf16.mxu0 0
      %1419 = vmatpush2.bf16.msra.mxu0 0
      %1420 = vmatprep.subr.bf16.mxu0 0
      %1421 = vmatpush2.bf16.msra.mxu0 0
      %1422 = vmatprep.subr.bf16.mxu0 0
      %1423 = vmatpush2.bf16.msra.mxu0 0
      %1424 = vmatprep.subr.bf16.mxu0 0
      %1425 = vmatpush2.bf16.msra.mxu0 0
      %1426 = vmatprep.subr.bf16.mxu0 0
      %1427 = vmatpush2.bf16.msra.mxu0 0
      %1428 = vmatprep.mubr.bf16.mxu0 0
      %1429 = vmatmul.mubr.bf16.gmra.mxu0 %v1391
      %v1430 = vpop.f32.mrf.mxu0
      %v1431 = vadd.f32 0.0, %v1430
      %v1432 = vpop.f32.mrf.mxu0
      %v1433 = vpop.f32.mrf.mxu0
      %v1434 = vpop.f32.mrf.mxu0
      %1435 = vdwg.mxu0
      %v1436 = vadd.f32 %v1386, %v1431
      %s1437 = scalar_lea.vmem %s2, 80
      %v1438 = vld [vmem:[%s1437] sm:$0xf]
      %v1440 = vunpack.c.l.b16 %v1387
      %v1441 = vunpack.c.h.b16 %v1387
      %v1442 = vpack.c.b16 %v1440, %v1440
      %v1443 = vpack.c.b16 %v1441, %v1441
      %1444 = vrot.lane.b32.xlu0 %v1442, 127
      %v1445 = vpop.permute.xlu0 %1444
      %1446 = vrot.lane.b32.xlu0 %v1443, 127
      %v1447 = vpop.permute.xlu0 %1446
      %v1448 = vsel %vm421, %v1445, %v1447
      %v1450 = vsel %vm423, %v1438, 0
      %v1453 = vsel %vm427, %v1448, 0
      %1455 = vmatprep.subr.bf16.mxu0 0
      %1456 = vmatpush1.bf16.msra.mxu0 0
      %1457 = vmatprep.subr.bf16.mxu0 0
      %1458 = vmatpush1.bf16.msra.mxu0 0
      %1459 = vmatprep.subr.bf16.mxu0 0
      %1460 = vmatpush1.bf16.msra.mxu0 0
      %1461 = vmatprep.subr.bf16.mxu0 0
      %1462 = vmatpush1.bf16.msra.mxu0 0
      %1463 = vmatprep.subr.bf16.mxu0 0
      %1464 = vmatpush1.bf16.msra.mxu0 0
      %1465 = vmatprep.subr.bf16.mxu0 0
      %1466 = vmatpush1.bf16.msra.mxu0 0
      %1467 = vmatprep.subr.bf16.mxu0 0
      %1468 = vmatpush1.bf16.msra.mxu0 0
      %1469 = vmatprep.subr.bf16.mxu0 0
      %1470 = vmatpush1.bf16.msra.mxu0 %v1453
      %1471 = vmatprep.subr.bf16.mxu0 0
      %1472 = vmatpush2.bf16.msra.mxu0 0
      %1473 = vmatprep.subr.bf16.mxu0 0
      %1474 = vmatpush2.bf16.msra.mxu0 0
      %1475 = vmatprep.subr.bf16.mxu0 0
      %1476 = vmatpush2.bf16.msra.mxu0 0
      %1477 = vmatprep.subr.bf16.mxu0 0
      %1478 = vmatpush2.bf16.msra.mxu0 0
      %1479 = vmatprep.subr.bf16.mxu0 0
      %1480 = vmatpush2.bf16.msra.mxu0 0
      %1481 = vmatprep.subr.bf16.mxu0 0
      %1482 = vmatpush2.bf16.msra.mxu0 0
      %1483 = vmatprep.subr.bf16.mxu0 0
      %1484 = vmatpush2.bf16.msra.mxu0 0
      %1485 = vmatprep.subr.bf16.mxu0 0
      %1486 = vmatpush2.bf16.msra.mxu0 0
      %1487 = vmatprep.mubr.bf16.mxu0 0
      %1488 = vmatmul.mubr.bf16.gmra.mxu0 %v1450
      %v1489 = vpop.f32.mrf.mxu0
      %v1490 = vadd.f32 0.0, %v1489
      %v1491 = vpop.f32.mrf.mxu0
      %v1492 = vpop.f32.mrf.mxu0
      %v1493 = vpop.f32.mrf.mxu0
      %1494 = vdwg.mxu0
      %v1495 = vadd.f32 %v1436, %v1490
      %s1496 = scalar_lea.vmem %s2, 96
      %v1497 = vld [vmem:[%s1496] sm:$0xf]
      %1498 = vrot.lane.b32.xlu0 %v1442, 119
      %v1499 = vpop.permute.xlu0 %1498
      %1500 = vrot.lane.b32.xlu0 %v1443, 119
      %v1501 = vpop.permute.xlu0 %1500
      %v1502 = vsel %vm523, %v1499, %v1501
      %v1504 = vsel %vm423, %v1497, 0
      %v1507 = vsel %vm427, %v1502, 0
      %1509 = vmatprep.subr.bf16.mxu0 0
      %1510 = vmatpush1.bf16.msra.mxu0 0
      %1511 = vmatprep.subr.bf16.mxu0 0
      %1512 = vmatpush1.bf16.msra.mxu0 0
      %1513 = vmatprep.subr.bf16.mxu0 0
      %1514 = vmatpush1.bf16.msra.mxu0 0
      %1515 = vmatprep.subr.bf16.mxu0 0
      %1516 = vmatpush1.bf16.msra.mxu0 0
      %1517 = vmatprep.subr.bf16.mxu0 0
      %1518 = vmatpush1.bf16.msra.mxu0 0
      %1519 = vmatprep.subr.bf16.mxu0 0
      %1520 = vmatpush1.bf16.msra.mxu0 0
      %1521 = vmatprep.subr.bf16.mxu0 0
      %1522 = vmatpush1.bf16.msra.mxu0 0
      %1523 = vmatprep.subr.bf16.mxu0 0
      %1524 = vmatpush1.bf16.msra.mxu0 %v1507
      %1525 = vmatprep.subr.bf16.mxu0 0
      %1526 = vmatpush2.bf16.msra.mxu0 0
      %1527 = vmatprep.subr.bf16.mxu0 0
      %1528 = vmatpush2.bf16.msra.mxu0 0
      %1529 = vmatprep.subr.bf16.mxu0 0
      %1530 = vmatpush2.bf16.msra.mxu0 0
      %1531 = vmatprep.subr.bf16.mxu0 0
      %1532 = vmatpush2.bf16.msra.mxu0 0
      %1533 = vmatprep.subr.bf16.mxu0 0
      %1534 = vmatpush2.bf16.msra.mxu0 0
      %1535 = vmatprep.subr.bf16.mxu0 0
      %1536 = vmatpush2.bf16.msra.mxu0 0
      %1537 = vmatprep.subr.bf16.mxu0 0
      %1538 = vmatpush2.bf16.msra.mxu0 0
      %1539 = vmatprep.subr.bf16.mxu0 0
      %1540 = vmatpush2.bf16.msra.mxu0 0
      %1541 = vmatprep.mubr.bf16.mxu0 0
      %1542 = vmatmul.mubr.bf16.gmra.mxu0 %v1504
      %v1543 = vpop.f32.mrf.mxu0
      %v1544 = vadd.f32 0.0, %v1543
      %v1545 = vpop.f32.mrf.mxu0
      %v1546 = vpop.f32.mrf.mxu0
      %v1547 = vpop.f32.mrf.mxu0
      %1548 = vdwg.mxu0
      %v1549 = vadd.f32 %v1495, %v1544
      %s1550 = scalar_lea.vmem %s2, 104
      %v1551 = vld [vmem:[%s1550] sm:$0xf]
      %1552 = vrot.lane.b32.xlu0 %v1442, 118
      %v1553 = vpop.permute.xlu0 %1552
      %1554 = vrot.lane.b32.xlu0 %v1443, 118
      %v1555 = vpop.permute.xlu0 %1554
      %v1556 = vsel %vm578, %v1553, %v1555
      %v1558 = vsel %vm423, %v1551, 0
      %v1561 = vsel %vm427, %v1556, 0
      %1563 = vmatprep.subr.bf16.mxu0 0
      %1564 = vmatpush1.bf16.msra.mxu0 0
      %1565 = vmatprep.subr.bf16.mxu0 0
      %1566 = vmatpush1.bf16.msra.mxu0 0
      %1567 = vmatprep.subr.bf16.mxu0 0
      %1568 = vmatpush1.bf16.msra.mxu0 0
      %1569 = vmatprep.subr.bf16.mxu0 0
      %1570 = vmatpush1.bf16.msra.mxu0 0
      %1571 = vmatprep.subr.bf16.mxu0 0
      %1572 = vmatpush1.bf16.msra.mxu0 0
      %1573 = vmatprep.subr.bf16.mxu0 0
      %1574 = vmatpush1.bf16.msra.mxu0 0
      %1575 = vmatprep.subr.bf16.mxu0 0
      %1576 = vmatpush1.bf16.msra.mxu0 0
      %1577 = vmatprep.subr.bf16.mxu0 0
      %1578 = vmatpush1.bf16.msra.mxu0 %v1561
      %1579 = vmatprep.subr.bf16.mxu0 0
      %1580 = vmatpush2.bf16.msra.mxu0 0
      %1581 = vmatprep.subr.bf16.mxu0 0
      %1582 = vmatpush2.bf16.msra.mxu0 0
      %1583 = vmatprep.subr.bf16.mxu0 0
      %1584 = vmatpush2.bf16.msra.mxu0 0
      %1585 = vmatprep.subr.bf16.mxu0 0
      %1586 = vmatpush2.bf16.msra.mxu0 0
      %1587 = vmatprep.subr.bf16.mxu0 0
      %1588 = vmatpush2.bf16.msra.mxu0 0
      %1589 = vmatprep.subr.bf16.mxu0 0
      %1590 = vmatpush2.bf16.msra.mxu0 0
      %1591 = vmatprep.subr.bf16.mxu0 0
      %1592 = vmatpush2.bf16.msra.mxu0 0
      %1593 = vmatprep.subr.bf16.mxu0 0
      %1594 = vmatpush2.bf16.msra.mxu0 0
      %1595 = vmatprep.mubr.bf16.mxu0 0
      %1596 = vmatmul.mubr.bf16.gmra.mxu0 %v1558
      %v1597 = vpop.f32.mrf.mxu0
      %v1598 = vadd.f32 0.0, %v1597
      %v1599 = vpop.f32.mrf.mxu0
      %v1600 = vpop.f32.mrf.mxu0
      %v1601 = vpop.f32.mrf.mxu0
      %1602 = vdwg.mxu0
      %v1603 = vadd.f32 %v1549, %v1598
      %s1604 = scalar_lea.vmem %s380, 8
      %v1605 = vld [vmem:[%s1604] sm:$0xff]
      %s1606 = scalar_lea.vmem %s2, 76
      %v1607 = vld [vmem:[%s1606] sm:$0xf]
      %v1609 = vsel %vm423, %v1607, 0
      %v1612 = vsel %vm427, %v1605, 0
      %1614 = vmatprep.subr.bf16.mxu0 0
      %1615 = vmatpush1.bf16.msra.mxu0 0
      %1616 = vmatprep.subr.bf16.mxu0 0
      %1617 = vmatpush1.bf16.msra.mxu0 0
      %1618 = vmatprep.subr.bf16.mxu0 0
      %1619 = vmatpush1.bf16.msra.mxu0 0
      %1620 = vmatprep.subr.bf16.mxu0 0
      %1621 = vmatpush1.bf16.msra.mxu0 0
      %1622 = vmatprep.subr.bf16.mxu0 0
      %1623 = vmatpush1.bf16.msra.mxu0 0
      %1624 = vmatprep.subr.bf16.mxu0 0
      %1625 = vmatpush1.bf16.msra.mxu0 0
      %1626 = vmatprep.subr.bf16.mxu0 0
      %1627 = vmatpush1.bf16.msra.mxu0 0
      %1628 = vmatprep.subr.bf16.mxu0 0
      %1629 = vmatpush1.bf16.msra.mxu0 %v1612
      %1630 = vmatprep.subr.bf16.mxu0 0
      %1631 = vmatpush2.bf16.msra.mxu0 0
      %1632 = vmatprep.subr.bf16.mxu0 0
      %1633 = vmatpush2.bf16.msra.mxu0 0
      %1634 = vmatprep.subr.bf16.mxu0 0
      %1635 = vmatpush2.bf16.msra.mxu0 0
      %1636 = vmatprep.subr.bf16.mxu0 0
      %1637 = vmatpush2.bf16.msra.mxu0 0
      %1638 = vmatprep.subr.bf16.mxu0 0
      %1639 = vmatpush2.bf16.msra.mxu0 0
      %1640 = vmatprep.subr.bf16.mxu0 0
      %1641 = vmatpush2.bf16.msra.mxu0 0
      %1642 = vmatprep.subr.bf16.mxu0 0
      %1643 = vmatpush2.bf16.msra.mxu0 0
      %1644 = vmatprep.subr.bf16.mxu0 0
      %1645 = vmatpush2.bf16.msra.mxu0 0
      %1646 = vmatprep.mubr.bf16.mxu0 0
      %1647 = vmatmul.mubr.bf16.gmra.mxu0 %v1609
      %v1648 = vpop.f32.mrf.mxu0
      %v1649 = vadd.f32 0.0, %v1648
      %v1650 = vpop.f32.mrf.mxu0
      %v1651 = vpop.f32.mrf.mxu0
      %v1652 = vpop.f32.mrf.mxu0
      %1653 = vdwg.mxu0
      %v1654 = vadd.f32 %v1603, %v1649
      %s1655 = scalar_lea.vmem %s2, 100
      %v1656 = vld [vmem:[%s1655] sm:$0xf]
      %v1658 = vunpack.c.l.b16 %v1605
      %v1659 = vunpack.c.h.b16 %v1605
      %v1660 = vpack.c.b16 %v1658, %v1658
      %v1661 = vpack.c.b16 %v1659, %v1659
      %1662 = vrot.lane.b32.xlu0 %v1660, 119
      %v1663 = vpop.permute.xlu0 %1662
      %1664 = vrot.lane.b32.xlu0 %v1661, 119
      %v1665 = vpop.permute.xlu0 %1664
      %v1666 = vsel %vm523, %v1663, %v1665
      %v1668 = vsel %vm423, %v1656, 0
      %v1671 = vsel %vm427, %v1666, 0
      %1673 = vmatprep.subr.bf16.mxu0 0
      %1674 = vmatpush1.bf16.msra.mxu0 0
      %1675 = vmatprep.subr.bf16.mxu0 0
      %1676 = vmatpush1.bf16.msra.mxu0 0
      %1677 = vmatprep.subr.bf16.mxu0 0
      %1678 = vmatpush1.bf16.msra.mxu0 0
      %1679 = vmatprep.subr.bf16.mxu0 0
      %1680 = vmatpush1.bf16.msra.mxu0 0
      %1681 = vmatprep.subr.bf16.mxu0 0
      %1682 = vmatpush1.bf16.msra.mxu0 0
      %1683 = vmatprep.subr.bf16.mxu0 0
      %1684 = vmatpush1.bf16.msra.mxu0 0
      %1685 = vmatprep.subr.bf16.mxu0 0
      %1686 = vmatpush1.bf16.msra.mxu0 0
      %1687 = vmatprep.subr.bf16.mxu0 0
      %1688 = vmatpush1.bf16.msra.mxu0 %v1671
      %1689 = vmatprep.subr.bf16.mxu0 0
      %1690 = vmatpush2.bf16.msra.mxu0 0
      %1691 = vmatprep.subr.bf16.mxu0 0
      %1692 = vmatpush2.bf16.msra.mxu0 0
      %1693 = vmatprep.subr.bf16.mxu0 0
      %1694 = vmatpush2.bf16.msra.mxu0 0
      %1695 = vmatprep.subr.bf16.mxu0 0
      %1696 = vmatpush2.bf16.msra.mxu0 0
      %1697 = vmatprep.subr.bf16.mxu0 0
      %1698 = vmatpush2.bf16.msra.mxu0 0
      %1699 = vmatprep.subr.bf16.mxu0 0
      %1700 = vmatpush2.bf16.msra.mxu0 0
      %1701 = vmatprep.subr.bf16.mxu0 0
      %1702 = vmatpush2.bf16.msra.mxu0 0
      %1703 = vmatprep.subr.bf16.mxu0 0
      %1704 = vmatpush2.bf16.msra.mxu0 0
      %1705 = vmatprep.mubr.bf16.mxu0 0
      %1706 = vmatmul.mubr.bf16.gmra.mxu0 %v1668
      %v1707 = vpop.f32.mrf.mxu0
      %v1708 = vadd.f32 0.0, %v1707
      %v1709 = vpop.f32.mrf.mxu0
      %v1710 = vpop.f32.mrf.mxu0
      %v1711 = vpop.f32.mrf.mxu0
      %1712 = vdwg.mxu0
      %v1713 = vadd.f32 %v1654, %v1708
      %s1714 = scalar_lea.vmem %s380, 16
      %v1715 = vld [vmem:[%s1714] sm:$0xff]
      %s1716 = scalar_lea.vmem %s2, 84
      %v1717 = vld [vmem:[%s1716] sm:$0xf]
      %v1719 = vsel %vm423, %v1717, 0
      %v1722 = vsel %vm427, %v1715, 0
      %1724 = vmatprep.subr.bf16.mxu0 0
      %1725 = vmatpush1.bf16.msra.mxu0 0
      %1726 = vmatprep.subr.bf16.mxu0 0
      %1727 = vmatpush1.bf16.msra.mxu0 0
      %1728 = vmatprep.subr.bf16.mxu0 0
      %1729 = vmatpush1.bf16.msra.mxu0 0
      %1730 = vmatprep.subr.bf16.mxu0 0
      %1731 = vmatpush1.bf16.msra.mxu0 0
      %1732 = vmatprep.subr.bf16.mxu0 0
      %1733 = vmatpush1.bf16.msra.mxu0 0
      %1734 = vmatprep.subr.bf16.mxu0 0
      %1735 = vmatpush1.bf16.msra.mxu0 0
      %1736 = vmatprep.subr.bf16.mxu0 0
      %1737 = vmatpush1.bf16.msra.mxu0 0
      %1738 = vmatprep.subr.bf16.mxu0 0
      %1739 = vmatpush1.bf16.msra.mxu0 %v1722
      %1740 = vmatprep.subr.bf16.mxu0 0
      %1741 = vmatpush2.bf16.msra.mxu0 0
      %1742 = vmatprep.subr.bf16.mxu0 0
      %1743 = vmatpush2.bf16.msra.mxu0 0
      %1744 = vmatprep.subr.bf16.mxu0 0
      %1745 = vmatpush2.bf16.msra.mxu0 0
      %1746 = vmatprep.subr.bf16.mxu0 0
      %1747 = vmatpush2.bf16.msra.mxu0 0
      %1748 = vmatprep.subr.bf16.mxu0 0
      %1749 = vmatpush2.bf16.msra.mxu0 0
      %1750 = vmatprep.subr.bf16.mxu0 0
      %1751 = vmatpush2.bf16.msra.mxu0 0
      %1752 = vmatprep.subr.bf16.mxu0 0
      %1753 = vmatpush2.bf16.msra.mxu0 0
      %1754 = vmatprep.subr.bf16.mxu0 0
      %1755 = vmatpush2.bf16.msra.mxu0 0
      %1756 = vmatprep.mubr.bf16.mxu0 0
      %1757 = vmatmul.mubr.bf16.gmra.mxu0 %v1719
      %v1758 = vpop.f32.mrf.mxu0
      %v1759 = vadd.f32 0.0, %v1758
      %v1760 = vpop.f32.mrf.mxu0
      %v1761 = vpop.f32.mrf.mxu0
      %v1762 = vpop.f32.mrf.mxu0
      %1763 = vdwg.mxu0
      %v1764 = vadd.f32 %v1713, %v1759
      %s1765 = scalar_lea.vmem %s2, 92
      %v1766 = vld [vmem:[%s1765] sm:$0xf]
      %v1768 = vunpack.c.l.b16 %v1715
      %v1769 = vunpack.c.h.b16 %v1715
      %v1770 = vpack.c.b16 %v1768, %v1768
      %v1771 = vpack.c.b16 %v1769, %v1769
      %1772 = vrot.lane.b32.xlu0 %v1770, 127
      %v1773 = vpop.permute.xlu0 %1772
      %1774 = vrot.lane.b32.xlu0 %v1771, 127
      %v1775 = vpop.permute.xlu0 %1774
      %v1776 = vsel %vm421, %v1773, %v1775
      %v1778 = vsel %vm423, %v1766, 0
      %v1781 = vsel %vm427, %v1776, 0
      %1783 = vmatprep.subr.bf16.mxu0 0
      %1784 = vmatpush1.bf16.msra.mxu0 0
      %1785 = vmatprep.subr.bf16.mxu0 0
      %1786 = vmatpush1.bf16.msra.mxu0 0
      %1787 = vmatprep.subr.bf16.mxu0 0
      %1788 = vmatpush1.bf16.msra.mxu0 0
      %1789 = vmatprep.subr.bf16.mxu0 0
      %1790 = vmatpush1.bf16.msra.mxu0 0
      %1791 = vmatprep.subr.bf16.mxu0 0
      %1792 = vmatpush1.bf16.msra.mxu0 0
      %1793 = vmatprep.subr.bf16.mxu0 0
      %1794 = vmatpush1.bf16.msra.mxu0 0
      %1795 = vmatprep.subr.bf16.mxu0 0
      %1796 = vmatpush1.bf16.msra.mxu0 0
      %1797 = vmatprep.subr.bf16.mxu0 0
      %1798 = vmatpush1.bf16.msra.mxu0 %v1781
      %1799 = vmatprep.subr.bf16.mxu0 0
      %1800 = vmatpush2.bf16.msra.mxu0 0
      %1801 = vmatprep.subr.bf16.mxu0 0
      %1802 = vmatpush2.bf16.msra.mxu0 0
      %1803 = vmatprep.subr.bf16.mxu0 0
      %1804 = vmatpush2.bf16.msra.mxu0 0
      %1805 = vmatprep.subr.bf16.mxu0 0
      %1806 = vmatpush2.bf16.msra.mxu0 0
      %1807 = vmatprep.subr.bf16.mxu0 0
      %1808 = vmatpush2.bf16.msra.mxu0 0
      %1809 = vmatprep.subr.bf16.mxu0 0
      %1810 = vmatpush2.bf16.msra.mxu0 0
      %1811 = vmatprep.subr.bf16.mxu0 0
      %1812 = vmatpush2.bf16.msra.mxu0 0
      %1813 = vmatprep.subr.bf16.mxu0 0
      %1814 = vmatpush2.bf16.msra.mxu0 0
      %1815 = vmatprep.mubr.bf16.mxu0 0
      %1816 = vmatmul.mubr.bf16.gmra.mxu0 %v1778
      %v1817 = vpop.f32.mrf.mxu0
      %v1818 = vadd.f32 0.0, %v1817
      %v1819 = vpop.f32.mrf.mxu0
      %v1820 = vpop.f32.mrf.mxu0
      %v1821 = vpop.f32.mrf.mxu0
      %1822 = vdwg.mxu0
      %v1823 = vadd.f32 %v1764, %v1818
      %s1824 = scalar_lea.vmem %s380, 24
      %v1825 = vld [vmem:[%s1824] sm:$0xff]
      %s1826 = scalar_lea.vmem %s2, 88
      %v1827 = vld [vmem:[%s1826] sm:$0xf]
      %v1829 = vsel %vm423, %v1827, 0
      %v1832 = vsel %vm427, %v1825, 0
      %1834 = vmatprep.subr.bf16.mxu0 0
      %1835 = vmatpush1.bf16.msra.mxu0 0
      %1836 = vmatprep.subr.bf16.mxu0 0
      %1837 = vmatpush1.bf16.msra.mxu0 0
      %1838 = vmatprep.subr.bf16.mxu0 0
      %1839 = vmatpush1.bf16.msra.mxu0 0
      %1840 = vmatprep.subr.bf16.mxu0 0
      %1841 = vmatpush1.bf16.msra.mxu0 0
      %1842 = vmatprep.subr.bf16.mxu0 0
      %1843 = vmatpush1.bf16.msra.mxu0 0
      %1844 = vmatprep.subr.bf16.mxu0 0
      %1845 = vmatpush1.bf16.msra.mxu0 0
      %1846 = vmatprep.subr.bf16.mxu0 0
      %1847 = vmatpush1.bf16.msra.mxu0 0
      %1848 = vmatprep.subr.bf16.mxu0 0
      %1849 = vmatpush1.bf16.msra.mxu0 %v1832
      %1850 = vmatprep.subr.bf16.mxu0 0
      %1851 = vmatpush2.bf16.msra.mxu0 0
      %1852 = vmatprep.subr.bf16.mxu0 0
      %1853 = vmatpush2.bf16.msra.mxu0 0
      %1854 = vmatprep.subr.bf16.mxu0 0
      %1855 = vmatpush2.bf16.msra.mxu0 0
      %1856 = vmatprep.subr.bf16.mxu0 0
      %1857 = vmatpush2.bf16.msra.mxu0 0
      %1858 = vmatprep.subr.bf16.mxu0 0
      %1859 = vmatpush2.bf16.msra.mxu0 0
      %1860 = vmatprep.subr.bf16.mxu0 0
      %1861 = vmatpush2.bf16.msra.mxu0 0
      %1862 = vmatprep.subr.bf16.mxu0 0
      %1863 = vmatpush2.bf16.msra.mxu0 0
      %1864 = vmatprep.subr.bf16.mxu0 0
      %1865 = vmatpush2.bf16.msra.mxu0 0
      %1866 = vmatprep.mubr.bf16.mxu0 0
      %1867 = vmatmul.mubr.bf16.gmra.mxu0 %v1829
      %v1868 = vpop.f32.mrf.mxu0
      %v1869 = vadd.f32 0.0, %v1868
      %v1870 = vpop.f32.mrf.mxu0
      %v1871 = vpop.f32.mrf.mxu0
      %v1872 = vpop.f32.mrf.mxu0
      %1873 = vdwg.mxu0
      %v1874 = vadd.f32 %v1823, %v1869
      %v1875 = vld [vmem:[%s3] sm:$0xff]
      %1877 = vset.pattern.permute.xlu0 0
      %1878 = vperm.xlu0 %1877, %v1875
      %v1879 = vpop.permute.xlu0 %1878
      %v1881 = vadd.f32 %v1874, %v1879
      %v1882 = vld [vmem:[%s4] sm:$0x1]
      %v1884 = vlaneseq
      %v1885 = vshrl.u32 %v1884, 7
      %v1886 = vsub.s32 0, %v1885
      %v1887 = vrot.slane %v1882, %v1886
      %v1889 = vmul.f32 %v1881, %v1887
      %1890 = vadd.xlane.f32.xlu0 %v1889
      %v1891 = vpop.xlane.xlu0 %1890
      %vm1892 = vcmask 7168
      %1893 = vst.msk [vmem:[%s398] sm:$0xff] %vm1892, %v1891
      %v1894 = vmul.f32 %v1881, %v1881
      %v1895 = vmul.f32 %v1894, %v1887
      %1896 = vadd.xlane.f32.xlu0 %v1895
      %v1897 = vpop.xlane.xlu0 %1896
      %1898 = vst.msk [vmem:[%s406] sm:$0xff] %vm1892, %v1897
      %v1899 = vpack.c.bf16 %v1881, %v1881
      %1900 = vst [vmem:[%s390] sm:$0xf] %v1899
      %p1901 = scmp.lt.s32.totalorder %s23, 1
      %s1902 = scalar_select %p1901, %s23, 1
      %p1903 = scmp.lt.s32.totalorder %s24, 7
      %s1904 = scalar_select %p1903, %s24, 7
      %s1905 = smul.addr %s1902, 8
      %s1906 = sadd.s32 %s1904, %s1905
      %s1907 = smul.addr %s1906, 4
      %s1908 = scalar_lea.vmem %s5, %s1907
      %p1909 = scmp.lt.s32.totalorder %s23, 1
      %s1910 = scalar_select %p1909, %s23, 1
      %p1911 = scmp.lt.s32.totalorder %s24, 7
      %s1912 = scalar_select %p1911, %s24, 7
      %s1913 = smul.addr %s1910, 8
      %s1914 = sadd.s32 %s1912, %s1913
      %s1915 = smul.addr %s1914, 8
      %s1916 = scalar_lea.vmem %s6, %s1915
      %p1917 = scmp.lt.s32.totalorder %s23, 1
      %s1918 = scalar_select %p1917, %s23, 1
      %p1919 = scmp.lt.s32.totalorder %s24, 7
      %s1920 = scalar_select %p1919, %s24, 7
      %s1921 = smul.addr %s1918, 8
      %s1922 = sadd.s32 %s1920, %s1921
      %s1923 = smul.addr %s1922, 8
      %s1924 = scalar_lea.vmem %s7, %s1923
      // Predicated region
      $region41: #{down_forward.4} parent=39 // pred_check
        %p1925 = pneg %p174
      $region42: #{down_forward.4} parent=39 // pred_check_branch
        %1927 = sbr.rel (%p1925) target = $region44
      $region43: #{down_forward.4} parent=39 // pred_region
        _
      $region44: #{down_forward.4} parent=39 // pred_fallthru
        _
      // Predicated region
      $region45: #{down_forward.4} parent=39 // pred_check
        %p1928 = pneg %p202
      $region46: #{down_forward.4} parent=39 // pred_check_branch
        %1930 = sbr.rel (%p1928) target = $region48
      $region47: #{down_forward.4} parent=39 // pred_region
        _
      $region48: #{down_forward.4} parent=39 // pred_fallthru
        _
      // Predicated region
      $region49: #{down_forward.4} parent=39 // pred_check
        %p1931 = pneg %p230
      $region50: #{down_forward.4} parent=39 // pred_check_branch
        %1933 = sbr.rel (%p1931) target = $region52
      $region51: #{down_forward.4} parent=39 // pred_region
        _
      $region52: #{down_forward.4} parent=39 // pred_fallthru
        _
    $region40: #{down_forward.4} parent=5 // pred_fallthru
      _
    %p1934 = scmp.le.s32.totalorder 2, %s14
    // Predicated region
    $region53: #{down_forward.4} parent=5 // pred_check
      %p1935 = pneg %p1934
    $region54: #{down_forward.4} parent=5 // pred_check_branch
      %1937 = sbr.rel (%p1935) target = $region56
    $region55: #{down_forward.4} parent=5 // pred_region
      %s1938 = ssub.s32 %s14, 2
      // Predicated region
      $region57: #{down_forward.4} parent=55 // pred_check
        %p1939 = pneg %p180
      $region58: #{down_forward.4} parent=55 // pred_check_branch
        %1941 = sbr.rel (%p1939) target = $region60
      $region59: #{down_forward.4} parent=55 // pred_region
        %p1942 = scmp.lt.s32.totalorder %s25, 1
        %s1943 = scalar_select %p1942, %s25, 1
        %p1944 = scmp.lt.s32.totalorder %s26, 7
        %s1945 = scalar_select %p1944, %s26, 7
        %s1946 = smul.addr %s1943, 8
        %s1947 = sadd.s32 %s1945, %s1946
        %s1948 = smul.addr %s1947, 4
        %s1949 = scalar_lea.vmem %s5, %s1948
      $region60: #{down_forward.4} parent=55 // pred_fallthru
        _
      // Predicated region
      $region61: #{down_forward.4} parent=55 // pred_check
        %p1950 = pneg %p208
      $region62: #{down_forward.4} parent=55 // pred_check_branch
        %1952 = sbr.rel (%p1950) target = $region64
      $region63: #{down_forward.4} parent=55 // pred_region
        %p1953 = scmp.lt.s32.totalorder %s25, 1
        %s1954 = scalar_select %p1953, %s25, 1
        %p1955 = scmp.lt.s32.totalorder %s26, 7
        %s1956 = scalar_select %p1955, %s26, 7
        %s1957 = smul.addr %s1954, 8
        %s1958 = sadd.s32 %s1956, %s1957
        %s1959 = smul.addr %s1958, 8
        %s1960 = scalar_lea.vmem %s6, %s1959
      $region64: #{down_forward.4} parent=55 // pred_fallthru
        _
      // Predicated region
      $region65: #{down_forward.4} parent=55 // pred_check
        %p1961 = pneg %p236
      $region66: #{down_forward.4} parent=55 // pred_check_branch
        %1963 = sbr.rel (%p1961) target = $region68
      $region67: #{down_forward.4} parent=55 // pred_region
        %p1964 = scmp.lt.s32.totalorder %s25, 1
        %s1965 = scalar_select %p1964, %s25, 1
        %p1966 = scmp.lt.s32.totalorder %s26, 7
        %s1967 = scalar_select %p1966, %s26, 7
        %s1968 = smul.addr %s1965, 8
        %s1969 = sadd.s32 %s1967, %s1968
        %s1970 = smul.addr %s1969, 8
        %s1971 = scalar_lea.vmem %s7, %s1970
      $region68: #{down_forward.4} parent=55 // pred_fallthru
        _
    $region56: #{down_forward.4} parent=5 // pred_fallthru
      _
  $region6: #{down_forward.4} parent=0 // loop_footer
    %s18 = sadd.s32 1, %s14
  $region7: #{down_forward.4} parent=0 // loop_footer_branch
    %13 = sbr.rel target = $region3
  $region8: #{down_forward.4} parent=0 // loop_exit
    _

// kernel: down_forward.5
$region0: #{down_forward.5}
  #allocation0 [shape = 'u32[]', space=smem, size = 0x4, offset = 0x4, fixed_abs, tag = 'smem constant byte address 0x4 - core index']
  #allocation1 [shape = 'u32[144,128]{1,0:T(1,128)}', space=vmem, size = 0x12000, scoped, tag = 'internal scratch']
  %s0 = inlined_call_operand.vmem [shape: bf16[2,8,8,128], index: 0, kind: input, shape index: {}]
  %s1 = inlined_call_operand.vmem [shape: bf16[2,18,4,8,256], index: 1, kind: input, shape index: {}]
  %s2 = inlined_call_operand.vmem [shape: f32[2,8,1], index: 2, kind: input, shape index: {}]
  %s3 = inlined_call_operand.vmem [shape: f32[2,8,1], index: 3, kind: input, shape index: {}]
  %s4 = inlined_call_operand.vmem [shape: f32[8,1], index: 4, kind: input, shape index: {}]
  %s5 = inlined_call_operand.vmem [shape: f32[8,1], index: 5, kind: input, shape index: {}]
  %s6 = inlined_call_operand.vmem [shape: bf16[16,8], index: 6, kind: input, shape index: {}]
  %s7 = inlined_call_operand.vmem [shape: f32[16,1], index: 7, kind: input, shape index: {}]
  %s8 = inlined_call_operand.vmem [shape: bf16[16,16], index: 8, kind: input, shape index: {}]
  %s9 = inlined_call_operand.vmem [shape: f32[16,1], index: 9, kind: input, shape index: {}]
  %s10 = inlined_call_operand.vmem [shape: bf16[16,8], index: 10, kind: input, shape index: {}]
  %s11 = inlined_call_operand.vmem [shape: f32[16,1], index: 11, kind: input, shape index: {}]
  %s12 = inlined_call_operand.vmem [shape: bf16[2,8,16,128], index: 12, kind: output, shape index: {}]
  %s13 = sld [smem:[#allocation0]]
  $region81: #{down_forward.5} parent=0
    _
  %s15 = ssub.s32 1, %s13
  %s16 = scalar_select 0, %s15, %s13
  loop: start=0, step=1, limit=18
  $region2: #{down_forward.5} parent=0 // loop_pre_header
    _
  $region3: #{down_forward.5} parent=0 // loop_header
    %s18 = sphi 0, %s22
    %p19 = scmp.ge.s32.totalorder %s18, 18
    %s25 = sphi 0, %s37
    %s26 = sphi 0, %s33
    %s27 = sphi 0, %s25
    %s28 = sphi 0, %s26
    %s29 = sphi 0, %s27
    %s30 = sphi 0, %s28
    %s42 = sphi 0, %s44
    %s45 = sphi 0, %s42
    %s46 = sphi 0, %s45
    %s62 = sphi 0, %s46
    %s74 = sphi 0, %s76
    %s77 = sphi 0, %s74
    %s78 = sphi 0, %s77
    %s94 = sphi 0, %s78
    %s100 = sphi 0, %s102
    %s103 = sphi 0, %s100
    %s104 = sphi 0, %s103
    %s120 = sphi 0, %s104
    %s126 = sphi 0, %s128
    %s129 = sphi 0, %s126
    %s130 = sphi 0, %s129
    %s146 = sphi 0, %s130
    %s150 = sphi 0, %s150
    %s152 = sphi 0, %s150
    %s153 = sphi 0, %s152
    %s167 = sphi 0, %s153
    %s171 = sphi 0, %s171
    %s173 = sphi 0, %s171
    %s174 = sphi 0, %s173
    %s188 = sphi 0, %s174
    %s192 = sphi 0, %s192
    %s194 = sphi 0, %s192
    %s195 = sphi 0, %s194
    %s209 = sphi 0, %s195
    %s213 = sphi 0, %s213
    %s215 = sphi 0, %s213
    %s216 = sphi 0, %s215
    %s230 = sphi 0, %s216
    %s234 = sphi 0, %s234
    %s236 = sphi 0, %s234
    %s237 = sphi 0, %s236
    %s251 = sphi 0, %s237
    %s255 = sphi 0, %s255
    %s257 = sphi 0, %s255
    %s258 = sphi 0, %s257
    %s272 = sphi 0, %s258
    %s276 = sphi 0, %s276
    %s278 = sphi 0, %s276
    %s279 = sphi 0, %s278
    %s293 = sphi 0, %s279
    %s297 = sphi 0, %s297
    %s299 = sphi 0, %s297
    %s300 = sphi 0, %s299
    %s314 = sphi 0, %s300
    %s322 = sphi 0, %s324
    %s325 = sphi 0, %s322
    %s326 = sphi 0, %s325
    %s342 = sphi 0, %s326
  $region4: #{down_forward.5} parent=0 // loop_header_branch
    %21 = sbr.rel (%p19) target = $region8
  $region5: #{down_forward.5} parent=0 // loop_body
    %s23 = ssub.s32 %s18, 1
    %s24 = ssub.s32 %s18, 2
    %s31 = sadd.s32 1, %s26
    %p32 = scmp.ge.s32.totalorder %s31, 8
    %s33 = scalar_select %p32, 0, %s31
    %s34 = sadd.s32 1, %s25
    %s35 = scalar_select %p32, %s34, %s25
    %p36 = scmp.ge.s32.totalorder %s35, 2
    %s37 = scalar_select %p36, 0, %s35
    %s38 = ssub.s32 %s25, %s37
    %s39 = ssub.s32 %s26, %s33
    %s40 = sor.u32 %s38, %s39
    %p41 = scmp.eq.s32.totalorder %s40, 0
    %s43 = sadd.s32 %s42, 1
    %s44 = scalar_select %p41, %s42, %s43
    %p47 = pneg %p41
    %p48 = scmp.eq.s32.totalorder %s18, 15
    %p49 = por %p47, %p48
    %p50 = scmp.ne.s32.totalorder %s42, %s45
    %p51 = scmp.eq.s32.totalorder %s18, 0
    %p52 = por %p50, %p51
    %p53 = scmp.ne.s32.totalorder %s42, %s45
    %p54 = scmp.eq.s32.totalorder %s23, 15
    %p55 = por %p53, %p54
    %p56 = scmp.ne.s32.totalorder %s45, %s46
    %p57 = scmp.eq.s32.totalorder %s23, 0
    %p58 = por %p56, %p57
    %p59 = scmp.ne.s32.totalorder %s45, %s46
    %p60 = scmp.eq.s32.totalorder %s24, 15
    %p61 = por %p59, %p60
    %p63 = scmp.ne.s32.totalorder %s46, %s62
    %p64 = scmp.eq.s32.totalorder %s24, 0
    %p65 = por %p63, %p64
    %s66 = smul.u32 %s26, 2
    %s67 = sadd.s32 %s66, 1
    %s68 = smul.u32 %s33, 2
    %s69 = sadd.s32 %s68, 1
    %s70 = ssub.s32 %s25, %s37
    %s71 = ssub.s32 %s67, %s69
    %s72 = sor.u32 %s70, %s71
    %p73 = scmp.eq.s32.totalorder %s72, 0
    %s75 = sadd.s32 %s74, 1
    %s76 = scalar_select %p73, %s74, %s75
    %p79 = pneg %p73
    %p80 = scmp.eq.s32.totalorder %s18, 15
    %p81 = por %p79, %p80
    %p82 = scmp.ne.s32.totalorder %s74, %s77
    %p83 = scmp.eq.s32.totalorder %s18, 0
    %p84 = por %p82, %p83
    %p85 = scmp.ne.s32.totalorder %s74, %s77
    %p86 = scmp.eq.s32.totalorder %s23, 15
    %p87 = por %p85, %p86
    %p88 = scmp.ne.s32.totalorder %s77, %s78
    %p89 = scmp.eq.s32.totalorder %s23, 0
    %p90 = por %p88, %p89
    %p91 = scmp.ne.s32.totalorder %s77, %s78
    %p92 = scmp.eq.s32.totalorder %s24, 15
    %p93 = por %p91, %p92
    %p95 = scmp.ne.s32.totalorder %s78, %s94
    %p96 = scmp.eq.s32.totalorder %s24, 0
    %p97 = por %p95, %p96
    %s98 = ssub.s32 %s25, %s37
    %p99 = scmp.eq.s32.totalorder %s98, 0
    %s101 = sadd.s32 %s100, 1
    %s102 = scalar_select %p99, %s100, %s101
    %p105 = pneg %p99
    %p106 = scmp.eq.s32.totalorder %s18, 15
    %p107 = por %p105, %p106
    %p108 = scmp.ne.s32.totalorder %s100, %s103
    %p109 = scmp.eq.s32.totalorder %s18, 0
    %p110 = por %p108, %p109
    %p111 = scmp.ne.s32.totalorder %s100, %s103
    %p112 = scmp.eq.s32.totalorder %s23, 15
    %p113 = por %p111, %p112
    %p114 = scmp.ne.s32.totalorder %s103, %s104
    %p115 = scmp.eq.s32.totalorder %s23, 0
    %p116 = por %p114, %p115
    %p117 = scmp.ne.s32.totalorder %s103, %s104
    %p118 = scmp.eq.s32.totalorder %s24, 15
    %p119 = por %p117, %p118
    %p121 = scmp.ne.s32.totalorder %s104, %s120
    %p122 = scmp.eq.s32.totalorder %s24, 0
    %p123 = por %p121, %p122
    %s124 = ssub.s32 %s25, %s37
    %p125 = scmp.eq.s32.totalorder %s124, 0
    %s127 = sadd.s32 %s126, 1
    %s128 = scalar_select %p125, %s126, %s127
    %p131 = pneg %p125
    %p132 = scmp.eq.s32.totalorder %s18, 15
    %p133 = por %p131, %p132
    %p134 = scmp.ne.s32.totalorder %s126, %s129
    %p135 = scmp.eq.s32.totalorder %s18, 0
    %p136 = por %p134, %p135
    %p137 = scmp.ne.s32.totalorder %s126, %s129
    %p138 = scmp.eq.s32.totalorder %s23, 15
    %p139 = por %p137, %p138
    %p140 = scmp.ne.s32.totalorder %s129, %s130
    %p141 = scmp.eq.s32.totalorder %s23, 0
    %p142 = por %p140, %p141
    %p143 = scmp.ne.s32.totalorder %s129, %s130
    %p144 = scmp.eq.s32.totalorder %s24, 15
    %p145 = por %p143, %p144
    %p147 = scmp.ne.s32.totalorder %s130, %s146
    %p148 = scmp.eq.s32.totalorder %s24, 0
    %p149 = por %p147, %p148
    %s151 = sadd.s32 %s150, 1
    %p154 = scmp.eq.s32.totalorder %s18, 15
    %p155 = scmp.ne.s32.totalorder %s150, %s152
    %p156 = scmp.eq.s32.totalorder %s18, 0
    %p157 = por %p155, %p156
    %p158 = scmp.ne.s32.totalorder %s150, %s152
    %p159 = scmp.eq.s32.totalorder %s23, 15
    %p160 = por %p158, %p159
    %p161 = scmp.ne.s32.totalorder %s152, %s153
    %p162 = scmp.eq.s32.totalorder %s23, 0
    %p163 = por %p161, %p162
    %p164 = scmp.ne.s32.totalorder %s152, %s153
    %p165 = scmp.eq.s32.totalorder %s24, 15
    %p166 = por %p164, %p165
    %p168 = scmp.ne.s32.totalorder %s153, %s167
    %p169 = scmp.eq.s32.totalorder %s24, 0
    %p170 = por %p168, %p169
    %s172 = sadd.s32 %s171, 1
    %p175 = scmp.eq.s32.totalorder %s18, 15
    %p176 = scmp.ne.s32.totalorder %s171, %s173
    %p177 = scmp.eq.s32.totalorder %s18, 0
    %p178 = por %p176, %p177
    %p179 = scmp.ne.s32.totalorder %s171, %s173
    %p180 = scmp.eq.s32.totalorder %s23, 15
    %p181 = por %p179, %p180
    %p182 = scmp.ne.s32.totalorder %s173, %s174
    %p183 = scmp.eq.s32.totalorder %s23, 0
    %p184 = por %p182, %p183
    %p185 = scmp.ne.s32.totalorder %s173, %s174
    %p186 = scmp.eq.s32.totalorder %s24, 15
    %p187 = por %p185, %p186
    %p189 = scmp.ne.s32.totalorder %s174, %s188
    %p190 = scmp.eq.s32.totalorder %s24, 0
    %p191 = por %p189, %p190
    %s193 = sadd.s32 %s192, 1
    %p196 = scmp.eq.s32.totalorder %s18, 15
    %p197 = scmp.ne.s32.totalorder %s192, %s194
    %p198 = scmp.eq.s32.totalorder %s18, 0
    %p199 = por %p197, %p198
    %p200 = scmp.ne.s32.totalorder %s192, %s194
    %p201 = scmp.eq.s32.totalorder %s23, 15
    %p202 = por %p200, %p201
    %p203 = scmp.ne.s32.totalorder %s194, %s195
    %p204 = scmp.eq.s32.totalorder %s23, 0
    %p205 = por %p203, %p204
    %p206 = scmp.ne.s32.totalorder %s194, %s195
    %p207 = scmp.eq.s32.totalorder %s24, 15
    %p208 = por %p206, %p207
    %p210 = scmp.ne.s32.totalorder %s195, %s209
    %p211 = scmp.eq.s32.totalorder %s24, 0
    %p212 = por %p210, %p211
    %s214 = sadd.s32 %s213, 1
    %p217 = scmp.eq.s32.totalorder %s18, 15
    %p218 = scmp.ne.s32.totalorder %s213, %s215
    %p219 = scmp.eq.s32.totalorder %s18, 0
    %p220 = por %p218, %p219
    %p221 = scmp.ne.s32.totalorder %s213, %s215
    %p222 = scmp.eq.s32.totalorder %s23, 15
    %p223 = por %p221, %p222
    %p224 = scmp.ne.s32.totalorder %s215, %s216
    %p225 = scmp.eq.s32.totalorder %s23, 0
    %p226 = por %p224, %p225
    %p227 = scmp.ne.s32.totalorder %s215, %s216
    %p228 = scmp.eq.s32.totalorder %s24, 15
    %p229 = por %p227, %p228
    %p231 = scmp.ne.s32.totalorder %s216, %s230
    %p232 = scmp.eq.s32.totalorder %s24, 0
    %p233 = por %p231, %p232
    %s235 = sadd.s32 %s234, 1
    %p238 = scmp.eq.s32.totalorder %s18, 15
    %p239 = scmp.ne.s32.totalorder %s234, %s236
    %p240 = scmp.eq.s32.totalorder %s18, 0
    %p241 = por %p239, %p240
    %p242 = scmp.ne.s32.totalorder %s234, %s236
    %p243 = scmp.eq.s32.totalorder %s23, 15
    %p244 = por %p242, %p243
    %p245 = scmp.ne.s32.totalorder %s236, %s237
    %p246 = scmp.eq.s32.totalorder %s23, 0
    %p247 = por %p245, %p246
    %p248 = scmp.ne.s32.totalorder %s236, %s237
    %p249 = scmp.eq.s32.totalorder %s24, 15
    %p250 = por %p248, %p249
    %p252 = scmp.ne.s32.totalorder %s237, %s251
    %p253 = scmp.eq.s32.totalorder %s24, 0
    %p254 = por %p252, %p253
    %s256 = sadd.s32 %s255, 1
    %p259 = scmp.eq.s32.totalorder %s18, 15
    %p260 = scmp.ne.s32.totalorder %s255, %s257
    %p261 = scmp.eq.s32.totalorder %s18, 0
    %p262 = por %p260, %p261
    %p263 = scmp.ne.s32.totalorder %s255, %s257
    %p264 = scmp.eq.s32.totalorder %s23, 15
    %p265 = por %p263, %p264
    %p266 = scmp.ne.s32.totalorder %s257, %s258
    %p267 = scmp.eq.s32.totalorder %s23, 0
    %p268 = por %p266, %p267
    %p269 = scmp.ne.s32.totalorder %s257, %s258
    %p270 = scmp.eq.s32.totalorder %s24, 15
    %p271 = por %p269, %p270
    %p273 = scmp.ne.s32.totalorder %s258, %s272
    %p274 = scmp.eq.s32.totalorder %s24, 0
    %p275 = por %p273, %p274
    %s277 = sadd.s32 %s276, 1
    %p280 = scmp.eq.s32.totalorder %s18, 15
    %p281 = scmp.ne.s32.totalorder %s276, %s278
    %p282 = scmp.eq.s32.totalorder %s18, 0
    %p283 = por %p281, %p282
    %p284 = scmp.ne.s32.totalorder %s276, %s278
    %p285 = scmp.eq.s32.totalorder %s23, 15
    %p286 = por %p284, %p285
    %p287 = scmp.ne.s32.totalorder %s278, %s279
    %p288 = scmp.eq.s32.totalorder %s23, 0
    %p289 = por %p287, %p288
    %p290 = scmp.ne.s32.totalorder %s278, %s279
    %p291 = scmp.eq.s32.totalorder %s24, 15
    %p292 = por %p290, %p291
    %p294 = scmp.ne.s32.totalorder %s279, %s293
    %p295 = scmp.eq.s32.totalorder %s24, 0
    %p296 = por %p294, %p295
    %s298 = sadd.s32 %s297, 1
    %p301 = scmp.eq.s32.totalorder %s18, 15
    %p302 = scmp.ne.s32.totalorder %s297, %s299
    %p303 = scmp.eq.s32.totalorder %s18, 0
    %p304 = por %p302, %p303
    %p305 = scmp.ne.s32.totalorder %s297, %s299
    %p306 = scmp.eq.s32.totalorder %s23, 15
    %p307 = por %p305, %p306
    %p308 = scmp.ne.s32.totalorder %s299, %s300
    %p309 = scmp.eq.s32.totalorder %s23, 0
    %p310 = por %p308, %p309
    %p311 = scmp.ne.s32.totalorder %s299, %s300
    %p312 = scmp.eq.s32.totalorder %s24, 15
    %p313 = por %p311, %p312
    %p315 = scmp.ne.s32.totalorder %s300, %s314
    %p316 = scmp.eq.s32.totalorder %s24, 0
    %p317 = por %p315, %p316
    %s318 = ssub.s32 %s25, %s37
    %s319 = ssub.s32 %s26, %s33
    %s320 = sor.u32 %s318, %s319
    %p321 = scmp.eq.s32.totalorder %s320, 0
    %s323 = sadd.s32 %s322, 1
    %s324 = scalar_select %p321, %s322, %s323
    %p327 = pneg %p321
    %p328 = scmp.eq.s32.totalorder %s18, 15
    %p329 = por %p327, %p328
    %p330 = scmp.ne.s32.totalorder %s322, %s325
    %p331 = scmp.eq.s32.totalorder %s18, 0
    %p332 = por %p330, %p331
    %p333 = scmp.ne.s32.totalorder %s322, %s325
    %p334 = scmp.eq.s32.totalorder %s23, 15
    %p335 = por %p333, %p334
    %p336 = scmp.ne.s32.totalorder %s325, %s326
    %p337 = scmp.eq.s32.totalorder %s23, 0
    %p338 = por %p336, %p337
    %p339 = scmp.ne.s32.totalorder %s325, %s326
    %p340 = scmp.eq.s32.totalorder %s24, 15
    %p341 = por %p339, %p340
    %p343 = scmp.ne.s32.totalorder %s326, %s342
    %p344 = scmp.eq.s32.totalorder %s24, 0
    %p345 = por %p343, %p344
    %p346 = scmp.le.s32.totalorder 1, %s18
    %p347 = scmp.lt.s32.totalorder %s18, 17
    %p348 = pnand %p346, %p347
    %p349 = pneg %p348
    // Predicated region
    $region9: #{down_forward.5} parent=5 // pred_check
      _
    $region10: #{down_forward.5} parent=5 // pred_check_branch
      %351 = sbr.rel (%p348) target = $region12
    $region11: #{down_forward.5} parent=5 // pred_region
      %s352 = ssub.s32 %s18, 1
      // Predicated region
      $region13: #{down_forward.5} parent=11 // pred_check
        %p353 = pneg %p163
      $region14: #{down_forward.5} parent=11 // pred_check_branch
        %355 = sbr.rel (%p353) target = $region16
      $region15: #{down_forward.5} parent=11 // pred_region
        _
      $region16: #{down_forward.5} parent=11 // pred_fallthru
        _
      // Predicated region
      $region17: #{down_forward.5} parent=11 // pred_check
        %p356 = pneg %p184
      $region18: #{down_forward.5} parent=11 // pred_check_branch
        %358 = sbr.rel (%p356) target = $region20
      $region19: #{down_forward.5} parent=11 // pred_region
        _
      $region20: #{down_forward.5} parent=11 // pred_fallthru
        _
      // Predicated region
      $region21: #{down_forward.5} parent=11 // pred_check
        %p359 = pneg %p205
      $region22: #{down_forward.5} parent=11 // pred_check_branch
        %361 = sbr.rel (%p359) target = $region24
      $region23: #{down_forward.5} parent=11 // pred_region
        _
      $region24: #{down_forward.5} parent=11 // pred_fallthru
        _
      // Predicated region
      $region25: #{down_forward.5} parent=11 // pred_check
        %p362 = pneg %p226
      $region26: #{down_forward.5} parent=11 // pred_check_branch
        %364 = sbr.rel (%p362) target = $region28
      $region27: #{down_forward.5} parent=11 // pred_region
        _
      $region28: #{down_forward.5} parent=11 // pred_fallthru
        _
      // Predicated region
      $region29: #{down_forward.5} parent=11 // pred_check
        %p365 = pneg %p247
      $region30: #{down_forward.5} parent=11 // pred_check_branch
        %367 = sbr.rel (%p365) target = $region32
      $region31: #{down_forward.5} parent=11 // pred_region
        _
      $region32: #{down_forward.5} parent=11 // pred_fallthru
        _
      // Predicated region
      $region33: #{down_forward.5} parent=11 // pred_check
        %p368 = pneg %p268
      $region34: #{down_forward.5} parent=11 // pred_check_branch
        %370 = sbr.rel (%p368) target = $region36
      $region35: #{down_forward.5} parent=11 // pred_region
        _
      $region36: #{down_forward.5} parent=11 // pred_fallthru
        _
      // Predicated region
      $region37: #{down_forward.5} parent=11 // pred_check
        %p371 = pneg %p289
      $region38: #{down_forward.5} parent=11 // pred_check_branch
        %373 = sbr.rel (%p371) target = $region40
      $region39: #{down_forward.5} parent=11 // pred_region
        _
      $region40: #{down_forward.5} parent=11 // pred_fallthru
        _
      // Predicated region
      $region41: #{down_forward.5} parent=11 // pred_check
        %p374 = pneg %p310
      $region42: #{down_forward.5} parent=11 // pred_check_branch
        %376 = sbr.rel (%p374) target = $region44
      $region43: #{down_forward.5} parent=11 // pred_region
        _
      $region44: #{down_forward.5} parent=11 // pred_fallthru
        _
    $region12: #{down_forward.5} parent=5 // pred_fallthru
      _
    %p377 = scmp.lt.s32.totalorder %s18, 16
    // Predicated region
    $region45: #{down_forward.5} parent=5 // pred_check
      %p378 = pneg %p377
    $region46: #{down_forward.5} parent=5 // pred_check_branch
      %380 = sbr.rel (%p378) target = $region48
    $region47: #{down_forward.5} parent=5 // pred_region
      // Predicated region
      $region49: #{down_forward.5} parent=47 // pred_check
        %p381 = pneg %p52
      $region50: #{down_forward.5} parent=47 // pred_check_branch
        %383 = sbr.rel (%p381) target = $region52
      $region51: #{down_forward.5} parent=47 // pred_region
        %p384 = scmp.lt.s32.totalorder %s25, 1
        %s385 = scalar_select %p384, %s25, 1
        %p386 = scmp.lt.s32.totalorder %s26, 7
        %s387 = scalar_select %p386, %s26, 7
        %s388 = smul.addr %s385, 8
        %s389 = sadd.s32 %s387, %s388
        %s390 = smul.addr %s389, 4
        %s391 = scalar_lea.vmem %s0, %s390
      $region52: #{down_forward.5} parent=47 // pred_fallthru
        _
      // Predicated region
      $region53: #{down_forward.5} parent=47 // pred_check
        %p392 = pneg %p84
      $region54: #{down_forward.5} parent=47 // pred_check_branch
        %394 = sbr.rel (%p392) target = $region56
      $region55: #{down_forward.5} parent=47 // pred_region
        %s395 = smul.u32 %s26, 2
        %s396 = sadd.s32 %s395, 1
        %p397 = scmp.lt.s32.totalorder %s25, 1
        %s398 = scalar_select %p397, %s25, 1
        %p399 = scmp.lt.s32.totalorder %s396, 17
        %s400 = scalar_select %p399, %s396, 17
        %s401 = smul.addr %s400, 8
        %s402 = sadd.s32 6, %s401
        %s403 = smul.addr %s398, 144
        %s404 = sadd.s32 %s402, %s403
        %s405 = smul.addr %s404, 4
        %s406 = scalar_lea.vmem %s1, %s405
        %s407 = smul.u32 %s26, 2
        %s408 = sadd.s32 %s407, 1
      $region56: #{down_forward.5} parent=47 // pred_fallthru
        _
      // Predicated region
      $region57: #{down_forward.5} parent=47 // pred_check
        %p409 = pneg %p110
      $region58: #{down_forward.5} parent=47 // pred_check_branch
        %411 = sbr.rel (%p409) target = $region60
      $region59: #{down_forward.5} parent=47 // pred_region
        %p412 = scmp.lt.s32.totalorder %s25, 1
        %s413 = scalar_select %p412, %s25, 1
        %s414 = smul.addr %s413, 8
        %s415 = scalar_lea.vmem %s2, %s414
      $region60: #{down_forward.5} parent=47 // pred_fallthru
        _
      // Predicated region
      $region61: #{down_forward.5} parent=47 // pred_check
        %p416 = pneg %p136
      $region62: #{down_forward.5} parent=47 // pred_check_branch
        %418 = sbr.rel (%p416) target = $region64
      $region63: #{down_forward.5} parent=47 // pred_region
        %p419 = scmp.lt.s32.totalorder %s25, 1
        %s420 = scalar_select %p419, %s25, 1
        %s421 = smul.addr %s420, 8
        %s422 = scalar_lea.vmem %s3, %s421
      $region64: #{down_forward.5} parent=47 // pred_fallthru
        _
    $region48: #{down_forward.5} parent=5 // pred_fallthru
      _
    %p423 = scmp.le.s32.totalorder 1, %s18
    %p424 = scmp.lt.s32.totalorder %s18, 17
    %p425 = pnand %p423, %p424
    %p426 = pneg %p425
    // Predicated region
    $region65: #{down_forward.5} parent=5 // pred_check
      _
    $region66: #{down_forward.5} parent=5 // pred_check_branch
      %428 = sbr.rel (%p425) target = $region68
    $region67: #{down_forward.5} parent=5 // pred_region
      %s429 = ssub.s32 %s18, 1
      %p430 = scmp.lt.s32.totalorder %s27, 1
      %s431 = scalar_select %p430, %s27, 1
      %p432 = scmp.lt.s32.totalorder %s28, 7
      %s433 = scalar_select %p432, %s28, 7
      %s434 = smul.addr %s431, 8
      %s435 = sadd.s32 %s433, %s434
      %s436 = smul.addr %s435, 4
      %s437 = scalar_lea.vmem %s0, %s436
      %p438 = pneg %p58
      %p439 = pneg %p55
      %s440 = smul.u32 %s28, 2
      %s441 = sadd.s32 %s440, 1
      %p442 = scmp.lt.s32.totalorder %s27, 1
      %s443 = scalar_select %p442, %s27, 1
      %p444 = scmp.lt.s32.totalorder %s441, 17
      %s445 = scalar_select %p444, %s441, 17
      %s446 = smul.addr %s445, 8
      %s447 = sadd.s32 6, %s446
      %s448 = smul.addr %s443, 144
      %s449 = sadd.s32 %s447, %s448
      %s450 = smul.addr %s449, 4
      %s451 = scalar_lea.vmem %s1, %s450
      %p452 = pneg %p90
      %p453 = pneg %p87
      %p454 = scmp.lt.s32.totalorder %s27, 1
      %s455 = scalar_select %p454, %s27, 1
      %s456 = smul.addr %s455, 8
      %s457 = scalar_lea.vmem %s2, %s456
      %p458 = pneg %p116
      %p459 = pneg %p113
      %p460 = scmp.lt.s32.totalorder %s27, 1
      %s461 = scalar_select %p460, %s27, 1
      %s462 = smul.addr %s461, 8
      %s463 = scalar_lea.vmem %s3, %s462
      %p464 = pneg %p142
      %p465 = pneg %p139
      %p466 = pneg %p163
      %p467 = pneg %p160
      %p468 = pneg %p184
      %p469 = pneg %p181
      %p470 = pneg %p205
      %p471 = pneg %p202
      %p472 = pneg %p226
      %p473 = pneg %p223
      %p474 = pneg %p247
      %p475 = pneg %p244
      %p476 = pneg %p268
      %p477 = pneg %p265
      %p478 = pneg %p289
      %p479 = pneg %p286
      %p480 = pneg %p310
      %p481 = pneg %p307
      %p482 = pneg %p338
      %p483 = pneg %p335
      %p484 = scmp.lt.s32.totalorder %s27, 1
      %s485 = scalar_select %p484, %s27, 1
      %p486 = scmp.lt.s32.totalorder %s28, 7
      %s487 = scalar_select %p486, %s28, 7
      %s488 = smul.addr %s487, 2
      %s489 = smul.addr %s485, 16
      %s490 = sadd.s32 %s488, %s489
      %s491 = smul.addr %s490, 4
      %s492 = scalar_lea.vmem %s12, %s491
      %p493 = scmp.lt.s32.totalorder %s27, 1
      %s494 = scalar_select %p493, %s27, 1
      %p495 = scmp.lt.s32.totalorder %s28, 7
      %s496 = scalar_select %p495, %s28, 7
      %s497 = smul.addr %s494, 8
      %s498 = sadd.s32 %s496, %s497
      %s499 = smul.addr %s498, 4
      %s500 = scalar_lea.vmem %s0, %s499
      %s501 = smul.u32 %s28, 2
      %s502 = sadd.s32 %s501, 1
      %p503 = scmp.lt.s32.totalorder %s27, 1
      %s504 = scalar_select %p503, %s27, 1
      %p505 = scmp.lt.s32.totalorder %s502, 17
      %s506 = scalar_select %p505, %s502, 17
      %s507 = smul.addr %s506, 8
      %s508 = sadd.s32 6, %s507
      %s509 = smul.addr %s504, 144
      %s510 = sadd.s32 %s508, %s509
      %s511 = smul.addr %s510, 4
      %s512 = scalar_lea.vmem %s1, %s511
      %s513 = smul.u32 %s28, 2
      %s514 = sadd.s32 %s513, 1
      %p515 = scmp.lt.s32.totalorder %s27, 1
      %s516 = scalar_select %p515, %s27, 1
      %s517 = smul.addr %s516, 8
      %s518 = scalar_lea.vmem %s2, %s517
      %p519 = scmp.lt.s32.totalorder %s27, 1
      %s520 = scalar_select %p519, %s27, 1
      %s521 = smul.addr %s520, 8
      %s522 = scalar_lea.vmem %s3, %s521
      %p523 = scmp.lt.s32.totalorder %s27, 1
      %s524 = scalar_select %p523, %s27, 1
      %p525 = scmp.lt.s32.totalorder %s28, 7
      %s526 = scalar_select %p525, %s28, 7
      %s527 = smul.addr %s526, 2
      %s528 = smul.addr %s524, 16
      %s529 = sadd.s32 %s527, %s528
      %s530 = smul.addr %s529, 4
      %s531 = scalar_lea.vmem %s12, %s530
      %v533 = vld [vmem:[%s500] sm:$0xf]
      %v534 = vunpack.c.l.bf16 %v533
      %v535 = vld [vmem:[%s518] sm:$0xff]
      %v536 = vld [vmem:[%s522] sm:$0xff]
      %v537 = vld [vmem:[%s4] sm:$0xff]
      %v538 = vld [vmem:[%s5] sm:$0xff]
      %v539 = vld [vmem:[%s6] sm:$0xf]
      %v540 = vld [vmem:[%s6 + $0x4] sm:$0xf]
      %v541 = vld [vmem:[%s7] sm:$0xff]
      %v542 = vld [vmem:[%s7 + $0x8] sm:$0xff]
      %v543 = vld [vmem:[%s8] sm:$0xf]
      %v544 = vld [vmem:[%s8 + $0x4] sm:$0xf]
      %v545 = vld [vmem:[%s9] sm:$0xff]
      %v546 = vld [vmem:[%s9 + $0x8] sm:$0xff]
      %548 = vset.pattern.permute.xlu0 0
      %549 = vperm.xlu0 %548, %v535
      %v550 = vpop.permute.xlu0 %549
      %v552 = vsub.f32 %v534, %v550
      %554 = vset.pattern.permute.xlu0 0
      %555 = vperm.xlu0 %554, %v536
      %v556 = vpop.permute.xlu0 %555
      %v558 = vmul.f32 %v552, %v556
      %560 = vset.pattern.permute.xlu0 0
      %561 = vperm.xlu0 %560, %v537
      %v562 = vpop.permute.xlu0 %561
      %v564 = vmul.f32 %v558, %v562
      %566 = vset.pattern.permute.xlu0 0
      %567 = vperm.xlu0 %566, %v538
      %v568 = vpop.permute.xlu0 %567
      %v570 = vadd.f32 %v564, %v568
      %v571 = vpack.c.bf16 %v570, %v570
      %573 = vset.pattern.permute.xlu0 0
      %574 = vperm.xlu0 %573, %v541
      %v575 = vpop.permute.xlu0 %574
      %578 = vset.pattern.permute.xlu0 0
      %579 = vperm.xlu0 %578, %v542
      %v580 = vpop.permute.xlu0 %579
      %v584 = vunpack.c.l.b16 %v539
      %v585 = vunpack.c.l.b16 %v540
      %v586 = vpack.c.b16 %v585, %v584
      %vm587 = vcmask 64512
      %v589 = vsel %vm587, %v586, 0
      %vm591 = vcmask 1043456
      %v593 = vsel %vm591, %v571, 0
      %595 = vmatprep.subr.bf16.mxu0 0
      %596 = vmatpush1.bf16.msra.mxu0 0
      %597 = vmatprep.subr.bf16.mxu0 0
      %598 = vmatpush1.bf16.msra.mxu0 0
      %599 = vmatprep.subr.bf16.mxu0 0
      %600 = vmatpush1.bf16.msra.mxu0 0
      %601 = vmatprep.subr.bf16.mxu0 0
      %602 = vmatpush1.bf16.msra.mxu0 0
      %603 = vmatprep.subr.bf16.mxu0 0
      %604 = vmatpush1.bf16.msra.mxu0 0
      %605 = vmatprep.subr.bf16.mxu0 0
      %606 = vmatpush1.bf16.msra.mxu0 0
      %607 = vmatprep.subr.bf16.mxu0 0
      %608 = vmatpush1.bf16.msra.mxu0 0
      %609 = vmatprep.subr.bf16.mxu0 0
      %610 = vmatpush1.bf16.msra.mxu0 %v593
      %611 = vmatprep.subr.bf16.mxu0 0
      %612 = vmatpush2.bf16.msra.mxu0 0
      %613 = vmatprep.subr.bf16.mxu0 0
      %614 = vmatpush2.bf16.msra.mxu0 0
      %615 = vmatprep.subr.bf16.mxu0 0
      %616 = vmatpush2.bf16.msra.mxu0 0
      %617 = vmatprep.subr.bf16.mxu0 0
      %618 = vmatpush2.bf16.msra.mxu0 0
      %619 = vmatprep.subr.bf16.mxu0 0
      %620 = vmatpush2.bf16.msra.mxu0 0
      %621 = vmatprep.subr.bf16.mxu0 0
      %622 = vmatpush2.bf16.msra.mxu0 0
      %623 = vmatprep.subr.bf16.mxu0 0
      %624 = vmatpush2.bf16.msra.mxu0 0
      %625 = vmatprep.subr.bf16.mxu0 0
      %626 = vmatpush2.bf16.msra.mxu0 0
      %627 = vmatprep.mubr.bf16.mxu0 0
      %628 = vmatmul.mubr.bf16.gmra.mxu0 %v589
      %v629 = vpop.f32.mrf.mxu0
      %v630 = vadd.f32 %v575, %v629
      %v631 = vpop.f32.mrf.mxu0
      %v632 = vpop.f32.mrf.mxu0
      %v633 = vadd.f32 %v580, %v632
      %v634 = vpop.f32.mrf.mxu0
      %635 = vdwg.mxu0
      %v636 = vmul.f32 %v630, 0.70710677
      %v637 = vmul.f32 %v633, 0.70710677
      %v638 = vand.u32 2147483647, %v636
      %v639 = vand.u32 2147483647, %v637
      %v640 = vmul.f32 %v638, 0.3275911
      %v641 = vmul.f32 %v639, 0.3275911
      %v642 = vadd.f32 %v640, 1.0
      %v643 = vadd.f32 %v641, 1.0
      %v644 = vrcp.pop %v642
      %v645 = vrcp.pop %v643
      %v646 = vmul.f32 %v644, 1.0614054
      %v647 = vmul.f32 %v645, 1.0614054
      %v648 = vadd.f32 %v646, -1.4531521
      %v649 = vadd.f32 %v647, -1.4531521
      %v650 = vmul.f32 %v648, %v644
      %v651 = vmul.f32 %v649, %v645
      %v652 = vadd.f32 %v650, 1.4214138
      %v653 = vadd.f32 %v651, 1.4214138
      %v654 = vmul.f32 %v652, %v644
      %v655 = vmul.f32 %v653, %v645
      %v656 = vadd.f32 %v654, -0.28449672
      %v657 = vadd.f32 %v655, -0.28449672
      %v658 = vmul.f32 %v656, %v644
      %v659 = vmul.f32 %v657, %v645
      %v660 = vadd.f32 %v658, 0.2548296
      %v661 = vadd.f32 %v659, 0.2548296
      %v662 = vmul.f32 %v660, %v644
      %v663 = vmul.f32 %v661, %v645
      %v664 = vsub.f32 0.0, %v638
      %v665 = vsub.f32 0.0, %v639
      %v666 = vmul.f32 %v664, %v638
      %v667 = vmul.f32 %v665, %v639
      %v668 = vmul.f32 %v666, 1.442695
      %v669 = vpow.pop %v668
      %v670 = vmul.f32 %v667, 1.442695
      %v671 = vpow.pop %v670
      %v672 = vmul.f32 %v662, %v669
      %v673 = vmul.f32 %v663, %v671
      %v674 = vsub.f32 1.0, %v672
      %v675 = vsub.f32 1.0, %v673
      %vm676 = vcmp.ge.f32.partialorder %v636, 0.0
      %vm677 = vcmp.ge.f32.partialorder %v637, 0.0
      %v678 = vsub.f32 0.0, %v674
      %v679 = vsub.f32 0.0, %v675
      %v680 = vsel %vm676, %v674, %v678
      %v681 = vsel %vm677, %v675, %v679
      %v682 = vmul.f32 %v630, 0.5
      %v683 = vmul.f32 %v633, 0.5
      %v684 = vadd.f32 %v680, 1.0
      %v685 = vadd.f32 %v681, 1.0
      %v686 = vmul.f32 %v682, %v684
      %v687 = vmul.f32 %v683, %v685
      %v688 = vpack.c.bf16 %v687, %v686
      %690 = vset.pattern.permute.xlu0 0
      %691 = vperm.xlu0 %690, %v545
      %v692 = vpop.permute.xlu0 %691
      %695 = vset.pattern.permute.xlu0 0
      %696 = vperm.xlu0 %695, %v546
      %v697 = vpop.permute.xlu0 %696
      %v701 = vunpack.c.l.b16 %v543
      %v702 = vunpack.c.l.b16 %v544
      %v703 = vpack.c.b16 %v702, %v701
      %vm704 = vcmask 130048
      %v706 = vsel %vm704, %v703, 0
      %708 = vmatprep.subr.bf16.mxu0 0
      %709 = vmatpush1.bf16.msra.mxu0 0
      %710 = vmatprep.subr.bf16.mxu0 0
      %711 = vmatpush1.bf16.msra.mxu0 0
      %712 = vmatprep.subr.bf16.mxu0 0
      %713 = vmatpush1.bf16.msra.mxu0 0
      %714 = vmatprep.subr.bf16.mxu0 0
      %715 = vmatpush1.bf16.msra.mxu0 0
      %716 = vmatprep.subr.bf16.mxu0 0
      %717 = vmatpush1.bf16.msra.mxu0 0
      %718 = vmatprep.subr.bf16.mxu0 0
      %719 = vmatpush1.bf16.msra.mxu0 0
      %720 = vmatprep.subr.bf16.mxu0 0
      %721 = vmatpush1.bf16.msra.mxu0 0
      %722 = vmatprep.subr.bf16.mxu0 0
      %723 = vmatpush1.bf16.msra.mxu0 %v688
      %724 = vmatprep.subr.bf16.mxu0 0
      %725 = vmatpush2.bf16.msra.mxu0 0
      %726 = vmatprep.subr.bf16.mxu0 0
      %727 = vmatpush2.bf16.msra.mxu0 0
      %728 = vmatprep.subr.bf16.mxu0 0
      %729 = vmatpush2.bf16.msra.mxu0 0
      %730 = vmatprep.subr.bf16.mxu0 0
      %731 = vmatpush2.bf16.msra.mxu0 0
      %732 = vmatprep.subr.bf16.mxu0 0
      %733 = vmatpush2.bf16.msra.mxu0 0
      %734 = vmatprep.subr.bf16.mxu0 0
      %735 = vmatpush2.bf16.msra.mxu0 0
      %736 = vmatprep.subr.bf16.mxu0 0
      %737 = vmatpush2.bf16.msra.mxu0 0
      %738 = vmatprep.subr.bf16.mxu0 0
      %739 = vmatpush2.bf16.msra.mxu0 0
      %740 = vmatprep.mubr.bf16.mxu0 0
      %741 = vmatmul.mubr.bf16.gmra.mxu0 %v706
      %v742 = vpop.f32.mrf.mxu0
      %v743 = vadd.f32 %v692, %v742
      %v744 = vpop.f32.mrf.mxu0
      %v745 = vpop.f32.mrf.mxu0
      %v746 = vadd.f32 %v697, %v745
      %v747 = vpop.f32.mrf.mxu0
      %748 = vdwg.mxu0
      %v749 = vld [vmem:[%s512] sm:$0xf]
      %v750 = vld [vmem:[%s10] sm:$0xf]
      %v751 = vld [vmem:[%s10 + $0x4] sm:$0xf]
      %v752 = vld [vmem:[%s11] sm:$0xff]
      %v753 = vld [vmem:[%s11 + $0x8] sm:$0xff]
      %755 = vset.pattern.permute.xlu0 0
      %756 = vperm.xlu0 %755, %v752
      %v757 = vpop.permute.xlu0 %756
      %760 = vset.pattern.permute.xlu0 0
      %761 = vperm.xlu0 %760, %v753
      %v762 = vpop.permute.xlu0 %761
      %v766 = vunpack.c.l.b16 %v750
      %v767 = vunpack.c.l.b16 %v751
      %v768 = vpack.c.b16 %v767, %v766
      %v770 = vsel %vm587, %v768, 0
      %v773 = vsel %vm591, %v749, 0
      %775 = vmatprep.subr.bf16.mxu0 0
      %776 = vmatpush1.bf16.msra.mxu0 0
      %777 = vmatprep.subr.bf16.mxu0 0
      %778 = vmatpush1.bf16.msra.mxu0 0
      %779 = vmatprep.subr.bf16.mxu0 0
      %780 = vmatpush1.bf16.msra.mxu0 0
      %781 = vmatprep.subr.bf16.mxu0 0
      %782 = vmatpush1.bf16.msra.mxu0 0
      %783 = vmatprep.subr.bf16.mxu0 0
      %784 = vmatpush1.bf16.msra.mxu0 0
      %785 = vmatprep.subr.bf16.mxu0 0
      %786 = vmatpush1.bf16.msra.mxu0 0
      %787 = vmatprep.subr.bf16.mxu0 0
      %788 = vmatpush1.bf16.msra.mxu0 0
      %789 = vmatprep.subr.bf16.mxu0 0
      %790 = vmatpush1.bf16.msra.mxu0 %v773
      %791 = vmatprep.subr.bf16.mxu0 0
      %792 = vmatpush2.bf16.msra.mxu0 0
      %793 = vmatprep.subr.bf16.mxu0 0
      %794 = vmatpush2.bf16.msra.mxu0 0
      %795 = vmatprep.subr.bf16.mxu0 0
      %796 = vmatpush2.bf16.msra.mxu0 0
      %797 = vmatprep.subr.bf16.mxu0 0
      %798 = vmatpush2.bf16.msra.mxu0 0
      %799 = vmatprep.subr.bf16.mxu0 0
      %800 = vmatpush2.bf16.msra.mxu0 0
      %801 = vmatprep.subr.bf16.mxu0 0
      %802 = vmatpush2.bf16.msra.mxu0 0
      %803 = vmatprep.subr.bf16.mxu0 0
      %804 = vmatpush2.bf16.msra.mxu0 0
      %805 = vmatprep.subr.bf16.mxu0 0
      %806 = vmatpush2.bf16.msra.mxu0 0
      %807 = vmatprep.mubr.bf16.mxu0 0
      %808 = vmatmul.mubr.bf16.gmra.mxu0 %v770
      %v809 = vpop.f32.mrf.mxu0
      %v810 = vadd.f32 %v757, %v809
      %v811 = vpop.f32.mrf.mxu0
      %v812 = vpop.f32.mrf.mxu0
      %v813 = vadd.f32 %v762, %v812
      %v814 = vpop.f32.mrf.mxu0
      %815 = vdwg.mxu0
      %v816 = vadd.f32 %v743, %v810
      %v817 = vadd.f32 %v746, %v813
      %v818 = vpack.c.bf16 %v817, %v816
      %v820 = vunpack.c.l.b16 %v818
      %v821 = vunpack.c.h.b16 %v818
      %v822 = vpack.c.b16 %v820, %v820
      %v823 = vpack.c.b16 %v821, %v821
      %826 = vst [vmem:[%s531] sm:$0xf] %v822
      %827 = vst [vmem:[%s531 + $0x4] sm:$0xf] %v823
      %p828 = scmp.lt.s32.totalorder %s27, 1
      %s829 = scalar_select %p828, %s27, 1
      %p830 = scmp.lt.s32.totalorder %s28, 7
      %s831 = scalar_select %p830, %s28, 7
      %s832 = smul.addr %s831, 2
      %s833 = smul.addr %s829, 16
      %s834 = sadd.s32 %s832, %s833
      %s835 = smul.addr %s834, 4
      %s836 = scalar_lea.vmem %s12, %s835
      // Predicated region
      $region69: #{down_forward.5} parent=67 // pred_check
        %p837 = pneg %p335
      $region70: #{down_forward.5} parent=67 // pred_check_branch
        %839 = sbr.rel (%p837) target = $region72
      $region71: #{down_forward.5} parent=67 // pred_region
        _
      $region72: #{down_forward.5} parent=67 // pred_fallthru
        _
    $region68: #{down_forward.5} parent=5 // pred_fallthru
      _
    %p840 = scmp.le.s32.totalorder 2, %s18
    // Predicated region
    $region73: #{down_forward.5} parent=5 // pred_check
      %p841 = pneg %p840
    $region74: #{down_forward.5} parent=5 // pred_check_branch
      %843 = sbr.rel (%p841) target = $region76
    $region75: #{down_forward.5} parent=5 // pred_region
      %s844 = ssub.s32 %s18, 2
      // Predicated region
      $region77: #{down_forward.5} parent=75 // pred_check
        %p845 = pneg %p341
      $region78: #{down_forward.5} parent=75 // pred_check_branch
        %847 = sbr.rel (%p845) target = $region80
      $region79: #{down_forward.5} parent=75 // pred_region
        %p848 = scmp.lt.s32.totalorder %s29, 1
        %s849 = scalar_select %p848, %s29, 1
        %p850 = scmp.lt.s32.totalorder %s30, 7
        %s851 = scalar_select %p850, %s30, 7
        %s852 = smul.addr %s851, 2
        %s853 = smul.addr %s849, 16
        %s854 = sadd.s32 %s852, %s853
        %s855 = smul.addr %s854, 4
        %s856 = scalar_lea.vmem %s12, %s855
      $region80: #{down_forward.5} parent=75 // pred_fallthru
        _
    $region76: #{down_forward.5} parent=5 // pred_fallthru
      _
  $region6: #{down_forward.5} parent=0 // loop_footer
    %s22 = sadd.s32 1, %s18
  $region7: #{down_forward.5} parent=0 // loop_footer_branch
    %17 = sbr.rel target = $region3
  $region8: #{down_forward.5} parent=0 // loop_exit
    _

// kernel: down_forward.7
$region0: #{down_forward.7}
  #allocation0 [shape = 'u32[]', space=smem, size = 0x4, offset = 0x4, fixed_abs, tag = 'smem constant byte address 0x4 - core index']
  #allocation1 [shape = 'u32[144,128]{1,0:T(1,128)}', space=vmem, size = 0x12000, scoped, tag = 'internal scratch']
  %s0 = inlined_call_operand.vmem [shape: bf16[2,8,16,128], index: 0, kind: input, shape index: {}]
  %s1 = inlined_call_operand.vmem [shape: bf16[2,10,16,256], index: 1, kind: input, shape index: {}]
  %s2 = inlined_call_operand.vmem [shape: f32[2,16,1], index: 2, kind: input, shape index: {}]
  %s3 = inlined_call_operand.vmem [shape: f32[2,16,1], index: 3, kind: input, shape index: {}]
  %s4 = inlined_call_operand.vmem [shape: f32[16,1], index: 4, kind: input, shape index: {}]
  %s5 = inlined_call_operand.vmem [shape: f32[16,1], index: 5, kind: input, shape index: {}]
  %s6 = inlined_call_operand.vmem [shape: bf16[32,16], index: 6, kind: input, shape index: {}]
  %s7 = inlined_call_operand.vmem [shape: f32[32,1], index: 7, kind: input, shape index: {}]
  %s8 = inlined_call_operand.vmem [shape: bf16[16,32], index: 8, kind: input, shape index: {}]
  %s9 = inlined_call_operand.vmem [shape: f32[16,1], index: 9, kind: input, shape index: {}]
  %s10 = inlined_call_operand.vmem [shape: f32[2,8,16,128], index: 10, kind: output, shape index: {}]
  %s11 = sld [smem:[#allocation0]]
  $region73: #{down_forward.7} parent=0
    _
  %s13 = ssub.s32 1, %s11
  %s14 = scalar_select 0, %s13, %s11
  loop: start=0, step=1, limit=18
  $region2: #{down_forward.7} parent=0 // loop_pre_header
    _
  $region3: #{down_forward.7} parent=0 // loop_header
    %s16 = sphi 0, %s20
    %p17 = scmp.ge.s32.totalorder %s16, 18
    %s23 = sphi 0, %s35
    %s24 = sphi 0, %s31
    %s25 = sphi 0, %s23
    %s26 = sphi 0, %s24
    %s27 = sphi 0, %s25
    %s28 = sphi 0, %s26
    %s40 = sphi 0, %s42
    %s43 = sphi 0, %s40
    %s44 = sphi 0, %s43
    %s60 = sphi 0, %s44
    %s70 = sphi 0, %s72
    %s73 = sphi 0, %s70
    %s74 = sphi 0, %s73
    %s90 = sphi 0, %s74
    %s96 = sphi 0, %s98
    %s99 = sphi 0, %s96
    %s100 = sphi 0, %s99
    %s116 = sphi 0, %s100
    %s122 = sphi 0, %s124
    %s125 = sphi 0, %s122
    %s126 = sphi 0, %s125
    %s142 = sphi 0, %s126
    %s146 = sphi 0, %s146
    %s148 = sphi 0, %s146
    %s149 = sphi 0, %s148
    %s163 = sphi 0, %s149
    %s167 = sphi 0, %s167
    %s169 = sphi 0, %s167
    %s170 = sphi 0, %s169
    %s184 = sphi 0, %s170
    %s188 = sphi 0, %s188
    %s190 = sphi 0, %s188
    %s191 = sphi 0, %s190
    %s205 = sphi 0, %s191
    %s209 = sphi 0, %s209
    %s211 = sphi 0, %s209
    %s212 = sphi 0, %s211
    %s226 = sphi 0, %s212
    %s230 = sphi 0, %s230
    %s232 = sphi 0, %s230
    %s233 = sphi 0, %s232
    %s247 = sphi 0, %s233
    %s251 = sphi 0, %s251
    %s253 = sphi 0, %s251
    %s254 = sphi 0, %s253
    %s268 = sphi 0, %s254
    %s276 = sphi 0, %s278
    %s279 = sphi 0, %s276
    %s280 = sphi 0, %s279
    %s296 = sphi 0, %s280
  $region4: #{down_forward.7} parent=0 // loop_header_branch
    %19 = sbr.rel (%p17) target = $region8
  $region5: #{down_forward.7} parent=0 // loop_body
    %s21 = ssub.s32 %s16, 1
    %s22 = ssub.s32 %s16, 2
    %s29 = sadd.s32 1, %s24
    %p30 = scmp.ge.s32.totalorder %s29, 8
    %s31 = scalar_select %p30, 0, %s29
    %s32 = sadd.s32 1, %s23
    %s33 = scalar_select %p30, %s32, %s23
    %p34 = scmp.ge.s32.totalorder %s33, 2
    %s35 = scalar_select %p34, 0, %s33
    %s36 = ssub.s32 %s23, %s35
    %s37 = ssub.s32 %s24, %s31
    %s38 = sor.u32 %s36, %s37
    %p39 = scmp.eq.s32.totalorder %s38, 0
    %s41 = sadd.s32 %s40, 1
    %s42 = scalar_select %p39, %s40, %s41
    %p45 = pneg %p39
    %p46 = scmp.eq.s32.totalorder %s16, 15
    %p47 = por %p45, %p46
    %p48 = scmp.ne.s32.totalorder %s40, %s43
    %p49 = scmp.eq.s32.totalorder %s16, 0
    %p50 = por %p48, %p49
    %p51 = scmp.ne.s32.totalorder %s40, %s43
    %p52 = scmp.eq.s32.totalorder %s21, 15
    %p53 = por %p51, %p52
    %p54 = scmp.ne.s32.totalorder %s43, %s44
    %p55 = scmp.eq.s32.totalorder %s21, 0
    %p56 = por %p54, %p55
    %p57 = scmp.ne.s32.totalorder %s43, %s44
    %p58 = scmp.eq.s32.totalorder %s22, 15
    %p59 = por %p57, %p58
    %p61 = scmp.ne.s32.totalorder %s44, %s60
    %p62 = scmp.eq.s32.totalorder %s22, 0
    %p63 = por %p61, %p62
    %s64 = sadd.s32 %s24, 1
    %s65 = sadd.s32 %s31, 1
    %s66 = ssub.s32 %s23, %s35
    %s67 = ssub.s32 %s64, %s65
    %s68 = sor.u32 %s66, %s67
    %p69 = scmp.eq.s32.totalorder %s68, 0
    %s71 = sadd.s32 %s70, 1
    %s72 = scalar_select %p69, %s70, %s71
    %p75 = pneg %p69
    %p76 = scmp.eq.s32.totalorder %s16, 15
    %p77 = por %p75, %p76
    %p78 = scmp.ne.s32.totalorder %s70, %s73
    %p79 = scmp.eq.s32.totalorder %s16, 0
    %p80 = por %p78, %p79
    %p81 = scmp.ne.s32.totalorder %s70, %s73
    %p82 = scmp.eq.s32.totalorder %s21, 15
    %p83 = por %p81, %p82
    %p84 = scmp.ne.s32.totalorder %s73, %s74
    %p85 = scmp.eq.s32.totalorder %s21, 0
    %p86 = por %p84, %p85
    %p87 = scmp.ne.s32.totalorder %s73, %s74
    %p88 = scmp.eq.s32.totalorder %s22, 15
    %p89 = por %p87, %p88
    %p91 = scmp.ne.s32.totalorder %s74, %s90
    %p92 = scmp.eq.s32.totalorder %s22, 0
    %p93 = por %p91, %p92
    %s94 = ssub.s32 %s23, %s35
    %p95 = scmp.eq.s32.totalorder %s94, 0
    %s97 = sadd.s32 %s96, 1
    %s98 = scalar_select %p95, %s96, %s97
    %p101 = pneg %p95
    %p102 = scmp.eq.s32.totalorder %s16, 15
    %p103 = por %p101, %p102
    %p104 = scmp.ne.s32.totalorder %s96, %s99
    %p105 = scmp.eq.s32.totalorder %s16, 0
    %p106 = por %p104, %p105
    %p107 = scmp.ne.s32.totalorder %s96, %s99
    %p108 = scmp.eq.s32.totalorder %s21, 15
    %p109 = por %p107, %p108
    %p110 = scmp.ne.s32.totalorder %s99, %s100
    %p111 = scmp.eq.s32.totalorder %s21, 0
    %p112 = por %p110, %p111
    %p113 = scmp.ne.s32.totalorder %s99, %s100
    %p114 = scmp.eq.s32.totalorder %s22, 15
    %p115 = por %p113, %p114
    %p117 = scmp.ne.s32.totalorder %s100, %s116
    %p118 = scmp.eq.s32.totalorder %s22, 0
    %p119 = por %p117, %p118
    %s120 = ssub.s32 %s23, %s35
    %p121 = scmp.eq.s32.totalorder %s120, 0
    %s123 = sadd.s32 %s122, 1
    %s124 = scalar_select %p121, %s122, %s123
    %p127 = pneg %p121
    %p128 = scmp.eq.s32.totalorder %s16, 15
    %p129 = por %p127, %p128
    %p130 = scmp.ne.s32.totalorder %s122, %s125
    %p131 = scmp.eq.s32.totalorder %s16, 0
    %p132 = por %p130, %p131
    %p133 = scmp.ne.s32.totalorder %s122, %s125
    %p134 = scmp.eq.s32.totalorder %s21, 15
    %p135 = por %p133, %p134
    %p136 = scmp.ne.s32.totalorder %s125, %s126
    %p137 = scmp.eq.s32.totalorder %s21, 0
    %p138 = por %p136, %p137
    %p139 = scmp.ne.s32.totalorder %s125, %s126
    %p140 = scmp.eq.s32.totalorder %s22, 15
    %p141 = por %p139, %p140
    %p143 = scmp.ne.s32.totalorder %s126, %s142
    %p144 = scmp.eq.s32.totalorder %s22, 0
    %p145 = por %p143, %p144
    %s147 = sadd.s32 %s146, 1
    %p150 = scmp.eq.s32.totalorder %s16, 15
    %p151 = scmp.ne.s32.totalorder %s146, %s148
    %p152 = scmp.eq.s32.totalorder %s16, 0
    %p153 = por %p151, %p152
    %p154 = scmp.ne.s32.totalorder %s146, %s148
    %p155 = scmp.eq.s32.totalorder %s21, 15
    %p156 = por %p154, %p155
    %p157 = scmp.ne.s32.totalorder %s148, %s149
    %p158 = scmp.eq.s32.totalorder %s21, 0
    %p159 = por %p157, %p158
    %p160 = scmp.ne.s32.totalorder %s148, %s149
    %p161 = scmp.eq.s32.totalorder %s22, 15
    %p162 = por %p160, %p161
    %p164 = scmp.ne.s32.totalorder %s149, %s163
    %p165 = scmp.eq.s32.totalorder %s22, 0
    %p166 = por %p164, %p165
    %s168 = sadd.s32 %s167, 1
    %p171 = scmp.eq.s32.totalorder %s16, 15
    %p172 = scmp.ne.s32.totalorder %s167, %s169
    %p173 = scmp.eq.s32.totalorder %s16, 0
    %p174 = por %p172, %p173
    %p175 = scmp.ne.s32.totalorder %s167, %s169
    %p176 = scmp.eq.s32.totalorder %s21, 15
    %p177 = por %p175, %p176
    %p178 = scmp.ne.s32.totalorder %s169, %s170
    %p179 = scmp.eq.s32.totalorder %s21, 0
    %p180 = por %p178, %p179
    %p181 = scmp.ne.s32.totalorder %s169, %s170
    %p182 = scmp.eq.s32.totalorder %s22, 15
    %p183 = por %p181, %p182
    %p185 = scmp.ne.s32.totalorder %s170, %s184
    %p186 = scmp.eq.s32.totalorder %s22, 0
    %p187 = por %p185, %p186
    %s189 = sadd.s32 %s188, 1
    %p192 = scmp.eq.s32.totalorder %s16, 15
    %p193 = scmp.ne.s32.totalorder %s188, %s190
    %p194 = scmp.eq.s32.totalorder %s16, 0
    %p195 = por %p193, %p194
    %p196 = scmp.ne.s32.totalorder %s188, %s190
    %p197 = scmp.eq.s32.totalorder %s21, 15
    %p198 = por %p196, %p197
    %p199 = scmp.ne.s32.totalorder %s190, %s191
    %p200 = scmp.eq.s32.totalorder %s21, 0
    %p201 = por %p199, %p200
    %p202 = scmp.ne.s32.totalorder %s190, %s191
    %p203 = scmp.eq.s32.totalorder %s22, 15
    %p204 = por %p202, %p203
    %p206 = scmp.ne.s32.totalorder %s191, %s205
    %p207 = scmp.eq.s32.totalorder %s22, 0
    %p208 = por %p206, %p207
    %s210 = sadd.s32 %s209, 1
    %p213 = scmp.eq.s32.totalorder %s16, 15
    %p214 = scmp.ne.s32.totalorder %s209, %s211
    %p215 = scmp.eq.s32.totalorder %s16, 0
    %p216 = por %p214, %p215
    %p217 = scmp.ne.s32.totalorder %s209, %s211
    %p218 = scmp.eq.s32.totalorder %s21, 15
    %p219 = por %p217, %p218
    %p220 = scmp.ne.s32.totalorder %s211, %s212
    %p221 = scmp.eq.s32.totalorder %s21, 0
    %p222 = por %p220, %p221
    %p223 = scmp.ne.s32.totalorder %s211, %s212
    %p224 = scmp.eq.s32.totalorder %s22, 15
    %p225 = por %p223, %p224
    %p227 = scmp.ne.s32.totalorder %s212, %s226
    %p228 = scmp.eq.s32.totalorder %s22, 0
    %p229 = por %p227, %p228
    %s231 = sadd.s32 %s230, 1
    %p234 = scmp.eq.s32.totalorder %s16, 15
    %p235 = scmp.ne.s32.totalorder %s230, %s232
    %p236 = scmp.eq.s32.totalorder %s16, 0
    %p237 = por %p235, %p236
    %p238 = scmp.ne.s32.totalorder %s230, %s232
    %p239 = scmp.eq.s32.totalorder %s21, 15
    %p240 = por %p238, %p239
    %p241 = scmp.ne.s32.totalorder %s232, %s233
    %p242 = scmp.eq.s32.totalorder %s21, 0
    %p243 = por %p241, %p242
    %p244 = scmp.ne.s32.totalorder %s232, %s233
    %p245 = scmp.eq.s32.totalorder %s22, 15
    %p246 = por %p244, %p245
    %p248 = scmp.ne.s32.totalorder %s233, %s247
    %p249 = scmp.eq.s32.totalorder %s22, 0
    %p250 = por %p248, %p249
    %s252 = sadd.s32 %s251, 1
    %p255 = scmp.eq.s32.totalorder %s16, 15
    %p256 = scmp.ne.s32.totalorder %s251, %s253
    %p257 = scmp.eq.s32.totalorder %s16, 0
    %p258 = por %p256, %p257
    %p259 = scmp.ne.s32.totalorder %s251, %s253
    %p260 = scmp.eq.s32.totalorder %s21, 15
    %p261 = por %p259, %p260
    %p262 = scmp.ne.s32.totalorder %s253, %s254
    %p263 = scmp.eq.s32.totalorder %s21, 0
    %p264 = por %p262, %p263
    %p265 = scmp.ne.s32.totalorder %s253, %s254
    %p266 = scmp.eq.s32.totalorder %s22, 15
    %p267 = por %p265, %p266
    %p269 = scmp.ne.s32.totalorder %s254, %s268
    %p270 = scmp.eq.s32.totalorder %s22, 0
    %p271 = por %p269, %p270
    %s272 = ssub.s32 %s23, %s35
    %s273 = ssub.s32 %s24, %s31
    %s274 = sor.u32 %s272, %s273
    %p275 = scmp.eq.s32.totalorder %s274, 0
    %s277 = sadd.s32 %s276, 1
    %s278 = scalar_select %p275, %s276, %s277
    %p281 = pneg %p275
    %p282 = scmp.eq.s32.totalorder %s16, 15
    %p283 = por %p281, %p282
    %p284 = scmp.ne.s32.totalorder %s276, %s279
    %p285 = scmp.eq.s32.totalorder %s16, 0
    %p286 = por %p284, %p285
    %p287 = scmp.ne.s32.totalorder %s276, %s279
    %p288 = scmp.eq.s32.totalorder %s21, 15
    %p289 = por %p287, %p288
    %p290 = scmp.ne.s32.totalorder %s279, %s280
    %p291 = scmp.eq.s32.totalorder %s21, 0
    %p292 = por %p290, %p291
    %p293 = scmp.ne.s32.totalorder %s279, %s280
    %p294 = scmp.eq.s32.totalorder %s22, 15
    %p295 = por %p293, %p294
    %p297 = scmp.ne.s32.totalorder %s280, %s296
    %p298 = scmp.eq.s32.totalorder %s22, 0
    %p299 = por %p297, %p298
    %p300 = scmp.le.s32.totalorder 1, %s16
    %p301 = scmp.lt.s32.totalorder %s16, 17
    %p302 = pnand %p300, %p301
    %p303 = pneg %p302
    // Predicated region
    $region9: #{down_forward.7} parent=5 // pred_check
      _
    $region10: #{down_forward.7} parent=5 // pred_check_branch
      %305 = sbr.rel (%p302) target = $region12
    $region11: #{down_forward.7} parent=5 // pred_region
      %s306 = ssub.s32 %s16, 1
      // Predicated region
      $region13: #{down_forward.7} parent=11 // pred_check
        %p307 = pneg %p159
      $region14: #{down_forward.7} parent=11 // pred_check_branch
        %309 = sbr.rel (%p307) target = $region16
      $region15: #{down_forward.7} parent=11 // pred_region
        _
      $region16: #{down_forward.7} parent=11 // pred_fallthru
        _
      // Predicated region
      $region17: #{down_forward.7} parent=11 // pred_check
        %p310 = pneg %p180
      $region18: #{down_forward.7} parent=11 // pred_check_branch
        %312 = sbr.rel (%p310) target = $region20
      $region19: #{down_forward.7} parent=11 // pred_region
        _
      $region20: #{down_forward.7} parent=11 // pred_fallthru
        _
      // Predicated region
      $region21: #{down_forward.7} parent=11 // pred_check
        %p313 = pneg %p201
      $region22: #{down_forward.7} parent=11 // pred_check_branch
        %315 = sbr.rel (%p313) target = $region24
      $region23: #{down_forward.7} parent=11 // pred_region
        _
      $region24: #{down_forward.7} parent=11 // pred_fallthru
        _
      // Predicated region
      $region25: #{down_forward.7} parent=11 // pred_check
        %p316 = pneg %p222
      $region26: #{down_forward.7} parent=11 // pred_check_branch
        %318 = sbr.rel (%p316) target = $region28
      $region27: #{down_forward.7} parent=11 // pred_region
        _
      $region28: #{down_forward.7} parent=11 // pred_fallthru
        _
      // Predicated region
      $region29: #{down_forward.7} parent=11 // pred_check
        %p319 = pneg %p243
      $region30: #{down_forward.7} parent=11 // pred_check_branch
        %321 = sbr.rel (%p319) target = $region32
      $region31: #{down_forward.7} parent=11 // pred_region
        _
      $region32: #{down_forward.7} parent=11 // pred_fallthru
        _
      // Predicated region
      $region33: #{down_forward.7} parent=11 // pred_check
        %p322 = pneg %p264
      $region34: #{down_forward.7} parent=11 // pred_check_branch
        %324 = sbr.rel (%p322) target = $region36
      $region35: #{down_forward.7} parent=11 // pred_region
        _
      $region36: #{down_forward.7} parent=11 // pred_fallthru
        _
    $region12: #{down_forward.7} parent=5 // pred_fallthru
      _
    %p325 = scmp.lt.s32.totalorder %s16, 16
    // Predicated region
    $region37: #{down_forward.7} parent=5 // pred_check
      %p326 = pneg %p325
    $region38: #{down_forward.7} parent=5 // pred_check_branch
      %328 = sbr.rel (%p326) target = $region40
    $region39: #{down_forward.7} parent=5 // pred_region
      // Predicated region
      $region41: #{down_forward.7} parent=39 // pred_check
        %p329 = pneg %p50
      $region42: #{down_forward.7} parent=39 // pred_check_branch
        %331 = sbr.rel (%p329) target = $region44
      $region43: #{down_forward.7} parent=39 // pred_region
        %p332 = scmp.lt.s32.totalorder %s23, 1
        %s333 = scalar_select %p332, %s23, 1
        %p334 = scmp.lt.s32.totalorder %s24, 7
        %s335 = scalar_select %p334, %s24, 7
        %s336 = smul.addr %s335, 2
        %s337 = smul.addr %s333, 16
        %s338 = sadd.s32 %s336, %s337
        %s339 = smul.addr %s338, 4
        %s340 = scalar_lea.vmem %s0, %s339
      $region44: #{down_forward.7} parent=39 // pred_fallthru
        _
      // Predicated region
      $region45: #{down_forward.7} parent=39 // pred_check
        %p341 = pneg %p80
      $region46: #{down_forward.7} parent=39 // pred_check_branch
        %343 = sbr.rel (%p341) target = $region48
      $region47: #{down_forward.7} parent=39 // pred_region
        %s344 = sadd.s32 %s24, 1
        %p345 = scmp.lt.s32.totalorder %s23, 1
        %s346 = scalar_select %p345, %s23, 1
        %p347 = scmp.lt.s32.totalorder %s344, 9
        %s348 = scalar_select %p347, %s344, 9
        %s349 = smul.addr %s348, 4
        %s350 = smul.addr %s346, 40
        %s351 = sadd.s32 %s349, %s350
        %s352 = smul.addr %s351, 4
        %s353 = scalar_lea.vmem %s1, %s352
        %s354 = sadd.s32 %s24, 1
      $region48: #{down_forward.7} parent=39 // pred_fallthru
        _
      // Predicated region
      $region49: #{down_forward.7} parent=39 // pred_check
        %p355 = pneg %p106
      $region50: #{down_forward.7} parent=39 // pred_check_branch
        %357 = sbr.rel (%p355) target = $region52
      $region51: #{down_forward.7} parent=39 // pred_region
        %p358 = scmp.lt.s32.totalorder %s23, 1
        %s359 = scalar_select %p358, %s23, 1
        %s360 = smul.addr %s359, 2
        %s361 = smul.addr %s360, 8
        %s362 = scalar_lea.vmem %s2, %s361
      $region52: #{down_forward.7} parent=39 // pred_fallthru
        _
      // Predicated region
      $region53: #{down_forward.7} parent=39 // pred_check
        %p363 = pneg %p132
      $region54: #{down_forward.7} parent=39 // pred_check_branch
        %365 = sbr.rel (%p363) target = $region56
      $region55: #{down_forward.7} parent=39 // pred_region
        %p366 = scmp.lt.s32.totalorder %s23, 1
        %s367 = scalar_select %p366, %s23, 1
        %s368 = smul.addr %s367, 2
        %s369 = smul.addr %s368, 8
        %s370 = scalar_lea.vmem %s3, %s369
      $region56: #{down_forward.7} parent=39 // pred_fallthru
        _
    $region40: #{down_forward.7} parent=5 // pred_fallthru
      _
    %p371 = scmp.le.s32.totalorder 1, %s16
    %p372 = scmp.lt.s32.totalorder %s16, 17
    %p373 = pnand %p371, %p372
    %p374 = pneg %p373
    // Predicated region
    $region57: #{down_forward.7} parent=5 // pred_check
      _
    $region58: #{down_forward.7} parent=5 // pred_check_branch
      %376 = sbr.rel (%p373) target = $region60
    $region59: #{down_forward.7} parent=5 // pred_region
      %s377 = ssub.s32 %s16, 1
      %p378 = scmp.lt.s32.totalorder %s25, 1
      %s379 = scalar_select %p378, %s25, 1
      %p380 = scmp.lt.s32.totalorder %s26, 7
      %s381 = scalar_select %p380, %s26, 7
      %s382 = smul.addr %s381, 2
      %s383 = smul.addr %s379, 16
      %s384 = sadd.s32 %s382, %s383
      %s385 = smul.addr %s384, 4
      %s386 = scalar_lea.vmem %s0, %s385
      %p387 = pneg %p56
      %p388 = pneg %p53
      %s389 = sadd.s32 %s26, 1
      %p390 = scmp.lt.s32.totalorder %s25, 1
      %s391 = scalar_select %p390, %s25, 1
      %p392 = scmp.lt.s32.totalorder %s389, 9
      %s393 = scalar_select %p392, %s389, 9
      %s394 = smul.addr %s393, 4
      %s395 = smul.addr %s391, 40
      %s396 = sadd.s32 %s394, %s395
      %s397 = smul.addr %s396, 4
      %s398 = scalar_lea.vmem %s1, %s397
      %p399 = pneg %p86
      %p400 = pneg %p83
      %p401 = scmp.lt.s32.totalorder %s25, 1
      %s402 = scalar_select %p401, %s25, 1
      %s403 = smul.addr %s402, 2
      %s404 = smul.addr %s403, 8
      %s405 = scalar_lea.vmem %s2, %s404
      %p406 = pneg %p112
      %p407 = pneg %p109
      %p408 = scmp.lt.s32.totalorder %s25, 1
      %s409 = scalar_select %p408, %s25, 1
      %s410 = smul.addr %s409, 2
      %s411 = smul.addr %s410, 8
      %s412 = scalar_lea.vmem %s3, %s411
      %p413 = pneg %p138
      %p414 = pneg %p135
      %p415 = pneg %p159
      %p416 = pneg %p156
      %p417 = pneg %p180
      %p418 = pneg %p177
      %p419 = pneg %p201
      %p420 = pneg %p198
      %p421 = pneg %p222
      %p422 = pneg %p219
      %p423 = pneg %p243
      %p424 = pneg %p240
      %p425 = pneg %p264
      %p426 = pneg %p261
      %p427 = pneg %p292
      %p428 = pneg %p289
      %p429 = scmp.lt.s32.totalorder %s25, 1
      %s430 = scalar_select %p429, %s25, 1
      %p431 = scmp.lt.s32.totalorder %s26, 7
      %s432 = scalar_select %p431, %s26, 7
      %s433 = smul.addr %s432, 2
      %s434 = smul.addr %s430, 16
      %s435 = sadd.s32 %s433, %s434
      %s436 = smul.addr %s435, 8
      %s437 = scalar_lea.vmem %s10, %s436
      %p438 = scmp.lt.s32.totalorder %s25, 1
      %s439 = scalar_select %p438, %s25, 1
      %p440 = scmp.lt.s32.totalorder %s26, 7
      %s441 = scalar_select %p440, %s26, 7
      %s442 = smul.addr %s441, 2
      %s443 = smul.addr %s439, 16
      %s444 = sadd.s32 %s442, %s443
      %s445 = smul.addr %s444, 4
      %s446 = scalar_lea.vmem %s0, %s445
      %s447 = sadd.s32 %s26, 1
      %p448 = scmp.lt.s32.totalorder %s25, 1
      %s449 = scalar_select %p448, %s25, 1
      %p450 = scmp.lt.s32.totalorder %s447, 9
      %s451 = scalar_select %p450, %s447, 9
      %s452 = smul.addr %s451, 4
      %s453 = smul.addr %s449, 40
      %s454 = sadd.s32 %s452, %s453
      %s455 = smul.addr %s454, 4
      %s456 = scalar_lea.vmem %s1, %s455
      %s457 = sadd.s32 %s26, 1
      %p458 = scmp.lt.s32.totalorder %s25, 1
      %s459 = scalar_select %p458, %s25, 1
      %s460 = smul.addr %s459, 2
      %s461 = smul.addr %s460, 8
      %s462 = scalar_lea.vmem %s2, %s461
      %p463 = scmp.lt.s32.totalorder %s25, 1
      %s464 = scalar_select %p463, %s25, 1
      %s465 = smul.addr %s464, 2
      %s466 = smul.addr %s465, 8
      %s467 = scalar_lea.vmem %s3, %s466
      %p468 = scmp.lt.s32.totalorder %s25, 1
      %s469 = scalar_select %p468, %s25, 1
      %p470 = scmp.lt.s32.totalorder %s26, 7
      %s471 = scalar_select %p470, %s26, 7
      %s472 = smul.addr %s471, 2
      %s473 = smul.addr %s469, 16
      %s474 = sadd.s32 %s472, %s473
      %s475 = smul.addr %s474, 8
      %s476 = scalar_lea.vmem %s10, %s475
      %v478 = vld [vmem:[%s446] sm:$0xf]
      %v479 = vld [vmem:[%s446 + $0x4] sm:$0xf]
      %v480 = vunpack.c.l.bf16 %v478
      %v481 = vunpack.c.l.bf16 %v479
      %v482 = vld [vmem:[%s462] sm:$0xff]
      %v483 = vld [vmem:[%s462 + $0x8] sm:$0xff]
      %v484 = vld [vmem:[%s467] sm:$0xff]
      %v485 = vld [vmem:[%s467 + $0x8] sm:$0xff]
      %v486 = vld [vmem:[%s4] sm:$0xff]
      %v487 = vld [vmem:[%s4 + $0x8] sm:$0xff]
      %v488 = vld [vmem:[%s5] sm:$0xff]
      %v489 = vld [vmem:[%s5 + $0x8] sm:$0xff]
      %v490 = vld [vmem:[%s6] sm:$0xf]
      %v491 = vld [vmem:[%s6 + $0x4] sm:$0xf]
      %v492 = vld [vmem:[%s6 + $0x8] sm:$0xf]
      %v493 = vld [vmem:[%s6 + $0xc] sm:$0xf]
      %v494 = vld [vmem:[%s7] sm:$0xff]
      %v495 = vld [vmem:[%s7 + $0x8] sm:$0xff]
      %v496 = vld [vmem:[%s7 + $0x10] sm:$0xff]
      %v497 = vld [vmem:[%s7 + $0x18] sm:$0xff]
      %v498 = vld [vmem:[%s8] sm:$0xf]
      %v499 = vld [vmem:[%s8 + $0x4] sm:$0xf]
      %v500 = vld [vmem:[%s9] sm:$0xff]
      %v501 = vld [vmem:[%s9 + $0x8] sm:$0xff]
      %503 = vset.pattern.permute.xlu0 0
      %504 = vperm.xlu0 %503, %v482
      %v505 = vpop.permute.xlu0 %504
      %508 = vset.pattern.permute.xlu0 0
      %509 = vperm.xlu0 %508, %v483
      %v510 = vpop.permute.xlu0 %509
      %v512 = vsub.f32 %v480, %v505
      %v513 = vsub.f32 %v481, %v510
      %515 = vset.pattern.permute.xlu0 0
      %516 = vperm.xlu0 %515, %v484
      %v517 = vpop.permute.xlu0 %516
      %520 = vset.pattern.permute.xlu0 0
      %521 = vperm.xlu0 %520, %v485
      %v522 = vpop.permute.xlu0 %521
      %v524 = vmul.f32 %v512, %v517
      %v525 = vmul.f32 %v513, %v522
      %527 = vset.pattern.permute.xlu0 0
      %528 = vperm.xlu0 %527, %v486
      %v529 = vpop.permute.xlu0 %528
      %532 = vset.pattern.permute.xlu0 0
      %533 = vperm.xlu0 %532, %v487
      %v534 = vpop.permute.xlu0 %533
      %v536 = vmul.f32 %v524, %v529
      %v537 = vmul.f32 %v525, %v534
      %539 = vset.pattern.permute.xlu0 0
      %540 = vperm.xlu0 %539, %v488
      %v541 = vpop.permute.xlu0 %540
      %544 = vset.pattern.permute.xlu0 0
      %545 = vperm.xlu0 %544, %v489
      %v546 = vpop.permute.xlu0 %545
      %v548 = vadd.f32 %v536, %v541
      %v549 = vadd.f32 %v537, %v546
      %v550 = vpack.c.bf16 %v549, %v548
      %552 = vset.pattern.permute.xlu0 0
      %553 = vperm.xlu0 %552, %v494
      %v554 = vpop.permute.xlu0 %553
      %557 = vset.pattern.permute.xlu0 0
      %558 = vperm.xlu0 %557, %v495
      %v559 = vpop.permute.xlu0 %558
      %562 = vset.pattern.permute.xlu0 0
      %563 = vperm.xlu0 %562, %v496
      %v564 = vpop.permute.xlu0 %563
      %567 = vset.pattern.permute.xlu0 0
      %568 = vperm.xlu0 %567, %v497
      %v569 = vpop.permute.xlu0 %568
      %v575 = vunpack.c.l.b16 %v490
      %v576 = vunpack.c.l.b16 %v491
      %v577 = vunpack.c.l.b16 %v492
      %v578 = vunpack.c.l.b16 %v493
      %v579 = vpack.c.b16 %v576, %v575
      %v580 = vpack.c.b16 %v578, %v577
      %vm581 = vcmask 130048
      %v583 = vsel %vm581, %v579, 0
      %v586 = vsel %vm581, %v580, 0
      %588 = vmatprep.subr.bf16.mxu0 0
      %589 = vmatpush1.bf16.msra.mxu0 0
      %590 = vmatprep.subr.bf16.mxu0 0
      %591 = vmatpush1.bf16.msra.mxu0 0
      %592 = vmatprep.subr.bf16.mxu0 0
      %593 = vmatpush1.bf16.msra.mxu0 0
      %594 = vmatprep.subr.bf16.mxu0 0
      %595 = vmatpush1.bf16.msra.mxu0 0
      %596 = vmatprep.subr.bf16.mxu0 0
      %597 = vmatpush1.bf16.msra.mxu0 0
      %598 = vmatprep.subr.bf16.mxu0 0
      %599 = vmatpush1.bf16.msra.mxu0 0
      %600 = vmatprep.subr.bf16.mxu0 0
      %601 = vmatpush1.bf16.msra.mxu0 0
      %602 = vmatprep.subr.bf16.mxu0 0
      %603 = vmatpush1.bf16.msra.mxu0 %v550
      %604 = vmatprep.subr.bf16.mxu0 0
      %605 = vmatpush2.bf16.msra.mxu0 0
      %606 = vmatprep.subr.bf16.mxu0 0
      %607 = vmatpush2.bf16.msra.mxu0 0
      %608 = vmatprep.subr.bf16.mxu0 0
      %609 = vmatpush2.bf16.msra.mxu0 0
      %610 = vmatprep.subr.bf16.mxu0 0
      %611 = vmatpush2.bf16.msra.mxu0 0
      %612 = vmatprep.subr.bf16.mxu0 0
      %613 = vmatpush2.bf16.msra.mxu0 0
      %614 = vmatprep.subr.bf16.mxu0 0
      %615 = vmatpush2.bf16.msra.mxu0 0
      %616 = vmatprep.subr.bf16.mxu0 0
      %617 = vmatpush2.bf16.msra.mxu0 0
      %618 = vmatprep.subr.bf16.mxu0 0
      %619 = vmatpush2.bf16.msra.mxu0 0
      %620 = vmatprep.mubr.bf16.mxu0 0
      %621 = vmatmul.mubr.bf16.gmra.mxu0 %v583
      %v622 = vpop.f32.mrf.mxu0
      %v623 = vadd.f32 %v554, %v622
      %v624 = vpop.f32.mrf.mxu0
      %v625 = vpop.f32.mrf.mxu0
      %v626 = vadd.f32 %v559, %v625
      %v627 = vpop.f32.mrf.mxu0
      %628 = vmatprep.mubr.bf16.mxu0 0
      %629 = vmatmul.mubr.bf16.gmra.mxu0 %v586
      %v630 = vpop.f32.mrf.mxu0
      %v631 = vadd.f32 %v564, %v630
      %v632 = vpop.f32.mrf.mxu0
      %v633 = vpop.f32.mrf.mxu0
      %v634 = vadd.f32 %v569, %v633
      %v635 = vpop.f32.mrf.mxu0
      %636 = vdwg.mxu0
      %v637 = vmul.f32 %v623, 0.70710677
      %v638 = vmul.f32 %v626, 0.70710677
      %v639 = vmul.f32 %v631, 0.70710677
      %v640 = vmul.f32 %v634, 0.70710677
      %v641 = vand.u32 2147483647, %v637
      %v642 = vand.u32 2147483647, %v638
      %v643 = vand.u32 2147483647, %v639
      %v644 = vand.u32 2147483647, %v640
      %v645 = vmul.f32 %v641, 0.3275911
      %v646 = vmul.f32 %v642, 0.3275911
      %v647 = vmul.f32 %v643, 0.3275911
      %v648 = vmul.f32 %v644, 0.3275911
      %v649 = vadd.f32 %v645, 1.0
      %v650 = vadd.f32 %v646, 1.0
      %v651 = vadd.f32 %v647, 1.0
      %v652 = vadd.f32 %v648, 1.0
      %v653 = vrcp.pop %v649
      %v654 = vrcp.pop %v650
      %v655 = vrcp.pop %v651
      %v656 = vrcp.pop %v652
      %v657 = vmul.f32 %v653, 1.0614054
      %v658 = vmul.f32 %v654, 1.0614054
      %v659 = vmul.f32 %v655, 1.0614054
      %v660 = vmul.f32 %v656, 1.0614054
      %v661 = vadd.f32 %v657, -1.4531521
      %v662 = vadd.f32 %v658, -1.4531521
      %v663 = vadd.f32 %v659, -1.4531521
      %v664 = vadd.f32 %v660, -1.4531521
      %v665 = vmul.f32 %v661, %v653
      %v666 = vmul.f32 %v662, %v654
      %v667 = vmul.f32 %v663, %v655
      %v668 = vmul.f32 %v664, %v656
      %v669 = vadd.f32 %v665, 1.4214138
      %v670 = vadd.f32 %v666, 1.4214138
      %v671 = vadd.f32 %v667, 1.4214138
      %v672 = vadd.f32 %v668, 1.4214138
      %v673 = vmul.f32 %v669, %v653
      %v674 = vmul.f32 %v670, %v654
      %v675 = vmul.f32 %v671, %v655
      %v676 = vmul.f32 %v672, %v656
      %v677 = vadd.f32 %v673, -0.28449672
      %v678 = vadd.f32 %v674, -0.28449672
      %v679 = vadd.f32 %v675, -0.28449672
      %v680 = vadd.f32 %v676, -0.28449672
      %v681 = vmul.f32 %v677, %v653
      %v682 = vmul.f32 %v678, %v654
      %v683 = vmul.f32 %v679, %v655
      %v684 = vmul.f32 %v680, %v656
      %v685 = vadd.f32 %v681, 0.2548296
      %v686 = vadd.f32 %v682, 0.2548296
      %v687 = vadd.f32 %v683, 0.2548296
      %v688 = vadd.f32 %v684, 0.2548296
      %v689 = vmul.f32 %v685, %v653
      %v690 = vmul.f32 %v686, %v654
      %v691 = vmul.f32 %v687, %v655
      %v692 = vmul.f32 %v688, %v656
      %v693 = vsub.f32 0.0, %v641
      %v694 = vsub.f32 0.0, %v642
      %v695 = vsub.f32 0.0, %v643
      %v696 = vsub.f32 0.0, %v644
      %v697 = vmul.f32 %v693, %v641
      %v698 = vmul.f32 %v694, %v642
      %v699 = vmul.f32 %v695, %v643
      %v700 = vmul.f32 %v696, %v644
      %v701 = vmul.f32 %v697, 1.442695
      %v702 = vpow.pop %v701
      %v703 = vmul.f32 %v698, 1.442695
      %v704 = vpow.pop %v703
      %v705 = vmul.f32 %v699, 1.442695
      %v706 = vpow.pop %v705
      %v707 = vmul.f32 %v700, 1.442695
      %v708 = vpow.pop %v707
      %v709 = vmul.f32 %v689, %v702
      %v710 = vmul.f32 %v690, %v704
      %v711 = vmul.f32 %v691, %v706
      %v712 = vmul.f32 %v692, %v708
      %v713 = vsub.f32 1.0, %v709
      %v714 = vsub.f32 1.0, %v710
      %v715 = vsub.f32 1.0, %v711
      %v716 = vsub.f32 1.0, %v712
      %vm717 = vcmp.ge.f32.partialorder %v637, 0.0
      %vm718 = vcmp.ge.f32.partialorder %v638, 0.0
      %vm719 = vcmp.ge.f32.partialorder %v639, 0.0
      %vm720 = vcmp.ge.f32.partialorder %v640, 0.0
      %v721 = vsub.f32 0.0, %v713
      %v722 = vsub.f32 0.0, %v714
      %v723 = vsub.f32 0.0, %v715
      %v724 = vsub.f32 0.0, %v716
      %v725 = vsel %vm717, %v713, %v721
      %v726 = vsel %vm718, %v714, %v722
      %v727 = vsel %vm719, %v715, %v723
      %v728 = vsel %vm720, %v716, %v724
      %v729 = vmul.f32 %v623, 0.5
      %v730 = vmul.f32 %v626, 0.5
      %v731 = vmul.f32 %v631, 0.5
      %v732 = vmul.f32 %v634, 0.5
      %v733 = vadd.f32 %v725, 1.0
      %v734 = vadd.f32 %v726, 1.0
      %v735 = vadd.f32 %v727, 1.0
      %v736 = vadd.f32 %v728, 1.0
      %v737 = vmul.f32 %v729, %v733
      %v738 = vmul.f32 %v730, %v734
      %v739 = vmul.f32 %v731, %v735
      %v740 = vmul.f32 %v732, %v736
      %v741 = vpack.c.bf16 %v738, %v737
      %v742 = vpack.c.bf16 %v740, %v739
      %744 = vset.pattern.permute.xlu0 0
      %745 = vperm.xlu0 %744, %v500
      %v746 = vpop.permute.xlu0 %745
      %749 = vset.pattern.permute.xlu0 0
      %750 = vperm.xlu0 %749, %v501
      %v751 = vpop.permute.xlu0 %750
      %v755 = vunpack.c.l.b16 %v498
      %v756 = vunpack.c.l.b16 %v499
      %v757 = vpack.c.b16 %v756, %v755
      %vm758 = vcmask 261120
      %v760 = vsel %vm758, %v757, 0
      %762 = vmatprep.subr.bf16.mxu0 0
      %763 = vmatpush1.bf16.msra.mxu0 0
      %764 = vmatprep.subr.bf16.mxu0 0
      %765 = vmatpush1.bf16.msra.mxu0 0
      %766 = vmatprep.subr.bf16.mxu0 0
      %767 = vmatpush1.bf16.msra.mxu0 0
      %768 = vmatprep.subr.bf16.mxu0 0
      %769 = vmatpush1.bf16.msra.mxu0 0
      %770 = vmatprep.subr.bf16.mxu0 0
      %771 = vmatpush1.bf16.msra.mxu0 0
      %772 = vmatprep.subr.bf16.mxu0 0
      %773 = vmatpush1.bf16.msra.mxu0 0
      %774 = vmatprep.subr.bf16.mxu0 0
      %775 = vmatpush1.bf16.msra.mxu0 %v742
      %776 = vmatprep.subr.bf16.mxu0 0
      %777 = vmatpush1.bf16.msra.mxu0 %v741
      %778 = vmatprep.subr.bf16.mxu0 0
      %779 = vmatpush2.bf16.msra.mxu0 0
      %780 = vmatprep.subr.bf16.mxu0 0
      %781 = vmatpush2.bf16.msra.mxu0 0
      %782 = vmatprep.subr.bf16.mxu0 0
      %783 = vmatpush2.bf16.msra.mxu0 0
      %784 = vmatprep.subr.bf16.mxu0 0
      %785 = vmatpush2.bf16.msra.mxu0 0
      %786 = vmatprep.subr.bf16.mxu0 0
      %787 = vmatpush2.bf16.msra.mxu0 0
      %788 = vmatprep.subr.bf16.mxu0 0
      %789 = vmatpush2.bf16.msra.mxu0 0
      %790 = vmatprep.subr.bf16.mxu0 0
      %791 = vmatpush2.bf16.msra.mxu0 0
      %792 = vmatprep.subr.bf16.mxu0 0
      %793 = vmatpush2.bf16.msra.mxu0 0
      %794 = vmatprep.mubr.bf16.mxu0 0
      %795 = vmatmul.mubr.bf16.gmra.mxu0 %v760
      %v796 = vpop.f32.mrf.mxu0
      %v797 = vadd.f32 %v746, %v796
      %v798 = vpop.f32.mrf.mxu0
      %v799 = vpop.f32.mrf.mxu0
      %v800 = vadd.f32 %v751, %v799
      %v801 = vpop.f32.mrf.mxu0
      %802 = vdwg.mxu0
      %v803 = vld [vmem:[%s456] sm:$0xff]
      %v804 = vld [vmem:[%s456 + $0x8] sm:$0xff]
      %v805 = vunpack.c.l.bf16 %v803
      %v806 = vunpack.c.h.bf16 %v803
      %v807 = vunpack.c.l.bf16 %v804
      %v808 = vunpack.c.h.bf16 %v804
      %813 = vrot.lane.b32.xlu0 %v805, 117
      %v814 = vpop.permute.xlu0 %813
      %815 = vrot.lane.b32.xlu0 %v806, 117
      %v816 = vpop.permute.xlu0 %815
      %817 = vrot.lane.b32.xlu0 %v807, 117
      %v818 = vpop.permute.xlu0 %817
      %819 = vrot.lane.b32.xlu0 %v808, 117
      %v820 = vpop.permute.xlu0 %819
      %vm821 = vcmask 957440
      %v822 = vsel %vm821, %v814, %v816
      %v823 = vsel %vm821, %v818, %v820
      %v826 = vadd.f32 %v797, %v822
      %v827 = vadd.f32 %v800, %v823
      %828 = vst [vmem:[%s476] sm:$0xff] %v826
      %829 = vst [vmem:[%s476 + $0x8] sm:$0xff] %v827
      %p830 = scmp.lt.s32.totalorder %s25, 1
      %s831 = scalar_select %p830, %s25, 1
      %p832 = scmp.lt.s32.totalorder %s26, 7
      %s833 = scalar_select %p832, %s26, 7
      %s834 = smul.addr %s833, 2
      %s835 = smul.addr %s831, 16
      %s836 = sadd.s32 %s834, %s835
      %s837 = smul.addr %s836, 8
      %s838 = scalar_lea.vmem %s10, %s837
      // Predicated region
      $region61: #{down_forward.7} parent=59 // pred_check
        %p839 = pneg %p289
      $region62: #{down_forward.7} parent=59 // pred_check_branch
        %841 = sbr.rel (%p839) target = $region64
      $region63: #{down_forward.7} parent=59 // pred_region
        _
      $region64: #{down_forward.7} parent=59 // pred_fallthru
        _
    $region60: #{down_forward.7} parent=5 // pred_fallthru
      _
    %p842 = scmp.le.s32.totalorder 2, %s16
    // Predicated region
    $region65: #{down_forward.7} parent=5 // pred_check
      %p843 = pneg %p842
    $region66: #{down_forward.7} parent=5 // pred_check_branch
      %845 = sbr.rel (%p843) target = $region68
    $region67: #{down_forward.7} parent=5 // pred_region
      %s846 = ssub.s32 %s16, 2
      // Predicated region
      $region69: #{down_forward.7} parent=67 // pred_check
        %p847 = pneg %p295
      $region70: #{down_forward.7} parent=67 // pred_check_branch
        %849 = sbr.rel (%p847) target = $region72
      $region71: #{down_forward.7} parent=67 // pred_region
        %p850 = scmp.lt.s32.totalorder %s27, 1
        %s851 = scalar_select %p850, %s27, 1
        %p852 = scmp.lt.s32.totalorder %s28, 7
        %s853 = scalar_select %p852, %s28, 7
        %s854 = smul.addr %s853, 2
        %s855 = smul.addr %s851, 16
        %s856 = sadd.s32 %s854, %s855
        %s857 = smul.addr %s856, 8
        %s858 = scalar_lea.vmem %s10, %s857
      $region72: #{down_forward.7} parent=67 // pred_fallthru
        _
    $region68: #{down_forward.7} parent=5 // pred_fallthru
      _
  $region6: #{down_forward.7} parent=0 // loop_footer
    %s20 = sadd.s32 1, %s16
  $region7: #{down_forward.7} parent=0 // loop_footer_branch
    %15 = sbr.rel target = $region3
  $region8: #{down_forward.7} parent=0 // loop_exit
    _

// kernel: down_forward.6
$region0: #{down_forward.6}
  #allocation0 [shape = 'u32[]', space=smem, size = 0x4, offset = 0x4, fixed_abs, tag = 'smem constant byte address 0x4 - core index']
  #allocation1 [shape = 'u32[144,128]{1,0:T(1,128)}', space=vmem, size = 0x12000, scoped, tag = 'internal scratch']
  %s0 = inlined_call_operand.vmem [shape: bf16[2,10,16,256], index: 0, kind: input, shape index: {}, may-alias: {0,1,2}]
  %s1 = inlined_call_operand.vmem [shape: bf16[2,10,16,256], index: 1, kind: input, shape index: {}, may-alias: {0,1,2}]
  %s2 = inlined_call_operand.vmem [shape: bf16[2,10,16,256], index: 2, kind: input, shape index: {}, may-alias: {0,1,2}]
  %s3 = inlined_call_operand.vmem [shape: bf16[3,3,3,16,16], index: 3, kind: input, shape index: {}]
  %s4 = inlined_call_operand.vmem [shape: f32[16,1], index: 4, kind: input, shape index: {}]
  %s5 = inlined_call_operand.vmem [shape: f32[1,128], index: 5, kind: input, shape index: {}]
  %s6 = inlined_call_operand.vmem [shape: bf16[2,8,16,128], index: 6, kind: output, shape index: {0}]
  %s7 = inlined_call_operand.vmem [shape: f32[2,8,16,1], index: 7, kind: output, shape index: {1}]
  %s8 = inlined_call_operand.vmem [shape: f32[2,8,16,1], index: 8, kind: output, shape index: {2}]
  %9 = xla_tuple %s6, %s7, %s8
  %s10 = sld [smem:[#allocation0]]
  $region73: #{down_forward.6} parent=0
    _
  %s12 = ssub.s32 1, %s10
  %s13 = scalar_select 0, %s12, %s10
  loop: start=0, step=1, limit=18
  $region2: #{down_forward.6} parent=0 // loop_pre_header
    _
  $region3: #{down_forward.6} parent=0 // loop_header
    %s15 = sphi 0, %s19
    %p16 = scmp.ge.s32.totalorder %s15, 18
    %s22 = sphi 0, %s34
    %s23 = sphi 0, %s30
    %s24 = sphi 0, %s22
    %s25 = sphi 0, %s23
    %s26 = sphi 0, %s24
    %s27 = sphi 0, %s25
    %s39 = sphi 0, %s41
    %s42 = sphi 0, %s39
    %s43 = sphi 0, %s42
    %s59 = sphi 0, %s43
    %s69 = sphi 0, %s71
    %s72 = sphi 0, %s69
    %s73 = sphi 0, %s72
    %s89 = sphi 0, %s73
    %s99 = sphi 0, %s101
    %s102 = sphi 0, %s99
    %s103 = sphi 0, %s102
    %s119 = sphi 0, %s103
    %s123 = sphi 0, %s123
    %s125 = sphi 0, %s123
    %s126 = sphi 0, %s125
    %s140 = sphi 0, %s126
    %s144 = sphi 0, %s144
    %s146 = sphi 0, %s144
    %s147 = sphi 0, %s146
    %s161 = sphi 0, %s147
    %s165 = sphi 0, %s165
    %s167 = sphi 0, %s165
    %s168 = sphi 0, %s167
    %s182 = sphi 0, %s168
    %s190 = sphi 0, %s192
    %s193 = sphi 0, %s190
    %s194 = sphi 0, %s193
    %s210 = sphi 0, %s194
    %s218 = sphi 0, %s220
    %s221 = sphi 0, %s218
    %s222 = sphi 0, %s221
    %s238 = sphi 0, %s222
    %s246 = sphi 0, %s248
    %s249 = sphi 0, %s246
    %s250 = sphi 0, %s249
    %s266 = sphi 0, %s250
  $region4: #{down_forward.6} parent=0 // loop_header_branch
    %18 = sbr.rel (%p16) target = $region8
  $region5: #{down_forward.6} parent=0 // loop_body
    %s20 = ssub.s32 %s15, 1
    %s21 = ssub.s32 %s15, 2
    %s28 = sadd.s32 1, %s23
    %p29 = scmp.ge.s32.totalorder %s28, 8
    %s30 = scalar_select %p29, 0, %s28
    %s31 = sadd.s32 1, %s22
    %s32 = scalar_select %p29, %s31, %s22
    %p33 = scmp.ge.s32.totalorder %s32, 2
    %s34 = scalar_select %p33, 0, %s32
    %s35 = ssub.s32 %s22, %s34
    %s36 = ssub.s32 %s23, %s30
    %s37 = sor.u32 %s35, %s36
    %p38 = scmp.eq.s32.totalorder %s37, 0
    %s40 = sadd.s32 %s39, 1
    %s41 = scalar_select %p38, %s39, %s40
    %p44 = pneg %p38
    %p45 = scmp.eq.s32.totalorder %s15, 15
    %p46 = por %p44, %p45
    %p47 = scmp.ne.s32.totalorder %s39, %s42
    %p48 = scmp.eq.s32.totalorder %s15, 0
    %p49 = por %p47, %p48
    %p50 = scmp.ne.s32.totalorder %s39, %s42
    %p51 = scmp.eq.s32.totalorder %s20, 15
    %p52 = por %p50, %p51
    %p53 = scmp.ne.s32.totalorder %s42, %s43
    %p54 = scmp.eq.s32.totalorder %s20, 0
    %p55 = por %p53, %p54
    %p56 = scmp.ne.s32.totalorder %s42, %s43
    %p57 = scmp.eq.s32.totalorder %s21, 15
    %p58 = por %p56, %p57
    %p60 = scmp.ne.s32.totalorder %s43, %s59
    %p61 = scmp.eq.s32.totalorder %s21, 0
    %p62 = por %p60, %p61
    %s63 = sadd.s32 %s23, 1
    %s64 = sadd.s32 %s30, 1
    %s65 = ssub.s32 %s22, %s34
    %s66 = ssub.s32 %s63, %s64
    %s67 = sor.u32 %s65, %s66
    %p68 = scmp.eq.s32.totalorder %s67, 0
    %s70 = sadd.s32 %s69, 1
    %s71 = scalar_select %p68, %s69, %s70
    %p74 = pneg %p68
    %p75 = scmp.eq.s32.totalorder %s15, 15
    %p76 = por %p74, %p75
    %p77 = scmp.ne.s32.totalorder %s69, %s72
    %p78 = scmp.eq.s32.totalorder %s15, 0
    %p79 = por %p77, %p78
    %p80 = scmp.ne.s32.totalorder %s69, %s72
    %p81 = scmp.eq.s32.totalorder %s20, 15
    %p82 = por %p80, %p81
    %p83 = scmp.ne.s32.totalorder %s72, %s73
    %p84 = scmp.eq.s32.totalorder %s20, 0
    %p85 = por %p83, %p84
    %p86 = scmp.ne.s32.totalorder %s72, %s73
    %p87 = scmp.eq.s32.totalorder %s21, 15
    %p88 = por %p86, %p87
    %p90 = scmp.ne.s32.totalorder %s73, %s89
    %p91 = scmp.eq.s32.totalorder %s21, 0
    %p92 = por %p90, %p91
    %s93 = sadd.s32 %s23, 2
    %s94 = sadd.s32 %s30, 2
    %s95 = ssub.s32 %s22, %s34
    %s96 = ssub.s32 %s93, %s94
    %s97 = sor.u32 %s95, %s96
    %p98 = scmp.eq.s32.totalorder %s97, 0
    %s100 = sadd.s32 %s99, 1
    %s101 = scalar_select %p98, %s99, %s100
    %p104 = pneg %p98
    %p105 = scmp.eq.s32.totalorder %s15, 15
    %p106 = por %p104, %p105
    %p107 = scmp.ne.s32.totalorder %s99, %s102
    %p108 = scmp.eq.s32.totalorder %s15, 0
    %p109 = por %p107, %p108
    %p110 = scmp.ne.s32.totalorder %s99, %s102
    %p111 = scmp.eq.s32.totalorder %s20, 15
    %p112 = por %p110, %p111
    %p113 = scmp.ne.s32.totalorder %s102, %s103
    %p114 = scmp.eq.s32.totalorder %s20, 0
    %p115 = por %p113, %p114
    %p116 = scmp.ne.s32.totalorder %s102, %s103
    %p117 = scmp.eq.s32.totalorder %s21, 15
    %p118 = por %p116, %p117
    %p120 = scmp.ne.s32.totalorder %s103, %s119
    %p121 = scmp.eq.s32.totalorder %s21, 0
    %p122 = por %p120, %p121
    %s124 = sadd.s32 %s123, 1
    %p127 = scmp.eq.s32.totalorder %s15, 15
    %p128 = scmp.ne.s32.totalorder %s123, %s125
    %p129 = scmp.eq.s32.totalorder %s15, 0
    %p130 = por %p128, %p129
    %p131 = scmp.ne.s32.totalorder %s123, %s125
    %p132 = scmp.eq.s32.totalorder %s20, 15
    %p133 = por %p131, %p132
    %p134 = scmp.ne.s32.totalorder %s125, %s126
    %p135 = scmp.eq.s32.totalorder %s20, 0
    %p136 = por %p134, %p135
    %p137 = scmp.ne.s32.totalorder %s125, %s126
    %p138 = scmp.eq.s32.totalorder %s21, 15
    %p139 = por %p137, %p138
    %p141 = scmp.ne.s32.totalorder %s126, %s140
    %p142 = scmp.eq.s32.totalorder %s21, 0
    %p143 = por %p141, %p142
    %s145 = sadd.s32 %s144, 1
    %p148 = scmp.eq.s32.totalorder %s15, 15
    %p149 = scmp.ne.s32.totalorder %s144, %s146
    %p150 = scmp.eq.s32.totalorder %s15, 0
    %p151 = por %p149, %p150
    %p152 = scmp.ne.s32.totalorder %s144, %s146
    %p153 = scmp.eq.s32.totalorder %s20, 15
    %p154 = por %p152, %p153
    %p155 = scmp.ne.s32.totalorder %s146, %s147
    %p156 = scmp.eq.s32.totalorder %s20, 0
    %p157 = por %p155, %p156
    %p158 = scmp.ne.s32.totalorder %s146, %s147
    %p159 = scmp.eq.s32.totalorder %s21, 15
    %p160 = por %p158, %p159
    %p162 = scmp.ne.s32.totalorder %s147, %s161
    %p163 = scmp.eq.s32.totalorder %s21, 0
    %p164 = por %p162, %p163
    %s166 = sadd.s32 %s165, 1
    %p169 = scmp.eq.s32.totalorder %s15, 15
    %p170 = scmp.ne.s32.totalorder %s165, %s167
    %p171 = scmp.eq.s32.totalorder %s15, 0
    %p172 = por %p170, %p171
    %p173 = scmp.ne.s32.totalorder %s165, %s167
    %p174 = scmp.eq.s32.totalorder %s20, 15
    %p175 = por %p173, %p174
    %p176 = scmp.ne.s32.totalorder %s167, %s168
    %p177 = scmp.eq.s32.totalorder %s20, 0
    %p178 = por %p176, %p177
    %p179 = scmp.ne.s32.totalorder %s167, %s168
    %p180 = scmp.eq.s32.totalorder %s21, 15
    %p181 = por %p179, %p180
    %p183 = scmp.ne.s32.totalorder %s168, %s182
    %p184 = scmp.eq.s32.totalorder %s21, 0
    %p185 = por %p183, %p184
    %s186 = ssub.s32 %s22, %s34
    %s187 = ssub.s32 %s23, %s30
    %s188 = sor.u32 %s186, %s187
    %p189 = scmp.eq.s32.totalorder %s188, 0
    %s191 = sadd.s32 %s190, 1
    %s192 = scalar_select %p189, %s190, %s191
    %p195 = pneg %p189
    %p196 = scmp.eq.s32.totalorder %s15, 15
    %p197 = por %p195, %p196
    %p198 = scmp.ne.s32.totalorder %s190, %s193
    %p199 = scmp.eq.s32.totalorder %s15, 0
    %p200 = por %p198, %p199
    %p201 = scmp.ne.s32.totalorder %s190, %s193
    %p202 = scmp.eq.s32.totalorder %s20, 15
    %p203 = por %p201, %p202
    %p204 = scmp.ne.s32.totalorder %s193, %s194
    %p205 = scmp.eq.s32.totalorder %s20, 0
    %p206 = por %p204, %p205
    %p207 = scmp.ne.s32.totalorder %s193, %s194
    %p208 = scmp.eq.s32.totalorder %s21, 15
    %p209 = por %p207, %p208
    %p211 = scmp.ne.s32.totalorder %s194, %s210
    %p212 = scmp.eq.s32.totalorder %s21, 0
    %p213 = por %p211, %p212
    %s214 = ssub.s32 %s22, %s34
    %s215 = ssub.s32 %s23, %s30
    %s216 = sor.u32 %s214, %s215
    %p217 = scmp.eq.s32.totalorder %s216, 0
    %s219 = sadd.s32 %s218, 1
    %s220 = scalar_select %p217, %s218, %s219
    %p223 = pneg %p217
    %p224 = scmp.eq.s32.totalorder %s15, 15
    %p225 = por %p223, %p224
    %p226 = scmp.ne.s32.totalorder %s218, %s221
    %p227 = scmp.eq.s32.totalorder %s15, 0
    %p228 = por %p226, %p227
    %p229 = scmp.ne.s32.totalorder %s218, %s221
    %p230 = scmp.eq.s32.totalorder %s20, 15
    %p231 = por %p229, %p230
    %p232 = scmp.ne.s32.totalorder %s221, %s222
    %p233 = scmp.eq.s32.totalorder %s20, 0
    %p234 = por %p232, %p233
    %p235 = scmp.ne.s32.totalorder %s221, %s222
    %p236 = scmp.eq.s32.totalorder %s21, 15
    %p237 = por %p235, %p236
    %p239 = scmp.ne.s32.totalorder %s222, %s238
    %p240 = scmp.eq.s32.totalorder %s21, 0
    %p241 = por %p239, %p240
    %s242 = ssub.s32 %s22, %s34
    %s243 = ssub.s32 %s23, %s30
    %s244 = sor.u32 %s242, %s243
    %p245 = scmp.eq.s32.totalorder %s244, 0
    %s247 = sadd.s32 %s246, 1
    %s248 = scalar_select %p245, %s246, %s247
    %p251 = pneg %p245
    %p252 = scmp.eq.s32.totalorder %s15, 15
    %p253 = por %p251, %p252
    %p254 = scmp.ne.s32.totalorder %s246, %s249
    %p255 = scmp.eq.s32.totalorder %s15, 0
    %p256 = por %p254, %p255
    %p257 = scmp.ne.s32.totalorder %s246, %s249
    %p258 = scmp.eq.s32.totalorder %s20, 15
    %p259 = por %p257, %p258
    %p260 = scmp.ne.s32.totalorder %s249, %s250
    %p261 = scmp.eq.s32.totalorder %s20, 0
    %p262 = por %p260, %p261
    %p263 = scmp.ne.s32.totalorder %s249, %s250
    %p264 = scmp.eq.s32.totalorder %s21, 15
    %p265 = por %p263, %p264
    %p267 = scmp.ne.s32.totalorder %s250, %s266
    %p268 = scmp.eq.s32.totalorder %s21, 0
    %p269 = por %p267, %p268
    %p270 = scmp.le.s32.totalorder 1, %s15
    %p271 = scmp.lt.s32.totalorder %s15, 17
    %p272 = pnand %p270, %p271
    %p273 = pneg %p272
    // Predicated region
    $region9: #{down_forward.6} parent=5 // pred_check
      _
    $region10: #{down_forward.6} parent=5 // pred_check_branch
      %275 = sbr.rel (%p272) target = $region12
    $region11: #{down_forward.6} parent=5 // pred_region
      %s276 = ssub.s32 %s15, 1
      // Predicated region
      $region13: #{down_forward.6} parent=11 // pred_check
        %p277 = pneg %p136
      $region14: #{down_forward.6} parent=11 // pred_check_branch
        %279 = sbr.rel (%p277) target = $region16
      $region15: #{down_forward.6} parent=11 // pred_region
        _
      $region16: #{down_forward.6} parent=11 // pred_fallthru
        _
      // Predicated region
      $region17: #{down_forward.6} parent=11 // pred_check
        %p280 = pneg %p157
      $region18: #{down_forward.6} parent=11 // pred_check_branch
        %282 = sbr.rel (%p280) target = $region20
      $region19: #{down_forward.6} parent=11 // pred_region
        _
      $region20: #{down_forward.6} parent=11 // pred_fallthru
        _
      // Predicated region
      $region21: #{down_forward.6} parent=11 // pred_check
        %p283 = pneg %p178
      $region22: #{down_forward.6} parent=11 // pred_check_branch
        %285 = sbr.rel (%p283) target = $region24
      $region23: #{down_forward.6} parent=11 // pred_region
        _
      $region24: #{down_forward.6} parent=11 // pred_fallthru
        _
    $region12: #{down_forward.6} parent=5 // pred_fallthru
      _
    %p286 = scmp.lt.s32.totalorder %s15, 16
    // Predicated region
    $region25: #{down_forward.6} parent=5 // pred_check
      %p287 = pneg %p286
    $region26: #{down_forward.6} parent=5 // pred_check_branch
      %289 = sbr.rel (%p287) target = $region28
    $region27: #{down_forward.6} parent=5 // pred_region
      // Predicated region
      $region29: #{down_forward.6} parent=27 // pred_check
        %p290 = pneg %p49
      $region30: #{down_forward.6} parent=27 // pred_check_branch
        %292 = sbr.rel (%p290) target = $region32
      $region31: #{down_forward.6} parent=27 // pred_region
        %p293 = scmp.lt.s32.totalorder %s22, 1
        %s294 = scalar_select %p293, %s22, 1
        %p295 = scmp.lt.s32.totalorder %s23, 9
        %s296 = scalar_select %p295, %s23, 9
        %s297 = smul.addr %s296, 4
        %s298 = smul.addr %s294, 40
        %s299 = sadd.s32 %s297, %s298
        %s300 = smul.addr %s299, 4
        %s301 = scalar_lea.vmem %s0, %s300
      $region32: #{down_forward.6} parent=27 // pred_fallthru
        _
      // Predicated region
      $region33: #{down_forward.6} parent=27 // pred_check
        %p302 = pneg %p79
      $region34: #{down_forward.6} parent=27 // pred_check_branch
        %304 = sbr.rel (%p302) target = $region36
      $region35: #{down_forward.6} parent=27 // pred_region
        %s305 = sadd.s32 %s23, 1
        %p306 = scmp.lt.s32.totalorder %s22, 1
        %s307 = scalar_select %p306, %s22, 1
        %p308 = scmp.lt.s32.totalorder %s305, 9
        %s309 = scalar_select %p308, %s305, 9
        %s310 = smul.addr %s309, 4
        %s311 = smul.addr %s307, 40
        %s312 = sadd.s32 %s310, %s311
        %s313 = smul.addr %s312, 4
        %s314 = scalar_lea.vmem %s1, %s313
        %s315 = sadd.s32 %s23, 1
      $region36: #{down_forward.6} parent=27 // pred_fallthru
        _
      // Predicated region
      $region37: #{down_forward.6} parent=27 // pred_check
        %p316 = pneg %p109
      $region38: #{down_forward.6} parent=27 // pred_check_branch
        %318 = sbr.rel (%p316) target = $region40
      $region39: #{down_forward.6} parent=27 // pred_region
        %s319 = sadd.s32 %s23, 2
        %p320 = scmp.lt.s32.totalorder %s22, 1
        %s321 = scalar_select %p320, %s22, 1
        %p322 = scmp.lt.s32.totalorder %s319, 9
        %s323 = scalar_select %p322, %s319, 9
        %s324 = smul.addr %s323, 4
        %s325 = smul.addr %s321, 40
        %s326 = sadd.s32 %s324, %s325
        %s327 = smul.addr %s326, 4
        %s328 = scalar_lea.vmem %s2, %s327
        %s329 = sadd.s32 %s23, 2
      $region40: #{down_forward.6} parent=27 // pred_fallthru
        _
    $region28: #{down_forward.6} parent=5 // pred_fallthru
      _
    %p330 = scmp.le.s32.totalorder 1, %s15
    %p331 = scmp.lt.s32.totalorder %s15, 17
    %p332 = pnand %p330, %p331
    %p333 = pneg %p332
    // Predicated region
    $region41: #{down_forward.6} parent=5 // pred_check
      _
    $region42: #{down_forward.6} parent=5 // pred_check_branch
      %335 = sbr.rel (%p332) target = $region44
    $region43: #{down_forward.6} parent=5 // pred_region
      %s336 = ssub.s32 %s15, 1
      %p337 = scmp.lt.s32.totalorder %s24, 1
      %s338 = scalar_select %p337, %s24, 1
      %p339 = scmp.lt.s32.totalorder %s25, 9
      %s340 = scalar_select %p339, %s25, 9
      %s341 = smul.addr %s340, 4
      %s342 = smul.addr %s338, 40
      %s343 = sadd.s32 %s341, %s342
      %s344 = smul.addr %s343, 4
      %s345 = scalar_lea.vmem %s0, %s344
      %p346 = pneg %p55
      %p347 = pneg %p52
      %s348 = sadd.s32 %s25, 1
      %p349 = scmp.lt.s32.totalorder %s24, 1
      %s350 = scalar_select %p349, %s24, 1
      %p351 = scmp.lt.s32.totalorder %s348, 9
      %s352 = scalar_select %p351, %s348, 9
      %s353 = smul.addr %s352, 4
      %s354 = smul.addr %s350, 40
      %s355 = sadd.s32 %s353, %s354
      %s356 = smul.addr %s355, 4
      %s357 = scalar_lea.vmem %s1, %s356
      %p358 = pneg %p85
      %p359 = pneg %p82
      %s360 = sadd.s32 %s25, 2
      %p361 = scmp.lt.s32.totalorder %s24, 1
      %s362 = scalar_select %p361, %s24, 1
      %p363 = scmp.lt.s32.totalorder %s360, 9
      %s364 = scalar_select %p363, %s360, 9
      %s365 = smul.addr %s364, 4
      %s366 = smul.addr %s362, 40
      %s367 = sadd.s32 %s365, %s366
      %s368 = smul.addr %s367, 4
      %s369 = scalar_lea.vmem %s2, %s368
      %p370 = pneg %p115
      %p371 = pneg %p112
      %p372 = pneg %p136
      %p373 = pneg %p133
      %p374 = pneg %p157
      %p375 = pneg %p154
      %p376 = pneg %p178
      %p377 = pneg %p175
      %p378 = pneg %p206
      %p379 = pneg %p203
      %p380 = scmp.lt.s32.totalorder %s24, 1
      %s381 = scalar_select %p380, %s24, 1
      %p382 = scmp.lt.s32.totalorder %s25, 7
      %s383 = scalar_select %p382, %s25, 7
      %s384 = smul.addr %s383, 2
      %s385 = smul.addr %s381, 16
      %s386 = sadd.s32 %s384, %s385
      %s387 = smul.addr %s386, 4
      %s388 = scalar_lea.vmem %s6, %s387
      %p389 = pneg %p234
      %p390 = pneg %p231
      %p391 = scmp.lt.s32.totalorder %s24, 1
      %s392 = scalar_select %p391, %s24, 1
      %p393 = scmp.lt.s32.totalorder %s25, 7
      %s394 = scalar_select %p393, %s25, 7
      %s395 = smul.addr %s394, 2
      %s396 = smul.addr %s392, 16
      %s397 = sadd.s32 %s395, %s396
      %s398 = smul.addr %s397, 8
      %s399 = scalar_lea.vmem %s7, %s398
      %p400 = pneg %p262
      %p401 = pneg %p259
      %p402 = scmp.lt.s32.totalorder %s24, 1
      %s403 = scalar_select %p402, %s24, 1
      %p404 = scmp.lt.s32.totalorder %s25, 7
      %s405 = scalar_select %p404, %s25, 7
      %s406 = smul.addr %s405, 2
      %s407 = smul.addr %s403, 16
      %s408 = sadd.s32 %s406, %s407
      %s409 = smul.addr %s408, 8
      %s410 = scalar_lea.vmem %s8, %s409
      %p411 = scmp.lt.s32.totalorder %s24, 1
      %s412 = scalar_select %p411, %s24, 1
      %p413 = scmp.lt.s32.totalorder %s25, 9
      %s414 = scalar_select %p413, %s25, 9
      %s415 = smul.addr %s414, 4
      %s416 = smul.addr %s412, 40
      %s417 = sadd.s32 %s415, %s416
      %s418 = smul.addr %s417, 4
      %s419 = scalar_lea.vmem %s0, %s418
      %s420 = sadd.s32 %s25, 1
      %p421 = scmp.lt.s32.totalorder %s24, 1
      %s422 = scalar_select %p421, %s24, 1
      %p423 = scmp.lt.s32.totalorder %s420, 9
      %s424 = scalar_select %p423, %s420, 9
      %s425 = smul.addr %s424, 4
      %s426 = smul.addr %s422, 40
      %s427 = sadd.s32 %s425, %s426
      %s428 = smul.addr %s427, 4
      %s429 = scalar_lea.vmem %s1, %s428
      %s430 = sadd.s32 %s25, 1
      %s431 = sadd.s32 %s25, 2
      %p432 = scmp.lt.s32.totalorder %s24, 1
      %s433 = scalar_select %p432, %s24, 1
      %p434 = scmp.lt.s32.totalorder %s431, 9
      %s435 = scalar_select %p434, %s431, 9
      %s436 = smul.addr %s435, 4
      %s437 = smul.addr %s433, 40
      %s438 = sadd.s32 %s436, %s437
      %s439 = smul.addr %s438, 4
      %s440 = scalar_lea.vmem %s2, %s439
      %s441 = sadd.s32 %s25, 2
      %p442 = scmp.lt.s32.totalorder %s24, 1
      %s443 = scalar_select %p442, %s24, 1
      %p444 = scmp.lt.s32.totalorder %s25, 7
      %s445 = scalar_select %p444, %s25, 7
      %s446 = smul.addr %s445, 2
      %s447 = smul.addr %s443, 16
      %s448 = sadd.s32 %s446, %s447
      %s449 = smul.addr %s448, 4
      %s450 = scalar_lea.vmem %s6, %s449
      %p451 = scmp.lt.s32.totalorder %s24, 1
      %s452 = scalar_select %p451, %s24, 1
      %p453 = scmp.lt.s32.totalorder %s25, 7
      %s454 = scalar_select %p453, %s25, 7
      %s455 = smul.addr %s454, 2
      %s456 = smul.addr %s452, 16
      %s457 = sadd.s32 %s455, %s456
      %s458 = smul.addr %s457, 8
      %s459 = scalar_lea.vmem %s7, %s458
      %p460 = scmp.lt.s32.totalorder %s24, 1
      %s461 = scalar_select %p460, %s24, 1
      %p462 = scmp.lt.s32.totalorder %s25, 7
      %s463 = scalar_select %p462, %s25, 7
      %s464 = smul.addr %s463, 2
      %s465 = smul.addr %s461, 16
      %s466 = sadd.s32 %s464, %s465
      %s467 = smul.addr %s466, 8
      %s468 = scalar_lea.vmem %s8, %s467
      %v470 = vld [vmem:[%s419] sm:$0xff]
      %v471 = vld [vmem:[%s419 + $0x8] sm:$0xff]
      %v472 = vld [vmem:[%s3] sm:$0xf]
      %v473 = vld [vmem:[%s3 + $0x4] sm:$0xf]
      %s474 = scalar_lea.vmem %s3, 8
      %v475 = vld [vmem:[%s474] sm:$0xf]
      %v476 = vld [vmem:[%s474 + $0x4] sm:$0xf]
      %v479 = vunpack.c.l.b16 %v475
      %v480 = vunpack.c.l.b16 %v476
      %v481 = vpack.c.b16 %v480, %v479
      %v484 = vunpack.c.l.b16 %v470
      %v485 = vunpack.c.h.b16 %v470
      %v486 = vunpack.c.l.b16 %v471
      %v487 = vunpack.c.h.b16 %v471
      %v488 = vpack.c.b16 %v486, %v484
      %v489 = vpack.c.b16 %v487, %v485
      %490 = vrot.lane.b32.xlu0 %v488, 127
      %v491 = vpop.permute.xlu0 %490
      %492 = vrot.lane.b32.xlu0 %v489, 127
      %v493 = vpop.permute.xlu0 %492
      %vm494 = vcmask 1039360
      %v495 = vsel %vm494, %v491, %v493
      %vm497 = vcmask 130048
      %v499 = vsel %vm497, %v481, 0
      %501 = vmatprep.subr.bf16.mxu0 0
      %502 = vmatpush1.bf16.msra.mxu0 0
      %503 = vmatprep.subr.bf16.mxu0 0
      %504 = vmatpush1.bf16.msra.mxu0 0
      %505 = vmatprep.subr.bf16.mxu0 0
      %506 = vmatpush1.bf16.msra.mxu0 0
      %507 = vmatprep.subr.bf16.mxu0 0
      %508 = vmatpush1.bf16.msra.mxu0 0
      %509 = vmatprep.subr.bf16.mxu0 0
      %510 = vmatpush1.bf16.msra.mxu0 0
      %511 = vmatprep.subr.bf16.mxu0 0
      %512 = vmatpush1.bf16.msra.mxu0 0
      %513 = vmatprep.subr.bf16.mxu0 0
      %514 = vmatpush1.bf16.msra.mxu0 0
      %515 = vmatprep.subr.bf16.mxu0 0
      %516 = vmatpush1.bf16.msra.mxu0 %v495
      %517 = vmatprep.subr.bf16.mxu0 0
      %518 = vmatpush2.bf16.msra.mxu0 0
      %519 = vmatprep.subr.bf16.mxu0 0
      %520 = vmatpush2.bf16.msra.mxu0 0
      %521 = vmatprep.subr.bf16.mxu0 0
      %522 = vmatpush2.bf16.msra.mxu0 0
      %523 = vmatprep.subr.bf16.mxu0 0
      %524 = vmatpush2.bf16.msra.mxu0 0
      %525 = vmatprep.subr.bf16.mxu0 0
      %526 = vmatpush2.bf16.msra.mxu0 0
      %527 = vmatprep.subr.bf16.mxu0 0
      %528 = vmatpush2.bf16.msra.mxu0 0
      %529 = vmatprep.subr.bf16.mxu0 0
      %530 = vmatpush2.bf16.msra.mxu0 0
      %531 = vmatprep.subr.bf16.mxu0 0
      %532 = vmatpush2.bf16.msra.mxu0 0
      %533 = vmatprep.mubr.bf16.mxu0 0
      %534 = vmatmul.mubr.bf16.gmra.mxu0 %v499
      %v535 = vpop.f32.mrf.mxu0
      %v536 = vadd.f32 0.0, %v535
      %v537 = vpop.f32.mrf.mxu0
      %v538 = vpop.f32.mrf.mxu0
      %v539 = vadd.f32 0.0, %v538
      %v540 = vpop.f32.mrf.mxu0
      %541 = vdwg.mxu0
      %v544 = vunpack.c.l.b16 %v472
      %v545 = vunpack.c.l.b16 %v473
      %v546 = vpack.c.b16 %v545, %v544
      %v549 = vsel %vm497, %v546, 0
      %551 = vmatprep.subr.bf16.mxu0 0
      %552 = vmatpush1.bf16.msra.mxu0 0
      %553 = vmatprep.subr.bf16.mxu0 0
      %554 = vmatpush1.bf16.msra.mxu0 0
      %555 = vmatprep.subr.bf16.mxu0 0
      %556 = vmatpush1.bf16.msra.mxu0 0
      %557 = vmatprep.subr.bf16.mxu0 0
      %558 = vmatpush1.bf16.msra.mxu0 0
      %559 = vmatprep.subr.bf16.mxu0 0
      %560 = vmatpush1.bf16.msra.mxu0 0
      %561 = vmatprep.subr.bf16.mxu0 0
      %562 = vmatpush1.bf16.msra.mxu0 0
      %563 = vmatprep.subr.bf16.mxu0 0
      %564 = vmatpush1.bf16.msra.mxu0 0
      %565 = vmatprep.subr.bf16.mxu0 0
      %566 = vmatpush1.bf16.msra.mxu0 %v488
      %567 = vmatprep.subr.bf16.mxu0 0
      %568 = vmatpush2.bf16.msra.mxu0 0
      %569 = vmatprep.subr.bf16.mxu0 0
      %570 = vmatpush2.bf16.msra.mxu0 0
      %571 = vmatprep.subr.bf16.mxu0 0
      %572 = vmatpush2.bf16.msra.mxu0 0
      %573 = vmatprep.subr.bf16.mxu0 0
      %574 = vmatpush2.bf16.msra.mxu0 0
      %575 = vmatprep.subr.bf16.mxu0 0
      %576 = vmatpush2.bf16.msra.mxu0 0
      %577 = vmatprep.subr.bf16.mxu0 0
      %578 = vmatpush2.bf16.msra.mxu0 0
      %579 = vmatprep.subr.bf16.mxu0 0
      %580 = vmatpush2.bf16.msra.mxu0 0
      %581 = vmatprep.subr.bf16.mxu0 0
      %582 = vmatpush2.bf16.msra.mxu0 0
      %583 = vmatprep.mubr.bf16.mxu0 0
      %584 = vmatmul.mubr.bf16.gmra.mxu0 %v549
      %v585 = vpop.f32.mrf.mxu0
      %v586 = vadd.f32 %v536, %v585
      %v587 = vpop.f32.mrf.mxu0
      %v588 = vpop.f32.mrf.mxu0
      %v589 = vadd.f32 %v539, %v588
      %v590 = vpop.f32.mrf.mxu0
      %591 = vdwg.mxu0
      %s592 = scalar_lea.vmem %s3, 16
      %v593 = vld [vmem:[%s592] sm:$0xf]
      %v594 = vld [vmem:[%s592 + $0x4] sm:$0xf]
      %v597 = vunpack.c.l.b16 %v593
      %v598 = vunpack.c.l.b16 %v594
      %v599 = vpack.c.b16 %v598, %v597
      %600 = vrot.lane.b32.xlu0 %v488, 126
      %v601 = vpop.permute.xlu0 %600
      %602 = vrot.lane.b32.xlu0 %v489, 126
      %v603 = vpop.permute.xlu0 %602
      %vm604 = vcmask 1031168
      %v605 = vsel %vm604, %v601, %v603
      %v608 = vsel %vm497, %v599, 0
      %610 = vmatprep.subr.bf16.mxu0 0
      %611 = vmatpush1.bf16.msra.mxu0 0
      %612 = vmatprep.subr.bf16.mxu0 0
      %613 = vmatpush1.bf16.msra.mxu0 0
      %614 = vmatprep.subr.bf16.mxu0 0
      %615 = vmatpush1.bf16.msra.mxu0 0
      %616 = vmatprep.subr.bf16.mxu0 0
      %617 = vmatpush1.bf16.msra.mxu0 0
      %618 = vmatprep.subr.bf16.mxu0 0
      %619 = vmatpush1.bf16.msra.mxu0 0
      %620 = vmatprep.subr.bf16.mxu0 0
      %621 = vmatpush1.bf16.msra.mxu0 0
      %622 = vmatprep.subr.bf16.mxu0 0
      %623 = vmatpush1.bf16.msra.mxu0 0
      %624 = vmatprep.subr.bf16.mxu0 0
      %625 = vmatpush1.bf16.msra.mxu0 %v605
      %626 = vmatprep.subr.bf16.mxu0 0
      %627 = vmatpush2.bf16.msra.mxu0 0
      %628 = vmatprep.subr.bf16.mxu0 0
      %629 = vmatpush2.bf16.msra.mxu0 0
      %630 = vmatprep.subr.bf16.mxu0 0
      %631 = vmatpush2.bf16.msra.mxu0 0
      %632 = vmatprep.subr.bf16.mxu0 0
      %633 = vmatpush2.bf16.msra.mxu0 0
      %634 = vmatprep.subr.bf16.mxu0 0
      %635 = vmatpush2.bf16.msra.mxu0 0
      %636 = vmatprep.subr.bf16.mxu0 0
      %637 = vmatpush2.bf16.msra.mxu0 0
      %638 = vmatprep.subr.bf16.mxu0 0
      %639 = vmatpush2.bf16.msra.mxu0 0
      %640 = vmatprep.subr.bf16.mxu0 0
      %641 = vmatpush2.bf16.msra.mxu0 0
      %642 = vmatprep.mubr.bf16.mxu0 0
      %643 = vmatmul.mubr.bf16.gmra.mxu0 %v608
      %v644 = vpop.f32.mrf.mxu0
      %v645 = vadd.f32 0.0, %v644
      %v646 = vpop.f32.mrf.mxu0
      %v647 = vpop.f32.mrf.mxu0
      %v648 = vadd.f32 0.0, %v647
      %v649 = vpop.f32.mrf.mxu0
      %650 = vdwg.mxu0
      %v651 = vadd.f32 %v586, %v645
      %v652 = vadd.f32 %v589, %v648
      %s653 = scalar_lea.vmem %s3, 24
      %v654 = vld [vmem:[%s653] sm:$0xf]
      %v655 = vld [vmem:[%s653 + $0x4] sm:$0xf]
      %v658 = vunpack.c.l.b16 %v654
      %v659 = vunpack.c.l.b16 %v655
      %v660 = vpack.c.b16 %v659, %v658
      %661 = vrot.lane.b32.xlu0 %v488, 118
      %v662 = vpop.permute.xlu0 %661
      %663 = vrot.lane.b32.xlu0 %v489, 118
      %v664 = vpop.permute.xlu0 %663
      %vm665 = vcmask 965632
      %v666 = vsel %vm665, %v662, %v664
      %v669 = vsel %vm497, %v660, 0
      %671 = vmatprep.subr.bf16.mxu0 0
      %672 = vmatpush1.bf16.msra.mxu0 0
      %673 = vmatprep.subr.bf16.mxu0 0
      %674 = vmatpush1.bf16.msra.mxu0 0
      %675 = vmatprep.subr.bf16.mxu0 0
      %676 = vmatpush1.bf16.msra.mxu0 0
      %677 = vmatprep.subr.bf16.mxu0 0
      %678 = vmatpush1.bf16.msra.mxu0 0
      %679 = vmatprep.subr.bf16.mxu0 0
      %680 = vmatpush1.bf16.msra.mxu0 0
      %681 = vmatprep.subr.bf16.mxu0 0
      %682 = vmatpush1.bf16.msra.mxu0 0
      %683 = vmatprep.subr.bf16.mxu0 0
      %684 = vmatpush1.bf16.msra.mxu0 0
      %685 = vmatprep.subr.bf16.mxu0 0
      %686 = vmatpush1.bf16.msra.mxu0 %v666
      %687 = vmatprep.subr.bf16.mxu0 0
      %688 = vmatpush2.bf16.msra.mxu0 0
      %689 = vmatprep.subr.bf16.mxu0 0
      %690 = vmatpush2.bf16.msra.mxu0 0
      %691 = vmatprep.subr.bf16.mxu0 0
      %692 = vmatpush2.bf16.msra.mxu0 0
      %693 = vmatprep.subr.bf16.mxu0 0
      %694 = vmatpush2.bf16.msra.mxu0 0
      %695 = vmatprep.subr.bf16.mxu0 0
      %696 = vmatpush2.bf16.msra.mxu0 0
      %697 = vmatprep.subr.bf16.mxu0 0
      %698 = vmatpush2.bf16.msra.mxu0 0
      %699 = vmatprep.subr.bf16.mxu0 0
      %700 = vmatpush2.bf16.msra.mxu0 0
      %701 = vmatprep.subr.bf16.mxu0 0
      %702 = vmatpush2.bf16.msra.mxu0 0
      %703 = vmatprep.mubr.bf16.mxu0 0
      %704 = vmatmul.mubr.bf16.gmra.mxu0 %v669
      %v705 = vpop.f32.mrf.mxu0
      %v706 = vadd.f32 0.0, %v705
      %v707 = vpop.f32.mrf.mxu0
      %v708 = vpop.f32.mrf.mxu0
      %v709 = vadd.f32 0.0, %v708
      %v710 = vpop.f32.mrf.mxu0
      %711 = vdwg.mxu0
      %v712 = vadd.f32 %v651, %v706
      %v713 = vadd.f32 %v652, %v709
      %s714 = scalar_lea.vmem %s3, 32
      %v715 = vld [vmem:[%s714] sm:$0xf]
      %v716 = vld [vmem:[%s714 + $0x4] sm:$0xf]
      %v719 = vunpack.c.l.b16 %v715
      %v720 = vunpack.c.l.b16 %v716
      %v721 = vpack.c.b16 %v720, %v719
      %722 = vrot.lane.b32.xlu0 %v488, 117
      %v723 = vpop.permute.xlu0 %722
      %724 = vrot.lane.b32.xlu0 %v489, 117
      %v725 = vpop.permute.xlu0 %724
      %vm726 = vcmask 957440
      %v727 = vsel %vm726, %v723, %v725
      %v730 = vsel %vm497, %v721, 0
      %732 = vmatprep.subr.bf16.mxu0 0
      %733 = vmatpush1.bf16.msra.mxu0 0
      %734 = vmatprep.subr.bf16.mxu0 0
      %735 = vmatpush1.bf16.msra.mxu0 0
      %736 = vmatprep.subr.bf16.mxu0 0
      %737 = vmatpush1.bf16.msra.mxu0 0
      %738 = vmatprep.subr.bf16.mxu0 0
      %739 = vmatpush1.bf16.msra.mxu0 0
      %740 = vmatprep.subr.bf16.mxu0 0
      %741 = vmatpush1.bf16.msra.mxu0 0
      %742 = vmatprep.subr.bf16.mxu0 0
      %743 = vmatpush1.bf16.msra.mxu0 0
      %744 = vmatprep.subr.bf16.mxu0 0
      %745 = vmatpush1.bf16.msra.mxu0 0
      %746 = vmatprep.subr.bf16.mxu0 0
      %747 = vmatpush1.bf16.msra.mxu0 %v727
      %748 = vmatprep.subr.bf16.mxu0 0
      %749 = vmatpush2.bf16.msra.mxu0 0
      %750 = vmatprep.subr.bf16.mxu0 0
      %751 = vmatpush2.bf16.msra.mxu0 0
      %752 = vmatprep.subr.bf16.mxu0 0
      %753 = vmatpush2.bf16.msra.mxu0 0
      %754 = vmatprep.subr.bf16.mxu0 0
      %755 = vmatpush2.bf16.msra.mxu0 0
      %756 = vmatprep.subr.bf16.mxu0 0
      %757 = vmatpush2.bf16.msra.mxu0 0
      %758 = vmatprep.subr.bf16.mxu0 0
      %759 = vmatpush2.bf16.msra.mxu0 0
      %760 = vmatprep.subr.bf16.mxu0 0
      %761 = vmatpush2.bf16.msra.mxu0 0
      %762 = vmatprep.subr.bf16.mxu0 0
      %763 = vmatpush2.bf16.msra.mxu0 0
      %764 = vmatprep.mubr.bf16.mxu0 0
      %765 = vmatmul.mubr.bf16.gmra.mxu0 %v730
      %v766 = vpop.f32.mrf.mxu0
      %v767 = vadd.f32 0.0, %v766
      %v768 = vpop.f32.mrf.mxu0
      %v769 = vpop.f32.mrf.mxu0
      %v770 = vadd.f32 0.0, %v769
      %v771 = vpop.f32.mrf.mxu0
      %772 = vdwg.mxu0
      %v773 = vadd.f32 %v712, %v767
      %v774 = vadd.f32 %v713, %v770
      %s775 = scalar_lea.vmem %s3, 40
      %v776 = vld [vmem:[%s775] sm:$0xf]
      %v777 = vld [vmem:[%s775 + $0x4] sm:$0xf]
      %v780 = vunpack.c.l.b16 %v776
      %v781 = vunpack.c.l.b16 %v777
      %v782 = vpack.c.b16 %v781, %v780
      %783 = vrot.lane.b32.xlu0 %v488, 116
      %v784 = vpop.permute.xlu0 %783
      %785 = vrot.lane.b32.xlu0 %v489, 116
      %v786 = vpop.permute.xlu0 %785
      %vm787 = vcmask 949248
      %v788 = vsel %vm787, %v784, %v786
      %v791 = vsel %vm497, %v782, 0
      %793 = vmatprep.subr.bf16.mxu0 0
      %794 = vmatpush1.bf16.msra.mxu0 0
      %795 = vmatprep.subr.bf16.mxu0 0
      %796 = vmatpush1.bf16.msra.mxu0 0
      %797 = vmatprep.subr.bf16.mxu0 0
      %798 = vmatpush1.bf16.msra.mxu0 0
      %799 = vmatprep.subr.bf16.mxu0 0
      %800 = vmatpush1.bf16.msra.mxu0 0
      %801 = vmatprep.subr.bf16.mxu0 0
      %802 = vmatpush1.bf16.msra.mxu0 0
      %803 = vmatprep.subr.bf16.mxu0 0
      %804 = vmatpush1.bf16.msra.mxu0 0
      %805 = vmatprep.subr.bf16.mxu0 0
      %806 = vmatpush1.bf16.msra.mxu0 0
      %807 = vmatprep.subr.bf16.mxu0 0
      %808 = vmatpush1.bf16.msra.mxu0 %v788
      %809 = vmatprep.subr.bf16.mxu0 0
      %810 = vmatpush2.bf16.msra.mxu0 0
      %811 = vmatprep.subr.bf16.mxu0 0
      %812 = vmatpush2.bf16.msra.mxu0 0
      %813 = vmatprep.subr.bf16.mxu0 0
      %814 = vmatpush2.bf16.msra.mxu0 0
      %815 = vmatprep.subr.bf16.mxu0 0
      %816 = vmatpush2.bf16.msra.mxu0 0
      %817 = vmatprep.subr.bf16.mxu0 0
      %818 = vmatpush2.bf16.msra.mxu0 0
      %819 = vmatprep.subr.bf16.mxu0 0
      %820 = vmatpush2.bf16.msra.mxu0 0
      %821 = vmatprep.subr.bf16.mxu0 0
      %822 = vmatpush2.bf16.msra.mxu0 0
      %823 = vmatprep.subr.bf16.mxu0 0
      %824 = vmatpush2.bf16.msra.mxu0 0
      %825 = vmatprep.mubr.bf16.mxu0 0
      %826 = vmatmul.mubr.bf16.gmra.mxu0 %v791
      %v827 = vpop.f32.mrf.mxu0
      %v828 = vadd.f32 0.0, %v827
      %v829 = vpop.f32.mrf.mxu0
      %v830 = vpop.f32.mrf.mxu0
      %v831 = vadd.f32 0.0, %v830
      %v832 = vpop.f32.mrf.mxu0
      %833 = vdwg.mxu0
      %v834 = vadd.f32 %v773, %v828
      %v835 = vadd.f32 %v774, %v831
      %s836 = scalar_lea.vmem %s3, 48
      %v837 = vld [vmem:[%s836] sm:$0xf]
      %v838 = vld [vmem:[%s836 + $0x4] sm:$0xf]
      %v841 = vunpack.c.l.b16 %v837
      %v842 = vunpack.c.l.b16 %v838
      %v843 = vpack.c.b16 %v842, %v841
      %844 = vrot.lane.b32.xlu0 %v488, 108
      %v845 = vpop.permute.xlu0 %844
      %846 = vrot.lane.b32.xlu0 %v489, 108
      %v847 = vpop.permute.xlu0 %846
      %vm848 = vcmask 883712
      %v849 = vsel %vm848, %v845, %v847
      %v852 = vsel %vm497, %v843, 0
      %854 = vmatprep.subr.bf16.mxu0 0
      %855 = vmatpush1.bf16.msra.mxu0 0
      %856 = vmatprep.subr.bf16.mxu0 0
      %857 = vmatpush1.bf16.msra.mxu0 0
      %858 = vmatprep.subr.bf16.mxu0 0
      %859 = vmatpush1.bf16.msra.mxu0 0
      %860 = vmatprep.subr.bf16.mxu0 0
      %861 = vmatpush1.bf16.msra.mxu0 0
      %862 = vmatprep.subr.bf16.mxu0 0
      %863 = vmatpush1.bf16.msra.mxu0 0
      %864 = vmatprep.subr.bf16.mxu0 0
      %865 = vmatpush1.bf16.msra.mxu0 0
      %866 = vmatprep.subr.bf16.mxu0 0
      %867 = vmatpush1.bf16.msra.mxu0 0
      %868 = vmatprep.subr.bf16.mxu0 0
      %869 = vmatpush1.bf16.msra.mxu0 %v849
      %870 = vmatprep.subr.bf16.mxu0 0
      %871 = vmatpush2.bf16.msra.mxu0 0
      %872 = vmatprep.subr.bf16.mxu0 0
      %873 = vmatpush2.bf16.msra.mxu0 0
      %874 = vmatprep.subr.bf16.mxu0 0
      %875 = vmatpush2.bf16.msra.mxu0 0
      %876 = vmatprep.subr.bf16.mxu0 0
      %877 = vmatpush2.bf16.msra.mxu0 0
      %878 = vmatprep.subr.bf16.mxu0 0
      %879 = vmatpush2.bf16.msra.mxu0 0
      %880 = vmatprep.subr.bf16.mxu0 0
      %881 = vmatpush2.bf16.msra.mxu0 0
      %882 = vmatprep.subr.bf16.mxu0 0
      %883 = vmatpush2.bf16.msra.mxu0 0
      %884 = vmatprep.subr.bf16.mxu0 0
      %885 = vmatpush2.bf16.msra.mxu0 0
      %886 = vmatprep.mubr.bf16.mxu0 0
      %887 = vmatmul.mubr.bf16.gmra.mxu0 %v852
      %v888 = vpop.f32.mrf.mxu0
      %v889 = vadd.f32 0.0, %v888
      %v890 = vpop.f32.mrf.mxu0
      %v891 = vpop.f32.mrf.mxu0
      %v892 = vadd.f32 0.0, %v891
      %v893 = vpop.f32.mrf.mxu0
      %894 = vdwg.mxu0
      %v895 = vadd.f32 %v834, %v889
      %v896 = vadd.f32 %v835, %v892
      %s897 = scalar_lea.vmem %s3, 56
      %v898 = vld [vmem:[%s897] sm:$0xf]
      %v899 = vld [vmem:[%s897 + $0x4] sm:$0xf]
      %v902 = vunpack.c.l.b16 %v898
      %v903 = vunpack.c.l.b16 %v899
      %v904 = vpack.c.b16 %v903, %v902
      %905 = vrot.lane.b32.xlu0 %v488, 107
      %v906 = vpop.permute.xlu0 %905
      %907 = vrot.lane.b32.xlu0 %v489, 107
      %v908 = vpop.permute.xlu0 %907
      %vm909 = vcmask 875520
      %v910 = vsel %vm909, %v906, %v908
      %v913 = vsel %vm497, %v904, 0
      %915 = vmatprep.subr.bf16.mxu0 0
      %916 = vmatpush1.bf16.msra.mxu0 0
      %917 = vmatprep.subr.bf16.mxu0 0
      %918 = vmatpush1.bf16.msra.mxu0 0
      %919 = vmatprep.subr.bf16.mxu0 0
      %920 = vmatpush1.bf16.msra.mxu0 0
      %921 = vmatprep.subr.bf16.mxu0 0
      %922 = vmatpush1.bf16.msra.mxu0 0
      %923 = vmatprep.subr.bf16.mxu0 0
      %924 = vmatpush1.bf16.msra.mxu0 0
      %925 = vmatprep.subr.bf16.mxu0 0
      %926 = vmatpush1.bf16.msra.mxu0 0
      %927 = vmatprep.subr.bf16.mxu0 0
      %928 = vmatpush1.bf16.msra.mxu0 0
      %929 = vmatprep.subr.bf16.mxu0 0
      %930 = vmatpush1.bf16.msra.mxu0 %v910
      %931 = vmatprep.subr.bf16.mxu0 0
      %932 = vmatpush2.bf16.msra.mxu0 0
      %933 = vmatprep.subr.bf16.mxu0 0
      %934 = vmatpush2.bf16.msra.mxu0 0
      %935 = vmatprep.subr.bf16.mxu0 0
      %936 = vmatpush2.bf16.msra.mxu0 0
      %937 = vmatprep.subr.bf16.mxu0 0
      %938 = vmatpush2.bf16.msra.mxu0 0
      %939 = vmatprep.subr.bf16.mxu0 0
      %940 = vmatpush2.bf16.msra.mxu0 0
      %941 = vmatprep.subr.bf16.mxu0 0
      %942 = vmatpush2.bf16.msra.mxu0 0
      %943 = vmatprep.subr.bf16.mxu0 0
      %944 = vmatpush2.bf16.msra.mxu0 0
      %945 = vmatprep.subr.bf16.mxu0 0
      %946 = vmatpush2.bf16.msra.mxu0 0
      %947 = vmatprep.mubr.bf16.mxu0 0
      %948 = vmatmul.mubr.bf16.gmra.mxu0 %v913
      %v949 = vpop.f32.mrf.mxu0
      %v950 = vadd.f32 0.0, %v949
      %v951 = vpop.f32.mrf.mxu0
      %v952 = vpop.f32.mrf.mxu0
      %v953 = vadd.f32 0.0, %v952
      %v954 = vpop.f32.mrf.mxu0
      %955 = vdwg.mxu0
      %v956 = vadd.f32 %v895, %v950
      %v957 = vadd.f32 %v896, %v953
      %s958 = scalar_lea.vmem %s3, 64
      %v959 = vld [vmem:[%s958] sm:$0xf]
      %v960 = vld [vmem:[%s958 + $0x4] sm:$0xf]
      %v963 = vunpack.c.l.b16 %v959
      %v964 = vunpack.c.l.b16 %v960
      %v965 = vpack.c.b16 %v964, %v963
      %966 = vrot.lane.b32.xlu0 %v488, 106
      %v967 = vpop.permute.xlu0 %966
      %968 = vrot.lane.b32.xlu0 %v489, 106
      %v969 = vpop.permute.xlu0 %968
      %vm970 = vcmask 867328
      %v971 = vsel %vm970, %v967, %v969
      %v974 = vsel %vm497, %v965, 0
      %976 = vmatprep.subr.bf16.mxu0 0
      %977 = vmatpush1.bf16.msra.mxu0 0
      %978 = vmatprep.subr.bf16.mxu0 0
      %979 = vmatpush1.bf16.msra.mxu0 0
      %980 = vmatprep.subr.bf16.mxu0 0
      %981 = vmatpush1.bf16.msra.mxu0 0
      %982 = vmatprep.subr.bf16.mxu0 0
      %983 = vmatpush1.bf16.msra.mxu0 0
      %984 = vmatprep.subr.bf16.mxu0 0
      %985 = vmatpush1.bf16.msra.mxu0 0
      %986 = vmatprep.subr.bf16.mxu0 0
      %987 = vmatpush1.bf16.msra.mxu0 0
      %988 = vmatprep.subr.bf16.mxu0 0
      %989 = vmatpush1.bf16.msra.mxu0 0
      %990 = vmatprep.subr.bf16.mxu0 0
      %991 = vmatpush1.bf16.msra.mxu0 %v971
      %992 = vmatprep.subr.bf16.mxu0 0
      %993 = vmatpush2.bf16.msra.mxu0 0
      %994 = vmatprep.subr.bf16.mxu0 0
      %995 = vmatpush2.bf16.msra.mxu0 0
      %996 = vmatprep.subr.bf16.mxu0 0
      %997 = vmatpush2.bf16.msra.mxu0 0
      %998 = vmatprep.subr.bf16.mxu0 0
      %999 = vmatpush2.bf16.msra.mxu0 0
      %1000 = vmatprep.subr.bf16.mxu0 0
      %1001 = vmatpush2.bf16.msra.mxu0 0
      %1002 = vmatprep.subr.bf16.mxu0 0
      %1003 = vmatpush2.bf16.msra.mxu0 0
      %1004 = vmatprep.subr.bf16.mxu0 0
      %1005 = vmatpush2.bf16.msra.mxu0 0
      %1006 = vmatprep.subr.bf16.mxu0 0
      %1007 = vmatpush2.bf16.msra.mxu0 0
      %1008 = vmatprep.mubr.bf16.mxu0 0
      %1009 = vmatmul.mubr.bf16.gmra.mxu0 %v974
      %v1010 = vpop.f32.mrf.mxu0
      %v1011 = vadd.f32 0.0, %v1010
      %v1012 = vpop.f32.mrf.mxu0
      %v1013 = vpop.f32.mrf.mxu0
      %v1014 = vadd.f32 0.0, %v1013
      %v1015 = vpop.f32.mrf.mxu0
      %1016 = vdwg.mxu0
      %v1017 = vadd.f32 %v956, %v1011
      %v1018 = vadd.f32 %v957, %v1014
      %v1019 = vld [vmem:[%s429] sm:$0xff]
      %v1020 = vld [vmem:[%s429 + $0x8] sm:$0xff]
      %s1021 = scalar_lea.vmem %s3, 72
      %v1022 = vld [vmem:[%s1021] sm:$0xf]
      %v1023 = vld [vmem:[%s1021 + $0x4] sm:$0xf]
      %v1026 = vunpack.c.l.b16 %v1022
      %v1027 = vunpack.c.l.b16 %v1023
      %v1028 = vpack.c.b16 %v1027, %v1026
      %v1031 = vunpack.c.l.b16 %v1019
      %v1032 = vunpack.c.l.b16 %v1020
      %v1033 = vpack.c.b16 %v1032, %v1031
      %v1036 = vsel %vm497, %v1028, 0
      %1038 = vmatprep.subr.bf16.mxu0 0
      %1039 = vmatpush1.bf16.msra.mxu0 0
      %1040 = vmatprep.subr.bf16.mxu0 0
      %1041 = vmatpush1.bf16.msra.mxu0 0
      %1042 = vmatprep.subr.bf16.mxu0 0
      %1043 = vmatpush1.bf16.msra.mxu0 0
      %1044 = vmatprep.subr.bf16.mxu0 0
      %1045 = vmatpush1.bf16.msra.mxu0 0
      %1046 = vmatprep.subr.bf16.mxu0 0
      %1047 = vmatpush1.bf16.msra.mxu0 0
      %1048 = vmatprep.subr.bf16.mxu0 0
      %1049 = vmatpush1.bf16.msra.mxu0 0
      %1050 = vmatprep.subr.bf16.mxu0 0
      %1051 = vmatpush1.bf16.msra.mxu0 0
      %1052 = vmatprep.subr.bf16.mxu0 0
      %1053 = vmatpush1.bf16.msra.mxu0 %v1033
      %1054 = vmatprep.subr.bf16.mxu0 0
      %1055 = vmatpush2.bf16.msra.mxu0 0
      %1056 = vmatprep.subr.bf16.mxu0 0
      %1057 = vmatpush2.bf16.msra.mxu0 0
      %1058 = vmatprep.subr.bf16.mxu0 0
      %1059 = vmatpush2.bf16.msra.mxu0 0
      %1060 = vmatprep.subr.bf16.mxu0 0
      %1061 = vmatpush2.bf16.msra.mxu0 0
      %1062 = vmatprep.subr.bf16.mxu0 0
      %1063 = vmatpush2.bf16.msra.mxu0 0
      %1064 = vmatprep.subr.bf16.mxu0 0
      %1065 = vmatpush2.bf16.msra.mxu0 0
      %1066 = vmatprep.subr.bf16.mxu0 0
      %1067 = vmatpush2.bf16.msra.mxu0 0
      %1068 = vmatprep.subr.bf16.mxu0 0
      %1069 = vmatpush2.bf16.msra.mxu0 0
      %1070 = vmatprep.mubr.bf16.mxu0 0
      %1071 = vmatmul.mubr.bf16.gmra.mxu0 %v1036
      %v1072 = vpop.f32.mrf.mxu0
      %v1073 = vadd.f32 0.0, %v1072
      %v1074 = vpop.f32.mrf.mxu0
      %v1075 = vpop.f32.mrf.mxu0
      %v1076 = vadd.f32 0.0, %v1075
      %v1077 = vpop.f32.mrf.mxu0
      %1078 = vdwg.mxu0
      %v1079 = vadd.f32 %v1017, %v1073
      %v1080 = vadd.f32 %v1018, %v1076
      %s1081 = scalar_lea.vmem %s3, 80
      %v1082 = vld [vmem:[%s1081] sm:$0xf]
      %v1083 = vld [vmem:[%s1081 + $0x4] sm:$0xf]
      %v1086 = vunpack.c.l.b16 %v1082
      %v1087 = vunpack.c.l.b16 %v1083
      %v1088 = vpack.c.b16 %v1087, %v1086
      %v1089 = vunpack.c.h.b16 %v1019
      %v1090 = vunpack.c.h.b16 %v1020
      %v1091 = vpack.c.b16 %v1090, %v1089
      %1092 = vrot.lane.b32.xlu0 %v1033, 127
      %v1093 = vpop.permute.xlu0 %1092
      %1094 = vrot.lane.b32.xlu0 %v1091, 127
      %v1095 = vpop.permute.xlu0 %1094
      %v1096 = vsel %vm494, %v1093, %v1095
      %v1099 = vsel %vm497, %v1088, 0
      %1101 = vmatprep.subr.bf16.mxu0 0
      %1102 = vmatpush1.bf16.msra.mxu0 0
      %1103 = vmatprep.subr.bf16.mxu0 0
      %1104 = vmatpush1.bf16.msra.mxu0 0
      %1105 = vmatprep.subr.bf16.mxu0 0
      %1106 = vmatpush1.bf16.msra.mxu0 0
      %1107 = vmatprep.subr.bf16.mxu0 0
      %1108 = vmatpush1.bf16.msra.mxu0 0
      %1109 = vmatprep.subr.bf16.mxu0 0
      %1110 = vmatpush1.bf16.msra.mxu0 0
      %1111 = vmatprep.subr.bf16.mxu0 0
      %1112 = vmatpush1.bf16.msra.mxu0 0
      %1113 = vmatprep.subr.bf16.mxu0 0
      %1114 = vmatpush1.bf16.msra.mxu0 0
      %1115 = vmatprep.subr.bf16.mxu0 0
      %1116 = vmatpush1.bf16.msra.mxu0 %v1096
      %1117 = vmatprep.subr.bf16.mxu0 0
      %1118 = vmatpush2.bf16.msra.mxu0 0
      %1119 = vmatprep.subr.bf16.mxu0 0
      %1120 = vmatpush2.bf16.msra.mxu0 0
      %1121 = vmatprep.subr.bf16.mxu0 0
      %1122 = vmatpush2.bf16.msra.mxu0 0
      %1123 = vmatprep.subr.bf16.mxu0 0
      %1124 = vmatpush2.bf16.msra.mxu0 0
      %1125 = vmatprep.subr.bf16.mxu0 0
      %1126 = vmatpush2.bf16.msra.mxu0 0
      %1127 = vmatprep.subr.bf16.mxu0 0
      %1128 = vmatpush2.bf16.msra.mxu0 0
      %1129 = vmatprep.subr.bf16.mxu0 0
      %1130 = vmatpush2.bf16.msra.mxu0 0
      %1131 = vmatprep.subr.bf16.mxu0 0
      %1132 = vmatpush2.bf16.msra.mxu0 0
      %1133 = vmatprep.mubr.bf16.mxu0 0
      %1134 = vmatmul.mubr.bf16.gmra.mxu0 %v1099
      %v1135 = vpop.f32.mrf.mxu0
      %v1136 = vadd.f32 0.0, %v1135
      %v1137 = vpop.f32.mrf.mxu0
      %v1138 = vpop.f32.mrf.mxu0
      %v1139 = vadd.f32 0.0, %v1138
      %v1140 = vpop.f32.mrf.mxu0
      %1141 = vdwg.mxu0
      %v1142 = vadd.f32 %v1079, %v1136
      %v1143 = vadd.f32 %v1080, %v1139
      %s1144 = scalar_lea.vmem %s3, 88
      %v1145 = vld [vmem:[%s1144] sm:$0xf]
      %v1146 = vld [vmem:[%s1144 + $0x4] sm:$0xf]
      %v1149 = vunpack.c.l.b16 %v1145
      %v1150 = vunpack.c.l.b16 %v1146
      %v1151 = vpack.c.b16 %v1150, %v1149
      %1152 = vrot.lane.b32.xlu0 %v1033, 126
      %v1153 = vpop.permute.xlu0 %1152
      %1154 = vrot.lane.b32.xlu0 %v1091, 126
      %v1155 = vpop.permute.xlu0 %1154
      %v1156 = vsel %vm604, %v1153, %v1155
      %v1159 = vsel %vm497, %v1151, 0
      %1161 = vmatprep.subr.bf16.mxu0 0
      %1162 = vmatpush1.bf16.msra.mxu0 0
      %1163 = vmatprep.subr.bf16.mxu0 0
      %1164 = vmatpush1.bf16.msra.mxu0 0
      %1165 = vmatprep.subr.bf16.mxu0 0
      %1166 = vmatpush1.bf16.msra.mxu0 0
      %1167 = vmatprep.subr.bf16.mxu0 0
      %1168 = vmatpush1.bf16.msra.mxu0 0
      %1169 = vmatprep.subr.bf16.mxu0 0
      %1170 = vmatpush1.bf16.msra.mxu0 0
      %1171 = vmatprep.subr.bf16.mxu0 0
      %1172 = vmatpush1.bf16.msra.mxu0 0
      %1173 = vmatprep.subr.bf16.mxu0 0
      %1174 = vmatpush1.bf16.msra.mxu0 0
      %1175 = vmatprep.subr.bf16.mxu0 0
      %1176 = vmatpush1.bf16.msra.mxu0 %v1156
      %1177 = vmatprep.subr.bf16.mxu0 0
      %1178 = vmatpush2.bf16.msra.mxu0 0
      %1179 = vmatprep.subr.bf16.mxu0 0
      %1180 = vmatpush2.bf16.msra.mxu0 0
      %1181 = vmatprep.subr.bf16.mxu0 0
      %1182 = vmatpush2.bf16.msra.mxu0 0
      %1183 = vmatprep.subr.bf16.mxu0 0
      %1184 = vmatpush2.bf16.msra.mxu0 0
      %1185 = vmatprep.subr.bf16.mxu0 0
      %1186 = vmatpush2.bf16.msra.mxu0 0
      %1187 = vmatprep.subr.bf16.mxu0 0
      %1188 = vmatpush2.bf16.msra.mxu0 0
      %1189 = vmatprep.subr.bf16.mxu0 0
      %1190 = vmatpush2.bf16.msra.mxu0 0
      %1191 = vmatprep.subr.bf16.mxu0 0
      %1192 = vmatpush2.bf16.msra.mxu0 0
      %1193 = vmatprep.mubr.bf16.mxu0 0
      %1194 = vmatmul.mubr.bf16.gmra.mxu0 %v1159
      %v1195 = vpop.f32.mrf.mxu0
      %v1196 = vadd.f32 0.0, %v1195
      %v1197 = vpop.f32.mrf.mxu0
      %v1198 = vpop.f32.mrf.mxu0
      %v1199 = vadd.f32 0.0, %v1198
      %v1200 = vpop.f32.mrf.mxu0
      %1201 = vdwg.mxu0
      %v1202 = vadd.f32 %v1142, %v1196
      %v1203 = vadd.f32 %v1143, %v1199
      %s1204 = scalar_lea.vmem %s3, 96
      %v1205 = vld [vmem:[%s1204] sm:$0xf]
      %v1206 = vld [vmem:[%s1204 + $0x4] sm:$0xf]
      %v1209 = vunpack.c.l.b16 %v1205
      %v1210 = vunpack.c.l.b16 %v1206
      %v1211 = vpack.c.b16 %v1210, %v1209
      %1212 = vrot.lane.b32.xlu0 %v1033, 118
      %v1213 = vpop.permute.xlu0 %1212
      %1214 = vrot.lane.b32.xlu0 %v1091, 118
      %v1215 = vpop.permute.xlu0 %1214
      %v1216 = vsel %vm665, %v1213, %v1215
      %v1219 = vsel %vm497, %v1211, 0
      %1221 = vmatprep.subr.bf16.mxu0 0
      %1222 = vmatpush1.bf16.msra.mxu0 0
      %1223 = vmatprep.subr.bf16.mxu0 0
      %1224 = vmatpush1.bf16.msra.mxu0 0
      %1225 = vmatprep.subr.bf16.mxu0 0
      %1226 = vmatpush1.bf16.msra.mxu0 0
      %1227 = vmatprep.subr.bf16.mxu0 0
      %1228 = vmatpush1.bf16.msra.mxu0 0
      %1229 = vmatprep.subr.bf16.mxu0 0
      %1230 = vmatpush1.bf16.msra.mxu0 0
      %1231 = vmatprep.subr.bf16.mxu0 0
      %1232 = vmatpush1.bf16.msra.mxu0 0
      %1233 = vmatprep.subr.bf16.mxu0 0
      %1234 = vmatpush1.bf16.msra.mxu0 0
      %1235 = vmatprep.subr.bf16.mxu0 0
      %1236 = vmatpush1.bf16.msra.mxu0 %v1216
      %1237 = vmatprep.subr.bf16.mxu0 0
      %1238 = vmatpush2.bf16.msra.mxu0 0
      %1239 = vmatprep.subr.bf16.mxu0 0
      %1240 = vmatpush2.bf16.msra.mxu0 0
      %1241 = vmatprep.subr.bf16.mxu0 0
      %1242 = vmatpush2.bf16.msra.mxu0 0
      %1243 = vmatprep.subr.bf16.mxu0 0
      %1244 = vmatpush2.bf16.msra.mxu0 0
      %1245 = vmatprep.subr.bf16.mxu0 0
      %1246 = vmatpush2.bf16.msra.mxu0 0
      %1247 = vmatprep.subr.bf16.mxu0 0
      %1248 = vmatpush2.bf16.msra.mxu0 0
      %1249 = vmatprep.subr.bf16.mxu0 0
      %1250 = vmatpush2.bf16.msra.mxu0 0
      %1251 = vmatprep.subr.bf16.mxu0 0
      %1252 = vmatpush2.bf16.msra.mxu0 0
      %1253 = vmatprep.mubr.bf16.mxu0 0
      %1254 = vmatmul.mubr.bf16.gmra.mxu0 %v1219
      %v1255 = vpop.f32.mrf.mxu0
      %v1256 = vadd.f32 0.0, %v1255
      %v1257 = vpop.f32.mrf.mxu0
      %v1258 = vpop.f32.mrf.mxu0
      %v1259 = vadd.f32 0.0, %v1258
      %v1260 = vpop.f32.mrf.mxu0
      %1261 = vdwg.mxu0
      %v1262 = vadd.f32 %v1202, %v1256
      %v1263 = vadd.f32 %v1203, %v1259
      %s1264 = scalar_lea.vmem %s3, 104
      %v1265 = vld [vmem:[%s1264] sm:$0xf]
      %v1266 = vld [vmem:[%s1264 + $0x4] sm:$0xf]
      %v1269 = vunpack.c.l.b16 %v1265
      %v1270 = vunpack.c.l.b16 %v1266
      %v1271 = vpack.c.b16 %v1270, %v1269
      %1272 = vrot.lane.b32.xlu0 %v1033, 117
      %v1273 = vpop.permute.xlu0 %1272
      %1274 = vrot.lane.b32.xlu0 %v1091, 117
      %v1275 = vpop.permute.xlu0 %1274
      %v1276 = vsel %vm726, %v1273, %v1275
      %v1279 = vsel %vm497, %v1271, 0
      %1281 = vmatprep.subr.bf16.mxu0 0
      %1282 = vmatpush1.bf16.msra.mxu0 0
      %1283 = vmatprep.subr.bf16.mxu0 0
      %1284 = vmatpush1.bf16.msra.mxu0 0
      %1285 = vmatprep.subr.bf16.mxu0 0
      %1286 = vmatpush1.bf16.msra.mxu0 0
      %1287 = vmatprep.subr.bf16.mxu0 0
      %1288 = vmatpush1.bf16.msra.mxu0 0
      %1289 = vmatprep.subr.bf16.mxu0 0
      %1290 = vmatpush1.bf16.msra.mxu0 0
      %1291 = vmatprep.subr.bf16.mxu0 0
      %1292 = vmatpush1.bf16.msra.mxu0 0
      %1293 = vmatprep.subr.bf16.mxu0 0
      %1294 = vmatpush1.bf16.msra.mxu0 0
      %1295 = vmatprep.subr.bf16.mxu0 0
      %1296 = vmatpush1.bf16.msra.mxu0 %v1276
      %1297 = vmatprep.subr.bf16.mxu0 0
      %1298 = vmatpush2.bf16.msra.mxu0 0
      %1299 = vmatprep.subr.bf16.mxu0 0
      %1300 = vmatpush2.bf16.msra.mxu0 0
      %1301 = vmatprep.subr.bf16.mxu0 0
      %1302 = vmatpush2.bf16.msra.mxu0 0
      %1303 = vmatprep.subr.bf16.mxu0 0
      %1304 = vmatpush2.bf16.msra.mxu0 0
      %1305 = vmatprep.subr.bf16.mxu0 0
      %1306 = vmatpush2.bf16.msra.mxu0 0
      %1307 = vmatprep.subr.bf16.mxu0 0
      %1308 = vmatpush2.bf16.msra.mxu0 0
      %1309 = vmatprep.subr.bf16.mxu0 0
      %1310 = vmatpush2.bf16.msra.mxu0 0
      %1311 = vmatprep.subr.bf16.mxu0 0
      %1312 = vmatpush2.bf16.msra.mxu0 0
      %1313 = vmatprep.mubr.bf16.mxu0 0
      %1314 = vmatmul.mubr.bf16.gmra.mxu0 %v1279
      %v1315 = vpop.f32.mrf.mxu0
      %v1316 = vadd.f32 0.0, %v1315
      %v1317 = vpop.f32.mrf.mxu0
      %v1318 = vpop.f32.mrf.mxu0
      %v1319 = vadd.f32 0.0, %v1318
      %v1320 = vpop.f32.mrf.mxu0
      %1321 = vdwg.mxu0
      %v1322 = vadd.f32 %v1262, %v1316
      %v1323 = vadd.f32 %v1263, %v1319
      %s1324 = scalar_lea.vmem %s3, 112
      %v1325 = vld [vmem:[%s1324] sm:$0xf]
      %v1326 = vld [vmem:[%s1324 + $0x4] sm:$0xf]
      %v1329 = vunpack.c.l.b16 %v1325
      %v1330 = vunpack.c.l.b16 %v1326
      %v1331 = vpack.c.b16 %v1330, %v1329
      %1332 = vrot.lane.b32.xlu0 %v1033, 116
      %v1333 = vpop.permute.xlu0 %1332
      %1334 = vrot.lane.b32.xlu0 %v1091, 116
      %v1335 = vpop.permute.xlu0 %1334
      %v1336 = vsel %vm787, %v1333, %v1335
      %v1339 = vsel %vm497, %v1331, 0
      %1341 = vmatprep.subr.bf16.mxu0 0
      %1342 = vmatpush1.bf16.msra.mxu0 0
      %1343 = vmatprep.subr.bf16.mxu0 0
      %1344 = vmatpush1.bf16.msra.mxu0 0
      %1345 = vmatprep.subr.bf16.mxu0 0
      %1346 = vmatpush1.bf16.msra.mxu0 0
      %1347 = vmatprep.subr.bf16.mxu0 0
      %1348 = vmatpush1.bf16.msra.mxu0 0
      %1349 = vmatprep.subr.bf16.mxu0 0
      %1350 = vmatpush1.bf16.msra.mxu0 0
      %1351 = vmatprep.subr.bf16.mxu0 0
      %1352 = vmatpush1.bf16.msra.mxu0 0
      %1353 = vmatprep.subr.bf16.mxu0 0
      %1354 = vmatpush1.bf16.msra.mxu0 0
      %1355 = vmatprep.subr.bf16.mxu0 0
      %1356 = vmatpush1.bf16.msra.mxu0 %v1336
      %1357 = vmatprep.subr.bf16.mxu0 0
      %1358 = vmatpush2.bf16.msra.mxu0 0
      %1359 = vmatprep.subr.bf16.mxu0 0
      %1360 = vmatpush2.bf16.msra.mxu0 0
      %1361 = vmatprep.subr.bf16.mxu0 0
      %1362 = vmatpush2.bf16.msra.mxu0 0
      %1363 = vmatprep.subr.bf16.mxu0 0
      %1364 = vmatpush2.bf16.msra.mxu0 0
      %1365 = vmatprep.subr.bf16.mxu0 0
      %1366 = vmatpush2.bf16.msra.mxu0 0
      %1367 = vmatprep.subr.bf16.mxu0 0
      %1368 = vmatpush2.bf16.msra.mxu0 0
      %1369 = vmatprep.subr.bf16.mxu0 0
      %1370 = vmatpush2.bf16.msra.mxu0 0
      %1371 = vmatprep.subr.bf16.mxu0 0
      %1372 = vmatpush2.bf16.msra.mxu0 0
      %1373 = vmatprep.mubr.bf16.mxu0 0
      %1374 = vmatmul.mubr.bf16.gmra.mxu0 %v1339
      %v1375 = vpop.f32.mrf.mxu0
      %v1376 = vadd.f32 0.0, %v1375
      %v1377 = vpop.f32.mrf.mxu0
      %v1378 = vpop.f32.mrf.mxu0
      %v1379 = vadd.f32 0.0, %v1378
      %v1380 = vpop.f32.mrf.mxu0
      %1381 = vdwg.mxu0
      %v1382 = vadd.f32 %v1322, %v1376
      %v1383 = vadd.f32 %v1323, %v1379
      %s1384 = scalar_lea.vmem %s3, 120
      %v1385 = vld [vmem:[%s1384] sm:$0xf]
      %v1386 = vld [vmem:[%s1384 + $0x4] sm:$0xf]
      %v1389 = vunpack.c.l.b16 %v1385
      %v1390 = vunpack.c.l.b16 %v1386
      %v1391 = vpack.c.b16 %v1390, %v1389
      %1392 = vrot.lane.b32.xlu0 %v1033, 108
      %v1393 = vpop.permute.xlu0 %1392
      %1394 = vrot.lane.b32.xlu0 %v1091, 108
      %v1395 = vpop.permute.xlu0 %1394
      %v1396 = vsel %vm848, %v1393, %v1395
      %v1399 = vsel %vm497, %v1391, 0
      %1401 = vmatprep.subr.bf16.mxu0 0
      %1402 = vmatpush1.bf16.msra.mxu0 0
      %1403 = vmatprep.subr.bf16.mxu0 0
      %1404 = vmatpush1.bf16.msra.mxu0 0
      %1405 = vmatprep.subr.bf16.mxu0 0
      %1406 = vmatpush1.bf16.msra.mxu0 0
      %1407 = vmatprep.subr.bf16.mxu0 0
      %1408 = vmatpush1.bf16.msra.mxu0 0
      %1409 = vmatprep.subr.bf16.mxu0 0
      %1410 = vmatpush1.bf16.msra.mxu0 0
      %1411 = vmatprep.subr.bf16.mxu0 0
      %1412 = vmatpush1.bf16.msra.mxu0 0
      %1413 = vmatprep.subr.bf16.mxu0 0
      %1414 = vmatpush1.bf16.msra.mxu0 0
      %1415 = vmatprep.subr.bf16.mxu0 0
      %1416 = vmatpush1.bf16.msra.mxu0 %v1396
      %1417 = vmatprep.subr.bf16.mxu0 0
      %1418 = vmatpush2.bf16.msra.mxu0 0
      %1419 = vmatprep.subr.bf16.mxu0 0
      %1420 = vmatpush2.bf16.msra.mxu0 0
      %1421 = vmatprep.subr.bf16.mxu0 0
      %1422 = vmatpush2.bf16.msra.mxu0 0
      %1423 = vmatprep.subr.bf16.mxu0 0
      %1424 = vmatpush2.bf16.msra.mxu0 0
      %1425 = vmatprep.subr.bf16.mxu0 0
      %1426 = vmatpush2.bf16.msra.mxu0 0
      %1427 = vmatprep.subr.bf16.mxu0 0
      %1428 = vmatpush2.bf16.msra.mxu0 0
      %1429 = vmatprep.subr.bf16.mxu0 0
      %1430 = vmatpush2.bf16.msra.mxu0 0
      %1431 = vmatprep.subr.bf16.mxu0 0
      %1432 = vmatpush2.bf16.msra.mxu0 0
      %1433 = vmatprep.mubr.bf16.mxu0 0
      %1434 = vmatmul.mubr.bf16.gmra.mxu0 %v1399
      %v1435 = vpop.f32.mrf.mxu0
      %v1436 = vadd.f32 0.0, %v1435
      %v1437 = vpop.f32.mrf.mxu0
      %v1438 = vpop.f32.mrf.mxu0
      %v1439 = vadd.f32 0.0, %v1438
      %v1440 = vpop.f32.mrf.mxu0
      %1441 = vdwg.mxu0
      %v1442 = vadd.f32 %v1382, %v1436
      %v1443 = vadd.f32 %v1383, %v1439
      %s1444 = scalar_lea.vmem %s3, 128
      %v1445 = vld [vmem:[%s1444] sm:$0xf]
      %v1446 = vld [vmem:[%s1444 + $0x4] sm:$0xf]
      %v1449 = vunpack.c.l.b16 %v1445
      %v1450 = vunpack.c.l.b16 %v1446
      %v1451 = vpack.c.b16 %v1450, %v1449
      %1452 = vrot.lane.b32.xlu0 %v1033, 107
      %v1453 = vpop.permute.xlu0 %1452
      %1454 = vrot.lane.b32.xlu0 %v1091, 107
      %v1455 = vpop.permute.xlu0 %1454
      %v1456 = vsel %vm909, %v1453, %v1455
      %v1459 = vsel %vm497, %v1451, 0
      %1461 = vmatprep.subr.bf16.mxu0 0
      %1462 = vmatpush1.bf16.msra.mxu0 0
      %1463 = vmatprep.subr.bf16.mxu0 0
      %1464 = vmatpush1.bf16.msra.mxu0 0
      %1465 = vmatprep.subr.bf16.mxu0 0
      %1466 = vmatpush1.bf16.msra.mxu0 0
      %1467 = vmatprep.subr.bf16.mxu0 0
      %1468 = vmatpush1.bf16.msra.mxu0 0
      %1469 = vmatprep.subr.bf16.mxu0 0
      %1470 = vmatpush1.bf16.msra.mxu0 0
      %1471 = vmatprep.subr.bf16.mxu0 0
      %1472 = vmatpush1.bf16.msra.mxu0 0
      %1473 = vmatprep.subr.bf16.mxu0 0
      %1474 = vmatpush1.bf16.msra.mxu0 0
      %1475 = vmatprep.subr.bf16.mxu0 0
      %1476 = vmatpush1.bf16.msra.mxu0 %v1456
      %1477 = vmatprep.subr.bf16.mxu0 0
      %1478 = vmatpush2.bf16.msra.mxu0 0
      %1479 = vmatprep.subr.bf16.mxu0 0
      %1480 = vmatpush2.bf16.msra.mxu0 0
      %1481 = vmatprep.subr.bf16.mxu0 0
      %1482 = vmatpush2.bf16.msra.mxu0 0
      %1483 = vmatprep.subr.bf16.mxu0 0
      %1484 = vmatpush2.bf16.msra.mxu0 0
      %1485 = vmatprep.subr.bf16.mxu0 0
      %1486 = vmatpush2.bf16.msra.mxu0 0
      %1487 = vmatprep.subr.bf16.mxu0 0
      %1488 = vmatpush2.bf16.msra.mxu0 0
      %1489 = vmatprep.subr.bf16.mxu0 0
      %1490 = vmatpush2.bf16.msra.mxu0 0
      %1491 = vmatprep.subr.bf16.mxu0 0
      %1492 = vmatpush2.bf16.msra.mxu0 0
      %1493 = vmatprep.mubr.bf16.mxu0 0
      %1494 = vmatmul.mubr.bf16.gmra.mxu0 %v1459
      %v1495 = vpop.f32.mrf.mxu0
      %v1496 = vadd.f32 0.0, %v1495
      %v1497 = vpop.f32.mrf.mxu0
      %v1498 = vpop.f32.mrf.mxu0
      %v1499 = vadd.f32 0.0, %v1498
      %v1500 = vpop.f32.mrf.mxu0
      %1501 = vdwg.mxu0
      %v1502 = vadd.f32 %v1442, %v1496
      %v1503 = vadd.f32 %v1443, %v1499
      %s1504 = scalar_lea.vmem %s3, 136
      %v1505 = vld [vmem:[%s1504] sm:$0xf]
      %v1506 = vld [vmem:[%s1504 + $0x4] sm:$0xf]
      %v1509 = vunpack.c.l.b16 %v1505
      %v1510 = vunpack.c.l.b16 %v1506
      %v1511 = vpack.c.b16 %v1510, %v1509
      %1512 = vrot.lane.b32.xlu0 %v1033, 106
      %v1513 = vpop.permute.xlu0 %1512
      %1514 = vrot.lane.b32.xlu0 %v1091, 106
      %v1515 = vpop.permute.xlu0 %1514
      %v1516 = vsel %vm970, %v1513, %v1515
      %v1519 = vsel %vm497, %v1511, 0
      %1521 = vmatprep.subr.bf16.mxu0 0
      %1522 = vmatpush1.bf16.msra.mxu0 0
      %1523 = vmatprep.subr.bf16.mxu0 0
      %1524 = vmatpush1.bf16.msra.mxu0 0
      %1525 = vmatprep.subr.bf16.mxu0 0
      %1526 = vmatpush1.bf16.msra.mxu0 0
      %1527 = vmatprep.subr.bf16.mxu0 0
      %1528 = vmatpush1.bf16.msra.mxu0 0
      %1529 = vmatprep.subr.bf16.mxu0 0
      %1530 = vmatpush1.bf16.msra.mxu0 0
      %1531 = vmatprep.subr.bf16.mxu0 0
      %1532 = vmatpush1.bf16.msra.mxu0 0
      %1533 = vmatprep.subr.bf16.mxu0 0
      %1534 = vmatpush1.bf16.msra.mxu0 0
      %1535 = vmatprep.subr.bf16.mxu0 0
      %1536 = vmatpush1.bf16.msra.mxu0 %v1516
      %1537 = vmatprep.subr.bf16.mxu0 0
      %1538 = vmatpush2.bf16.msra.mxu0 0
      %1539 = vmatprep.subr.bf16.mxu0 0
      %1540 = vmatpush2.bf16.msra.mxu0 0
      %1541 = vmatprep.subr.bf16.mxu0 0
      %1542 = vmatpush2.bf16.msra.mxu0 0
      %1543 = vmatprep.subr.bf16.mxu0 0
      %1544 = vmatpush2.bf16.msra.mxu0 0
      %1545 = vmatprep.subr.bf16.mxu0 0
      %1546 = vmatpush2.bf16.msra.mxu0 0
      %1547 = vmatprep.subr.bf16.mxu0 0
      %1548 = vmatpush2.bf16.msra.mxu0 0
      %1549 = vmatprep.subr.bf16.mxu0 0
      %1550 = vmatpush2.bf16.msra.mxu0 0
      %1551 = vmatprep.subr.bf16.mxu0 0
      %1552 = vmatpush2.bf16.msra.mxu0 0
      %1553 = vmatprep.mubr.bf16.mxu0 0
      %1554 = vmatmul.mubr.bf16.gmra.mxu0 %v1519
      %v1555 = vpop.f32.mrf.mxu0
      %v1556 = vadd.f32 0.0, %v1555
      %v1557 = vpop.f32.mrf.mxu0
      %v1558 = vpop.f32.mrf.mxu0
      %v1559 = vadd.f32 0.0, %v1558
      %v1560 = vpop.f32.mrf.mxu0
      %1561 = vdwg.mxu0
      %v1562 = vadd.f32 %v1502, %v1556
      %v1563 = vadd.f32 %v1503, %v1559
      %v1564 = vld [vmem:[%s440] sm:$0xff]
      %v1565 = vld [vmem:[%s440 + $0x8] sm:$0xff]
      %s1566 = scalar_lea.vmem %s3, 144
      %v1567 = vld [vmem:[%s1566] sm:$0xf]
      %v1568 = vld [vmem:[%s1566 + $0x4] sm:$0xf]
      %v1571 = vunpack.c.l.b16 %v1567
      %v1572 = vunpack.c.l.b16 %v1568
      %v1573 = vpack.c.b16 %v1572, %v1571
      %v1576 = vunpack.c.l.b16 %v1564
      %v1577 = vunpack.c.l.b16 %v1565
      %v1578 = vpack.c.b16 %v1577, %v1576
      %v1581 = vsel %vm497, %v1573, 0
      %1583 = vmatprep.subr.bf16.mxu0 0
      %1584 = vmatpush1.bf16.msra.mxu0 0
      %1585 = vmatprep.subr.bf16.mxu0 0
      %1586 = vmatpush1.bf16.msra.mxu0 0
      %1587 = vmatprep.subr.bf16.mxu0 0
      %1588 = vmatpush1.bf16.msra.mxu0 0
      %1589 = vmatprep.subr.bf16.mxu0 0
      %1590 = vmatpush1.bf16.msra.mxu0 0
      %1591 = vmatprep.subr.bf16.mxu0 0
      %1592 = vmatpush1.bf16.msra.mxu0 0
      %1593 = vmatprep.subr.bf16.mxu0 0
      %1594 = vmatpush1.bf16.msra.mxu0 0
      %1595 = vmatprep.subr.bf16.mxu0 0
      %1596 = vmatpush1.bf16.msra.mxu0 0
      %1597 = vmatprep.subr.bf16.mxu0 0
      %1598 = vmatpush1.bf16.msra.mxu0 %v1578
      %1599 = vmatprep.subr.bf16.mxu0 0
      %1600 = vmatpush2.bf16.msra.mxu0 0
      %1601 = vmatprep.subr.bf16.mxu0 0
      %1602 = vmatpush2.bf16.msra.mxu0 0
      %1603 = vmatprep.subr.bf16.mxu0 0
      %1604 = vmatpush2.bf16.msra.mxu0 0
      %1605 = vmatprep.subr.bf16.mxu0 0
      %1606 = vmatpush2.bf16.msra.mxu0 0
      %1607 = vmatprep.subr.bf16.mxu0 0
      %1608 = vmatpush2.bf16.msra.mxu0 0
      %1609 = vmatprep.subr.bf16.mxu0 0
      %1610 = vmatpush2.bf16.msra.mxu0 0
      %1611 = vmatprep.subr.bf16.mxu0 0
      %1612 = vmatpush2.bf16.msra.mxu0 0
      %1613 = vmatprep.subr.bf16.mxu0 0
      %1614 = vmatpush2.bf16.msra.mxu0 0
      %1615 = vmatprep.mubr.bf16.mxu0 0
      %1616 = vmatmul.mubr.bf16.gmra.mxu0 %v1581
      %v1617 = vpop.f32.mrf.mxu0
      %v1618 = vadd.f32 0.0, %v1617
      %v1619 = vpop.f32.mrf.mxu0
      %v1620 = vpop.f32.mrf.mxu0
      %v1621 = vadd.f32 0.0, %v1620
      %v1622 = vpop.f32.mrf.mxu0
      %1623 = vdwg.mxu0
      %v1624 = vadd.f32 %v1562, %v1618
      %v1625 = vadd.f32 %v1563, %v1621
      %s1626 = scalar_lea.vmem %s3, 152
      %v1627 = vld [vmem:[%s1626] sm:$0xf]
      %v1628 = vld [vmem:[%s1626 + $0x4] sm:$0xf]
      %v1631 = vunpack.c.l.b16 %v1627
      %v1632 = vunpack.c.l.b16 %v1628
      %v1633 = vpack.c.b16 %v1632, %v1631
      %v1634 = vunpack.c.h.b16 %v1564
      %v1635 = vunpack.c.h.b16 %v1565
      %v1636 = vpack.c.b16 %v1635, %v1634
      %1637 = vrot.lane.b32.xlu0 %v1578, 127
      %v1638 = vpop.permute.xlu0 %1637
      %1639 = vrot.lane.b32.xlu0 %v1636, 127
      %v1640 = vpop.permute.xlu0 %1639
      %v1641 = vsel %vm494, %v1638, %v1640
      %v1644 = vsel %vm497, %v1633, 0
      %1646 = vmatprep.subr.bf16.mxu0 0
      %1647 = vmatpush1.bf16.msra.mxu0 0
      %1648 = vmatprep.subr.bf16.mxu0 0
      %1649 = vmatpush1.bf16.msra.mxu0 0
      %1650 = vmatprep.subr.bf16.mxu0 0
      %1651 = vmatpush1.bf16.msra.mxu0 0
      %1652 = vmatprep.subr.bf16.mxu0 0
      %1653 = vmatpush1.bf16.msra.mxu0 0
      %1654 = vmatprep.subr.bf16.mxu0 0
      %1655 = vmatpush1.bf16.msra.mxu0 0
      %1656 = vmatprep.subr.bf16.mxu0 0
      %1657 = vmatpush1.bf16.msra.mxu0 0
      %1658 = vmatprep.subr.bf16.mxu0 0
      %1659 = vmatpush1.bf16.msra.mxu0 0
      %1660 = vmatprep.subr.bf16.mxu0 0
      %1661 = vmatpush1.bf16.msra.mxu0 %v1641
      %1662 = vmatprep.subr.bf16.mxu0 0
      %1663 = vmatpush2.bf16.msra.mxu0 0
      %1664 = vmatprep.subr.bf16.mxu0 0
      %1665 = vmatpush2.bf16.msra.mxu0 0
      %1666 = vmatprep.subr.bf16.mxu0 0
      %1667 = vmatpush2.bf16.msra.mxu0 0
      %1668 = vmatprep.subr.bf16.mxu0 0
      %1669 = vmatpush2.bf16.msra.mxu0 0
      %1670 = vmatprep.subr.bf16.mxu0 0
      %1671 = vmatpush2.bf16.msra.mxu0 0
      %1672 = vmatprep.subr.bf16.mxu0 0
      %1673 = vmatpush2.bf16.msra.mxu0 0
      %1674 = vmatprep.subr.bf16.mxu0 0
      %1675 = vmatpush2.bf16.msra.mxu0 0
      %1676 = vmatprep.subr.bf16.mxu0 0
      %1677 = vmatpush2.bf16.msra.mxu0 0
      %1678 = vmatprep.mubr.bf16.mxu0 0
      %1679 = vmatmul.mubr.bf16.gmra.mxu0 %v1644
      %v1680 = vpop.f32.mrf.mxu0
      %v1681 = vadd.f32 0.0, %v1680
      %v1682 = vpop.f32.mrf.mxu0
      %v1683 = vpop.f32.mrf.mxu0
      %v1684 = vadd.f32 0.0, %v1683
      %v1685 = vpop.f32.mrf.mxu0
      %1686 = vdwg.mxu0
      %v1687 = vadd.f32 %v1624, %v1681
      %v1688 = vadd.f32 %v1625, %v1684
      %s1689 = scalar_lea.vmem %s3, 160
      %v1690 = vld [vmem:[%s1689] sm:$0xf]
      %v1691 = vld [vmem:[%s1689 + $0x4] sm:$0xf]
      %v1694 = vunpack.c.l.b16 %v1690
      %v1695 = vunpack.c.l.b16 %v1691
      %v1696 = vpack.c.b16 %v1695, %v1694
      %1697 = vrot.lane.b32.xlu0 %v1578, 126
      %v1698 = vpop.permute.xlu0 %1697
      %1699 = vrot.lane.b32.xlu0 %v1636, 126
      %v1700 = vpop.permute.xlu0 %1699
      %v1701 = vsel %vm604, %v1698, %v1700
      %v1704 = vsel %vm497, %v1696, 0
      %1706 = vmatprep.subr.bf16.mxu0 0
      %1707 = vmatpush1.bf16.msra.mxu0 0
      %1708 = vmatprep.subr.bf16.mxu0 0
      %1709 = vmatpush1.bf16.msra.mxu0 0
      %1710 = vmatprep.subr.bf16.mxu0 0
      %1711 = vmatpush1.bf16.msra.mxu0 0
      %1712 = vmatprep.subr.bf16.mxu0 0
      %1713 = vmatpush1.bf16.msra.mxu0 0
      %1714 = vmatprep.subr.bf16.mxu0 0
      %1715 = vmatpush1.bf16.msra.mxu0 0
      %1716 = vmatprep.subr.bf16.mxu0 0
      %1717 = vmatpush1.bf16.msra.mxu0 0
      %1718 = vmatprep.subr.bf16.mxu0 0
      %1719 = vmatpush1.bf16.msra.mxu0 0
      %1720 = vmatprep.subr.bf16.mxu0 0
      %1721 = vmatpush1.bf16.msra.mxu0 %v1701
      %1722 = vmatprep.subr.bf16.mxu0 0
      %1723 = vmatpush2.bf16.msra.mxu0 0
      %1724 = vmatprep.subr.bf16.mxu0 0
      %1725 = vmatpush2.bf16.msra.mxu0 0
      %1726 = vmatprep.subr.bf16.mxu0 0
      %1727 = vmatpush2.bf16.msra.mxu0 0
      %1728 = vmatprep.subr.bf16.mxu0 0
      %1729 = vmatpush2.bf16.msra.mxu0 0
      %1730 = vmatprep.subr.bf16.mxu0 0
      %1731 = vmatpush2.bf16.msra.mxu0 0
      %1732 = vmatprep.subr.bf16.mxu0 0
      %1733 = vmatpush2.bf16.msra.mxu0 0
      %1734 = vmatprep.subr.bf16.mxu0 0
      %1735 = vmatpush2.bf16.msra.mxu0 0
      %1736 = vmatprep.subr.bf16.mxu0 0
      %1737 = vmatpush2.bf16.msra.mxu0 0
      %1738 = vmatprep.mubr.bf16.mxu0 0
      %1739 = vmatmul.mubr.bf16.gmra.mxu0 %v1704
      %v1740 = vpop.f32.mrf.mxu0
      %v1741 = vadd.f32 0.0, %v1740
      %v1742 = vpop.f32.mrf.mxu0
      %v1743 = vpop.f32.mrf.mxu0
      %v1744 = vadd.f32 0.0, %v1743
      %v1745 = vpop.f32.mrf.mxu0
      %1746 = vdwg.mxu0
      %v1747 = vadd.f32 %v1687, %v1741
      %v1748 = vadd.f32 %v1688, %v1744
      %s1749 = scalar_lea.vmem %s3, 168
      %v1750 = vld [vmem:[%s1749] sm:$0xf]
      %v1751 = vld [vmem:[%s1749 + $0x4] sm:$0xf]
      %v1754 = vunpack.c.l.b16 %v1750
      %v1755 = vunpack.c.l.b16 %v1751
      %v1756 = vpack.c.b16 %v1755, %v1754
      %1757 = vrot.lane.b32.xlu0 %v1578, 118
      %v1758 = vpop.permute.xlu0 %1757
      %1759 = vrot.lane.b32.xlu0 %v1636, 118
      %v1760 = vpop.permute.xlu0 %1759
      %v1761 = vsel %vm665, %v1758, %v1760
      %v1764 = vsel %vm497, %v1756, 0
      %1766 = vmatprep.subr.bf16.mxu0 0
      %1767 = vmatpush1.bf16.msra.mxu0 0
      %1768 = vmatprep.subr.bf16.mxu0 0
      %1769 = vmatpush1.bf16.msra.mxu0 0
      %1770 = vmatprep.subr.bf16.mxu0 0
      %1771 = vmatpush1.bf16.msra.mxu0 0
      %1772 = vmatprep.subr.bf16.mxu0 0
      %1773 = vmatpush1.bf16.msra.mxu0 0
      %1774 = vmatprep.subr.bf16.mxu0 0
      %1775 = vmatpush1.bf16.msra.mxu0 0
      %1776 = vmatprep.subr.bf16.mxu0 0
      %1777 = vmatpush1.bf16.msra.mxu0 0
      %1778 = vmatprep.subr.bf16.mxu0 0
      %1779 = vmatpush1.bf16.msra.mxu0 0
      %1780 = vmatprep.subr.bf16.mxu0 0
      %1781 = vmatpush1.bf16.msra.mxu0 %v1761
      %1782 = vmatprep.subr.bf16.mxu0 0
      %1783 = vmatpush2.bf16.msra.mxu0 0
      %1784 = vmatprep.subr.bf16.mxu0 0
      %1785 = vmatpush2.bf16.msra.mxu0 0
      %1786 = vmatprep.subr.bf16.mxu0 0
      %1787 = vmatpush2.bf16.msra.mxu0 0
      %1788 = vmatprep.subr.bf16.mxu0 0
      %1789 = vmatpush2.bf16.msra.mxu0 0
      %1790 = vmatprep.subr.bf16.mxu0 0
      %1791 = vmatpush2.bf16.msra.mxu0 0
      %1792 = vmatprep.subr.bf16.mxu0 0
      %1793 = vmatpush2.bf16.msra.mxu0 0
      %1794 = vmatprep.subr.bf16.mxu0 0
      %1795 = vmatpush2.bf16.msra.mxu0 0
      %1796 = vmatprep.subr.bf16.mxu0 0
      %1797 = vmatpush2.bf16.msra.mxu0 0
      %1798 = vmatprep.mubr.bf16.mxu0 0
      %1799 = vmatmul.mubr.bf16.gmra.mxu0 %v1764
      %v1800 = vpop.f32.mrf.mxu0
      %v1801 = vadd.f32 0.0, %v1800
      %v1802 = vpop.f32.mrf.mxu0
      %v1803 = vpop.f32.mrf.mxu0
      %v1804 = vadd.f32 0.0, %v1803
      %v1805 = vpop.f32.mrf.mxu0
      %1806 = vdwg.mxu0
      %v1807 = vadd.f32 %v1747, %v1801
      %v1808 = vadd.f32 %v1748, %v1804
      %s1809 = scalar_lea.vmem %s3, 176
      %v1810 = vld [vmem:[%s1809] sm:$0xf]
      %v1811 = vld [vmem:[%s1809 + $0x4] sm:$0xf]
      %v1814 = vunpack.c.l.b16 %v1810
      %v1815 = vunpack.c.l.b16 %v1811
      %v1816 = vpack.c.b16 %v1815, %v1814
      %1817 = vrot.lane.b32.xlu0 %v1578, 117
      %v1818 = vpop.permute.xlu0 %1817
      %1819 = vrot.lane.b32.xlu0 %v1636, 117
      %v1820 = vpop.permute.xlu0 %1819
      %v1821 = vsel %vm726, %v1818, %v1820
      %v1824 = vsel %vm497, %v1816, 0
      %1826 = vmatprep.subr.bf16.mxu0 0
      %1827 = vmatpush1.bf16.msra.mxu0 0
      %1828 = vmatprep.subr.bf16.mxu0 0
      %1829 = vmatpush1.bf16.msra.mxu0 0
      %1830 = vmatprep.subr.bf16.mxu0 0
      %1831 = vmatpush1.bf16.msra.mxu0 0
      %1832 = vmatprep.subr.bf16.mxu0 0
      %1833 = vmatpush1.bf16.msra.mxu0 0
      %1834 = vmatprep.subr.bf16.mxu0 0
      %1835 = vmatpush1.bf16.msra.mxu0 0
      %1836 = vmatprep.subr.bf16.mxu0 0
      %1837 = vmatpush1.bf16.msra.mxu0 0
      %1838 = vmatprep.subr.bf16.mxu0 0
      %1839 = vmatpush1.bf16.msra.mxu0 0
      %1840 = vmatprep.subr.bf16.mxu0 0
      %1841 = vmatpush1.bf16.msra.mxu0 %v1821
      %1842 = vmatprep.subr.bf16.mxu0 0
      %1843 = vmatpush2.bf16.msra.mxu0 0
      %1844 = vmatprep.subr.bf16.mxu0 0
      %1845 = vmatpush2.bf16.msra.mxu0 0
      %1846 = vmatprep.subr.bf16.mxu0 0
      %1847 = vmatpush2.bf16.msra.mxu0 0
      %1848 = vmatprep.subr.bf16.mxu0 0
      %1849 = vmatpush2.bf16.msra.mxu0 0
      %1850 = vmatprep.subr.bf16.mxu0 0
      %1851 = vmatpush2.bf16.msra.mxu0 0
      %1852 = vmatprep.subr.bf16.mxu0 0
      %1853 = vmatpush2.bf16.msra.mxu0 0
      %1854 = vmatprep.subr.bf16.mxu0 0
      %1855 = vmatpush2.bf16.msra.mxu0 0
      %1856 = vmatprep.subr.bf16.mxu0 0
      %1857 = vmatpush2.bf16.msra.mxu0 0
      %1858 = vmatprep.mubr.bf16.mxu0 0
      %1859 = vmatmul.mubr.bf16.gmra.mxu0 %v1824
      %v1860 = vpop.f32.mrf.mxu0
      %v1861 = vadd.f32 0.0, %v1860
      %v1862 = vpop.f32.mrf.mxu0
      %v1863 = vpop.f32.mrf.mxu0
      %v1864 = vadd.f32 0.0, %v1863
      %v1865 = vpop.f32.mrf.mxu0
      %1866 = vdwg.mxu0
      %v1867 = vadd.f32 %v1807, %v1861
      %v1868 = vadd.f32 %v1808, %v1864
      %s1869 = scalar_lea.vmem %s3, 184
      %v1870 = vld [vmem:[%s1869] sm:$0xf]
      %v1871 = vld [vmem:[%s1869 + $0x4] sm:$0xf]
      %v1874 = vunpack.c.l.b16 %v1870
      %v1875 = vunpack.c.l.b16 %v1871
      %v1876 = vpack.c.b16 %v1875, %v1874
      %1877 = vrot.lane.b32.xlu0 %v1578, 116
      %v1878 = vpop.permute.xlu0 %1877
      %1879 = vrot.lane.b32.xlu0 %v1636, 116
      %v1880 = vpop.permute.xlu0 %1879
      %v1881 = vsel %vm787, %v1878, %v1880
      %v1884 = vsel %vm497, %v1876, 0
      %1886 = vmatprep.subr.bf16.mxu0 0
      %1887 = vmatpush1.bf16.msra.mxu0 0
      %1888 = vmatprep.subr.bf16.mxu0 0
      %1889 = vmatpush1.bf16.msra.mxu0 0
      %1890 = vmatprep.subr.bf16.mxu0 0
      %1891 = vmatpush1.bf16.msra.mxu0 0
      %1892 = vmatprep.subr.bf16.mxu0 0
      %1893 = vmatpush1.bf16.msra.mxu0 0
      %1894 = vmatprep.subr.bf16.mxu0 0
      %1895 = vmatpush1.bf16.msra.mxu0 0
      %1896 = vmatprep.subr.bf16.mxu0 0
      %1897 = vmatpush1.bf16.msra.mxu0 0
      %1898 = vmatprep.subr.bf16.mxu0 0
      %1899 = vmatpush1.bf16.msra.mxu0 0
      %1900 = vmatprep.subr.bf16.mxu0 0
      %1901 = vmatpush1.bf16.msra.mxu0 %v1881
      %1902 = vmatprep.subr.bf16.mxu0 0
      %1903 = vmatpush2.bf16.msra.mxu0 0
      %1904 = vmatprep.subr.bf16.mxu0 0
      %1905 = vmatpush2.bf16.msra.mxu0 0
      %1906 = vmatprep.subr.bf16.mxu0 0
      %1907 = vmatpush2.bf16.msra.mxu0 0
      %1908 = vmatprep.subr.bf16.mxu0 0
      %1909 = vmatpush2.bf16.msra.mxu0 0
      %1910 = vmatprep.subr.bf16.mxu0 0
      %1911 = vmatpush2.bf16.msra.mxu0 0
      %1912 = vmatprep.subr.bf16.mxu0 0
      %1913 = vmatpush2.bf16.msra.mxu0 0
      %1914 = vmatprep.subr.bf16.mxu0 0
      %1915 = vmatpush2.bf16.msra.mxu0 0
      %1916 = vmatprep.subr.bf16.mxu0 0
      %1917 = vmatpush2.bf16.msra.mxu0 0
      %1918 = vmatprep.mubr.bf16.mxu0 0
      %1919 = vmatmul.mubr.bf16.gmra.mxu0 %v1884
      %v1920 = vpop.f32.mrf.mxu0
      %v1921 = vadd.f32 0.0, %v1920
      %v1922 = vpop.f32.mrf.mxu0
      %v1923 = vpop.f32.mrf.mxu0
      %v1924 = vadd.f32 0.0, %v1923
      %v1925 = vpop.f32.mrf.mxu0
      %1926 = vdwg.mxu0
      %v1927 = vadd.f32 %v1867, %v1921
      %v1928 = vadd.f32 %v1868, %v1924
      %s1929 = scalar_lea.vmem %s3, 192
      %v1930 = vld [vmem:[%s1929] sm:$0xf]
      %v1931 = vld [vmem:[%s1929 + $0x4] sm:$0xf]
      %v1934 = vunpack.c.l.b16 %v1930
      %v1935 = vunpack.c.l.b16 %v1931
      %v1936 = vpack.c.b16 %v1935, %v1934
      %1937 = vrot.lane.b32.xlu0 %v1578, 108
      %v1938 = vpop.permute.xlu0 %1937
      %1939 = vrot.lane.b32.xlu0 %v1636, 108
      %v1940 = vpop.permute.xlu0 %1939
      %v1941 = vsel %vm848, %v1938, %v1940
      %v1944 = vsel %vm497, %v1936, 0
      %1946 = vmatprep.subr.bf16.mxu0 0
      %1947 = vmatpush1.bf16.msra.mxu0 0
      %1948 = vmatprep.subr.bf16.mxu0 0
      %1949 = vmatpush1.bf16.msra.mxu0 0
      %1950 = vmatprep.subr.bf16.mxu0 0
      %1951 = vmatpush1.bf16.msra.mxu0 0
      %1952 = vmatprep.subr.bf16.mxu0 0
      %1953 = vmatpush1.bf16.msra.mxu0 0
      %1954 = vmatprep.subr.bf16.mxu0 0
      %1955 = vmatpush1.bf16.msra.mxu0 0
      %1956 = vmatprep.subr.bf16.mxu0 0
      %1957 = vmatpush1.bf16.msra.mxu0 0
      %1958 = vmatprep.subr.bf16.mxu0 0
      %1959 = vmatpush1.bf16.msra.mxu0 0
      %1960 = vmatprep.subr.bf16.mxu0 0
      %1961 = vmatpush1.bf16.msra.mxu0 %v1941
      %1962 = vmatprep.subr.bf16.mxu0 0
      %1963 = vmatpush2.bf16.msra.mxu0 0
      %1964 = vmatprep.subr.bf16.mxu0 0
      %1965 = vmatpush2.bf16.msra.mxu0 0
      %1966 = vmatprep.subr.bf16.mxu0 0
      %1967 = vmatpush2.bf16.msra.mxu0 0
      %1968 = vmatprep.subr.bf16.mxu0 0
      %1969 = vmatpush2.bf16.msra.mxu0 0
      %1970 = vmatprep.subr.bf16.mxu0 0
      %1971 = vmatpush2.bf16.msra.mxu0 0
      %1972 = vmatprep.subr.bf16.mxu0 0
      %1973 = vmatpush2.bf16.msra.mxu0 0
      %1974 = vmatprep.subr.bf16.mxu0 0
      %1975 = vmatpush2.bf16.msra.mxu0 0
      %1976 = vmatprep.subr.bf16.mxu0 0
      %1977 = vmatpush2.bf16.msra.mxu0 0
      %1978 = vmatprep.mubr.bf16.mxu0 0
      %1979 = vmatmul.mubr.bf16.gmra.mxu0 %v1944
      %v1980 = vpop.f32.mrf.mxu0
      %v1981 = vadd.f32 0.0, %v1980
      %v1982 = vpop.f32.mrf.mxu0
      %v1983 = vpop.f32.mrf.mxu0
      %v1984 = vadd.f32 0.0, %v1983
      %v1985 = vpop.f32.mrf.mxu0
      %1986 = vdwg.mxu0
      %v1987 = vadd.f32 %v1927, %v1981
      %v1988 = vadd.f32 %v1928, %v1984
      %s1989 = scalar_lea.vmem %s3, 200
      %v1990 = vld [vmem:[%s1989] sm:$0xf]
      %v1991 = vld [vmem:[%s1989 + $0x4] sm:$0xf]
      %v1994 = vunpack.c.l.b16 %v1990
      %v1995 = vunpack.c.l.b16 %v1991
      %v1996 = vpack.c.b16 %v1995, %v1994
      %1997 = vrot.lane.b32.xlu0 %v1578, 107
      %v1998 = vpop.permute.xlu0 %1997
      %1999 = vrot.lane.b32.xlu0 %v1636, 107
      %v2000 = vpop.permute.xlu0 %1999
      %v2001 = vsel %vm909, %v1998, %v2000
      %v2004 = vsel %vm497, %v1996, 0
      %2006 = vmatprep.subr.bf16.mxu0 0
      %2007 = vmatpush1.bf16.msra.mxu0 0
      %2008 = vmatprep.subr.bf16.mxu0 0
      %2009 = vmatpush1.bf16.msra.mxu0 0
      %2010 = vmatprep.subr.bf16.mxu0 0
      %2011 = vmatpush1.bf16.msra.mxu0 0
      %2012 = vmatprep.subr.bf16.mxu0 0
      %2013 = vmatpush1.bf16.msra.mxu0 0
      %2014 = vmatprep.subr.bf16.mxu0 0
      %2015 = vmatpush1.bf16.msra.mxu0 0
      %2016 = vmatprep.subr.bf16.mxu0 0
      %2017 = vmatpush1.bf16.msra.mxu0 0
      %2018 = vmatprep.subr.bf16.mxu0 0
      %2019 = vmatpush1.bf16.msra.mxu0 0
      %2020 = vmatprep.subr.bf16.mxu0 0
      %2021 = vmatpush1.bf16.msra.mxu0 %v2001
      %2022 = vmatprep.subr.bf16.mxu0 0
      %2023 = vmatpush2.bf16.msra.mxu0 0
      %2024 = vmatprep.subr.bf16.mxu0 0
      %2025 = vmatpush2.bf16.msra.mxu0 0
      %2026 = vmatprep.subr.bf16.mxu0 0
      %2027 = vmatpush2.bf16.msra.mxu0 0
      %2028 = vmatprep.subr.bf16.mxu0 0
      %2029 = vmatpush2.bf16.msra.mxu0 0
      %2030 = vmatprep.subr.bf16.mxu0 0
      %2031 = vmatpush2.bf16.msra.mxu0 0
      %2032 = vmatprep.subr.bf16.mxu0 0
      %2033 = vmatpush2.bf16.msra.mxu0 0
      %2034 = vmatprep.subr.bf16.mxu0 0
      %2035 = vmatpush2.bf16.msra.mxu0 0
      %2036 = vmatprep.subr.bf16.mxu0 0
      %2037 = vmatpush2.bf16.msra.mxu0 0
      %2038 = vmatprep.mubr.bf16.mxu0 0
      %2039 = vmatmul.mubr.bf16.gmra.mxu0 %v2004
      %v2040 = vpop.f32.mrf.mxu0
      %v2041 = vadd.f32 0.0, %v2040
      %v2042 = vpop.f32.mrf.mxu0
      %v2043 = vpop.f32.mrf.mxu0
      %v2044 = vadd.f32 0.0, %v2043
      %v2045 = vpop.f32.mrf.mxu0
      %2046 = vdwg.mxu0
      %v2047 = vadd.f32 %v1987, %v2041
      %v2048 = vadd.f32 %v1988, %v2044
      %s2049 = scalar_lea.vmem %s3, 208
      %v2050 = vld [vmem:[%s2049] sm:$0xf]
      %v2051 = vld [vmem:[%s2049 + $0x4] sm:$0xf]
      %v2054 = vunpack.c.l.b16 %v2050
      %v2055 = vunpack.c.l.b16 %v2051
      %v2056 = vpack.c.b16 %v2055, %v2054
      %2057 = vrot.lane.b32.xlu0 %v1578, 106
      %v2058 = vpop.permute.xlu0 %2057
      %2059 = vrot.lane.b32.xlu0 %v1636, 106
      %v2060 = vpop.permute.xlu0 %2059
      %v2061 = vsel %vm970, %v2058, %v2060
      %v2064 = vsel %vm497, %v2056, 0
      %2066 = vmatprep.subr.bf16.mxu0 0
      %2067 = vmatpush1.bf16.msra.mxu0 0
      %2068 = vmatprep.subr.bf16.mxu0 0
      %2069 = vmatpush1.bf16.msra.mxu0 0
      %2070 = vmatprep.subr.bf16.mxu0 0
      %2071 = vmatpush1.bf16.msra.mxu0 0
      %2072 = vmatprep.subr.bf16.mxu0 0
      %2073 = vmatpush1.bf16.msra.mxu0 0
      %2074 = vmatprep.subr.bf16.mxu0 0
      %2075 = vmatpush1.bf16.msra.mxu0 0
      %2076 = vmatprep.subr.bf16.mxu0 0
      %2077 = vmatpush1.bf16.msra.mxu0 0
      %2078 = vmatprep.subr.bf16.mxu0 0
      %2079 = vmatpush1.bf16.msra.mxu0 0
      %2080 = vmatprep.subr.bf16.mxu0 0
      %2081 = vmatpush1.bf16.msra.mxu0 %v2061
      %2082 = vmatprep.subr.bf16.mxu0 0
      %2083 = vmatpush2.bf16.msra.mxu0 0
      %2084 = vmatprep.subr.bf16.mxu0 0
      %2085 = vmatpush2.bf16.msra.mxu0 0
      %2086 = vmatprep.subr.bf16.mxu0 0
      %2087 = vmatpush2.bf16.msra.mxu0 0
      %2088 = vmatprep.subr.bf16.mxu0 0
      %2089 = vmatpush2.bf16.msra.mxu0 0
      %2090 = vmatprep.subr.bf16.mxu0 0
      %2091 = vmatpush2.bf16.msra.mxu0 0
      %2092 = vmatprep.subr.bf16.mxu0 0
      %2093 = vmatpush2.bf16.msra.mxu0 0
      %2094 = vmatprep.subr.bf16.mxu0 0
      %2095 = vmatpush2.bf16.msra.mxu0 0
      %2096 = vmatprep.subr.bf16.mxu0 0
      %2097 = vmatpush2.bf16.msra.mxu0 0
      %2098 = vmatprep.mubr.bf16.mxu0 0
      %2099 = vmatmul.mubr.bf16.gmra.mxu0 %v2064
      %v2100 = vpop.f32.mrf.mxu0
      %v2101 = vadd.f32 0.0, %v2100
      %v2102 = vpop.f32.mrf.mxu0
      %v2103 = vpop.f32.mrf.mxu0
      %v2104 = vadd.f32 0.0, %v2103
      %v2105 = vpop.f32.mrf.mxu0
      %2106 = vdwg.mxu0
      %v2107 = vadd.f32 %v2047, %v2101
      %v2108 = vadd.f32 %v2048, %v2104
      %v2109 = vld [vmem:[%s4] sm:$0xff]
      %v2110 = vld [vmem:[%s4 + $0x8] sm:$0xff]
      %2112 = vset.pattern.permute.xlu0 0
      %2113 = vperm.xlu0 %2112, %v2109
      %v2114 = vpop.permute.xlu0 %2113
      %2117 = vset.pattern.permute.xlu0 0
      %2118 = vperm.xlu0 %2117, %v2110
      %v2119 = vpop.permute.xlu0 %2118
      %v2121 = vadd.f32 %v2107, %v2114
      %v2122 = vadd.f32 %v2108, %v2119
      %v2123 = vld [vmem:[%s5] sm:$0x1]
      %v2125 = vlaneseq
      %v2126 = vshrl.u32 %v2125, 7
      %v2127 = vsub.s32 0, %v2126
      %v2128 = vrot.slane %v2123, %v2127
      %v2130 = vmul.f32 %v2121, %v2128
      %v2131 = vmul.f32 %v2122, %v2128
      %2132 = vadd.xlane.f32.xlu0 %v2130
      %v2133 = vpop.xlane.xlu0 %2132
      %2134 = vadd.xlane.f32.xlu0 %v2131
      %v2135 = vpop.xlane.xlu0 %2134
      %vm2136 = vcmask 7168
      %2137 = vst.msk [vmem:[%s459] sm:$0xff] %vm2136, %v2133
      %2138 = vst.msk [vmem:[%s459 + $0x8] sm:$0xff] %vm2136, %v2135
      %v2139 = vmul.f32 %v2121, %v2121
      %v2140 = vmul.f32 %v2122, %v2122
      %v2141 = vmul.f32 %v2139, %v2128
      %v2142 = vmul.f32 %v2140, %v2128
      %2143 = vadd.xlane.f32.xlu0 %v2141
      %v2144 = vpop.xlane.xlu0 %2143
      %2145 = vadd.xlane.f32.xlu0 %v2142
      %v2146 = vpop.xlane.xlu0 %2145
      %2147 = vst.msk [vmem:[%s468] sm:$0xff] %vm2136, %v2144
      %2148 = vst.msk [vmem:[%s468 + $0x8] sm:$0xff] %vm2136, %v2146
      %v2149 = vpack.c.bf16 %v2122, %v2121
      %v2151 = vunpack.c.l.b16 %v2149
      %v2152 = vunpack.c.h.b16 %v2149
      %v2153 = vpack.c.b16 %v2151, %v2151
      %v2154 = vpack.c.b16 %v2152, %v2152
      %2157 = vst [vmem:[%s450] sm:$0xf] %v2153
      %2158 = vst [vmem:[%s450 + $0x4] sm:$0xf] %v2154
      %p2159 = scmp.lt.s32.totalorder %s24, 1
      %s2160 = scalar_select %p2159, %s24, 1
      %p2161 = scmp.lt.s32.totalorder %s25, 7
      %s2162 = scalar_select %p2161, %s25, 7
      %s2163 = smul.addr %s2162, 2
      %s2164 = smul.addr %s2160, 16
      %s2165 = sadd.s32 %s2163, %s2164
      %s2166 = smul.addr %s2165, 4
      %s2167 = scalar_lea.vmem %s6, %s2166
      %p2168 = scmp.lt.s32.totalorder %s24, 1
      %s2169 = scalar_select %p2168, %s24, 1
      %p2170 = scmp.lt.s32.totalorder %s25, 7
      %s2171 = scalar_select %p2170, %s25, 7
      %s2172 = smul.addr %s2171, 2
      %s2173 = smul.addr %s2169, 16
      %s2174 = sadd.s32 %s2172, %s2173
      %s2175 = smul.addr %s2174, 8
      %s2176 = scalar_lea.vmem %s7, %s2175
      %p2177 = scmp.lt.s32.totalorder %s24, 1
      %s2178 = scalar_select %p2177, %s24, 1
      %p2179 = scmp.lt.s32.totalorder %s25, 7
      %s2180 = scalar_select %p2179, %s25, 7
      %s2181 = smul.addr %s2180, 2
      %s2182 = smul.addr %s2178, 16
      %s2183 = sadd.s32 %s2181, %s2182
      %s2184 = smul.addr %s2183, 8
      %s2185 = scalar_lea.vmem %s8, %s2184
      // Predicated region
      $region45: #{down_forward.6} parent=43 // pred_check
        %p2186 = pneg %p203
      $region46: #{down_forward.6} parent=43 // pred_check_branch
        %2188 = sbr.rel (%p2186) target = $region48
      $region47: #{down_forward.6} parent=43 // pred_region
        _
      $region48: #{down_forward.6} parent=43 // pred_fallthru
        _
      // Predicated region
      $region49: #{down_forward.6} parent=43 // pred_check
        %p2189 = pneg %p231
      $region50: #{down_forward.6} parent=43 // pred_check_branch
        %2191 = sbr.rel (%p2189) target = $region52
      $region51: #{down_forward.6} parent=43 // pred_region
        _
      $region52: #{down_forward.6} parent=43 // pred_fallthru
        _
      // Predicated region
      $region53: #{down_forward.6} parent=43 // pred_check
        %p2192 = pneg %p259
      $region54: #{down_forward.6} parent=43 // pred_check_branch
        %2194 = sbr.rel (%p2192) target = $region56
      $region55: #{down_forward.6} parent=43 // pred_region
        _
      $region56: #{down_forward.6} parent=43 // pred_fallthru
        _
    $region44: #{down_forward.6} parent=5 // pred_fallthru
      _
    %p2195 = scmp.le.s32.totalorder 2, %s15
    // Predicated region
    $region57: #{down_forward.6} parent=5 // pred_check
      %p2196 = pneg %p2195
    $region58: #{down_forward.6} parent=5 // pred_check_branch
      %2198 = sbr.rel (%p2196) target = $region60
    $region59: #{down_forward.6} parent=5 // pred_region
      %s2199 = ssub.s32 %s15, 2
      // Predicated region
      $region61: #{down_forward.6} parent=59 // pred_check
        %p2200 = pneg %p209
      $region62: #{down_forward.6} parent=59 // pred_check_branch
        %2202 = sbr.rel (%p2200) target = $region64
      $region63: #{down_forward.6} parent=59 // pred_region
        %p2203 = scmp.lt.s32.totalorder %s26, 1
        %s2204 = scalar_select %p2203, %s26, 1
        %p2205 = scmp.lt.s32.totalorder %s27, 7
        %s2206 = scalar_select %p2205, %s27, 7
        %s2207 = smul.addr %s2206, 2
        %s2208 = smul.addr %s2204, 16
        %s2209 = sadd.s32 %s2207, %s2208
        %s2210 = smul.addr %s2209, 4
        %s2211 = scalar_lea.vmem %s6, %s2210
      $region64: #{down_forward.6} parent=59 // pred_fallthru
        _
      // Predicated region
      $region65: #{down_forward.6} parent=59 // pred_check
        %p2212 = pneg %p237
      $region66: #{down_forward.6} parent=59 // pred_check_branch
        %2214 = sbr.rel (%p2212) target = $region68
      $region67: #{down_forward.6} parent=59 // pred_region
        %p2215 = scmp.lt.s32.totalorder %s26, 1
        %s2216 = scalar_select %p2215, %s26, 1
        %p2217 = scmp.lt.s32.totalorder %s27, 7
        %s2218 = scalar_select %p2217, %s27, 7
        %s2219 = smul.addr %s2218, 2
        %s2220 = smul.addr %s2216, 16
        %s2221 = sadd.s32 %s2219, %s2220
        %s2222 = smul.addr %s2221, 8
        %s2223 = scalar_lea.vmem %s7, %s2222
      $region68: #{down_forward.6} parent=59 // pred_fallthru
        _
      // Predicated region
      $region69: #{down_forward.6} parent=59 // pred_check
        %p2224 = pneg %p265
      $region70: #{down_forward.6} parent=59 // pred_check_branch
        %2226 = sbr.rel (%p2224) target = $region72
      $region71: #{down_forward.6} parent=59 // pred_region
        %p2227 = scmp.lt.s32.totalorder %s26, 1
        %s2228 = scalar_select %p2227, %s26, 1
        %p2229 = scmp.lt.s32.totalorder %s27, 7
        %s2230 = scalar_select %p2229, %s27, 7
        %s2231 = smul.addr %s2230, 2
        %s2232 = smul.addr %s2228, 16
        %s2233 = sadd.s32 %s2231, %s2232
        %s2234 = smul.addr %s2233, 8
        %s2235 = scalar_lea.vmem %s8, %s2234
      $region72: #{down_forward.6} parent=59 // pred_fallthru
        _
    $region60: #{down_forward.6} parent=5 // pred_fallthru
      _
  $region6: #{down_forward.6} parent=0 // loop_footer
    %s19 = sadd.s32 1, %s15
  $region7: #{down_forward.6} parent=0 // loop_footer_branch
    %14 = sbr.rel target = $region3
  $region8: #{down_forward.6} parent=0 // loop_exit
    _

</llo_original>
